<compile_context>
chip_gen: v7x
topology: tpu7x:2x2x1
jax: 0.10.0
libtpu: 0.0.40
codegen_flags: <defaults>
</compile_context>

<pallas_src>
import functools
import numpy as np
import jax
import jax.numpy as jnp
from jax.experimental import pallas as pl
from jax.experimental.pallas import tpu as pltpu


LANE = 128  # TPU lane width; feature dims are zero-padded to a multiple of it.


# ----------------------------- helpers (in-kernel) -----------------------------

def _ln_pad(x, g, b, nd, eps=1e-5):
    """LayerNorm over the first `nd` features of a zero-padded [*, Dp] value.

    Padded columns of x are exactly zero, so sums over the padded width equal
    sums over the real width; g/b are zero in padded columns, so those columns
    stay exactly zero.
    """
    xf = x.astype(jnp.float32)
    inv_n = 1.0 / nd
    mean = jnp.sum(xf, axis=-1, keepdims=True) * inv_n
    ex2 = jnp.sum(xf * xf, axis=-1, keepdims=True) * inv_n
    var = jnp.maximum(ex2 - mean * mean, 0.0)
    y = (xf - mean) * jax.lax.rsqrt(var + eps)
    return y * g + b


# ----------------------------- Pallas kernels -----------------------------

def _resize_kernel(img_ref, wy_ref, wxt_ref, o_ref):
    """Fused bilinear resize of one channel plane: R = Wy @ (I @ Wx^T), bf16 out."""
    plane = img_ref[...].astype(jnp.float32)                                  # [H, W]
    tmp = jnp.dot(plane, wxt_ref[...], preferred_element_type=jnp.float32)    # [H, 224]
    o_ref[...] = jnp.dot(wy_ref[...], tmp,
                         preferred_element_type=jnp.float32).astype(o_ref.dtype)


def _encoder_kernel(p_ref, wp_ref, pospad_ref, lnpre_g_ref, lnpre_b_ref, kbias_ref,
                    ln1_g_ref, ln1_b_ref, wqkv_ref, bqkv_ref, wo_ref, bo_ref,
                    ln2_g_ref, ln2_b_ref, w1_ref, b1_ref, w2_ref, b2_ref,
                    lnpost_g_ref, lnpost_b_ref, proj_ref,
                    o_ref, feat_ref,
                    qkv_ref, ocat_ref,
                    *, B, Sp, heads, Wd):
    """grid=(L,): one step = one transformer layer for ALL images at once.
    The [B*Sp, Dp] token state lives in the resident output block."""
    l = pl.program_id(0)
    n_layers = pl.num_programs(0)
    Dp = o_ref.shape[-1]
    Dh = Wd // heads
    scale = Dh ** -0.5
    bf16 = jnp.bfloat16
    f32 = jnp.float32

    # ---- l==0 prologue: patch-embed + CLS/pos assembly + ln_pre ----
    # p_ref rows are already placed at their sequence slots (CLS/pad rows zero).
    @pl.when(l == 0)
    def _():
        tok = jnp.dot(p_ref[...], wp_ref[...], preferred_element_type=f32)    # [B*Sp, Dp]
        pos = jnp.concatenate([pospad_ref[...]] * B, axis=0)                  # [B*Sp, Dp]
        o_ref[...] = _ln_pad(tok + pos, lnpre_g_ref[...], lnpre_b_ref[...], Wd)

    x = o_ref[...]                                                            # [B*Sp, Dp] f32

    # ---- multi-head self-attention ----
    h = _ln_pad(x, ln1_g_ref[...], ln1_b_ref[...], Wd)
    qkv = jnp.dot(h.astype(bf16), wqkv_ref[...],
                  preferred_element_type=f32) + bqkv_ref[...]                 # [B*Sp, 3*Dp]
    qkv_ref[...] = qkv.astype(bf16)                                           # stage once, bf16

    key_bias = kbias_ref[...]                                                 # [1, Sp]

    for b in range(B):                                                        # static unroll
        r0 = b * Sp
        for hh in range(heads):
            q = qkv_ref[r0:r0 + Sp, hh * Dh:(hh + 1) * Dh]                    # [Sp, Dh] bf16
            k = qkv_ref[r0:r0 + Sp, Dp + hh * Dh:Dp + (hh + 1) * Dh]
            v = qkv_ref[r0:r0 + Sp, 2 * Dp + hh * Dh:2 * Dp + (hh + 1) * Dh]
            s = jax.lax.dot_general(q, k, (((1,), (1,)), ((), ())),
                                    preferred_element_type=f32) * scale       # [Sp, Sp]
            s = s + key_bias                                                  # mask padded keys
            m = jnp.max(s, axis=-1, keepdims=True)
            p = jnp.exp(s - m)
            denom = jnp.sum(p, axis=-1, keepdims=True)
            p = p * pl.reciprocal(denom, approx=True)
            o_h = jnp.dot(p.astype(bf16), v, preferred_element_type=f32)      # [Sp, Dh]
            ocat_ref[r0:r0 + Sp, hh * Dh:(hh + 1) * Dh] = o_h.astype(bf16)

    # Single merged out-projection over all images / heads.
    att = jnp.dot(ocat_ref[...], wo_ref[...],
                  preferred_element_type=f32) + bo_ref[...]                   # [B*Sp, Dp]
    x = x + att

    # ---- MLP with QuickGELU ----
    h = _ln_pad(x, ln2_g_ref[...], ln2_b_ref[...], Wd)
    h1 = jnp.dot(h.astype(bf16), w1_ref[...],
                 preferred_element_type=f32) + b1_ref[...]                    # [B*Sp, 4*Wd]
    h1 = h1 * jax.nn.sigmoid(1.702 * h1)                                      # QuickGELU (f32)
    h2 = jnp.dot(h1.astype(bf16), w2_ref[...],
                 preferred_element_type=f32) + b2_ref[...]                    # [B*Sp, Dp]
    x = x + h2

    o_ref[...] = x

    # ---- l==L-1 epilogue: ln_post on CLS rows + projection ----
    @pl.when(l == n_layers - 1)
    def _():
        cls_rows = jnp.concatenate([x[b * Sp:b * Sp + 1, :] for b in range(B)], axis=0)
        y = _ln_pad(cls_rows, lnpost_g_ref[...], lnpost_b_ref[...], Wd)
        feat_ref[...] = jnp.dot(y.astype(bf16), proj_ref[...],
                                preferred_element_type=f32)


# ----------------------------- CLIP ViT config -----------------------------

class Config:
    image_size = 224      # F.interpolate target in the reference forward
    patch_size = 32
    width = 64            # shrunk hidden size (real ViT-B/32 is 768)
    layers = 2
    heads = 4
    output_dim = 32


def _bilinear_matrix(in_size, out_size):
    """PyTorch F.interpolate(mode='bilinear', align_corners=False) as a matrix."""
    i = np.arange(out_size, dtype=np.float64)
    src = (i + 0.5) * (in_size / out_size) - 0.5
    src = np.clip(src, 0.0, in_size - 1)
    i0 = np.floor(src).astype(np.int64)
    i1 = np.minimum(i0 + 1, in_size - 1)
    w1 = (src - i0).astype(np.float32)
    w0 = 1.0 - w1
    W = np.zeros((out_size, in_size), np.float32)
    W[np.arange(out_size), i0] += w0
    W[np.arange(out_size), i1] += w1
    return W


def init_clip_params(key, cfg):
    """Synthetic CLIP-ViT parameters in the PyTorch layout (same as the spec)."""
    Wd, P = cfg.width, cfg.patch_size
    g = cfg.image_size // P
    S = g * g + 1
    keys = iter(jax.random.split(key, 4 + 8 * cfg.layers))

    def nrm(shape, std=0.02):
        return std * jax.random.normal(next(keys), shape, jnp.float32)

    params = {
        "conv1_w": nrm((Wd, 3, P, P)),                 # patch-embed conv, no bias
        "class_embedding": nrm((Wd,)),
        "positional_embedding": nrm((S, Wd)),
        "ln_pre_g": jnp.ones((Wd,), jnp.float32),
        "ln_pre_b": jnp.zeros((Wd,), jnp.float32),
        "ln_post_g": jnp.ones((Wd,), jnp.float32),
        "ln_post_b": jnp.zeros((Wd,), jnp.float32),
        "proj": nrm((Wd, cfg.output_dim)),
        "blocks": [],
    }
    for _ in range(cfg.layers):
        params["blocks"].append({
            "ln1_g": jnp.ones((Wd,), jnp.float32), "ln1_b": jnp.zeros((Wd,), jnp.float32),
            "ln2_g": jnp.ones((Wd,), jnp.float32), "ln2_b": jnp.zeros((Wd,), jnp.float32),
            "in_proj_w": nrm((3 * Wd, Wd)),            # PyTorch [3W, W]
            "in_proj_b": nrm((3 * Wd,)),
            "out_proj_w": nrm((Wd, Wd)),
            "out_proj_b": nrm((Wd,)),
            "fc1_w": nrm((4 * Wd, Wd)),
            "fc1_b": nrm((4 * Wd,)),
            "fc2_w": nrm((Wd, 4 * Wd)),
            "fc2_b": nrm((Wd,)),
        })
    return params


def pack_params(params, cfg):
    """Zero-pad the feature dim to the lane width, transpose to [in, out],
    stack per-layer weights along a leading layer axis, cast matmul weights to
    bf16 (biases / LN params stay f32), fold CLS into the positional table."""
    Wd = cfg.width
    Dp = -(-Wd // LANE) * LANE
    H4 = 4 * Wd
    P = cfg.patch_size
    g = cfg.image_size // P
    S0 = g * g + 1
    Sp = -(-S0 // 8) * 8
    f32, bf16 = jnp.float32, jnp.bfloat16

    def pad2(a, rows, cols):
        return jnp.pad(a, ((0, rows - a.shape[0]), (0, cols - a.shape[1])))

    def padv(a, n):
        return jnp.pad(a, (0, n - a.shape[0]))

    wqkv, bqkv, wo, bo = [], [], [], []
    ln1g, ln1b, ln2g, ln2b = [], [], [], []
    w1, b1, w2, b2 = [], [], [], []
    for blk in params["blocks"]:
        ipw, ipb = blk["in_proj_w"], blk["in_proj_b"]
        wq = pad2(ipw[0 * Wd:1 * Wd].T, Dp, Dp)
        wk = pad2(ipw[1 * Wd:2 * Wd].T, Dp, Dp)
        wv = pad2(ipw[2 * Wd:3 * Wd].T, Dp, Dp)
        wqkv.append(jnp.concatenate([wq, wk, wv], axis=1).astype(bf16))   # [Dp, 3*Dp]
        bqkv.append(jnp.concatenate([padv(ipb[0 * Wd:1 * Wd], Dp),
                                     padv(ipb[1 * Wd:2 * Wd], Dp),
                                     padv(ipb[2 * Wd:3 * Wd], Dp)])[None, :].astype(f32))
        wo.append(pad2(blk["out_proj_w"].T, Wd, Dp).astype(bf16))         # [Wd, Dp]
        bo.append(padv(blk["out_proj_b"], Dp)[None, :].astype(f32))
        ln1g.append(padv(blk["ln1_g"], Dp)[None, :].astype(f32))
        ln1b.append(padv(blk["ln1_b"], Dp)[None, :].astype(f32))
        ln2g.append(padv(blk["ln2_g"], Dp)[None, :].astype(f32))
        ln2b.append(padv(blk["ln2_b"], Dp)[None, :].astype(f32))
        w1.append(pad2(blk["fc1_w"].T, Dp, H4).astype(bf16))              # [Dp, 4Wd]
        b1.append(blk["fc1_b"][None, :].astype(f32))
        w2.append(pad2(blk["fc2_w"].T, H4, Dp).astype(bf16))              # [4Wd, Dp]
        b2.append(padv(blk["fc2_b"], Dp)[None, :].astype(f32))

    # CLS embedding folded into row 0 of the positional table; rows padded to Sp.
    pos = params["positional_embedding"].at[0, :].add(params["class_embedding"])
    pos_pad = jnp.zeros((Sp, Dp), f32).at[:S0, :Wd].set(pos)
    # Additive softmax key mask for the padded sequence positions.
    key_bias = jnp.where(jnp.arange(Sp) < S0, 0.0, -1e30).astype(f32)[None, :]

    return {
        "wqkv": jnp.stack(wqkv), "bqkv": jnp.stack(bqkv),
        "wo": jnp.stack(wo), "bo": jnp.stack(bo),
        "ln1_g": jnp.stack(ln1g), "ln1_b": jnp.stack(ln1b),
        "ln2_g": jnp.stack(ln2g), "ln2_b": jnp.stack(ln2b),
        "w1": jnp.stack(w1), "b1": jnp.stack(b1),
        "w2": jnp.stack(w2), "b2": jnp.stack(b2),
        "ln_pre_g": padv(params["ln_pre_g"], Dp)[None, :].astype(f32),
        "ln_pre_b": padv(params["ln_pre_b"], Dp)[None, :].astype(f32),
        "ln_post_g": padv(params["ln_post_g"], Dp)[None, :].astype(f32),
        "ln_post_b": padv(params["ln_post_b"], Dp)[None, :].astype(f32),
        "proj": jnp.pad(params["proj"], ((0, Dp - Wd), (0, 0))).astype(bf16),
        "pos_pad": pos_pad,
        "key_bias": key_bias,
        "w_patch": jnp.pad(params["conv1_w"].reshape(Wd, -1).T,
                           ((0, 0), (0, Dp - Wd))).astype(bf16),          # [C*P*P, Dp]
    }


# ----------------------------- Forward pass -----------------------------

def clip_vision_forward(packed, image, cfg):
    """image: NCHW float32 [B, 3, H, W] -> features [B, output_dim]."""
    B, C, H, W_in = image.shape
    T, P, Wd, L = cfg.image_size, cfg.patch_size, cfg.width, cfg.layers
    g = T // P
    S0 = g * g + 1                       # real sequence length (CLS + patches)
    Sp = -(-S0 // 8) * 8                 # padded sequence (sublane multiple)
    Dp = -(-Wd // LANE) * LANE           # padded feature width (lane multiple)
    CPP = C * P * P

    # 1) Fused bilinear resize: one channel plane per grid step, both
    #    interpolation matmuls stay in VMEM; bf16 output halves downstream DMA.
    Wy = jnp.asarray(_bilinear_matrix(H, T))          # [224, H]
    WxT = jnp.asarray(_bilinear_matrix(W_in, T)).T    # [W_in, 224]
    planes = image.reshape(B * C, H, W_in)
    resized = pl.pallas_call(
        _resize_kernel,
        out_shape=jax.ShapeDtypeStruct((B * C, T, T), jnp.bfloat16),
        grid=(B * C,),
        in_specs=[pl.BlockSpec((None, H, W_in), lambda i: (i, 0, 0)),
                  pl.BlockSpec((T, H), lambda i: (0, 0)),
                  pl.BlockSpec((W_in, T), lambda i: (0, 0))],
        out_specs=pl.BlockSpec((None, T, T), lambda i: (i, 0, 0)),
        compiler_params=pltpu.CompilerParams(dimension_semantics=("parallel",)),
    )(planes, Wy, WxT)

    # 2) Patch unfold (single small XLA relayout on the bf16 tensor), with rows
    #    placed directly at their final sequence slots (CLS + tail rows zero)
    #    so the encoder kernel needs no in-kernel scatter.
    # TODO(synk): fold this im2col relayout into a kernel once Mosaic has a
    # clean sublane<->lane unfold path.
    patches = (resized.reshape(B, C, g, P, g, P)
               .transpose(0, 2, 4, 1, 3, 5)
               .reshape(B, g * g, CPP))
    patches = jnp.pad(patches, ((0, 0), (1, Sp - S0), (0, 0))).reshape(B * Sp, CPP)

    # 3) Whole encoder (patch-embed, assembly, ln_pre, all layers, head) in ONE
    #    pallas_call.  grid=(L,): batch folded into the block, weights streamed
    #    once per layer, token state resident in the output block.
    lyr = lambda l: (l, 0, 0)     # noqa: E731
    cst = lambda l: (0, 0)        # noqa: E731
    out_dim = cfg.output_dim
    _, feats = pl.pallas_call(
        functools.partial(_encoder_kernel, B=B, Sp=Sp, heads=cfg.heads, Wd=Wd),
        out_shape=(jax.ShapeDtypeStruct((B * Sp, Dp), jnp.float32),
                   jax.ShapeDtypeStruct((B, out_dim), jnp.float32)),
        grid=(L,),
        in_specs=[
            pl.BlockSpec((B * Sp, CPP), cst),             # patches (pre-placed rows)
            pl.BlockSpec((CPP, Dp), cst),                 # patch-embed weight (bf16)
            pl.BlockSpec((Sp, Dp), cst),                  # CLS+pos table (padded)
            pl.BlockSpec((1, Dp), cst),                   # ln_pre g
            pl.BlockSpec((1, Dp), cst),                   # ln_pre b
            pl.BlockSpec((1, Sp), cst),                   # softmax key mask bias
            pl.BlockSpec((None, 1, Dp), lyr),             # ln1 g
            pl.BlockSpec((None, 1, Dp), lyr),             # ln1 b
            pl.BlockSpec((None, Dp, 3 * Dp), lyr),        # wqkv (bf16)
            pl.BlockSpec((None, 1, 3 * Dp), lyr),         # bqkv
            pl.BlockSpec((None, Wd, Dp), lyr),            # wo (bf16)
            pl.BlockSpec((None, 1, Dp), lyr),             # bo
            pl.BlockSpec((None, 1, Dp), lyr),             # ln2 g
            pl.BlockSpec((None, 1, Dp), lyr),             # ln2 b
            pl.BlockSpec((None, Dp, 4 * Wd), lyr),        # w1 (bf16)
            pl.BlockSpec((None, 1, 4 * Wd), lyr),         # b1
            pl.BlockSpec((None, 4 * Wd, Dp), lyr),        # w2 (bf16)
            pl.BlockSpec((None, 1, Dp), lyr),             # b2
            pl.BlockSpec((1, Dp), cst),                   # ln_post g
            pl.BlockSpec((1, Dp), cst),                   # ln_post b
            pl.BlockSpec((Dp, out_dim), cst),             # proj (bf16)
        ],
        out_specs=(pl.BlockSpec((B * Sp, Dp), cst),       # resident token state
                   pl.BlockSpec((B, out_dim), cst)),      # features (epilogue)
        scratch_shapes=[pltpu.VMEM((B * Sp, 3 * Dp), jnp.bfloat16),   # staged qkv
                        pltpu.VMEM((B * Sp, Wd), jnp.bfloat16)],      # head outputs
        compiler_params=pltpu.CompilerParams(
            dimension_semantics=("arbitrary",)),
    )(patches, packed["w_patch"], packed["pos_pad"],
      packed["ln_pre_g"], packed["ln_pre_b"], packed["key_bias"],
      packed["ln1_g"], packed["ln1_b"], packed["wqkv"], packed["bqkv"],
      packed["wo"], packed["bo"], packed["ln2_g"], packed["ln2_b"],
      packed["w1"], packed["b1"], packed["w2"], packed["b2"],
      packed["ln_post_g"], packed["ln_post_b"], packed["proj"])
    return feats


# ----------------------------- Main -----------------------------

if __name__ == "__main__":
    cfg = Config()
    assert cfg.width % cfg.heads == 0
    key = jax.random.PRNGKey(0)
    pkey, xkey = jax.random.split(key)

    params = init_clip_params(pkey, cfg)
    packed = pack_params(params, cfg)
    x = jax.random.normal(xkey, (2, 3, 32, 32), jnp.float32)   # NCHW image tensor

    fwd = jax.jit(functools.partial(clip_vision_forward, cfg=cfg))
    feats = fwd(packed, x)
    feats = jax.block_until_ready(feats)
    assert feats.shape == (2, cfg.output_dim)
    assert bool(jnp.all(jnp.isfinite(feats)))
    print("KERNEL_OK")
</pallas_src>

<mosaic_0001>
module attributes {stable_mosaic.version = 11 : i64} {
  func.func @_resize_kernel(%arg0: i32, %arg1: memref<1x32x32xf32, #tpu.memory_space<vmem>>, %arg2: memref<224x32xf32, #tpu.memory_space<vmem>>, %arg3: memref<32x224xf32, #tpu.memory_space<vmem>>, %arg4: memref<1x224x224xbf16, #tpu.memory_space<vmem>>) attributes {dimension_semantics = [#tpu.dimension_semantics<parallel>], iteration_bounds = array<i64: 6>, scalar_prefetch = 0 : i64, scratch_operands = 0 : i64, tpu.core_type = #tpu.core_type<tc>, window_params = [{transform_indices = @transform_0, window_bounds = array<i64: 1, 32, 32>}, {pipeline_mode = #tpu.pipeline_mode<synchronous>, transform_indices = @transform_1, window_bounds = array<i64: 224, 32>}, {pipeline_mode = #tpu.pipeline_mode<synchronous>, transform_indices = @transform_2, window_bounds = array<i64: 32, 224>}, {transform_indices = @transform_3, window_bounds = array<i64: 1, 224, 224>}]} {
    %c0 = arith.constant 0 : index
    %c0_0 = arith.constant 0 : index
    %c0_1 = arith.constant 0 : index
    %0 = vector.load %arg1[%c0, %c0_0, %c0_1] : memref<1x32x32xf32, #tpu.memory_space<vmem>>, vector<1x32x32xf32>
    %1 = vector.shape_cast %0 : vector<1x32x32xf32> to vector<32x32xf32>
    %c0_2 = arith.constant 0 : index
    %c0_3 = arith.constant 0 : index
    %2 = vector.load %arg3[%c0_2, %c0_3] : memref<32x224xf32, #tpu.memory_space<vmem>>, vector<32x224xf32>
    %cst = arith.constant dense<0.000000e+00> : vector<32x224xf32>
    %3 = tpu.matmul %1, %2, %cst {dimension_numbers = #tpu.dot_dimension_numbers<[1], [0], [0], [1], [0, 0, 1, 1], [], []>} : vector<32x32xf32>, vector<32x224xf32>, vector<32x224xf32> -> vector<32x224xf32>
    %c0_4 = arith.constant 0 : index
    %c0_5 = arith.constant 0 : index
    %4 = vector.load %arg2[%c0_4, %c0_5] : memref<224x32xf32, #tpu.memory_space<vmem>>, vector<224x32xf32>
    %cst_6 = arith.constant dense<0.000000e+00> : vector<224x224xf32>
    %5 = tpu.matmul %4, %3, %cst_6 {dimension_numbers = #tpu.dot_dimension_numbers<[1], [0], [0], [1], [0, 0, 1, 1], [], []>} : vector<224x32xf32>, vector<32x224xf32>, vector<224x224xf32> -> vector<224x224xf32>
    %6 = arith.truncf %5 : vector<224x224xf32> to vector<224x224xbf16>
    %c0_7 = arith.constant 0 : index
    %c0_8 = arith.constant 0 : index
    %c0_9 = arith.constant 0 : index
    %7 = vector.load %arg4[%c0_7, %c0_8, %c0_9] : memref<1x224x224xbf16, #tpu.memory_space<vmem>>, vector<1x224x224xbf16>
    %8 = vector.shape_cast %7 : vector<1x224x224xbf16> to vector<224x224xbf16>
    %9 = vector.shape_cast %6 : vector<224x224xbf16> to vector<1x224x224xbf16>
    tpu.vector_store %arg4[%c0_7, %c0_8, %c0_9], %9 {strides = array<i32>} : memref<1x224x224xbf16, #tpu.memory_space<vmem>>, vector<1x224x224xbf16>,
    return
  }
  func.func @transform_0(%arg0: i32) -> (i32, i32, i32) {
    %c0_i32 = arith.constant 0 : i32
    %c0_i32_0 = arith.constant 0 : i32
    %c0_i32_1 = arith.constant 0 : i32
    return %arg0, %c0_i32, %c0_i32_0 : i32, i32, i32
  }
  func.func @transform_1(%arg0: i32) -> (i32, i32) {
    %c0_i32 = arith.constant 0 : i32
    %c0_i32_0 = arith.constant 0 : i32
    %c0_i32_1 = arith.constant 0 : i32
    return %c0_i32, %c0_i32_0 : i32, i32
  }
  func.func @transform_2(%arg0: i32) -> (i32, i32) {
    %c0_i32 = arith.constant 0 : i32
    %c0_i32_0 = arith.constant 0 : i32
    %c0_i32_1 = arith.constant 0 : i32
    return %c0_i32, %c0_i32_0 : i32, i32
  }
  func.func @transform_3(%arg0: i32) -> (i32, i32, i32) {
    %c0_i32 = arith.constant 0 : i32
    %c0_i32_0 = arith.constant 0 : i32
    %c0_i32_1 = arith.constant 0 : i32
    return %arg0, %c0_i32, %c0_i32_0 : i32, i32, i32
  }
}

module attributes {stable_mosaic.version = 11 : i64} {
  func.func @_encoder_kernel(%arg0: i32, %arg1: memref<112x3072xbf16, #tpu.memory_space<vmem>>, %arg2: memref<3072x128xbf16, #tpu.memory_space<vmem>>, %arg3: memref<56x128xf32, #tpu.memory_space<vmem>>, %arg4: memref<1x128xf32, #tpu.memory_space<vmem>>, %arg5: memref<1x128xf32, #tpu.memory_space<vmem>>, %arg6: memref<1x56xf32, #tpu.memory_space<vmem>>, %arg7: memref<1x1x128xf32, #tpu.memory_space<vmem>>, %arg8: memref<1x1x128xf32, #tpu.memory_space<vmem>>, %arg9: memref<1x128x384xbf16, #tpu.memory_space<vmem>>, %arg10: memref<1x1x384xf32, #tpu.memory_space<vmem>>, %arg11: memref<1x64x128xbf16, #tpu.memory_space<vmem>>, %arg12: memref<1x1x128xf32, #tpu.memory_space<vmem>>, %arg13: memref<1x1x128xf32, #tpu.memory_space<vmem>>, %arg14: memref<1x1x128xf32, #tpu.memory_space<vmem>>, %arg15: memref<1x128x256xbf16, #tpu.memory_space<vmem>>, %arg16: memref<1x1x256xf32, #tpu.memory_space<vmem>>, %arg17: memref<1x256x128xbf16, #tpu.memory_space<vmem>>, %arg18: memref<1x1x128xf32, #tpu.memory_space<vmem>>, %arg19: memref<1x128xf32, #tpu.memory_space<vmem>>, %arg20: memref<1x128xf32, #tpu.memory_space<vmem>>, %arg21: memref<128x32xbf16, #tpu.memory_space<vmem>>, %arg22: memref<112x128xf32, #tpu.memory_space<vmem>>, %arg23: memref<2x32xf32, #tpu.memory_space<vmem>>, %arg24: memref<112x384xbf16, #tpu.memory_space<vmem>>, %arg25: memref<112x64xbf16, #tpu.memory_space<vmem>>) attributes {dimension_semantics = [#tpu.dimension_semantics<arbitrary>], iteration_bounds = array<i64: 2>, scalar_prefetch = 0 : i64, scratch_operands = 2 : i64, tpu.core_type = #tpu.core_type<tc>, window_params = [{pipeline_mode = #tpu.pipeline_mode<synchronous>, transform_indices = @transform_0, window_bounds = array<i64: 112, 3072>}, {pipeline_mode = #tpu.pipeline_mode<synchronous>, transform_indices = @transform_1, window_bounds = array<i64: 3072, 128>}, {pipeline_mode = #tpu.pipeline_mode<synchronous>, transform_indices = @transform_2, window_bounds = array<i64: 56, 128>}, {pipeline_mode = #tpu.pipeline_mode<synchronous>, transform_indices = @transform_3, window_bounds = array<i64: 1, 128>}, {pipeline_mode = #tpu.pipeline_mode<synchronous>, transform_indices = @transform_4, window_bounds = array<i64: 1, 128>}, {pipeline_mode = #tpu.pipeline_mode<synchronous>, transform_indices = @transform_5, window_bounds = array<i64: 1, 56>}, {transform_indices = @transform_6, window_bounds = array<i64: 1, 1, 128>}, {transform_indices = @transform_7, window_bounds = array<i64: 1, 1, 128>}, {transform_indices = @transform_8, window_bounds = array<i64: 1, 128, 384>}, {transform_indices = @transform_9, window_bounds = array<i64: 1, 1, 384>}, {transform_indices = @transform_10, window_bounds = array<i64: 1, 64, 128>}, {transform_indices = @transform_11, window_bounds = array<i64: 1, 1, 128>}, {transform_indices = @transform_12, window_bounds = array<i64: 1, 1, 128>}, {transform_indices = @transform_13, window_bounds = array<i64: 1, 1, 128>}, {transform_indices = @transform_14, window_bounds = array<i64: 1, 128, 256>}, {transform_indices = @transform_15, window_bounds = array<i64: 1, 1, 256>}, {transform_indices = @transform_16, window_bounds = array<i64: 1, 256, 128>}, {transform_indices = @transform_17, window_bounds = array<i64: 1, 1, 128>}, {pipeline_mode = #tpu.pipeline_mode<synchronous>, transform_indices = @transform_18, window_bounds = array<i64: 1, 128>}, {pipeline_mode = #tpu.pipeline_mode<synchronous>, transform_indices = @transform_19, window_bounds = array<i64: 1, 128>}, {pipeline_mode = #tpu.pipeline_mode<synchronous>, transform_indices = @transform_20, window_bounds = array<i64: 128, 32>}, {pipeline_mode = #tpu.pipeline_mode<synchronous>, transform_indices = @transform_21, window_bounds = array<i64: 112, 128>}, {pipeline_mode = #tpu.pipeline_mode<synchronous>, transform_indices = @transform_22, window_bounds = array<i64: 2, 32>}]} {
    %c0_i32 = arith.constant 0 : i32
    %0 = arith.cmpi eq, %arg0, %c0_i32 : i32
    %1 = arith.extui %0 : i1 to i32
    %c0_i32_0 = arith.constant 0 : i32
    %2 = arith.cmpi ne, %1, %c0_i32_0 : i32
    scf.if %2 {
      %c0_156 = arith.constant 0 : index
      %c0_157 = arith.constant 0 : index
      %285 = vector.load %arg1[%c0_156, %c0_157] : memref<112x3072xbf16, #tpu.memory_space<vmem>>, vector<112x3072xbf16>
      %c0_158 = arith.constant 0 : index
      %c0_159 = arith.constant 0 : index
      %286 = vector.load %arg2[%c0_158, %c0_159] : memref<3072x128xbf16, #tpu.memory_space<vmem>>, vector<3072x128xbf16>
      %cst_160 = arith.constant dense<0.000000e+00> : vector<112x128xf32>
      %287 = tpu.matmul %285, %286, %cst_160 {dimension_numbers = #tpu.dot_dimension_numbers<[1], [0], [0], [1], [0, 0, 1, 1], [], []>} : vector<112x3072xbf16>, vector<3072x128xbf16>, vector<112x128xf32> -> vector<112x128xf32>
      %c0_161 = arith.constant 0 : index
      %c0_162 = arith.constant 0 : index
      %288 = vector.load %arg3[%c0_161, %c0_162] : memref<56x128xf32, #tpu.memory_space<vmem>>, vector<56x128xf32>
      %289 = tpu.concatenate %288, %288 in 0 : vector<56x128xf32>, vector<56x128xf32> -> vector<112x128xf32>
      %290 = arith.addf %287, %289 : vector<112x128xf32>
      %c0_163 = arith.constant 0 : index
      %c0_164 = arith.constant 0 : index
      %291 = vector.load %arg4[%c0_163, %c0_164] : memref<1x128xf32, #tpu.memory_space<vmem>>, vector<1x128xf32>
      %c0_165 = arith.constant 0 : index
      %c0_166 = arith.constant 0 : index
      %292 = vector.load %arg5[%c0_165, %c0_166] : memref<1x128xf32, #tpu.memory_space<vmem>>, vector<1x128xf32>
      %cst_167 = arith.constant dense<0.000000e+00> : vector<112xf32>
      %293 = vector.multi_reduction <add>, %290, %cst_167 [1] : vector<112x128xf32> to vector<112xf32>
      %294 = vector.shape_cast %293 : vector<112xf32> to vector<112x1xf32>
      %cst_168 = arith.constant 1.562500e-02 : f32
      %295 = vector.broadcast %cst_168 : f32 to vector<112x1xf32>
      %296 = arith.mulf %294, %295 : vector<112x1xf32>
      %297 = arith.mulf %290, %290 : vector<112x128xf32>
      %cst_169 = arith.constant dense<0.000000e+00> : vector<112xf32>
      %298 = vector.multi_reduction <add>, %297, %cst_169 [1] : vector<112x128xf32> to vector<112xf32>
      %299 = vector.shape_cast %298 : vector<112xf32> to vector<112x1xf32>
      %cst_170 = arith.constant 1.562500e-02 : f32
      %300 = vector.broadcast %cst_170 : f32 to vector<112x1xf32>
      %301 = arith.mulf %299, %300 : vector<112x1xf32>
      %302 = arith.mulf %296, %296 : vector<112x1xf32>
      %303 = arith.subf %301, %302 : vector<112x1xf32>
      %cst_171 = arith.constant 0.000000e+00 : f32
      %304 = vector.broadcast %cst_171 : f32 to vector<112x1xf32>
      %305 = arith.maximumf %303, %304 : vector<112x1xf32>
      %306 = vector.broadcast %296 : vector<112x1xf32> to vector<112x128xf32>
      %307 = arith.subf %290, %306 : vector<112x128xf32>
      %cst_172 = arith.constant 9.99999974E-6 : f32
      %308 = vector.broadcast %cst_172 : f32 to vector<112x1xf32>
      %309 = arith.addf %305, %308 : vector<112x1xf32>
      %310 = math.rsqrt %309 : vector<112x1xf32>
      %311 = vector.broadcast %310 : vector<112x1xf32> to vector<112x128xf32>
      %312 = arith.mulf %307, %311 : vector<112x128xf32>
      %313 = vector.broadcast %291 : vector<1x128xf32> to vector<112x128xf32>
      %314 = arith.mulf %312, %313 : vector<112x128xf32>
      %315 = vector.broadcast %292 : vector<1x128xf32> to vector<112x128xf32>
      %316 = arith.addf %314, %315 : vector<112x128xf32>
      %c0_173 = arith.constant 0 : index
      %c0_174 = arith.constant 0 : index
      %317 = vector.load %arg22[%c0_173, %c0_174] : memref<112x128xf32, #tpu.memory_space<vmem>>, vector<112x128xf32>
      tpu.vector_store %arg22[%c0_173, %c0_174], %316 {strides = array<i32>} : memref<112x128xf32, #tpu.memory_space<vmem>>, vector<112x128xf32>,
    } else {
    }
    %c0 = arith.constant 0 : index
    %c0_1 = arith.constant 0 : index
    %3 = vector.load %arg22[%c0, %c0_1] : memref<112x128xf32, #tpu.memory_space<vmem>>, vector<112x128xf32>
    %c0_2 = arith.constant 0 : index
    %c0_3 = arith.constant 0 : index
    %c0_4 = arith.constant 0 : index
    %4 = vector.load %arg7[%c0_2, %c0_3, %c0_4] : memref<1x1x128xf32, #tpu.memory_space<vmem>>, vector<1x1x128xf32>
    %5 = vector.shape_cast %4 : vector<1x1x128xf32> to vector<1x128xf32>
    %c0_5 = arith.constant 0 : index
    %c0_6 = arith.constant 0 : index
    %c0_7 = arith.constant 0 : index
    %6 = vector.load %arg8[%c0_5, %c0_6, %c0_7] : memref<1x1x128xf32, #tpu.memory_space<vmem>>, vector<1x1x128xf32>
    %7 = vector.shape_cast %6 : vector<1x1x128xf32> to vector<1x128xf32>
    %cst = arith.constant dense<0.000000e+00> : vector<112xf32>
    %8 = vector.multi_reduction <add>, %3, %cst [1] : vector<112x128xf32> to vector<112xf32>
    %9 = vector.shape_cast %8 : vector<112xf32> to vector<112x1xf32>
    %cst_8 = arith.constant 1.562500e-02 : f32
    %10 = vector.broadcast %cst_8 : f32 to vector<112x1xf32>
    %11 = arith.mulf %9, %10 : vector<112x1xf32>
    %12 = arith.mulf %3, %3 : vector<112x128xf32>
    %cst_9 = arith.constant dense<0.000000e+00> : vector<112xf32>
    %13 = vector.multi_reduction <add>, %12, %cst_9 [1] : vector<112x128xf32> to vector<112xf32>
    %14 = vector.shape_cast %13 : vector<112xf32> to vector<112x1xf32>
    %cst_10 = arith.constant 1.562500e-02 : f32
    %15 = vector.broadcast %cst_10 : f32 to vector<112x1xf32>
    %16 = arith.mulf %14, %15 : vector<112x1xf32>
    %17 = arith.mulf %11, %11 : vector<112x1xf32>
    %18 = arith.subf %16, %17 : vector<112x1xf32>
    %cst_11 = arith.constant 0.000000e+00 : f32
    %19 = vector.broadcast %cst_11 : f32 to vector<112x1xf32>
    %20 = arith.maximumf %18, %19 : vector<112x1xf32>
    %21 = vector.broadcast %11 : vector<112x1xf32> to vector<112x128xf32>
    %22 = arith.subf %3, %21 : vector<112x128xf32>
    %cst_12 = arith.constant 9.99999974E-6 : f32
    %23 = vector.broadcast %cst_12 : f32 to vector<112x1xf32>
    %24 = arith.addf %20, %23 : vector<112x1xf32>
    %25 = math.rsqrt %24 : vector<112x1xf32>
    %26 = vector.broadcast %25 : vector<112x1xf32> to vector<112x128xf32>
    %27 = arith.mulf %22, %26 : vector<112x128xf32>
    %28 = vector.broadcast %5 : vector<1x128xf32> to vector<112x128xf32>
    %29 = arith.mulf %27, %28 : vector<112x128xf32>
    %30 = vector.broadcast %7 : vector<1x128xf32> to vector<112x128xf32>
    %31 = arith.addf %29, %30 : vector<112x128xf32>
    %32 = arith.truncf %31 : vector<112x128xf32> to vector<112x128xbf16>
    %c0_13 = arith.constant 0 : index
    %c0_14 = arith.constant 0 : index
    %c0_15 = arith.constant 0 : index
    %33 = vector.load %arg9[%c0_13, %c0_14, %c0_15] : memref<1x128x384xbf16, #tpu.memory_space<vmem>>, vector<1x128x384xbf16>
    %34 = vector.shape_cast %33 : vector<1x128x384xbf16> to vector<128x384xbf16>
    %cst_16 = arith.constant dense<0.000000e+00> : vector<112x384xf32>
    %35 = tpu.matmul %32, %34, %cst_16 {dimension_numbers = #tpu.dot_dimension_numbers<[1], [0], [0], [1], [0, 0, 1, 1], [], []>} : vector<112x128xbf16>, vector<128x384xbf16>, vector<112x384xf32> -> vector<112x384xf32>
    %c0_17 = arith.constant 0 : index
    %c0_18 = arith.constant 0 : index
    %c0_19 = arith.constant 0 : index
    %36 = vector.load %arg10[%c0_17, %c0_18, %c0_19] : memref<1x1x384xf32, #tpu.memory_space<vmem>>, vector<1x1x384xf32>
    %37 = vector.shape_cast %36 : vector<1x1x384xf32> to vector<1x384xf32>
    %38 = vector.broadcast %37 : vector<1x384xf32> to vector<112x384xf32>
    %39 = arith.addf %35, %38 : vector<112x384xf32>
    %40 = arith.truncf %39 : vector<112x384xf32> to vector<112x384xbf16>
    %c0_20 = arith.constant 0 : index
    %c0_21 = arith.constant 0 : index
    %41 = vector.load %arg24[%c0_20, %c0_21] : memref<112x384xbf16, #tpu.memory_space<vmem>>, vector<112x384xbf16>
    tpu.vector_store %arg24[%c0_20, %c0_21], %40 {strides = array<i32>} : memref<112x384xbf16, #tpu.memory_space<vmem>>, vector<112x384xbf16>,
    %c0_22 = arith.constant 0 : index
    %c0_23 = arith.constant 0 : index
    %42 = vector.load %arg6[%c0_22, %c0_23] : memref<1x56xf32, #tpu.memory_space<vmem>>, vector<1x56xf32>
    %c0_24 = arith.constant 0 : index
    %c0_25 = arith.constant 0 : index
    %43 = vector.load %arg24[%c0_24, %c0_25] : memref<112x384xbf16, #tpu.memory_space<vmem>>, vector<56x16xbf16>
    %c0_26 = arith.constant 0 : index
    %c128 = arith.constant 128 : index
    %44 = vector.load %arg24[%c0_26, %c128] : memref<112x384xbf16, #tpu.memory_space<vmem>>, vector<56x16xbf16>
    %c0_27 = arith.constant 0 : index
    %c256 = arith.constant 256 : index
    %45 = vector.load %arg24[%c0_27, %c256] : memref<112x384xbf16, #tpu.memory_space<vmem>>, vector<56x16xbf16>
    %cst_28 = arith.constant dense<0.000000e+00> : vector<56x56xf32>
    %46 = tpu.matmul %43, %44, %cst_28 {dimension_numbers = #tpu.dot_dimension_numbers<[1], [1], [0], [0], [0, 0, 1, 0], [], []>} : vector<56x16xbf16>, vector<56x16xbf16>, vector<56x56xf32> -> vector<56x56xf32>
    %cst_29 = arith.constant 2.500000e-01 : f32
    %47 = vector.broadcast %cst_29 : f32 to vector<56x56xf32>
    %48 = arith.mulf %46, %47 : vector<56x56xf32>
    %49 = vector.broadcast %42 : vector<1x56xf32> to vector<56x56xf32>
    %50 = arith.addf %48, %49 : vector<56x56xf32>
    %cst_30 = arith.constant dense<0xFF800000> : vector<56xf32>
    %51 = vector.multi_reduction <maximumf>, %50, %cst_30 [1] : vector<56x56xf32> to vector<56xf32>
    %52 = vector.shape_cast %51 : vector<56xf32> to vector<56x1xf32>
    %53 = vector.broadcast %52 : vector<56x1xf32> to vector<56x56xf32>
    %54 = arith.subf %50, %53 : vector<56x56xf32>
    %55 = math.exp %54 : vector<56x56xf32>
    %cst_31 = arith.constant dense<0.000000e+00> : vector<56xf32>
    %56 = vector.multi_reduction <add>, %55, %cst_31 [1] : vector<56x56xf32> to vector<56xf32>
    %57 = vector.shape_cast %56 : vector<56xf32> to vector<56x1xf32>
    %58 = tpu.reciprocal %57 {approx = true} : vector<56x1xf32> -> vector<56x1xf32>
    %59 = vector.broadcast %58 : vector<56x1xf32> to vector<56x56xf32>
    %60 = arith.mulf %55, %59 : vector<56x56xf32>
    %61 = arith.truncf %60 : vector<56x56xf32> to vector<56x56xbf16>
    %cst_32 = arith.constant dense<0.000000e+00> : vector<56x16xf32>
    %62 = tpu.matmul %61, %45, %cst_32 {dimension_numbers = #tpu.dot_dimension_numbers<[1], [0], [0], [1], [0, 0, 1, 1], [], []>} : vector<56x56xbf16>, vector<56x16xbf16>, vector<56x16xf32> -> vector<56x16xf32>
    %63 = arith.truncf %62 : vector<56x16xf32> to vector<56x16xbf16>
    %c0_33 = arith.constant 0 : index
    %c0_34 = arith.constant 0 : index
    %64 = vector.load %arg25[%c0_33, %c0_34] : memref<112x64xbf16, #tpu.memory_space<vmem>>, vector<56x16xbf16>
    tpu.vector_store %arg25[%c0_33, %c0_34], %63 {strides = array<i32>} : memref<112x64xbf16, #tpu.memory_space<vmem>>, vector<56x16xbf16>,
    %c0_35 = arith.constant 0 : index
    %c16 = arith.constant 16 : index
    %65 = vector.load %arg24[%c0_35, %c16] : memref<112x384xbf16, #tpu.memory_space<vmem>>, vector<56x16xbf16>
    %c0_36 = arith.constant 0 : index
    %c144 = arith.constant 144 : index
    %66 = vector.load %arg24[%c0_36, %c144] : memref<112x384xbf16, #tpu.memory_space<vmem>>, vector<56x16xbf16>
    %c0_37 = arith.constant 0 : index
    %c272 = arith.constant 272 : index
    %67 = vector.load %arg24[%c0_37, %c272] : memref<112x384xbf16, #tpu.memory_space<vmem>>, vector<56x16xbf16>
    %cst_38 = arith.constant dense<0.000000e+00> : vector<56x56xf32>
    %68 = tpu.matmul %65, %66, %cst_38 {dimension_numbers = #tpu.dot_dimension_numbers<[1], [1], [0], [0], [0, 0, 1, 0], [], []>} : vector<56x16xbf16>, vector<56x16xbf16>, vector<56x56xf32> -> vector<56x56xf32>
    %cst_39 = arith.constant 2.500000e-01 : f32
    %69 = vector.broadcast %cst_39 : f32 to vector<56x56xf32>
    %70 = arith.mulf %68, %69 : vector<56x56xf32>
    %71 = vector.broadcast %42 : vector<1x56xf32> to vector<56x56xf32>
    %72 = arith.addf %70, %71 : vector<56x56xf32>
    %cst_40 = arith.constant dense<0xFF800000> : vector<56xf32>
    %73 = vector.multi_reduction <maximumf>, %72, %cst_40 [1] : vector<56x56xf32> to vector<56xf32>
    %74 = vector.shape_cast %73 : vector<56xf32> to vector<56x1xf32>
    %75 = vector.broadcast %74 : vector<56x1xf32> to vector<56x56xf32>
    %76 = arith.subf %72, %75 : vector<56x56xf32>
    %77 = math.exp %76 : vector<56x56xf32>
    %cst_41 = arith.constant dense<0.000000e+00> : vector<56xf32>
    %78 = vector.multi_reduction <add>, %77, %cst_41 [1] : vector<56x56xf32> to vector<56xf32>
    %79 = vector.shape_cast %78 : vector<56xf32> to vector<56x1xf32>
    %80 = tpu.reciprocal %79 {approx = true} : vector<56x1xf32> -> vector<56x1xf32>
    %81 = vector.broadcast %80 : vector<56x1xf32> to vector<56x56xf32>
    %82 = arith.mulf %77, %81 : vector<56x56xf32>
    %83 = arith.truncf %82 : vector<56x56xf32> to vector<56x56xbf16>
    %cst_42 = arith.constant dense<0.000000e+00> : vector<56x16xf32>
    %84 = tpu.matmul %83, %67, %cst_42 {dimension_numbers = #tpu.dot_dimension_numbers<[1], [0], [0], [1], [0, 0, 1, 1], [], []>} : vector<56x56xbf16>, vector<56x16xbf16>, vector<56x16xf32> -> vector<56x16xf32>
    %85 = arith.truncf %84 : vector<56x16xf32> to vector<56x16xbf16>
    %c0_43 = arith.constant 0 : index
    %c16_44 = arith.constant 16 : index
    %86 = vector.load %arg25[%c0_43, %c16_44] : memref<112x64xbf16, #tpu.memory_space<vmem>>, vector<56x16xbf16>
    tpu.vector_store %arg25[%c0_43, %c16_44], %85 {strides = array<i32>} : memref<112x64xbf16, #tpu.memory_space<vmem>>, vector<56x16xbf16>,
    %c0_45 = arith.constant 0 : index
    %c32 = arith.constant 32 : index
    %87 = vector.load %arg24[%c0_45, %c32] : memref<112x384xbf16, #tpu.memory_space<vmem>>, vector<56x16xbf16>
    %c0_46 = arith.constant 0 : index
    %c160 = arith.constant 160 : index
    %88 = vector.load %arg24[%c0_46, %c160] : memref<112x384xbf16, #tpu.memory_space<vmem>>, vector<56x16xbf16>
    %c0_47 = arith.constant 0 : index
    %c288 = arith.constant 288 : index
    %89 = vector.load %arg24[%c0_47, %c288] : memref<112x384xbf16, #tpu.memory_space<vmem>>, vector<56x16xbf16>
    %cst_48 = arith.constant dense<0.000000e+00> : vector<56x56xf32>
    %90 = tpu.matmul %87, %88, %cst_48 {dimension_numbers = #tpu.dot_dimension_numbers<[1], [1], [0], [0], [0, 0, 1, 0], [], []>} : vector<56x16xbf16>, vector<56x16xbf16>, vector<56x56xf32> -> vector<56x56xf32>
    %cst_49 = arith.constant 2.500000e-01 : f32
    %91 = vector.broadcast %cst_49 : f32 to vector<56x56xf32>
    %92 = arith.mulf %90, %91 : vector<56x56xf32>
    %93 = vector.broadcast %42 : vector<1x56xf32> to vector<56x56xf32>
    %94 = arith.addf %92, %93 : vector<56x56xf32>
    %cst_50 = arith.constant dense<0xFF800000> : vector<56xf32>
    %95 = vector.multi_reduction <maximumf>, %94, %cst_50 [1] : vector<56x56xf32> to vector<56xf32>
    %96 = vector.shape_cast %95 : vector<56xf32> to vector<56x1xf32>
    %97 = vector.broadcast %96 : vector<56x1xf32> to vector<56x56xf32>
    %98 = arith.subf %94, %97 : vector<56x56xf32>
    %99 = math.exp %98 : vector<56x56xf32>
    %cst_51 = arith.constant dense<0.000000e+00> : vector<56xf32>
    %100 = vector.multi_reduction <add>, %99, %cst_51 [1] : vector<56x56xf32> to vector<56xf32>
    %101 = vector.shape_cast %100 : vector<56xf32> to vector<56x1xf32>
    %102 = tpu.reciprocal %101 {approx = true} : vector<56x1xf32> -> vector<56x1xf32>
    %103 = vector.broadcast %102 : vector<56x1xf32> to vector<56x56xf32>
    %104 = arith.mulf %99, %103 : vector<56x56xf32>
    %105 = arith.truncf %104 : vector<56x56xf32> to vector<56x56xbf16>
    %cst_52 = arith.constant dense<0.000000e+00> : vector<56x16xf32>
    %106 = tpu.matmul %105, %89, %cst_52 {dimension_numbers = #tpu.dot_dimension_numbers<[1], [0], [0], [1], [0, 0, 1, 1], [], []>} : vector<56x56xbf16>, vector<56x16xbf16>, vector<56x16xf32> -> vector<56x16xf32>
    %107 = arith.truncf %106 : vector<56x16xf32> to vector<56x16xbf16>
    %c0_53 = arith.constant 0 : index
    %c32_54 = arith.constant 32 : index
    %108 = vector.load %arg25[%c0_53, %c32_54] : memref<112x64xbf16, #tpu.memory_space<vmem>>, vector<56x16xbf16>
    tpu.vector_store %arg25[%c0_53, %c32_54], %107 {strides = array<i32>} : memref<112x64xbf16, #tpu.memory_space<vmem>>, vector<56x16xbf16>,
    %c0_55 = arith.constant 0 : index
    %c48 = arith.constant 48 : index
    %109 = vector.load %arg24[%c0_55, %c48] : memref<112x384xbf16, #tpu.memory_space<vmem>>, vector<56x16xbf16>
    %c0_56 = arith.constant 0 : index
    %c176 = arith.constant 176 : index
    %110 = vector.load %arg24[%c0_56, %c176] : memref<112x384xbf16, #tpu.memory_space<vmem>>, vector<56x16xbf16>
    %c0_57 = arith.constant 0 : index
    %c304 = arith.constant 304 : index
    %111 = vector.load %arg24[%c0_57, %c304] : memref<112x384xbf16, #tpu.memory_space<vmem>>, vector<56x16xbf16>
    %cst_58 = arith.constant dense<0.000000e+00> : vector<56x56xf32>
    %112 = tpu.matmul %109, %110, %cst_58 {dimension_numbers = #tpu.dot_dimension_numbers<[1], [1], [0], [0], [0, 0, 1, 0], [], []>} : vector<56x16xbf16>, vector<56x16xbf16>, vector<56x56xf32> -> vector<56x56xf32>
    %cst_59 = arith.constant 2.500000e-01 : f32
    %113 = vector.broadcast %cst_59 : f32 to vector<56x56xf32>
    %114 = arith.mulf %112, %113 : vector<56x56xf32>
    %115 = vector.broadcast %42 : vector<1x56xf32> to vector<56x56xf32>
    %116 = arith.addf %114, %115 : vector<56x56xf32>
    %cst_60 = arith.constant dense<0xFF800000> : vector<56xf32>
    %117 = vector.multi_reduction <maximumf>, %116, %cst_60 [1] : vector<56x56xf32> to vector<56xf32>
    %118 = vector.shape_cast %117 : vector<56xf32> to vector<56x1xf32>
    %119 = vector.broadcast %118 : vector<56x1xf32> to vector<56x56xf32>
    %120 = arith.subf %116, %119 : vector<56x56xf32>
    %121 = math.exp %120 : vector<56x56xf32>
    %cst_61 = arith.constant dense<0.000000e+00> : vector<56xf32>
    %122 = vector.multi_reduction <add>, %121, %cst_61 [1] : vector<56x56xf32> to vector<56xf32>
    %123 = vector.shape_cast %122 : vector<56xf32> to vector<56x1xf32>
    %124 = tpu.reciprocal %123 {approx = true} : vector<56x1xf32> -> vector<56x1xf32>
    %125 = vector.broadcast %124 : vector<56x1xf32> to vector<56x56xf32>
    %126 = arith.mulf %121, %125 : vector<56x56xf32>
    %127 = arith.truncf %126 : vector<56x56xf32> to vector<56x56xbf16>
    %cst_62 = arith.constant dense<0.000000e+00> : vector<56x16xf32>
    %128 = tpu.matmul %127, %111, %cst_62 {dimension_numbers = #tpu.dot_dimension_numbers<[1], [0], [0], [1], [0, 0, 1, 1], [], []>} : vector<56x56xbf16>, vector<56x16xbf16>, vector<56x16xf32> -> vector<56x16xf32>
    %129 = arith.truncf %128 : vector<56x16xf32> to vector<56x16xbf16>
    %c0_63 = arith.constant 0 : index
    %c48_64 = arith.constant 48 : index
    %130 = vector.load %arg25[%c0_63, %c48_64] : memref<112x64xbf16, #tpu.memory_space<vmem>>, vector<56x16xbf16>
    tpu.vector_store %arg25[%c0_63, %c48_64], %129 {strides = array<i32>} : memref<112x64xbf16, #tpu.memory_space<vmem>>, vector<56x16xbf16>,
    %c56 = arith.constant 56 : index
    %c0_65 = arith.constant 0 : index
    %131 = vector.load %arg24[%c56, %c0_65] : memref<112x384xbf16, #tpu.memory_space<vmem>>, vector<56x16xbf16>
    %c56_66 = arith.constant 56 : index
    %c128_67 = arith.constant 128 : index
    %132 = vector.load %arg24[%c56_66, %c128_67] : memref<112x384xbf16, #tpu.memory_space<vmem>>, vector<56x16xbf16>
    %c56_68 = arith.constant 56 : index
    %c256_69 = arith.constant 256 : index
    %133 = vector.load %arg24[%c56_68, %c256_69] : memref<112x384xbf16, #tpu.memory_space<vmem>>, vector<56x16xbf16>
    %cst_70 = arith.constant dense<0.000000e+00> : vector<56x56xf32>
    %134 = tpu.matmul %131, %132, %cst_70 {dimension_numbers = #tpu.dot_dimension_numbers<[1], [1], [0], [0], [0, 0, 1, 0], [], []>} : vector<56x16xbf16>, vector<56x16xbf16>, vector<56x56xf32> -> vector<56x56xf32>
    %cst_71 = arith.constant 2.500000e-01 : f32
    %135 = vector.broadcast %cst_71 : f32 to vector<56x56xf32>
    %136 = arith.mulf %134, %135 : vector<56x56xf32>
    %137 = vector.broadcast %42 : vector<1x56xf32> to vector<56x56xf32>
    %138 = arith.addf %136, %137 : vector<56x56xf32>
    %cst_72 = arith.constant dense<0xFF800000> : vector<56xf32>
    %139 = vector.multi_reduction <maximumf>, %138, %cst_72 [1] : vector<56x56xf32> to vector<56xf32>
    %140 = vector.shape_cast %139 : vector<56xf32> to vector<56x1xf32>
    %141 = vector.broadcast %140 : vector<56x1xf32> to vector<56x56xf32>
    %142 = arith.subf %138, %141 : vector<56x56xf32>
    %143 = math.exp %142 : vector<56x56xf32>
    %cst_73 = arith.constant dense<0.000000e+00> : vector<56xf32>
    %144 = vector.multi_reduction <add>, %143, %cst_73 [1] : vector<56x56xf32> to vector<56xf32>
    %145 = vector.shape_cast %144 : vector<56xf32> to vector<56x1xf32>
    %146 = tpu.reciprocal %145 {approx = true} : vector<56x1xf32> -> vector<56x1xf32>
    %147 = vector.broadcast %146 : vector<56x1xf32> to vector<56x56xf32>
    %148 = arith.mulf %143, %147 : vector<56x56xf32>
    %149 = arith.truncf %148 : vector<56x56xf32> to vector<56x56xbf16>
    %cst_74 = arith.constant dense<0.000000e+00> : vector<56x16xf32>
    %150 = tpu.matmul %149, %133, %cst_74 {dimension_numbers = #tpu.dot_dimension_numbers<[1], [0], [0], [1], [0, 0, 1, 1], [], []>} : vector<56x56xbf16>, vector<56x16xbf16>, vector<56x16xf32> -> vector<56x16xf32>
    %151 = arith.truncf %150 : vector<56x16xf32> to vector<56x16xbf16>
    %c56_75 = arith.constant 56 : index
    %c0_76 = arith.constant 0 : index
    %152 = vector.load %arg25[%c56_75, %c0_76] : memref<112x64xbf16, #tpu.memory_space<vmem>>, vector<56x16xbf16>
    tpu.vector_store %arg25[%c56_75, %c0_76], %151 {strides = array<i32>} : memref<112x64xbf16, #tpu.memory_space<vmem>>, vector<56x16xbf16>,
    %c56_77 = arith.constant 56 : index
    %c16_78 = arith.constant 16 : index
    %153 = vector.load %arg24[%c56_77, %c16_78] : memref<112x384xbf16, #tpu.memory_space<vmem>>, vector<56x16xbf16>
    %c56_79 = arith.constant 56 : index
    %c144_80 = arith.constant 144 : index
    %154 = vector.load %arg24[%c56_79, %c144_80] : memref<112x384xbf16, #tpu.memory_space<vmem>>, vector<56x16xbf16>
    %c56_81 = arith.constant 56 : index
    %c272_82 = arith.constant 272 : index
    %155 = vector.load %arg24[%c56_81, %c272_82] : memref<112x384xbf16, #tpu.memory_space<vmem>>, vector<56x16xbf16>
    %cst_83 = arith.constant dense<0.000000e+00> : vector<56x56xf32>
    %156 = tpu.matmul %153, %154, %cst_83 {dimension_numbers = #tpu.dot_dimension_numbers<[1], [1], [0], [0], [0, 0, 1, 0], [], []>} : vector<56x16xbf16>, vector<56x16xbf16>, vector<56x56xf32> -> vector<56x56xf32>
    %cst_84 = arith.constant 2.500000e-01 : f32
    %157 = vector.broadcast %cst_84 : f32 to vector<56x56xf32>
    %158 = arith.mulf %156, %157 : vector<56x56xf32>
    %159 = vector.broadcast %42 : vector<1x56xf32> to vector<56x56xf32>
    %160 = arith.addf %158, %159 : vector<56x56xf32>
    %cst_85 = arith.constant dense<0xFF800000> : vector<56xf32>
    %161 = vector.multi_reduction <maximumf>, %160, %cst_85 [1] : vector<56x56xf32> to vector<56xf32>
    %162 = vector.shape_cast %161 : vector<56xf32> to vector<56x1xf32>
    %163 = vector.broadcast %162 : vector<56x1xf32> to vector<56x56xf32>
    %164 = arith.subf %160, %163 : vector<56x56xf32>
    %165 = math.exp %164 : vector<56x56xf32>
    %cst_86 = arith.constant dense<0.000000e+00> : vector<56xf32>
    %166 = vector.multi_reduction <add>, %165, %cst_86 [1] : vector<56x56xf32> to vector<56xf32>
    %167 = vector.shape_cast %166 : vector<56xf32> to vector<56x1xf32>
    %168 = tpu.reciprocal %167 {approx = true} : vector<56x1xf32> -> vector<56x1xf32>
    %169 = vector.broadcast %168 : vector<56x1xf32> to vector<56x56xf32>
    %170 = arith.mulf %165, %169 : vector<56x56xf32>
    %171 = arith.truncf %170 : vector<56x56xf32> to vector<56x56xbf16>
    %cst_87 = arith.constant dense<0.000000e+00> : vector<56x16xf32>
    %172 = tpu.matmul %171, %155, %cst_87 {dimension_numbers = #tpu.dot_dimension_numbers<[1], [0], [0], [1], [0, 0, 1, 1], [], []>} : vector<56x56xbf16>, vector<56x16xbf16>, vector<56x16xf32> -> vector<56x16xf32>
    %173 = arith.truncf %172 : vector<56x16xf32> to vector<56x16xbf16>
    %c56_88 = arith.constant 56 : index
    %c16_89 = arith.constant 16 : index
    %174 = vector.load %arg25[%c56_88, %c16_89] : memref<112x64xbf16, #tpu.memory_space<vmem>>, vector<56x16xbf16>
    tpu.vector_store %arg25[%c56_88, %c16_89], %173 {strides = array<i32>} : memref<112x64xbf16, #tpu.memory_space<vmem>>, vector<56x16xbf16>,
    %c56_90 = arith.constant 56 : index
    %c32_91 = arith.constant 32 : index
    %175 = vector.load %arg24[%c56_90, %c32_91] : memref<112x384xbf16, #tpu.memory_space<vmem>>, vector<56x16xbf16>
    %c56_92 = arith.constant 56 : index
    %c160_93 = arith.constant 160 : index
    %176 = vector.load %arg24[%c56_92, %c160_93] : memref<112x384xbf16, #tpu.memory_space<vmem>>, vector<56x16xbf16>
    %c56_94 = arith.constant 56 : index
    %c288_95 = arith.constant 288 : index
    %177 = vector.load %arg24[%c56_94, %c288_95] : memref<112x384xbf16, #tpu.memory_space<vmem>>, vector<56x16xbf16>
    %cst_96 = arith.constant dense<0.000000e+00> : vector<56x56xf32>
    %178 = tpu.matmul %175, %176, %cst_96 {dimension_numbers = #tpu.dot_dimension_numbers<[1], [1], [0], [0], [0, 0, 1, 0], [], []>} : vector<56x16xbf16>, vector<56x16xbf16>, vector<56x56xf32> -> vector<56x56xf32>
    %cst_97 = arith.constant 2.500000e-01 : f32
    %179 = vector.broadcast %cst_97 : f32 to vector<56x56xf32>
    %180 = arith.mulf %178, %179 : vector<56x56xf32>
    %181 = vector.broadcast %42 : vector<1x56xf32> to vector<56x56xf32>
    %182 = arith.addf %180, %181 : vector<56x56xf32>
    %cst_98 = arith.constant dense<0xFF800000> : vector<56xf32>
    %183 = vector.multi_reduction <maximumf>, %182, %cst_98 [1] : vector<56x56xf32> to vector<56xf32>
    %184 = vector.shape_cast %183 : vector<56xf32> to vector<56x1xf32>
    %185 = vector.broadcast %184 : vector<56x1xf32> to vector<56x56xf32>
    %186 = arith.subf %182, %185 : vector<56x56xf32>
    %187 = math.exp %186 : vector<56x56xf32>
    %cst_99 = arith.constant dense<0.000000e+00> : vector<56xf32>
    %188 = vector.multi_reduction <add>, %187, %cst_99 [1] : vector<56x56xf32> to vector<56xf32>
    %189 = vector.shape_cast %188 : vector<56xf32> to vector<56x1xf32>
    %190 = tpu.reciprocal %189 {approx = true} : vector<56x1xf32> -> vector<56x1xf32>
    %191 = vector.broadcast %190 : vector<56x1xf32> to vector<56x56xf32>
    %192 = arith.mulf %187, %191 : vector<56x56xf32>
    %193 = arith.truncf %192 : vector<56x56xf32> to vector<56x56xbf16>
    %cst_100 = arith.constant dense<0.000000e+00> : vector<56x16xf32>
    %194 = tpu.matmul %193, %177, %cst_100 {dimension_numbers = #tpu.dot_dimension_numbers<[1], [0], [0], [1], [0, 0, 1, 1], [], []>} : vector<56x56xbf16>, vector<56x16xbf16>, vector<56x16xf32> -> vector<56x16xf32>
    %195 = arith.truncf %194 : vector<56x16xf32> to vector<56x16xbf16>
    %c56_101 = arith.constant 56 : index
    %c32_102 = arith.constant 32 : index
    %196 = vector.load %arg25[%c56_101, %c32_102] : memref<112x64xbf16, #tpu.memory_space<vmem>>, vector<56x16xbf16>
    tpu.vector_store %arg25[%c56_101, %c32_102], %195 {strides = array<i32>} : memref<112x64xbf16, #tpu.memory_space<vmem>>, vector<56x16xbf16>,
    %c56_103 = arith.constant 56 : index
    %c48_104 = arith.constant 48 : index
    %197 = vector.load %arg24[%c56_103, %c48_104] : memref<112x384xbf16, #tpu.memory_space<vmem>>, vector<56x16xbf16>
    %c56_105 = arith.constant 56 : index
    %c176_106 = arith.constant 176 : index
    %198 = vector.load %arg24[%c56_105, %c176_106] : memref<112x384xbf16, #tpu.memory_space<vmem>>, vector<56x16xbf16>
    %c56_107 = arith.constant 56 : index
    %c304_108 = arith.constant 304 : index
    %199 = vector.load %arg24[%c56_107, %c304_108] : memref<112x384xbf16, #tpu.memory_space<vmem>>, vector<56x16xbf16>
    %cst_109 = arith.constant dense<0.000000e+00> : vector<56x56xf32>
    %200 = tpu.matmul %197, %198, %cst_109 {dimension_numbers = #tpu.dot_dimension_numbers<[1], [1], [0], [0], [0, 0, 1, 0], [], []>} : vector<56x16xbf16>, vector<56x16xbf16>, vector<56x56xf32> -> vector<56x56xf32>
    %cst_110 = arith.constant 2.500000e-01 : f32
    %201 = vector.broadcast %cst_110 : f32 to vector<56x56xf32>
    %202 = arith.mulf %200, %201 : vector<56x56xf32>
    %203 = vector.broadcast %42 : vector<1x56xf32> to vector<56x56xf32>
    %204 = arith.addf %202, %203 : vector<56x56xf32>
    %cst_111 = arith.constant dense<0xFF800000> : vector<56xf32>
    %205 = vector.multi_reduction <maximumf>, %204, %cst_111 [1] : vector<56x56xf32> to vector<56xf32>
    %206 = vector.shape_cast %205 : vector<56xf32> to vector<56x1xf32>
    %207 = vector.broadcast %206 : vector<56x1xf32> to vector<56x56xf32>
    %208 = arith.subf %204, %207 : vector<56x56xf32>
    %209 = math.exp %208 : vector<56x56xf32>
    %cst_112 = arith.constant dense<0.000000e+00> : vector<56xf32>
    %210 = vector.multi_reduction <add>, %209, %cst_112 [1] : vector<56x56xf32> to vector<56xf32>
    %211 = vector.shape_cast %210 : vector<56xf32> to vector<56x1xf32>
    %212 = tpu.reciprocal %211 {approx = true} : vector<56x1xf32> -> vector<56x1xf32>
    %213 = vector.broadcast %212 : vector<56x1xf32> to vector<56x56xf32>
    %214 = arith.mulf %209, %213 : vector<56x56xf32>
    %215 = arith.truncf %214 : vector<56x56xf32> to vector<56x56xbf16>
    %cst_113 = arith.constant dense<0.000000e+00> : vector<56x16xf32>
    %216 = tpu.matmul %215, %199, %cst_113 {dimension_numbers = #tpu.dot_dimension_numbers<[1], [0], [0], [1], [0, 0, 1, 1], [], []>} : vector<56x56xbf16>, vector<56x16xbf16>, vector<56x16xf32> -> vector<56x16xf32>
    %217 = arith.truncf %216 : vector<56x16xf32> to vector<56x16xbf16>
    %c56_114 = arith.constant 56 : index
    %c48_115 = arith.constant 48 : index
    %218 = vector.load %arg25[%c56_114, %c48_115] : memref<112x64xbf16, #tpu.memory_space<vmem>>, vector<56x16xbf16>
    tpu.vector_store %arg25[%c56_114, %c48_115], %217 {strides = array<i32>} : memref<112x64xbf16, #tpu.memory_space<vmem>>, vector<56x16xbf16>,
    %c0_116 = arith.constant 0 : index
    %c0_117 = arith.constant 0 : index
    %219 = vector.load %arg25[%c0_116, %c0_117] : memref<112x64xbf16, #tpu.memory_space<vmem>>, vector<112x64xbf16>
    %c0_118 = arith.constant 0 : index
    %c0_119 = arith.constant 0 : index
    %c0_120 = arith.constant 0 : index
    %220 = vector.load %arg11[%c0_118, %c0_119, %c0_120] : memref<1x64x128xbf16, #tpu.memory_space<vmem>>, vector<1x64x128xbf16>
    %221 = vector.shape_cast %220 : vector<1x64x128xbf16> to vector<64x128xbf16>
    %cst_121 = arith.constant dense<0.000000e+00> : vector<112x128xf32>
    %222 = tpu.matmul %219, %221, %cst_121 {dimension_numbers = #tpu.dot_dimension_numbers<[1], [0], [0], [1], [0, 0, 1, 1], [], []>} : vector<112x64xbf16>, vector<64x128xbf16>, vector<112x128xf32> -> vector<112x128xf32>
    %c0_122 = arith.constant 0 : index
    %c0_123 = arith.constant 0 : index
    %c0_124 = arith.constant 0 : index
    %223 = vector.load %arg12[%c0_122, %c0_123, %c0_124] : memref<1x1x128xf32, #tpu.memory_space<vmem>>, vector<1x1x128xf32>
    %224 = vector.shape_cast %223 : vector<1x1x128xf32> to vector<1x128xf32>
    %225 = vector.broadcast %224 : vector<1x128xf32> to vector<112x128xf32>
    %226 = arith.addf %222, %225 : vector<112x128xf32>
    %227 = arith.addf %3, %226 : vector<112x128xf32>
    %c0_125 = arith.constant 0 : index
    %c0_126 = arith.constant 0 : index
    %c0_127 = arith.constant 0 : index
    %228 = vector.load %arg13[%c0_125, %c0_126, %c0_127] : memref<1x1x128xf32, #tpu.memory_space<vmem>>, vector<1x1x128xf32>
    %229 = vector.shape_cast %228 : vector<1x1x128xf32> to vector<1x128xf32>
    %c0_128 = arith.constant 0 : index
    %c0_129 = arith.constant 0 : index
    %c0_130 = arith.constant 0 : index
    %230 = vector.load %arg14[%c0_128, %c0_129, %c0_130] : memref<1x1x128xf32, #tpu.memory_space<vmem>>, vector<1x1x128xf32>
    %231 = vector.shape_cast %230 : vector<1x1x128xf32> to vector<1x128xf32>
    %cst_131 = arith.constant dense<0.000000e+00> : vector<112xf32>
    %232 = vector.multi_reduction <add>, %227, %cst_131 [1] : vector<112x128xf32> to vector<112xf32>
    %233 = vector.shape_cast %232 : vector<112xf32> to vector<112x1xf32>
    %cst_132 = arith.constant 1.562500e-02 : f32
    %234 = vector.broadcast %cst_132 : f32 to vector<112x1xf32>
    %235 = arith.mulf %233, %234 : vector<112x1xf32>
    %236 = arith.mulf %227, %227 : vector<112x128xf32>
    %cst_133 = arith.constant dense<0.000000e+00> : vector<112xf32>
    %237 = vector.multi_reduction <add>, %236, %cst_133 [1] : vector<112x128xf32> to vector<112xf32>
    %238 = vector.shape_cast %237 : vector<112xf32> to vector<112x1xf32>
    %cst_134 = arith.constant 1.562500e-02 : f32
    %239 = vector.broadcast %cst_134 : f32 to vector<112x1xf32>
    %240 = arith.mulf %238, %239 : vector<112x1xf32>
    %241 = arith.mulf %235, %235 : vector<112x1xf32>
    %242 = arith.subf %240, %241 : vector<112x1xf32>
    %cst_135 = arith.constant 0.000000e+00 : f32
    %243 = vector.broadcast %cst_135 : f32 to vector<112x1xf32>
    %244 = arith.maximumf %242, %243 : vector<112x1xf32>
    %245 = vector.broadcast %235 : vector<112x1xf32> to vector<112x128xf32>
    %246 = arith.subf %227, %245 : vector<112x128xf32>
    %cst_136 = arith.constant 9.99999974E-6 : f32
    %247 = vector.broadcast %cst_136 : f32 to vector<112x1xf32>
    %248 = arith.addf %244, %247 : vector<112x1xf32>
    %249 = math.rsqrt %248 : vector<112x1xf32>
    %250 = vector.broadcast %249 : vector<112x1xf32> to vector<112x128xf32>
    %251 = arith.mulf %246, %250 : vector<112x128xf32>
    %252 = vector.broadcast %229 : vector<1x128xf32> to vector<112x128xf32>
    %253 = arith.mulf %251, %252 : vector<112x128xf32>
    %254 = vector.broadcast %231 : vector<1x128xf32> to vector<112x128xf32>
    %255 = arith.addf %253, %254 : vector<112x128xf32>
    %256 = arith.truncf %255 : vector<112x128xf32> to vector<112x128xbf16>
    %c0_137 = arith.constant 0 : index
    %c0_138 = arith.constant 0 : index
    %c0_139 = arith.constant 0 : index
    %257 = vector.load %arg15[%c0_137, %c0_138, %c0_139] : memref<1x128x256xbf16, #tpu.memory_space<vmem>>, vector<1x128x256xbf16>
    %258 = vector.shape_cast %257 : vector<1x128x256xbf16> to vector<128x256xbf16>
    %cst_140 = arith.constant dense<0.000000e+00> : vector<112x256xf32>
    %259 = tpu.matmul %256, %258, %cst_140 {dimension_numbers = #tpu.dot_dimension_numbers<[1], [0], [0], [1], [0, 0, 1, 1], [], []>} : vector<112x128xbf16>, vector<128x256xbf16>, vector<112x256xf32> -> vector<112x256xf32>
    %c0_141 = arith.constant 0 : index
    %c0_142 = arith.constant 0 : index
    %c0_143 = arith.constant 0 : index
    %260 = vector.load %arg16[%c0_141, %c0_142, %c0_143] : memref<1x1x256xf32, #tpu.memory_space<vmem>>, vector<1x1x256xf32>
    %261 = vector.shape_cast %260 : vector<1x1x256xf32> to vector<1x256xf32>
    %262 = vector.broadcast %261 : vector<1x256xf32> to vector<112x256xf32>
    %263 = arith.addf %259, %262 : vector<112x256xf32>
    %cst_144 = arith.constant 1.702000e+00 : f32
    %264 = vector.broadcast %cst_144 : f32 to vector<112x256xf32>
    %265 = arith.mulf %264, %263 : vector<112x256xf32>
    %266 = arith.negf %265 : vector<112x256xf32>
    %267 = math.exp %266 : vector<112x256xf32>
    %cst_145 = arith.constant 1.000000e+00 : f32
    %268 = vector.broadcast %cst_145 : f32 to vector<112x256xf32>
    %269 = arith.addf %268, %267 : vector<112x256xf32>
    %270 = arith.divf %268, %269 : vector<112x256xf32>
    %271 = arith.mulf %263, %270 : vector<112x256xf32>
    %272 = arith.truncf %271 : vector<112x256xf32> to vector<112x256xbf16>
    %c0_146 = arith.constant 0 : index
    %c0_147 = arith.constant 0 : index
    %c0_148 = arith.constant 0 : index
    %273 = vector.load %arg17[%c0_146, %c0_147, %c0_148] : memref<1x256x128xbf16, #tpu.memory_space<vmem>>, vector<1x256x128xbf16>
    %274 = vector.shape_cast %273 : vector<1x256x128xbf16> to vector<256x128xbf16>
    %cst_149 = arith.constant dense<0.000000e+00> : vector<112x128xf32>
    %275 = tpu.matmul %272, %274, %cst_149 {dimension_numbers = #tpu.dot_dimension_numbers<[1], [0], [0], [1], [0, 0, 1, 1], [], []>} : vector<112x256xbf16>, vector<256x128xbf16>, vector<112x128xf32> -> vector<112x128xf32>
    %c0_150 = arith.constant 0 : index
    %c0_151 = arith.constant 0 : index
    %c0_152 = arith.constant 0 : index
    %276 = vector.load %arg18[%c0_150, %c0_151, %c0_152] : memref<1x1x128xf32, #tpu.memory_space<vmem>>, vector<1x1x128xf32>
    %277 = vector.shape_cast %276 : vector<1x1x128xf32> to vector<1x128xf32>
    %278 = vector.broadcast %277 : vector<1x128xf32> to vector<112x128xf32>
    %279 = arith.addf %275, %278 : vector<112x128xf32>
    %280 = arith.addf %227, %279 : vector<112x128xf32>
    %c0_153 = arith.constant 0 : index
    %c0_154 = arith.constant 0 : index
    %281 = vector.load %arg22[%c0_153, %c0_154] : memref<112x128xf32, #tpu.memory_space<vmem>>, vector<112x128xf32>
    tpu.vector_store %arg22[%c0_153, %c0_154], %280 {strides = array<i32>} : memref<112x128xf32, #tpu.memory_space<vmem>>, vector<112x128xf32>,
    %c1_i32 = arith.constant 1 : i32
    %282 = arith.cmpi eq, %arg0, %c1_i32 : i32
    %283 = arith.extui %282 : i1 to i32
    %c0_i32_155 = arith.constant 0 : i32
    %284 = arith.cmpi ne, %283, %c0_i32_155 : i32
    scf.if %284 {
      %285 = vector.extract_strided_slice %280 {offsets = [0, 0], sizes = [1, 128], strides = [1, 1]} : vector<112x128xf32> to vector<1x128xf32>
      %286 = vector.extract_strided_slice %280 {offsets = [56, 0], sizes = [1, 128], strides = [1, 1]} : vector<112x128xf32> to vector<1x128xf32>
      %287 = tpu.concatenate %285, %286 in 0 : vector<1x128xf32>, vector<1x128xf32> -> vector<2x128xf32>
      %c0_156 = arith.constant 0 : index
      %c0_157 = arith.constant 0 : index
      %288 = vector.load %arg19[%c0_156, %c0_157] : memref<1x128xf32, #tpu.memory_space<vmem>>, vector<1x128xf32>
      %c0_158 = arith.constant 0 : index
      %c0_159 = arith.constant 0 : index
      %289 = vector.load %arg20[%c0_158, %c0_159] : memref<1x128xf32, #tpu.memory_space<vmem>>, vector<1x128xf32>
      %cst_160 = arith.constant dense<0.000000e+00> : vector<2xf32>
      %290 = vector.multi_reduction <add>, %287, %cst_160 [1] : vector<2x128xf32> to vector<2xf32>
      %291 = vector.shape_cast %290 : vector<2xf32> to vector<2x1xf32>
      %cst_161 = arith.constant 1.562500e-02 : f32
      %292 = vector.broadcast %cst_161 : f32 to vector<2x1xf32>
      %293 = arith.mulf %291, %292 : vector<2x1xf32>
      %294 = arith.mulf %287, %287 : vector<2x128xf32>
      %cst_162 = arith.constant dense<0.000000e+00> : vector<2xf32>
      %295 = vector.multi_reduction <add>, %294, %cst_162 [1] : vector<2x128xf32> to vector<2xf32>
      %296 = vector.shape_cast %295 : vector<2xf32> to vector<2x1xf32>
      %cst_163 = arith.constant 1.562500e-02 : f32
      %297 = vector.broadcast %cst_163 : f32 to vector<2x1xf32>
      %298 = arith.mulf %296, %297 : vector<2x1xf32>
      %299 = arith.mulf %293, %293 : vector<2x1xf32>
      %300 = arith.subf %298, %299 : vector<2x1xf32>
      %cst_164 = arith.constant 0.000000e+00 : f32
      %301 = vector.broadcast %cst_164 : f32 to vector<2x1xf32>
      %302 = arith.maximumf %300, %301 : vector<2x1xf32>
      %303 = vector.broadcast %293 : vector<2x1xf32> to vector<2x128xf32>
      %304 = arith.subf %287, %303 : vector<2x128xf32>
      %cst_165 = arith.constant 9.99999974E-6 : f32
      %305 = vector.broadcast %cst_165 : f32 to vector<2x1xf32>
      %306 = arith.addf %302, %305 : vector<2x1xf32>
      %307 = math.rsqrt %306 : vector<2x1xf32>
      %308 = vector.broadcast %307 : vector<2x1xf32> to vector<2x128xf32>
      %309 = arith.mulf %304, %308 : vector<2x128xf32>
      %310 = vector.broadcast %288 : vector<1x128xf32> to vector<2x128xf32>
      %311 = arith.mulf %309, %310 : vector<2x128xf32>
      %312 = vector.broadcast %289 : vector<1x128xf32> to vector<2x128xf32>
      %313 = arith.addf %311, %312 : vector<2x128xf32>
      %314 = arith.truncf %313 : vector<2x128xf32> to vector<2x128xbf16>
      %c0_166 = arith.constant 0 : index
      %c0_167 = arith.constant 0 : index
      %315 = vector.load %arg21[%c0_166, %c0_167] : memref<128x32xbf16, #tpu.memory_space<vmem>>, vector<128x32xbf16>
      %cst_168 = arith.constant dense<0.000000e+00> : vector<2x32xf32>
      %316 = tpu.matmul %314, %315, %cst_168 {dimension_numbers = #tpu.dot_dimension_numbers<[1], [0], [0], [1], [0, 0, 1, 1], [], []>} : vector<2x128xbf16>, vector<128x32xbf16>, vector<2x32xf32> -> vector<2x32xf32>
      %c0_169 = arith.constant 0 : index
      %c0_170 = arith.constant 0 : index
      %317 = vector.load %arg23[%c0_169, %c0_170] : memref<2x32xf32, #tpu.memory_space<vmem>>, vector<2x32xf32>
      tpu.vector_store %arg23[%c0_169, %c0_170], %316 {strides = array<i32>} : memref<2x32xf32, #tpu.memory_space<vmem>>, vector<2x32xf32>,
    } else {
    }
    return
  }
  func.func @transform_0(%arg0: i32) -> (i32, i32) {
    %c0_i32 = arith.constant 0 : i32
    %c0_i32_0 = arith.constant 0 : i32
    %c0_i32_1 = arith.constant 0 : i32
    return %c0_i32, %c0_i32_0 : i32, i32
  }
  func.func @transform_1(%arg0: i32) -> (i32, i32) {
    %c0_i32 = arith.constant 0 : i32
    %c0_i32_0 = arith.constant 0 : i32
    %c0_i32_1 = arith.constant 0 : i32
    return %c0_i32, %c0_i32_0 : i32, i32
  }
  func.func @transform_2(%arg0: i32) -> (i32, i32) {
    %c0_i32 = arith.constant 0 : i32
    %c0_i32_0 = arith.constant 0 : i32
    %c0_i32_1 = arith.constant 0 : i32
    return %c0_i32, %c0_i32_0 : i32, i32
  }
  func.func @transform_3(%arg0: i32) -> (i32, i32) {
    %c0_i32 = arith.constant 0 : i32
    %c0_i32_0 = arith.constant 0 : i32
    %c0_i32_1 = arith.constant 0 : i32
    return %c0_i32, %c0_i32_0 : i32, i32
  }
  func.func @transform_4(%arg0: i32) -> (i32, i32) {
    %c0_i32 = arith.constant 0 : i32
    %c0_i32_0 = arith.constant 0 : i32
    %c0_i32_1 = arith.constant 0 : i32
    return %c0_i32, %c0_i32_0 : i32, i32
  }
  func.func @transform_5(%arg0: i32) -> (i32, i32) {
    %c0_i32 = arith.constant 0 : i32
    %c0_i32_0 = arith.constant 0 : i32
    %c0_i32_1 = arith.constant 0 : i32
    return %c0_i32, %c0_i32_0 : i32, i32
  }
  func.func @transform_6(%arg0: i32) -> (i32, i32, i32) {
    %c0_i32 = arith.constant 0 : i32
    %c0_i32_0 = arith.constant 0 : i32
    %c0_i32_1 = arith.constant 0 : i32
    return %arg0, %c0_i32, %c0_i32_0 : i32, i32, i32
  }
  func.func @transform_7(%arg0: i32) -> (i32, i32, i32) {
    %c0_i32 = arith.constant 0 : i32
    %c0_i32_0 = arith.constant 0 : i32
    %c0_i32_1 = arith.constant 0 : i32
    return %arg0, %c0_i32, %c0_i32_0 : i32, i32, i32
  }
  func.func @transform_8(%arg0: i32) -> (i32, i32, i32) {
    %c0_i32 = arith.constant 0 : i32
    %c0_i32_0 = arith.constant 0 : i32
    %c0_i32_1 = arith.constant 0 : i32
    return %arg0, %c0_i32, %c0_i32_0 : i32, i32, i32
  }
  func.func @transform_9(%arg0: i32) -> (i32, i32, i32) {
    %c0_i32 = arith.constant 0 : i32
    %c0_i32_0 = arith.constant 0 : i32
    %c0_i32_1 = arith.constant 0 : i32
    return %arg0, %c0_i32, %c0_i32_0 : i32, i32, i32
  }
  func.func @transform_10(%arg0: i32) -> (i32, i32, i32) {
    %c0_i32 = arith.constant 0 : i32
    %c0_i32_0 = arith.constant 0 : i32
    %c0_i32_1 = arith.constant 0 : i32
    return %arg0, %c0_i32, %c0_i32_0 : i32, i32, i32
  }
  func.func @transform_11(%arg0: i32) -> (i32, i32, i32) {
    %c0_i32 = arith.constant 0 : i32
    %c0_i32_0 = arith.constant 0 : i32
    %c0_i32_1 = arith.constant 0 : i32
    return %arg0, %c0_i32, %c0_i32_0 : i32, i32, i32
  }
  func.func @transform_12(%arg0: i32) -> (i32, i32, i32) {
    %c0_i32 = arith.constant 0 : i32
    %c0_i32_0 = arith.constant 0 : i32
    %c0_i32_1 = arith.constant 0 : i32
    return %arg0, %c0_i32, %c0_i32_0 : i32, i32, i32
  }
  func.func @transform_13(%arg0: i32) -> (i32, i32, i32) {
    %c0_i32 = arith.constant 0 : i32
    %c0_i32_0 = arith.constant 0 : i32
    %c0_i32_1 = arith.constant 0 : i32
    return %arg0, %c0_i32, %c0_i32_0 : i32, i32, i32
  }
  func.func @transform_14(%arg0: i32) -> (i32, i32, i32) {
    %c0_i32 = arith.constant 0 : i32
    %c0_i32_0 = arith.constant 0 : i32
    %c0_i32_1 = arith.constant 0 : i32
    return %arg0, %c0_i32, %c0_i32_0 : i32, i32, i32
  }
  func.func @transform_15(%arg0: i32) -> (i32, i32, i32) {
    %c0_i32 = arith.constant 0 : i32
    %c0_i32_0 = arith.constant 0 : i32
    %c0_i32_1 = arith.constant 0 : i32
    return %arg0, %c0_i32, %c0_i32_0 : i32, i32, i32
  }
  func.func @transform_16(%arg0: i32) -> (i32, i32, i32) {
    %c0_i32 = arith.constant 0 : i32
    %c0_i32_0 = arith.constant 0 : i32
    %c0_i32_1 = arith.constant 0 : i32
    return %arg0, %c0_i32, %c0_i32_0 : i32, i32, i32
  }
  func.func @transform_17(%arg0: i32) -> (i32, i32, i32) {
    %c0_i32 = arith.constant 0 : i32
    %c0_i32_0 = arith.constant 0 : i32
    %c0_i32_1 = arith.constant 0 : i32
    return %arg0, %c0_i32, %c0_i32_0 : i32, i32, i32
  }
  func.func @transform_18(%arg0: i32) -> (i32, i32) {
    %c0_i32 = arith.constant 0 : i32
    %c0_i32_0 = arith.constant 0 : i32
    %c0_i32_1 = arith.constant 0 : i32
    return %c0_i32, %c0_i32_0 : i32, i32
  }
  func.func @transform_19(%arg0: i32) -> (i32, i32) {
    %c0_i32 = arith.constant 0 : i32
    %c0_i32_0 = arith.constant 0 : i32
    %c0_i32_1 = arith.constant 0 : i32
    return %c0_i32, %c0_i32_0 : i32, i32
  }
  func.func @transform_20(%arg0: i32) -> (i32, i32) {
    %c0_i32 = arith.constant 0 : i32
    %c0_i32_0 = arith.constant 0 : i32
    %c0_i32_1 = arith.constant 0 : i32
    return %c0_i32, %c0_i32_0 : i32, i32
  }
  func.func @transform_21(%arg0: i32) -> (i32, i32) {
    %c0_i32 = arith.constant 0 : i32
    %c0_i32_0 = arith.constant 0 : i32
    %c0_i32_1 = arith.constant 0 : i32
    return %c0_i32, %c0_i32_0 : i32, i32
  }
  func.func @transform_22(%arg0: i32) -> (i32, i32) {
    %c0_i32 = arith.constant 0 : i32
    %c0_i32_0 = arith.constant 0 : i32
    %c0_i32_1 = arith.constant 0 : i32
    return %c0_i32, %c0_i32_0 : i32, i32
  }
}

</mosaic_0001>

<llo_original>
// kernel: clip_vision_forward.2
$region0: #{clip_vision_forward.2}
  #allocation0 [shape = 'u32[]', space=smem, size = 0x4, offset = 0x4, fixed_abs, tag = 'smem constant byte address 0x4 - core index']
  #allocation1 [shape = 'u32[144,128]{1,0:T(1,128)}', space=vmem, size = 0x12000, scoped, tag = 'internal scratch']
  %s0 = inlined_call_operand.hbm [shape: f32[6,32,32], index: 0, kind: input, shape index: {}]
  %s1 = inlined_call_operand.hbm [shape: f32[224,32], index: 1, kind: input, shape index: {}]
  %s2 = inlined_call_operand.hbm [shape: f32[32,224], index: 2, kind: input, shape index: {}]
  %s3 = inlined_call_operand.vmem [shape: bf16[6,224,224], index: 3, kind: output, shape index: {}]
  %s4 = sld [smem:[#allocation0]]
  $region57: #{clip_vision_forward.2} parent=0
    _
  %s6 = ssub.s32 1, %s4
  %s7 = scalar_select 0, %s6, %s4
  $region1: #{clip_vision_forward.2} parent=0
    #allocation2 [shape = 'u8[32768]{0}', space=vmem, size = 0x8000, scoped, tag = 'input window, operand 0']
    #allocation3 [shape = 's32[2]{0}', space=sflag, size = 0x8, scoped, tag = 'scoped memory for clip_vision_forward.2']
    #allocation4 [shape = 'u8[114688]{0}', space=vmem, size = 0x1c000, scoped, tag = 'input window, operand 1, single buffered']
    #allocation5 [shape = 's32[1]{0}', space=sflag, size = 0x4, scoped, tag = 'scoped memory for clip_vision_forward.2']
    #allocation6 [shape = 'u8[32768]{0}', space=vmem, size = 0x8000, scoped, tag = 'input window, operand 2, single buffered']
    %8 = vsyncpa [#allocation3], 0
    %s9 = scalar_lea.sflag [#allocation3], 1
    %10 = vsyncpa %s9, 0
    %11 = vsyncpa [#allocation5], 0
    loop: start=0, step=1, limit=8
    $region2: #{clip_vision_forward.2} parent=1 // loop_pre_header
      _
    $region3: #{clip_vision_forward.2} parent=1 // loop_header
      %s13 = sphi 0, %s17
      %p14 = scmp.ge.s32.totalorder %s13, 8
      %s23 = sphi 0, %s25
      %s26 = sphi 0, %s23
      %s27 = sphi 0, %s26
      %s43 = sphi 0, %s27
      %s47 = sphi 0, %s47
      %s49 = sphi 0, %s47
      %s50 = sphi 0, %s49
      %s64 = sphi 0, %s50
      %s68 = sphi 0, %s68
      %s70 = sphi 0, %s68
      %s71 = sphi 0, %s70
      %s85 = sphi 0, %s71
      %s91 = sphi 0, %s93
      %s94 = sphi 0, %s91
      %s95 = sphi 0, %s94
      %s111 = sphi 0, %s95
    $region4: #{clip_vision_forward.2} parent=1 // loop_header_branch
      %16 = sbr.rel (%p14) target = $region8
    $region5: #{clip_vision_forward.2} parent=1 // loop_body
      %s18 = ssub.s32 %s13, 1
      %s19 = ssub.s32 %s13, 2
      %s20 = sadd.s32 %s13, 1
      %s21 = ssub.s32 %s13, %s20
      %p22 = scmp.eq.s32.totalorder %s21, 0
      %s24 = sadd.s32 %s23, 1
      %s25 = scalar_select %p22, %s23, %s24
      %p28 = pneg %p22
      %p29 = scmp.eq.s32.totalorder %s13, 5
      %p30 = por %p28, %p29
      %p31 = scmp.ne.s32.totalorder %s23, %s26
      %p32 = scmp.eq.s32.totalorder %s13, 0
      %p33 = por %p31, %p32
      %p34 = scmp.ne.s32.totalorder %s23, %s26
      %p35 = scmp.eq.s32.totalorder %s18, 5
      %p36 = por %p34, %p35
      %p37 = scmp.ne.s32.totalorder %s26, %s27
      %p38 = scmp.eq.s32.totalorder %s18, 0
      %p39 = por %p37, %p38
      %p40 = scmp.ne.s32.totalorder %s26, %s27
      %p41 = scmp.eq.s32.totalorder %s19, 5
      %p42 = por %p40, %p41
      %p44 = scmp.ne.s32.totalorder %s27, %s43
      %p45 = scmp.eq.s32.totalorder %s19, 0
      %p46 = por %p44, %p45
      %s48 = sadd.s32 %s47, 1
      %p51 = scmp.eq.s32.totalorder %s13, 5
      %p52 = scmp.ne.s32.totalorder %s47, %s49
      %p53 = scmp.eq.s32.totalorder %s13, 0
      %p54 = por %p52, %p53
      %p55 = scmp.ne.s32.totalorder %s47, %s49
      %p56 = scmp.eq.s32.totalorder %s18, 5
      %p57 = por %p55, %p56
      %p58 = scmp.ne.s32.totalorder %s49, %s50
      %p59 = scmp.eq.s32.totalorder %s18, 0
      %p60 = por %p58, %p59
      %p61 = scmp.ne.s32.totalorder %s49, %s50
      %p62 = scmp.eq.s32.totalorder %s19, 5
      %p63 = por %p61, %p62
      %p65 = scmp.ne.s32.totalorder %s50, %s64
      %p66 = scmp.eq.s32.totalorder %s19, 0
      %p67 = por %p65, %p66
      %s69 = sadd.s32 %s68, 1
      %p72 = scmp.eq.s32.totalorder %s13, 5
      %p73 = scmp.ne.s32.totalorder %s68, %s70
      %p74 = scmp.eq.s32.totalorder %s13, 0
      %p75 = por %p73, %p74
      %p76 = scmp.ne.s32.totalorder %s68, %s70
      %p77 = scmp.eq.s32.totalorder %s18, 5
      %p78 = por %p76, %p77
      %p79 = scmp.ne.s32.totalorder %s70, %s71
      %p80 = scmp.eq.s32.totalorder %s18, 0
      %p81 = por %p79, %p80
      %p82 = scmp.ne.s32.totalorder %s70, %s71
      %p83 = scmp.eq.s32.totalorder %s19, 5
      %p84 = por %p82, %p83
      %p86 = scmp.ne.s32.totalorder %s71, %s85
      %p87 = scmp.eq.s32.totalorder %s19, 0
      %p88 = por %p86, %p87
      %s89 = ssub.s32 %s13, %s20
      %p90 = scmp.eq.s32.totalorder %s89, 0
      %s92 = sadd.s32 %s91, 1
      %s93 = scalar_select %p90, %s91, %s92
      %p96 = pneg %p90
      %p97 = scmp.eq.s32.totalorder %s13, 5
      %p98 = por %p96, %p97
      %p99 = scmp.ne.s32.totalorder %s91, %s94
      %p100 = scmp.eq.s32.totalorder %s13, 0
      %p101 = por %p99, %p100
      %p102 = scmp.ne.s32.totalorder %s91, %s94
      %p103 = scmp.eq.s32.totalorder %s18, 5
      %p104 = por %p102, %p103
      %p105 = scmp.ne.s32.totalorder %s94, %s95
      %p106 = scmp.eq.s32.totalorder %s18, 0
      %p107 = por %p105, %p106
      %p108 = scmp.ne.s32.totalorder %s94, %s95
      %p109 = scmp.eq.s32.totalorder %s19, 5
      %p110 = por %p108, %p109
      %p112 = scmp.ne.s32.totalorder %s95, %s111
      %p113 = scmp.eq.s32.totalorder %s19, 0
      %p114 = por %p112, %p113
      %p115 = scmp.le.s32.totalorder 1, %s13
      %p116 = scmp.lt.s32.totalorder %s13, 7
      %p117 = pnand %p115, %p116
      %p118 = pneg %p117
      // Predicated region
      $region9: #{clip_vision_forward.2} parent=5 // pred_check
        _
      $region10: #{clip_vision_forward.2} parent=5 // pred_check_branch
        %120 = sbr.rel (%p117) target = $region12
      $region11: #{clip_vision_forward.2} parent=5 // pred_region
        %s121 = ssub.s32 %s13, 1
        // Predicated region
        $region13: #{clip_vision_forward.2} parent=11 // pred_check
          %p122 = pneg %p60
        $region14: #{clip_vision_forward.2} parent=11 // pred_check_branch
          %124 = sbr.rel (%p122) target = $region16
        $region15: #{clip_vision_forward.2} parent=11 // pred_region
          %s126 = ssub.s32 3584, 3584
          %127 = vsyncadd [#allocation5], %s126
          %s128 = sshll.u32 [#allocation4], 4
          %s129 = int_to_ptr.vmem [resolvable:$true] %s128
          %134 = dma.hbm_to_vmem [thread:$0]  %s1, 3584, %s129, [#allocation5], 128, 128, 8
        $region16: #{clip_vision_forward.2} parent=11 // pred_fallthru
          _
        // Predicated region
        $region17: #{clip_vision_forward.2} parent=11 // pred_check
          %p135 = pneg %p81
        $region18: #{clip_vision_forward.2} parent=11 // pred_check_branch
          %137 = sbr.rel (%p135) target = $region20
        $region19: #{clip_vision_forward.2} parent=11 // pred_region
          %s139 = ssub.s32 1024, 1024
          %140 = vsyncadd [#allocation5], %s139
          %s141 = sshll.u32 [#allocation6], 4
          %s142 = int_to_ptr.vmem [resolvable:$true] %s141
          %147 = dma.hbm_to_vmem [thread:$0]  %s2, 1024, %s142, [#allocation5], 256, 256, 16
        $region20: #{clip_vision_forward.2} parent=11 // pred_fallthru
          _
      $region12: #{clip_vision_forward.2} parent=5 // pred_fallthru
        _
      %p148 = scmp.lt.s32.totalorder %s13, 6
      // Predicated region
      $region21: #{clip_vision_forward.2} parent=5 // pred_check
        %p149 = pneg %p148
      $region22: #{clip_vision_forward.2} parent=5 // pred_check_branch
        %151 = sbr.rel (%p149) target = $region24
      $region23: #{clip_vision_forward.2} parent=5 // pred_region
        // Predicated region
        $region25: #{clip_vision_forward.2} parent=23 // pred_check
          %p152 = pneg %p33
        $region26: #{clip_vision_forward.2} parent=23 // pred_check_branch
          %154 = sbr.rel (%p152) target = $region28
        $region27: #{clip_vision_forward.2} parent=23 // pred_region
          %s155 = sand.u32 %s23, 1
          %s156 = scalar_lea.sflag [#allocation3], %s155
          %s157 = sand.u32 %s23, 1
          %s158 = smul.addr %s157, 32
          %s159 = scalar_lea.vmem [#allocation2], %s158
          %s161 = ssub.s32 512, 512
          %162 = vsyncadd %s156, %s161
          %s163 = smul.addr %s13, 4
          %s164 = smul.addr %s163, 128
          %s165 = scalar_lea.hbm %s0, %s164
          %s166 = sshll.u32 %s159, 4
          %s167 = int_to_ptr.vmem [resolvable:$true] %s166
          %172 = dma.hbm_to_vmem [thread:$0]  %s165, 512, %s167, %s156, 128, 128, 8
        $region28: #{clip_vision_forward.2} parent=23 // pred_fallthru
          _
      $region24: #{clip_vision_forward.2} parent=5 // pred_fallthru
        _
      %p173 = scmp.le.s32.totalorder 1, %s13
      %p174 = scmp.lt.s32.totalorder %s13, 7
      %p175 = pnand %p173, %p174
      %p176 = pneg %p175
      // Predicated region
      $region29: #{clip_vision_forward.2} parent=5 // pred_check
        _
      $region30: #{clip_vision_forward.2} parent=5 // pred_check_branch
        %178 = sbr.rel (%p175) target = $region32
      $region31: #{clip_vision_forward.2} parent=5 // pred_region
        %s179 = ssub.s32 %s13, 1
        %s180 = sand.u32 %s26, 1
        %s181 = scalar_lea.sflag [#allocation3], %s180
        %s182 = sand.u32 %s26, 1
        %s183 = smul.addr %s182, 32
        %s184 = scalar_lea.vmem [#allocation2], %s183
        // Predicated region
        $region33: #{clip_vision_forward.2} parent=31 // pred_check
          %p185 = pneg %p39
        $region34: #{clip_vision_forward.2} parent=31 // pred_check_branch
          %187 = sbr.rel (%p185) target = $region36
        $region35: #{clip_vision_forward.2} parent=31 // pred_region
          %188 = dma.done %s181, 512
        $region36: #{clip_vision_forward.2} parent=31 // pred_fallthru
          _
        // Predicated region
        $region37: #{clip_vision_forward.2} parent=31 // pred_check
          %p189 = pneg %p60
        $region38: #{clip_vision_forward.2} parent=31 // pred_check_branch
          %191 = sbr.rel (%p189) target = $region40
        $region39: #{clip_vision_forward.2} parent=31 // pred_region
          %192 = dma.done [#allocation5], 3584
        $region40: #{clip_vision_forward.2} parent=31 // pred_fallthru
          _
        // Predicated region
        $region41: #{clip_vision_forward.2} parent=31 // pred_check
          %p193 = pneg %p81
        $region42: #{clip_vision_forward.2} parent=31 // pred_check_branch
          %195 = sbr.rel (%p193) target = $region44
        $region43: #{clip_vision_forward.2} parent=31 // pred_region
          %196 = dma.done [#allocation5], 1024
        $region44: #{clip_vision_forward.2} parent=31 // pred_fallthru
          _
        %s197 = sand.u32 %s26, 1
        %s198 = scalar_lea.sflag [#allocation3], %s197
        %s199 = sand.u32 %s26, 1
        %s200 = smul.addr %s199, 32
        %s201 = scalar_lea.vmem [#allocation2], %s200
        %p202 = pneg %p39
        %p203 = pneg %p36
        %p204 = pneg %p60
        %p205 = pneg %p57
        %p206 = pneg %p81
        %p207 = pneg %p78
        %p208 = pneg %p107
        %p209 = pneg %p104
        %p210 = scmp.lt.s32.totalorder %s18, 5
        %s211 = scalar_select %p210, %s18, 5
        %s212 = smul.addr %s211, 56
        %s213 = smul.addr %s212, 4
        %s214 = scalar_lea.vmem %s3, %s213
        %p215 = scmp.lt.s32.totalorder %s18, 5
        %s216 = scalar_select %p215, %s18, 5
        %s217 = smul.addr %s216, 56
        %s218 = smul.addr %s217, 4
        %s219 = scalar_lea.vmem %s3, %s218
        %v220 = vld [vmem:[%s184] sm:$0xff]
        %v221 = vld [vmem:[%s184 + $0x8] sm:$0xff]
        %v222 = vld [vmem:[%s184 + $0x10] sm:$0xff]
        %v223 = vld [vmem:[%s184 + $0x18] sm:$0xff]
        %v224 = vld [vmem:[#allocation6] sm:$0xff]
        %v225 = vld [vmem:[#allocation6 + $0x8] sm:$0xff]
        %v226 = vld [vmem:[#allocation6 + $0x10] sm:$0xff]
        %v227 = vld [vmem:[#allocation6 + $0x18] sm:$0xff]
        %v228 = vld [vmem:[#allocation6 + $0x20] sm:$0xff]
        %v229 = vld [vmem:[#allocation6 + $0x28] sm:$0xff]
        %v230 = vld [vmem:[#allocation6 + $0x30] sm:$0xff]
        %v231 = vld [vmem:[#allocation6 + $0x38] sm:$0xff]
        %vm232 = vcmask 261120
        %v234 = vsel %vm232, %v220, 0
        %v237 = vsel %vm232, %v221, 0
        %v240 = vsel %vm232, %v222, 0
        %v243 = vsel %vm232, %v223, 0
        %245 = vmatprep.subr.mxu0 %v225
        %246 = vmatpush1.msra.mxu0 %v224
        %247 = vmatprep.subr.mxu0 %v227
        %248 = vmatpush1.msra.mxu0 %v226
        %249 = vmatprep.subr.mxu0 %v229
        %250 = vmatpush1.msra.mxu0 %v228
        %251 = vmatprep.subr.mxu0 %v231
        %252 = vmatpush1.msra.mxu0 %v230
        %253 = vmatprep.subr.mxu0 0.0
        %254 = vmatpush1.msra.mxu0 0.0
        %255 = vmatprep.subr.mxu0 0.0
        %256 = vmatpush1.msra.mxu0 0.0
        %257 = vmatprep.subr.mxu0 0.0
        %258 = vmatpush1.msra.mxu0 0.0
        %259 = vmatprep.subr.mxu0 0.0
        %260 = vmatpush1.msra.mxu0 0.0
        %261 = vmatprep.subr.mxu0 0.0
        %262 = vmatpush1.msra.mxu0 0.0
        %263 = vmatprep.subr.mxu0 0.0
        %264 = vmatpush1.msra.mxu0 0.0
        %265 = vmatprep.subr.mxu0 0.0
        %266 = vmatpush1.msra.mxu0 0.0
        %267 = vmatprep.subr.mxu0 0.0
        %268 = vmatpush1.msra.mxu0 0.0
        %269 = vmatprep.subr.mxu0 0.0
        %270 = vmatpush1.msra.mxu0 0.0
        %271 = vmatprep.subr.mxu0 0.0
        %272 = vmatpush1.msra.mxu0 0.0
        %273 = vmatprep.subr.mxu0 0.0
        %274 = vmatpush1.msra.mxu0 0.0
        %275 = vmatprep.subr.mxu0 0.0
        %276 = vmatpush1.msra.mxu0 0.0
        %277 = vmatprep.subr.mxu0 0.0
        %278 = vmatpush1.msra.mxu0 0.0
        %279 = vmatprep.subr.mxu0 0.0
        %280 = vmatpush1.msra.mxu0 0.0
        %281 = vmatprep.subr.mxu0 0.0
        %282 = vmatpush1.msra.mxu0 0.0
        %283 = vmatprep.subr.mxu0 0.0
        %284 = vmatpush1.msra.mxu0 0.0
        %285 = vmatprep.subr.mxu0 0.0
        %286 = vmatpush1.msra.mxu0 0.0
        %287 = vmatprep.subr.mxu0 0.0
        %288 = vmatpush1.msra.mxu0 0.0
        %289 = vmatprep.subr.mxu0 0.0
        %290 = vmatpush1.msra.mxu0 0.0
        %291 = vmatprep.subr.mxu0 0.0
        %292 = vmatpush1.msra.mxu0 0.0
        %293 = vmatprep.subr.mxu0 0.0
        %294 = vmatpush1.msra.mxu0 0.0
        %295 = vmatprep.subr.mxu0 0.0
        %296 = vmatpush1.msra.mxu0 0.0
        %297 = vmatprep.subr.mxu0 0.0
        %298 = vmatpush1.msra.mxu0 0.0
        %299 = vmatprep.subr.mxu0 0.0
        %300 = vmatpush1.msra.mxu0 0.0
        %301 = vmatprep.subr.mxu0 0.0
        %302 = vmatpush1.msra.mxu0 0.0
        %303 = vmatprep.subr.mxu0 0.0
        %304 = vmatpush1.msra.mxu0 0.0
        %305 = vmatprep.subr.mxu0 0.0
        %306 = vmatpush1.msra.mxu0 0.0
        %307 = vmatprep.subr.mxu0 0.0
        %308 = vmatpush1.msra.mxu0 0.0
        %309 = vmatprep.mubr.f32.mxu0 0.0
        %310 = vmatmul.mubr.f32.gmra.mrb[0].mxu0 %v234
        %v311 = vpop.f32.mrb[0].mxu0
        %v312 = vadd.f32 0.0, %v311
        %v313 = vpop.f32.mrb[0].mxu0
        %v314 = vadd.f32 0.0, %v313
        %315 = vmatprep.mubr.f32.mxu0 0.0
        %316 = vmatmul.mubr.f32.gmra.mrb[0].mxu0 %v237
        %v317 = vpop.f32.mrb[0].mxu0
        %v318 = vadd.f32 0.0, %v317
        %v319 = vpop.f32.mrb[0].mxu0
        %v320 = vadd.f32 0.0, %v319
        %321 = vmatprep.mubr.f32.mxu0 0.0
        %322 = vmatmul.mubr.f32.gmra.mrb[0].mxu0 %v240
        %v323 = vpop.f32.mrb[0].mxu0
        %v324 = vadd.f32 0.0, %v323
        %v325 = vpop.f32.mrb[0].mxu0
        %v326 = vadd.f32 0.0, %v325
        %327 = vmatprep.mubr.f32.mxu0 0.0
        %328 = vmatmul.mubr.f32.gmra.mrb[0].mxu0 %v243
        %v329 = vpop.f32.mrb[0].mxu0
        %v330 = vadd.f32 0.0, %v329
        %v331 = vpop.f32.mrb[0].mxu0
        %v332 = vadd.f32 0.0, %v331
        %333 = vdwg.mxu0
        %v334 = vld [vmem:[#allocation4] sm:$0xff]
        %v335 = vld [vmem:[#allocation4 + $0x8] sm:$0xff]
        %v336 = vld [vmem:[#allocation4 + $0x10] sm:$0xff]
        %v337 = vld [vmem:[#allocation4 + $0x18] sm:$0xff]
        %v338 = vld [vmem:[#allocation4 + $0x20] sm:$0xff]
        %v339 = vld [vmem:[#allocation4 + $0x28] sm:$0xff]
        %v340 = vld [vmem:[#allocation4 + $0x30] sm:$0xff]
        %v341 = vld [vmem:[#allocation4 + $0x38] sm:$0xff]
        %v342 = vld [vmem:[#allocation4 + $0x40] sm:$0xff]
        %v343 = vld [vmem:[#allocation4 + $0x48] sm:$0xff]
        %v344 = vld [vmem:[#allocation4 + $0x50] sm:$0xff]
        %v345 = vld [vmem:[#allocation4 + $0x58] sm:$0xff]
        %v346 = vld [vmem:[#allocation4 + $0x60] sm:$0xff]
        %v347 = vld [vmem:[#allocation4 + $0x68] sm:$0xff]
        %v348 = vld [vmem:[#allocation4 + $0x70] sm:$0xff]
        %v349 = vld [vmem:[#allocation4 + $0x78] sm:$0xff]
        %v350 = vld [vmem:[#allocation4 + $0x80] sm:$0xff]
        %v351 = vld [vmem:[#allocation4 + $0x88] sm:$0xff]
        %v352 = vld [vmem:[#allocation4 + $0x90] sm:$0xff]
        %v353 = vld [vmem:[#allocation4 + $0x98] sm:$0xff]
        %v354 = vld [vmem:[#allocation4 + $0xa0] sm:$0xff]
        %v355 = vld [vmem:[#allocation4 + $0xa8] sm:$0xff]
        %v356 = vld [vmem:[#allocation4 + $0xb0] sm:$0xff]
        %v357 = vld [vmem:[#allocation4 + $0xb8] sm:$0xff]
        %v358 = vld [vmem:[#allocation4 + $0xc0] sm:$0xff]
        %v359 = vld [vmem:[#allocation4 + $0xc8] sm:$0xff]
        %v360 = vld [vmem:[#allocation4 + $0xd0] sm:$0xff]
        %v361 = vld [vmem:[#allocation4 + $0xd8] sm:$0xff]
        %v363 = vsel %vm232, %v334, 0
        %v366 = vsel %vm232, %v335, 0
        %v369 = vsel %vm232, %v336, 0
        %v372 = vsel %vm232, %v337, 0
        %v375 = vsel %vm232, %v338, 0
        %v378 = vsel %vm232, %v339, 0
        %v381 = vsel %vm232, %v340, 0
        %v384 = vsel %vm232, %v341, 0
        %v387 = vsel %vm232, %v342, 0
        %v390 = vsel %vm232, %v343, 0
        %v393 = vsel %vm232, %v344, 0
        %v396 = vsel %vm232, %v345, 0
        %v399 = vsel %vm232, %v346, 0
        %v402 = vsel %vm232, %v347, 0
        %v405 = vsel %vm232, %v348, 0
        %v408 = vsel %vm232, %v349, 0
        %v411 = vsel %vm232, %v350, 0
        %v414 = vsel %vm232, %v351, 0
        %v417 = vsel %vm232, %v352, 0
        %v420 = vsel %vm232, %v353, 0
        %v423 = vsel %vm232, %v354, 0
        %v426 = vsel %vm232, %v355, 0
        %v429 = vsel %vm232, %v356, 0
        %v432 = vsel %vm232, %v357, 0
        %v435 = vsel %vm232, %v358, 0
        %v438 = vsel %vm232, %v359, 0
        %v441 = vsel %vm232, %v360, 0
        %v444 = vsel %vm232, %v361, 0
        %446 = vmatprep.subr.mxu0 %v314
        %447 = vmatpush1.msra.mxu0 %v312
        %448 = vmatprep.subr.mxu0 %v320
        %449 = vmatpush1.msra.mxu0 %v318
        %450 = vmatprep.subr.mxu0 %v326
        %451 = vmatpush1.msra.mxu0 %v324
        %452 = vmatprep.subr.mxu0 %v332
        %453 = vmatpush1.msra.mxu0 %v330
        %454 = vmatprep.subr.mxu0 0.0
        %455 = vmatpush1.msra.mxu0 0.0
        %456 = vmatprep.subr.mxu0 0.0
        %457 = vmatpush1.msra.mxu0 0.0
        %458 = vmatprep.subr.mxu0 0.0
        %459 = vmatpush1.msra.mxu0 0.0
        %460 = vmatprep.subr.mxu0 0.0
        %461 = vmatpush1.msra.mxu0 0.0
        %462 = vmatprep.subr.mxu0 0.0
        %463 = vmatpush1.msra.mxu0 0.0
        %464 = vmatprep.subr.mxu0 0.0
        %465 = vmatpush1.msra.mxu0 0.0
        %466 = vmatprep.subr.mxu0 0.0
        %467 = vmatpush1.msra.mxu0 0.0
        %468 = vmatprep.subr.mxu0 0.0
        %469 = vmatpush1.msra.mxu0 0.0
        %470 = vmatprep.subr.mxu0 0.0
        %471 = vmatpush1.msra.mxu0 0.0
        %472 = vmatprep.subr.mxu0 0.0
        %473 = vmatpush1.msra.mxu0 0.0
        %474 = vmatprep.subr.mxu0 0.0
        %475 = vmatpush1.msra.mxu0 0.0
        %476 = vmatprep.subr.mxu0 0.0
        %477 = vmatpush1.msra.mxu0 0.0
        %478 = vmatprep.subr.mxu0 0.0
        %479 = vmatpush1.msra.mxu0 0.0
        %480 = vmatprep.subr.mxu0 0.0
        %481 = vmatpush1.msra.mxu0 0.0
        %482 = vmatprep.subr.mxu0 0.0
        %483 = vmatpush1.msra.mxu0 0.0
        %484 = vmatprep.subr.mxu0 0.0
        %485 = vmatpush1.msra.mxu0 0.0
        %486 = vmatprep.subr.mxu0 0.0
        %487 = vmatpush1.msra.mxu0 0.0
        %488 = vmatprep.subr.mxu0 0.0
        %489 = vmatpush1.msra.mxu0 0.0
        %490 = vmatprep.subr.mxu0 0.0
        %491 = vmatpush1.msra.mxu0 0.0
        %492 = vmatprep.subr.mxu0 0.0
        %493 = vmatpush1.msra.mxu0 0.0
        %494 = vmatprep.subr.mxu0 0.0
        %495 = vmatpush1.msra.mxu0 0.0
        %496 = vmatprep.subr.mxu0 0.0
        %497 = vmatpush1.msra.mxu0 0.0
        %498 = vmatprep.subr.mxu0 0.0
        %499 = vmatpush1.msra.mxu0 0.0
        %500 = vmatprep.subr.mxu0 0.0
        %501 = vmatpush1.msra.mxu0 0.0
        %502 = vmatprep.subr.mxu0 0.0
        %503 = vmatpush1.msra.mxu0 0.0
        %504 = vmatprep.subr.mxu0 0.0
        %505 = vmatpush1.msra.mxu0 0.0
        %506 = vmatprep.subr.mxu0 0.0
        %507 = vmatpush1.msra.mxu0 0.0
        %508 = vmatprep.subr.mxu0 0.0
        %509 = vmatpush1.msra.mxu0 0.0
        %510 = vmatprep.mubr.f32.mxu0 0.0
        %511 = vmatmul.mubr.f32.gmra.mrb[0].mxu0 %v363
        %v512 = vpop.f32.mrb[0].mxu0
        %v513 = vadd.f32 0.0, %v512
        %v514 = vpop.f32.mrb[0].mxu0
        %v515 = vadd.f32 0.0, %v514
        %516 = vmatprep.mubr.f32.mxu0 0.0
        %517 = vmatmul.mubr.f32.gmra.mrb[0].mxu0 %v366
        %v518 = vpop.f32.mrb[0].mxu0
        %v519 = vadd.f32 0.0, %v518
        %v520 = vpop.f32.mrb[0].mxu0
        %v521 = vadd.f32 0.0, %v520
        %522 = vmatprep.mubr.f32.mxu0 0.0
        %523 = vmatmul.mubr.f32.gmra.mrb[0].mxu0 %v369
        %v524 = vpop.f32.mrb[0].mxu0
        %v525 = vadd.f32 0.0, %v524
        %v526 = vpop.f32.mrb[0].mxu0
        %v527 = vadd.f32 0.0, %v526
        %528 = vmatprep.mubr.f32.mxu0 0.0
        %529 = vmatmul.mubr.f32.gmra.mrb[0].mxu0 %v372
        %v530 = vpop.f32.mrb[0].mxu0
        %v531 = vadd.f32 0.0, %v530
        %v532 = vpop.f32.mrb[0].mxu0
        %v533 = vadd.f32 0.0, %v532
        %534 = vmatprep.mubr.f32.mxu0 0.0
        %535 = vmatmul.mubr.f32.gmra.mrb[0].mxu0 %v375
        %v536 = vpop.f32.mrb[0].mxu0
        %v537 = vadd.f32 0.0, %v536
        %v538 = vpop.f32.mrb[0].mxu0
        %v539 = vadd.f32 0.0, %v538
        %540 = vmatprep.mubr.f32.mxu0 0.0
        %541 = vmatmul.mubr.f32.gmra.mrb[0].mxu0 %v378
        %v542 = vpop.f32.mrb[0].mxu0
        %v543 = vadd.f32 0.0, %v542
        %v544 = vpop.f32.mrb[0].mxu0
        %v545 = vadd.f32 0.0, %v544
        %546 = vmatprep.mubr.f32.mxu0 0.0
        %547 = vmatmul.mubr.f32.gmra.mrb[0].mxu0 %v381
        %v548 = vpop.f32.mrb[0].mxu0
        %v549 = vadd.f32 0.0, %v548
        %v550 = vpop.f32.mrb[0].mxu0
        %v551 = vadd.f32 0.0, %v550
        %552 = vmatprep.mubr.f32.mxu0 0.0
        %553 = vmatmul.mubr.f32.gmra.mrb[0].mxu0 %v384
        %v554 = vpop.f32.mrb[0].mxu0
        %v555 = vadd.f32 0.0, %v554
        %v556 = vpop.f32.mrb[0].mxu0
        %v557 = vadd.f32 0.0, %v556
        %558 = vmatprep.mubr.f32.mxu0 0.0
        %559 = vmatmul.mubr.f32.gmra.mrb[0].mxu0 %v387
        %v560 = vpop.f32.mrb[0].mxu0
        %v561 = vadd.f32 0.0, %v560
        %v562 = vpop.f32.mrb[0].mxu0
        %v563 = vadd.f32 0.0, %v562
        %564 = vmatprep.mubr.f32.mxu0 0.0
        %565 = vmatmul.mubr.f32.gmra.mrb[0].mxu0 %v390
        %v566 = vpop.f32.mrb[0].mxu0
        %v567 = vadd.f32 0.0, %v566
        %v568 = vpop.f32.mrb[0].mxu0
        %v569 = vadd.f32 0.0, %v568
        %570 = vmatprep.mubr.f32.mxu0 0.0
        %571 = vmatmul.mubr.f32.gmra.mrb[0].mxu0 %v393
        %v572 = vpop.f32.mrb[0].mxu0
        %v573 = vadd.f32 0.0, %v572
        %v574 = vpop.f32.mrb[0].mxu0
        %v575 = vadd.f32 0.0, %v574
        %576 = vmatprep.mubr.f32.mxu0 0.0
        %577 = vmatmul.mubr.f32.gmra.mrb[0].mxu0 %v396
        %v578 = vpop.f32.mrb[0].mxu0
        %v579 = vadd.f32 0.0, %v578
        %v580 = vpop.f32.mrb[0].mxu0
        %v581 = vadd.f32 0.0, %v580
        %582 = vmatprep.mubr.f32.mxu0 0.0
        %583 = vmatmul.mubr.f32.gmra.mrb[0].mxu0 %v399
        %v584 = vpop.f32.mrb[0].mxu0
        %v585 = vadd.f32 0.0, %v584
        %v586 = vpop.f32.mrb[0].mxu0
        %v587 = vadd.f32 0.0, %v586
        %588 = vmatprep.mubr.f32.mxu0 0.0
        %589 = vmatmul.mubr.f32.gmra.mrb[0].mxu0 %v402
        %v590 = vpop.f32.mrb[0].mxu0
        %v591 = vadd.f32 0.0, %v590
        %v592 = vpop.f32.mrb[0].mxu0
        %v593 = vadd.f32 0.0, %v592
        %594 = vmatprep.mubr.f32.mxu0 0.0
        %595 = vmatmul.mubr.f32.gmra.mrb[0].mxu0 %v405
        %v596 = vpop.f32.mrb[0].mxu0
        %v597 = vadd.f32 0.0, %v596
        %v598 = vpop.f32.mrb[0].mxu0
        %v599 = vadd.f32 0.0, %v598
        %600 = vmatprep.mubr.f32.mxu0 0.0
        %601 = vmatmul.mubr.f32.gmra.mrb[0].mxu0 %v408
        %v602 = vpop.f32.mrb[0].mxu0
        %v603 = vadd.f32 0.0, %v602
        %v604 = vpop.f32.mrb[0].mxu0
        %v605 = vadd.f32 0.0, %v604
        %606 = vmatprep.mubr.f32.mxu0 0.0
        %607 = vmatmul.mubr.f32.gmra.mrb[0].mxu0 %v411
        %v608 = vpop.f32.mrb[0].mxu0
        %v609 = vadd.f32 0.0, %v608
        %v610 = vpop.f32.mrb[0].mxu0
        %v611 = vadd.f32 0.0, %v610
        %612 = vmatprep.mubr.f32.mxu0 0.0
        %613 = vmatmul.mubr.f32.gmra.mrb[0].mxu0 %v414
        %v614 = vpop.f32.mrb[0].mxu0
        %v615 = vadd.f32 0.0, %v614
        %v616 = vpop.f32.mrb[0].mxu0
        %v617 = vadd.f32 0.0, %v616
        %618 = vmatprep.mubr.f32.mxu0 0.0
        %619 = vmatmul.mubr.f32.gmra.mrb[0].mxu0 %v417
        %v620 = vpop.f32.mrb[0].mxu0
        %v621 = vadd.f32 0.0, %v620
        %v622 = vpop.f32.mrb[0].mxu0
        %v623 = vadd.f32 0.0, %v622
        %624 = vmatprep.mubr.f32.mxu0 0.0
        %625 = vmatmul.mubr.f32.gmra.mrb[0].mxu0 %v420
        %v626 = vpop.f32.mrb[0].mxu0
        %v627 = vadd.f32 0.0, %v626
        %v628 = vpop.f32.mrb[0].mxu0
        %v629 = vadd.f32 0.0, %v628
        %630 = vmatprep.mubr.f32.mxu0 0.0
        %631 = vmatmul.mubr.f32.gmra.mrb[0].mxu0 %v423
        %v632 = vpop.f32.mrb[0].mxu0
        %v633 = vadd.f32 0.0, %v632
        %v634 = vpop.f32.mrb[0].mxu0
        %v635 = vadd.f32 0.0, %v634
        %636 = vmatprep.mubr.f32.mxu0 0.0
        %637 = vmatmul.mubr.f32.gmra.mrb[0].mxu0 %v426
        %v638 = vpop.f32.mrb[0].mxu0
        %v639 = vadd.f32 0.0, %v638
        %v640 = vpop.f32.mrb[0].mxu0
        %v641 = vadd.f32 0.0, %v640
        %642 = vmatprep.mubr.f32.mxu0 0.0
        %643 = vmatmul.mubr.f32.gmra.mrb[0].mxu0 %v429
        %v644 = vpop.f32.mrb[0].mxu0
        %v645 = vadd.f32 0.0, %v644
        %v646 = vpop.f32.mrb[0].mxu0
        %v647 = vadd.f32 0.0, %v646
        %648 = vmatprep.mubr.f32.mxu0 0.0
        %649 = vmatmul.mubr.f32.gmra.mrb[0].mxu0 %v432
        %v650 = vpop.f32.mrb[0].mxu0
        %v651 = vadd.f32 0.0, %v650
        %v652 = vpop.f32.mrb[0].mxu0
        %v653 = vadd.f32 0.0, %v652
        %654 = vmatprep.mubr.f32.mxu0 0.0
        %655 = vmatmul.mubr.f32.gmra.mrb[0].mxu0 %v435
        %v656 = vpop.f32.mrb[0].mxu0
        %v657 = vadd.f32 0.0, %v656
        %v658 = vpop.f32.mrb[0].mxu0
        %v659 = vadd.f32 0.0, %v658
        %660 = vmatprep.mubr.f32.mxu0 0.0
        %661 = vmatmul.mubr.f32.gmra.mrb[0].mxu0 %v438
        %v662 = vpop.f32.mrb[0].mxu0
        %v663 = vadd.f32 0.0, %v662
        %v664 = vpop.f32.mrb[0].mxu0
        %v665 = vadd.f32 0.0, %v664
        %666 = vmatprep.mubr.f32.mxu0 0.0
        %667 = vmatmul.mubr.f32.gmra.mrb[0].mxu0 %v441
        %v668 = vpop.f32.mrb[0].mxu0
        %v669 = vadd.f32 0.0, %v668
        %v670 = vpop.f32.mrb[0].mxu0
        %v671 = vadd.f32 0.0, %v670
        %672 = vmatprep.mubr.f32.mxu0 0.0
        %673 = vmatmul.mubr.f32.gmra.mrb[0].mxu0 %v444
        %v674 = vpop.f32.mrb[0].mxu0
        %v675 = vadd.f32 0.0, %v674
        %v676 = vpop.f32.mrb[0].mxu0
        %v677 = vadd.f32 0.0, %v676
        %678 = vdwg.mxu0
        %v679 = vpack.c.bf16 %v519, %v513
        %v680 = vpack.c.bf16 %v521, %v515
        %v681 = vpack.c.bf16 %v531, %v525
        %v682 = vpack.c.bf16 %v533, %v527
        %v683 = vpack.c.bf16 %v543, %v537
        %v684 = vpack.c.bf16 %v545, %v539
        %v685 = vpack.c.bf16 %v555, %v549
        %v686 = vpack.c.bf16 %v557, %v551
        %v687 = vpack.c.bf16 %v567, %v561
        %v688 = vpack.c.bf16 %v569, %v563
        %v689 = vpack.c.bf16 %v579, %v573
        %v690 = vpack.c.bf16 %v581, %v575
        %v691 = vpack.c.bf16 %v591, %v585
        %v692 = vpack.c.bf16 %v593, %v587
        %v693 = vpack.c.bf16 %v603, %v597
        %v694 = vpack.c.bf16 %v605, %v599
        %v695 = vpack.c.bf16 %v615, %v609
        %v696 = vpack.c.bf16 %v617, %v611
        %v697 = vpack.c.bf16 %v627, %v621
        %v698 = vpack.c.bf16 %v629, %v623
        %v699 = vpack.c.bf16 %v639, %v633
        %v700 = vpack.c.bf16 %v641, %v635
        %v701 = vpack.c.bf16 %v651, %v645
        %v702 = vpack.c.bf16 %v653, %v647
        %v703 = vpack.c.bf16 %v663, %v657
        %v704 = vpack.c.bf16 %v665, %v659
        %v705 = vpack.c.bf16 %v675, %v669
        %v706 = vpack.c.bf16 %v677, %v671
        %v735 = vunpack.c.l.b16 %v679
        %v736 = vunpack.c.l.b16 %v680
        %v737 = vunpack.c.h.b16 %v679
        %v738 = vunpack.c.h.b16 %v680
        %v739 = vunpack.c.l.b16 %v681
        %v740 = vunpack.c.l.b16 %v682
        %v741 = vunpack.c.h.b16 %v681
        %v742 = vunpack.c.h.b16 %v682
        %v743 = vunpack.c.l.b16 %v683
        %v744 = vunpack.c.l.b16 %v684
        %v745 = vunpack.c.h.b16 %v683
        %v746 = vunpack.c.h.b16 %v684
        %v747 = vunpack.c.l.b16 %v685
        %v748 = vunpack.c.l.b16 %v686
        %v749 = vunpack.c.h.b16 %v685
        %v750 = vunpack.c.h.b16 %v686
        %v751 = vunpack.c.l.b16 %v687
        %v752 = vunpack.c.l.b16 %v688
        %v753 = vunpack.c.h.b16 %v687
        %v754 = vunpack.c.h.b16 %v688
        %v755 = vunpack.c.l.b16 %v689
        %v756 = vunpack.c.l.b16 %v690
        %v757 = vunpack.c.h.b16 %v689
        %v758 = vunpack.c.h.b16 %v690
        %v759 = vunpack.c.l.b16 %v691
        %v760 = vunpack.c.l.b16 %v692
        %v761 = vunpack.c.h.b16 %v691
        %v762 = vunpack.c.h.b16 %v692
        %v763 = vunpack.c.l.b16 %v693
        %v764 = vunpack.c.l.b16 %v694
        %v765 = vunpack.c.h.b16 %v693
        %v766 = vunpack.c.h.b16 %v694
        %v767 = vunpack.c.l.b16 %v695
        %v768 = vunpack.c.l.b16 %v696
        %v769 = vunpack.c.h.b16 %v695
        %v770 = vunpack.c.h.b16 %v696
        %v771 = vunpack.c.l.b16 %v697
        %v772 = vunpack.c.l.b16 %v698
        %v773 = vunpack.c.h.b16 %v697
        %v774 = vunpack.c.h.b16 %v698
        %v775 = vunpack.c.l.b16 %v699
        %v776 = vunpack.c.l.b16 %v700
        %v777 = vunpack.c.h.b16 %v699
        %v778 = vunpack.c.h.b16 %v700
        %v779 = vunpack.c.l.b16 %v701
        %v780 = vunpack.c.l.b16 %v702
        %v781 = vunpack.c.h.b16 %v701
        %v782 = vunpack.c.h.b16 %v702
        %v783 = vunpack.c.l.b16 %v703
        %v784 = vunpack.c.l.b16 %v704
        %v785 = vunpack.c.h.b16 %v703
        %v786 = vunpack.c.h.b16 %v704
        %v787 = vunpack.c.l.b16 %v705
        %v788 = vunpack.c.l.b16 %v706
        %v789 = vunpack.c.h.b16 %v705
        %v790 = vunpack.c.h.b16 %v706
        %v791 = vpack.c.b16 %v736, %v735
        %v792 = vpack.c.b16 %v738, %v737
        %v793 = vpack.c.b16 %v740, %v739
        %v794 = vpack.c.b16 %v742, %v741
        %v795 = vpack.c.b16 %v744, %v743
        %v796 = vpack.c.b16 %v746, %v745
        %v797 = vpack.c.b16 %v748, %v747
        %v798 = vpack.c.b16 %v750, %v749
        %v799 = vpack.c.b16 %v752, %v751
        %v800 = vpack.c.b16 %v754, %v753
        %v801 = vpack.c.b16 %v756, %v755
        %v802 = vpack.c.b16 %v758, %v757
        %v803 = vpack.c.b16 %v760, %v759
        %v804 = vpack.c.b16 %v762, %v761
        %v805 = vpack.c.b16 %v764, %v763
        %v806 = vpack.c.b16 %v766, %v765
        %v807 = vpack.c.b16 %v768, %v767
        %v808 = vpack.c.b16 %v770, %v769
        %v809 = vpack.c.b16 %v772, %v771
        %v810 = vpack.c.b16 %v774, %v773
        %v811 = vpack.c.b16 %v776, %v775
        %v812 = vpack.c.b16 %v778, %v777
        %v813 = vpack.c.b16 %v780, %v779
        %v814 = vpack.c.b16 %v782, %v781
        %v815 = vpack.c.b16 %v784, %v783
        %v816 = vpack.c.b16 %v786, %v785
        %v817 = vpack.c.b16 %v788, %v787
        %v818 = vpack.c.b16 %v790, %v789
        %vm847 = vcmask 1043456
        %vm848 = vcmask 785412
        %vm849 = vmor %vm848, %vm847
        %850 = vst.msk [vmem:[%s219] sm:$0xff] %vm849, %v791
        %851 = vst.msk [vmem:[%s219 + $0x8] sm:$0xff] %vm849, %v792
        %852 = vst.msk [vmem:[%s219 + $0x10] sm:$0xff] %vm849, %v793
        %853 = vst.msk [vmem:[%s219 + $0x18] sm:$0xff] %vm849, %v794
        %854 = vst.msk [vmem:[%s219 + $0x20] sm:$0xff] %vm849, %v795
        %855 = vst.msk [vmem:[%s219 + $0x28] sm:$0xff] %vm849, %v796
        %856 = vst.msk [vmem:[%s219 + $0x30] sm:$0xff] %vm849, %v797
        %857 = vst.msk [vmem:[%s219 + $0x38] sm:$0xff] %vm849, %v798
        %858 = vst.msk [vmem:[%s219 + $0x40] sm:$0xff] %vm849, %v799
        %859 = vst.msk [vmem:[%s219 + $0x48] sm:$0xff] %vm849, %v800
        %860 = vst.msk [vmem:[%s219 + $0x50] sm:$0xff] %vm849, %v801
        %861 = vst.msk [vmem:[%s219 + $0x58] sm:$0xff] %vm849, %v802
        %862 = vst.msk [vmem:[%s219 + $0x60] sm:$0xff] %vm849, %v803
        %863 = vst.msk [vmem:[%s219 + $0x68] sm:$0xff] %vm849, %v804
        %864 = vst.msk [vmem:[%s219 + $0x70] sm:$0xff] %vm849, %v805
        %865 = vst.msk [vmem:[%s219 + $0x78] sm:$0xff] %vm849, %v806
        %866 = vst.msk [vmem:[%s219 + $0x80] sm:$0xff] %vm849, %v807
        %867 = vst.msk [vmem:[%s219 + $0x88] sm:$0xff] %vm849, %v808
        %868 = vst.msk [vmem:[%s219 + $0x90] sm:$0xff] %vm849, %v809
        %869 = vst.msk [vmem:[%s219 + $0x98] sm:$0xff] %vm849, %v810
        %870 = vst.msk [vmem:[%s219 + $0xa0] sm:$0xff] %vm849, %v811
        %871 = vst.msk [vmem:[%s219 + $0xa8] sm:$0xff] %vm849, %v812
        %872 = vst.msk [vmem:[%s219 + $0xb0] sm:$0xff] %vm849, %v813
        %873 = vst.msk [vmem:[%s219 + $0xb8] sm:$0xff] %vm849, %v814
        %874 = vst.msk [vmem:[%s219 + $0xc0] sm:$0xff] %vm849, %v815
        %875 = vst.msk [vmem:[%s219 + $0xc8] sm:$0xff] %vm849, %v816
        %876 = vst.msk [vmem:[%s219 + $0xd0] sm:$0xff] %vm849, %v817
        %877 = vst.msk [vmem:[%s219 + $0xd8] sm:$0xff] %vm849, %v818
        %p878 = scmp.lt.s32.totalorder %s18, 5
        %s879 = scalar_select %p878, %s18, 5
        %s880 = smul.addr %s879, 56
        %s881 = smul.addr %s880, 4
        %s882 = scalar_lea.vmem %s3, %s881
        // Predicated region
        $region45: #{clip_vision_forward.2} parent=31 // pred_check
          %p883 = pneg %p104
        $region46: #{clip_vision_forward.2} parent=31 // pred_check_branch
          %885 = sbr.rel (%p883) target = $region48
        $region47: #{clip_vision_forward.2} parent=31 // pred_region
          _
        $region48: #{clip_vision_forward.2} parent=31 // pred_fallthru
          _
      $region32: #{clip_vision_forward.2} parent=5 // pred_fallthru
        _
      %p886 = scmp.le.s32.totalorder 2, %s13
      // Predicated region
      $region49: #{clip_vision_forward.2} parent=5 // pred_check
        %p887 = pneg %p886
      $region50: #{clip_vision_forward.2} parent=5 // pred_check_branch
        %889 = sbr.rel (%p887) target = $region52
      $region51: #{clip_vision_forward.2} parent=5 // pred_region
        %s890 = ssub.s32 %s13, 2
        // Predicated region
        $region53: #{clip_vision_forward.2} parent=51 // pred_check
          %p891 = pneg %p110
        $region54: #{clip_vision_forward.2} parent=51 // pred_check_branch
          %893 = sbr.rel (%p891) target = $region56
        $region55: #{clip_vision_forward.2} parent=51 // pred_region
          %p894 = scmp.lt.s32.totalorder %s19, 5
          %s895 = scalar_select %p894, %s19, 5
          %s896 = smul.addr %s895, 56
          %s897 = smul.addr %s896, 4
          %s898 = scalar_lea.vmem %s3, %s897
        $region56: #{clip_vision_forward.2} parent=51 // pred_fallthru
          _
      $region52: #{clip_vision_forward.2} parent=5 // pred_fallthru
        _
    $region6: #{clip_vision_forward.2} parent=1 // loop_footer
      %s17 = sadd.s32 1, %s13
    $region7: #{clip_vision_forward.2} parent=1 // loop_footer_branch
      %12 = sbr.rel target = $region3
    $region8: #{clip_vision_forward.2} parent=1 // loop_exit
      _
    %899 = vsyncpa [#allocation3], 1
    %s900 = scalar_lea.sflag [#allocation3], 1
    %901 = vsyncpa %s900, 1
    %902 = vsyncpa [#allocation5], 1

// kernel: clip_vision_forward.3
$region0: #{clip_vision_forward.3}
  #allocation0 [shape = 'u32[]', space=smem, size = 0x4, offset = 0x4, fixed_abs, tag = 'smem constant byte address 0x4 - core index']
  #allocation1 [shape = 'u32[144,128]{1,0:T(1,128)}', space=vmem, size = 0x12000, scoped, tag = 'internal scratch']
  #allocation2 [shape = 'bf16[112,384]{1,0:T(16,128)(2,1)}', space=vmem, size = 0x15000, scoped, tag = 'scratch operand']
  #allocation3 [shape = 'bf16[112,64]{1,0:T(16,128)(2,1)}', space=vmem, size = 0x7000, scoped, tag = 'scratch operand']
  %s0 = inlined_call_operand.vmem [shape: bf16[112,3072], index: 0, kind: input, shape index: {}]
  %s1 = inlined_call_operand.vmem [shape: bf16[3072,128], index: 1, kind: input, shape index: {}]
  %s2 = inlined_call_operand.vmem [shape: f32[56,128], index: 2, kind: input, shape index: {}]
  %s3 = inlined_call_operand.vmem [shape: f32[1,128], index: 3, kind: input, shape index: {}]
  %s4 = inlined_call_operand.vmem [shape: f32[1,128], index: 4, kind: input, shape index: {}]
  %s5 = inlined_call_operand.vmem [shape: f32[1,56], index: 5, kind: input, shape index: {}]
  %s6 = inlined_call_operand.vmem [shape: f32[2,1,128], index: 6, kind: input, shape index: {}]
  %s7 = inlined_call_operand.vmem [shape: f32[2,1,128], index: 7, kind: input, shape index: {}]
  %s8 = inlined_call_operand.vmem [shape: bf16[2,128,384], index: 8, kind: input, shape index: {}]
  %s9 = inlined_call_operand.vmem [shape: f32[2,1,384], index: 9, kind: input, shape index: {}]
  %s10 = inlined_call_operand.vmem [shape: bf16[2,64,128], index: 10, kind: input, shape index: {}]
  %s11 = inlined_call_operand.vmem [shape: f32[2,1,128], index: 11, kind: input, shape index: {}]
  %s12 = inlined_call_operand.vmem [shape: f32[2,1,128], index: 12, kind: input, shape index: {}]
  %s13 = inlined_call_operand.vmem [shape: f32[2,1,128], index: 13, kind: input, shape index: {}]
  %s14 = inlined_call_operand.vmem [shape: bf16[2,128,256], index: 14, kind: input, shape index: {}]
  %s15 = inlined_call_operand.vmem [shape: f32[2,1,256], index: 15, kind: input, shape index: {}]
  %s16 = inlined_call_operand.vmem [shape: bf16[2,256,128], index: 16, kind: input, shape index: {}]
  %s17 = inlined_call_operand.vmem [shape: f32[2,1,128], index: 17, kind: input, shape index: {}]
  %s18 = inlined_call_operand.vmem [shape: f32[1,128], index: 18, kind: input, shape index: {}]
  %s19 = inlined_call_operand.vmem [shape: f32[1,128], index: 19, kind: input, shape index: {}]
  %s20 = inlined_call_operand.vmem [shape: bf16[128,32], index: 20, kind: input, shape index: {}]
  %s21 = inlined_call_operand.hbm [shape: f32[112,128], index: 21, kind: output, shape index: {0}]
  %s22 = inlined_call_operand.hbm [shape: f32[2,32], index: 22, kind: output, shape index: {1}]
  %23 = xla_tuple %s21, %s22
  %s24 = sld [smem:[#allocation0]]
  $region133: #{clip_vision_forward.3} parent=0
    _
  %s26 = ssub.s32 1, %s24
  %s27 = scalar_select 0, %s26, %s24
  $region1: #{clip_vision_forward.3} parent=0
    #allocation4 [shape = 'u8[57344]{0}', space=vmem, size = 0xe000, scoped, tag = 'output window, operand 0, single buffered']
    #allocation5 [shape = 's32[2]{0}', space=sflag, size = 0x8, scoped, tag = 'scoped memory for clip_vision_forward.3']
    #allocation6 [shape = 'u8[1024]{0}', space=vmem, size = 0x400, scoped, tag = 'output window, operand 1, single buffered']
    #allocation7 [shape = 's32[1]{0}', space=sflag, size = 0x4, scoped, tag = 'scoped memory for clip_vision_forward.3']
    %28 = vsyncpa [#allocation5], 0
    %29 = vsyncpa [#allocation7], 0
    loop: start=0, step=1, limit=4
    $region2: #{clip_vision_forward.3} parent=1 // loop_pre_header
      _
    $region3: #{clip_vision_forward.3} parent=1 // loop_header
      %s31 = sphi 0, %s35
      %p32 = scmp.ge.s32.totalorder %s31, 4
      %s39 = sphi 0, %s39
      %s41 = sphi 0, %s39
      %s42 = sphi 0, %s41
      %s56 = sphi 0, %s42
      %s60 = sphi 0, %s60
      %s62 = sphi 0, %s60
      %s63 = sphi 0, %s62
      %s77 = sphi 0, %s63
      %s81 = sphi 0, %s81
      %s83 = sphi 0, %s81
      %s84 = sphi 0, %s83
      %s98 = sphi 0, %s84
      %s102 = sphi 0, %s102
      %s104 = sphi 0, %s102
      %s105 = sphi 0, %s104
      %s119 = sphi 0, %s105
      %s123 = sphi 0, %s123
      %s125 = sphi 0, %s123
      %s126 = sphi 0, %s125
      %s140 = sphi 0, %s126
      %s144 = sphi 0, %s144
      %s146 = sphi 0, %s144
      %s147 = sphi 0, %s146
      %s161 = sphi 0, %s147
      %s167 = sphi 0, %s169
      %s170 = sphi 0, %s167
      %s171 = sphi 0, %s170
      %s187 = sphi 0, %s171
      %s193 = sphi 0, %s195
      %s196 = sphi 0, %s193
      %s197 = sphi 0, %s196
      %s213 = sphi 0, %s197
      %s219 = sphi 0, %s221
      %s222 = sphi 0, %s219
      %s223 = sphi 0, %s222
      %s239 = sphi 0, %s223
      %s245 = sphi 0, %s247
      %s248 = sphi 0, %s245
      %s249 = sphi 0, %s248
      %s265 = sphi 0, %s249
      %s271 = sphi 0, %s273
      %s274 = sphi 0, %s271
      %s275 = sphi 0, %s274
      %s291 = sphi 0, %s275
      %s297 = sphi 0, %s299
      %s300 = sphi 0, %s297
      %s301 = sphi 0, %s300
      %s317 = sphi 0, %s301
      %s323 = sphi 0, %s325
      %s326 = sphi 0, %s323
      %s327 = sphi 0, %s326
      %s343 = sphi 0, %s327
      %s349 = sphi 0, %s351
      %s352 = sphi 0, %s349
      %s353 = sphi 0, %s352
      %s369 = sphi 0, %s353
      %s375 = sphi 0, %s377
      %s378 = sphi 0, %s375
      %s379 = sphi 0, %s378
      %s395 = sphi 0, %s379
      %s401 = sphi 0, %s403
      %s404 = sphi 0, %s401
      %s405 = sphi 0, %s404
      %s421 = sphi 0, %s405
      %s427 = sphi 0, %s429
      %s430 = sphi 0, %s427
      %s431 = sphi 0, %s430
      %s447 = sphi 0, %s431
      %s453 = sphi 0, %s455
      %s456 = sphi 0, %s453
      %s457 = sphi 0, %s456
      %s473 = sphi 0, %s457
      %s477 = sphi 0, %s477
      %s479 = sphi 0, %s477
      %s480 = sphi 0, %s479
      %s494 = sphi 0, %s480
      %s498 = sphi 0, %s498
      %s500 = sphi 0, %s498
      %s501 = sphi 0, %s500
      %s515 = sphi 0, %s501
      %s519 = sphi 0, %s519
      %s521 = sphi 0, %s519
      %s522 = sphi 0, %s521
      %s536 = sphi 0, %s522
      %s540 = sphi 0, %s540
      %s542 = sphi 0, %s540
      %s543 = sphi 0, %s542
      %s557 = sphi 0, %s543
      %s561 = sphi 0, %s561
      %s563 = sphi 0, %s561
      %s564 = sphi 0, %s563
      %s578 = sphi 0, %s564
    $region4: #{clip_vision_forward.3} parent=1 // loop_header_branch
      %34 = sbr.rel (%p32) target = $region8
    $region5: #{clip_vision_forward.3} parent=1 // loop_body
      %s36 = ssub.s32 %s31, 1
      %s37 = ssub.s32 %s31, 2
      %s38 = sadd.s32 %s31, 1
      %s40 = sadd.s32 %s39, 1
      %p43 = scmp.eq.s32.totalorder %s31, 1
      %p44 = scmp.ne.s32.totalorder %s39, %s41
      %p45 = scmp.eq.s32.totalorder %s31, 0
      %p46 = por %p44, %p45
      %p47 = scmp.ne.s32.totalorder %s39, %s41
      %p48 = scmp.eq.s32.totalorder %s36, 1
      %p49 = por %p47, %p48
      %p50 = scmp.ne.s32.totalorder %s41, %s42
      %p51 = scmp.eq.s32.totalorder %s36, 0
      %p52 = por %p50, %p51
      %p53 = scmp.ne.s32.totalorder %s41, %s42
      %p54 = scmp.eq.s32.totalorder %s37, 1
      %p55 = por %p53, %p54
      %p57 = scmp.ne.s32.totalorder %s42, %s56
      %p58 = scmp.eq.s32.totalorder %s37, 0
      %p59 = por %p57, %p58
      %s61 = sadd.s32 %s60, 1
      %p64 = scmp.eq.s32.totalorder %s31, 1
      %p65 = scmp.ne.s32.totalorder %s60, %s62
      %p66 = scmp.eq.s32.totalorder %s31, 0
      %p67 = por %p65, %p66
      %p68 = scmp.ne.s32.totalorder %s60, %s62
      %p69 = scmp.eq.s32.totalorder %s36, 1
      %p70 = por %p68, %p69
      %p71 = scmp.ne.s32.totalorder %s62, %s63
      %p72 = scmp.eq.s32.totalorder %s36, 0
      %p73 = por %p71, %p72
      %p74 = scmp.ne.s32.totalorder %s62, %s63
      %p75 = scmp.eq.s32.totalorder %s37, 1
      %p76 = por %p74, %p75
      %p78 = scmp.ne.s32.totalorder %s63, %s77
      %p79 = scmp.eq.s32.totalorder %s37, 0
      %p80 = por %p78, %p79
      %s82 = sadd.s32 %s81, 1
      %p85 = scmp.eq.s32.totalorder %s31, 1
      %p86 = scmp.ne.s32.totalorder %s81, %s83
      %p87 = scmp.eq.s32.totalorder %s31, 0
      %p88 = por %p86, %p87
      %p89 = scmp.ne.s32.totalorder %s81, %s83
      %p90 = scmp.eq.s32.totalorder %s36, 1
      %p91 = por %p89, %p90
      %p92 = scmp.ne.s32.totalorder %s83, %s84
      %p93 = scmp.eq.s32.totalorder %s36, 0
      %p94 = por %p92, %p93
      %p95 = scmp.ne.s32.totalorder %s83, %s84
      %p96 = scmp.eq.s32.totalorder %s37, 1
      %p97 = por %p95, %p96
      %p99 = scmp.ne.s32.totalorder %s84, %s98
      %p100 = scmp.eq.s32.totalorder %s37, 0
      %p101 = por %p99, %p100
      %s103 = sadd.s32 %s102, 1
      %p106 = scmp.eq.s32.totalorder %s31, 1
      %p107 = scmp.ne.s32.totalorder %s102, %s104
      %p108 = scmp.eq.s32.totalorder %s31, 0
      %p109 = por %p107, %p108
      %p110 = scmp.ne.s32.totalorder %s102, %s104
      %p111 = scmp.eq.s32.totalorder %s36, 1
      %p112 = por %p110, %p111
      %p113 = scmp.ne.s32.totalorder %s104, %s105
      %p114 = scmp.eq.s32.totalorder %s36, 0
      %p115 = por %p113, %p114
      %p116 = scmp.ne.s32.totalorder %s104, %s105
      %p117 = scmp.eq.s32.totalorder %s37, 1
      %p118 = por %p116, %p117
      %p120 = scmp.ne.s32.totalorder %s105, %s119
      %p121 = scmp.eq.s32.totalorder %s37, 0
      %p122 = por %p120, %p121
      %s124 = sadd.s32 %s123, 1
      %p127 = scmp.eq.s32.totalorder %s31, 1
      %p128 = scmp.ne.s32.totalorder %s123, %s125
      %p129 = scmp.eq.s32.totalorder %s31, 0
      %p130 = por %p128, %p129
      %p131 = scmp.ne.s32.totalorder %s123, %s125
      %p132 = scmp.eq.s32.totalorder %s36, 1
      %p133 = por %p131, %p132
      %p134 = scmp.ne.s32.totalorder %s125, %s126
      %p135 = scmp.eq.s32.totalorder %s36, 0
      %p136 = por %p134, %p135
      %p137 = scmp.ne.s32.totalorder %s125, %s126
      %p138 = scmp.eq.s32.totalorder %s37, 1
      %p139 = por %p137, %p138
      %p141 = scmp.ne.s32.totalorder %s126, %s140
      %p142 = scmp.eq.s32.totalorder %s37, 0
      %p143 = por %p141, %p142
      %s145 = sadd.s32 %s144, 1
      %p148 = scmp.eq.s32.totalorder %s31, 1
      %p149 = scmp.ne.s32.totalorder %s144, %s146
      %p150 = scmp.eq.s32.totalorder %s31, 0
      %p151 = por %p149, %p150
      %p152 = scmp.ne.s32.totalorder %s144, %s146
      %p153 = scmp.eq.s32.totalorder %s36, 1
      %p154 = por %p152, %p153
      %p155 = scmp.ne.s32.totalorder %s146, %s147
      %p156 = scmp.eq.s32.totalorder %s36, 0
      %p157 = por %p155, %p156
      %p158 = scmp.ne.s32.totalorder %s146, %s147
      %p159 = scmp.eq.s32.totalorder %s37, 1
      %p160 = por %p158, %p159
      %p162 = scmp.ne.s32.totalorder %s147, %s161
      %p163 = scmp.eq.s32.totalorder %s37, 0
      %p164 = por %p162, %p163
      %s165 = ssub.s32 %s31, %s38
      %p166 = scmp.eq.s32.totalorder %s165, 0
      %s168 = sadd.s32 %s167, 1
      %s169 = scalar_select %p166, %s167, %s168
      %p172 = pneg %p166
      %p173 = scmp.eq.s32.totalorder %s31, 1
      %p174 = por %p172, %p173
      %p175 = scmp.ne.s32.totalorder %s167, %s170
      %p176 = scmp.eq.s32.totalorder %s31, 0
      %p177 = por %p175, %p176
      %p178 = scmp.ne.s32.totalorder %s167, %s170
      %p179 = scmp.eq.s32.totalorder %s36, 1
      %p180 = por %p178, %p179
      %p181 = scmp.ne.s32.totalorder %s170, %s171
      %p182 = scmp.eq.s32.totalorder %s36, 0
      %p183 = por %p181, %p182
      %p184 = scmp.ne.s32.totalorder %s170, %s171
      %p185 = scmp.eq.s32.totalorder %s37, 1
      %p186 = por %p184, %p185
      %p188 = scmp.ne.s32.totalorder %s171, %s187
      %p189 = scmp.eq.s32.totalorder %s37, 0
      %p190 = por %p188, %p189
      %s191 = ssub.s32 %s31, %s38
      %p192 = scmp.eq.s32.totalorder %s191, 0
      %s194 = sadd.s32 %s193, 1
      %s195 = scalar_select %p192, %s193, %s194
      %p198 = pneg %p192
      %p199 = scmp.eq.s32.totalorder %s31, 1
      %p200 = por %p198, %p199
      %p201 = scmp.ne.s32.totalorder %s193, %s196
      %p202 = scmp.eq.s32.totalorder %s31, 0
      %p203 = por %p201, %p202
      %p204 = scmp.ne.s32.totalorder %s193, %s196
      %p205 = scmp.eq.s32.totalorder %s36, 1
      %p206 = por %p204, %p205
      %p207 = scmp.ne.s32.totalorder %s196, %s197
      %p208 = scmp.eq.s32.totalorder %s36, 0
      %p209 = por %p207, %p208
      %p210 = scmp.ne.s32.totalorder %s196, %s197
      %p211 = scmp.eq.s32.totalorder %s37, 1
      %p212 = por %p210, %p211
      %p214 = scmp.ne.s32.totalorder %s197, %s213
      %p215 = scmp.eq.s32.totalorder %s37, 0
      %p216 = por %p214, %p215
      %s217 = ssub.s32 %s31, %s38
      %p218 = scmp.eq.s32.totalorder %s217, 0
      %s220 = sadd.s32 %s219, 1
      %s221 = scalar_select %p218, %s219, %s220
      %p224 = pneg %p218
      %p225 = scmp.eq.s32.totalorder %s31, 1
      %p226 = por %p224, %p225
      %p227 = scmp.ne.s32.totalorder %s219, %s222
      %p228 = scmp.eq.s32.totalorder %s31, 0
      %p229 = por %p227, %p228
      %p230 = scmp.ne.s32.totalorder %s219, %s222
      %p231 = scmp.eq.s32.totalorder %s36, 1
      %p232 = por %p230, %p231
      %p233 = scmp.ne.s32.totalorder %s222, %s223
      %p234 = scmp.eq.s32.totalorder %s36, 0
      %p235 = por %p233, %p234
      %p236 = scmp.ne.s32.totalorder %s222, %s223
      %p237 = scmp.eq.s32.totalorder %s37, 1
      %p238 = por %p236, %p237
      %p240 = scmp.ne.s32.totalorder %s223, %s239
      %p241 = scmp.eq.s32.totalorder %s37, 0
      %p242 = por %p240, %p241
      %s243 = ssub.s32 %s31, %s38
      %p244 = scmp.eq.s32.totalorder %s243, 0
      %s246 = sadd.s32 %s245, 1
      %s247 = scalar_select %p244, %s245, %s246
      %p250 = pneg %p244
      %p251 = scmp.eq.s32.totalorder %s31, 1
      %p252 = por %p250, %p251
      %p253 = scmp.ne.s32.totalorder %s245, %s248
      %p254 = scmp.eq.s32.totalorder %s31, 0
      %p255 = por %p253, %p254
      %p256 = scmp.ne.s32.totalorder %s245, %s248
      %p257 = scmp.eq.s32.totalorder %s36, 1
      %p258 = por %p256, %p257
      %p259 = scmp.ne.s32.totalorder %s248, %s249
      %p260 = scmp.eq.s32.totalorder %s36, 0
      %p261 = por %p259, %p260
      %p262 = scmp.ne.s32.totalorder %s248, %s249
      %p263 = scmp.eq.s32.totalorder %s37, 1
      %p264 = por %p262, %p263
      %p266 = scmp.ne.s32.totalorder %s249, %s265
      %p267 = scmp.eq.s32.totalorder %s37, 0
      %p268 = por %p266, %p267
      %s269 = ssub.s32 %s31, %s38
      %p270 = scmp.eq.s32.totalorder %s269, 0
      %s272 = sadd.s32 %s271, 1
      %s273 = scalar_select %p270, %s271, %s272
      %p276 = pneg %p270
      %p277 = scmp.eq.s32.totalorder %s31, 1
      %p278 = por %p276, %p277
      %p279 = scmp.ne.s32.totalorder %s271, %s274
      %p280 = scmp.eq.s32.totalorder %s31, 0
      %p281 = por %p279, %p280
      %p282 = scmp.ne.s32.totalorder %s271, %s274
      %p283 = scmp.eq.s32.totalorder %s36, 1
      %p284 = por %p282, %p283
      %p285 = scmp.ne.s32.totalorder %s274, %s275
      %p286 = scmp.eq.s32.totalorder %s36, 0
      %p287 = por %p285, %p286
      %p288 = scmp.ne.s32.totalorder %s274, %s275
      %p289 = scmp.eq.s32.totalorder %s37, 1
      %p290 = por %p288, %p289
      %p292 = scmp.ne.s32.totalorder %s275, %s291
      %p293 = scmp.eq.s32.totalorder %s37, 0
      %p294 = por %p292, %p293
      %s295 = ssub.s32 %s31, %s38
      %p296 = scmp.eq.s32.totalorder %s295, 0
      %s298 = sadd.s32 %s297, 1
      %s299 = scalar_select %p296, %s297, %s298
      %p302 = pneg %p296
      %p303 = scmp.eq.s32.totalorder %s31, 1
      %p304 = por %p302, %p303
      %p305 = scmp.ne.s32.totalorder %s297, %s300
      %p306 = scmp.eq.s32.totalorder %s31, 0
      %p307 = por %p305, %p306
      %p308 = scmp.ne.s32.totalorder %s297, %s300
      %p309 = scmp.eq.s32.totalorder %s36, 1
      %p310 = por %p308, %p309
      %p311 = scmp.ne.s32.totalorder %s300, %s301
      %p312 = scmp.eq.s32.totalorder %s36, 0
      %p313 = por %p311, %p312
      %p314 = scmp.ne.s32.totalorder %s300, %s301
      %p315 = scmp.eq.s32.totalorder %s37, 1
      %p316 = por %p314, %p315
      %p318 = scmp.ne.s32.totalorder %s301, %s317
      %p319 = scmp.eq.s32.totalorder %s37, 0
      %p320 = por %p318, %p319
      %s321 = ssub.s32 %s31, %s38
      %p322 = scmp.eq.s32.totalorder %s321, 0
      %s324 = sadd.s32 %s323, 1
      %s325 = scalar_select %p322, %s323, %s324
      %p328 = pneg %p322
      %p329 = scmp.eq.s32.totalorder %s31, 1
      %p330 = por %p328, %p329
      %p331 = scmp.ne.s32.totalorder %s323, %s326
      %p332 = scmp.eq.s32.totalorder %s31, 0
      %p333 = por %p331, %p332
      %p334 = scmp.ne.s32.totalorder %s323, %s326
      %p335 = scmp.eq.s32.totalorder %s36, 1
      %p336 = por %p334, %p335
      %p337 = scmp.ne.s32.totalorder %s326, %s327
      %p338 = scmp.eq.s32.totalorder %s36, 0
      %p339 = por %p337, %p338
      %p340 = scmp.ne.s32.totalorder %s326, %s327
      %p341 = scmp.eq.s32.totalorder %s37, 1
      %p342 = por %p340, %p341
      %p344 = scmp.ne.s32.totalorder %s327, %s343
      %p345 = scmp.eq.s32.totalorder %s37, 0
      %p346 = por %p344, %p345
      %s347 = ssub.s32 %s31, %s38
      %p348 = scmp.eq.s32.totalorder %s347, 0
      %s350 = sadd.s32 %s349, 1
      %s351 = scalar_select %p348, %s349, %s350
      %p354 = pneg %p348
      %p355 = scmp.eq.s32.totalorder %s31, 1
      %p356 = por %p354, %p355
      %p357 = scmp.ne.s32.totalorder %s349, %s352
      %p358 = scmp.eq.s32.totalorder %s31, 0
      %p359 = por %p357, %p358
      %p360 = scmp.ne.s32.totalorder %s349, %s352
      %p361 = scmp.eq.s32.totalorder %s36, 1
      %p362 = por %p360, %p361
      %p363 = scmp.ne.s32.totalorder %s352, %s353
      %p364 = scmp.eq.s32.totalorder %s36, 0
      %p365 = por %p363, %p364
      %p366 = scmp.ne.s32.totalorder %s352, %s353
      %p367 = scmp.eq.s32.totalorder %s37, 1
      %p368 = por %p366, %p367
      %p370 = scmp.ne.s32.totalorder %s353, %s369
      %p371 = scmp.eq.s32.totalorder %s37, 0
      %p372 = por %p370, %p371
      %s373 = ssub.s32 %s31, %s38
      %p374 = scmp.eq.s32.totalorder %s373, 0
      %s376 = sadd.s32 %s375, 1
      %s377 = scalar_select %p374, %s375, %s376
      %p380 = pneg %p374
      %p381 = scmp.eq.s32.totalorder %s31, 1
      %p382 = por %p380, %p381
      %p383 = scmp.ne.s32.totalorder %s375, %s378
      %p384 = scmp.eq.s32.totalorder %s31, 0
      %p385 = por %p383, %p384
      %p386 = scmp.ne.s32.totalorder %s375, %s378
      %p387 = scmp.eq.s32.totalorder %s36, 1
      %p388 = por %p386, %p387
      %p389 = scmp.ne.s32.totalorder %s378, %s379
      %p390 = scmp.eq.s32.totalorder %s36, 0
      %p391 = por %p389, %p390
      %p392 = scmp.ne.s32.totalorder %s378, %s379
      %p393 = scmp.eq.s32.totalorder %s37, 1
      %p394 = por %p392, %p393
      %p396 = scmp.ne.s32.totalorder %s379, %s395
      %p397 = scmp.eq.s32.totalorder %s37, 0
      %p398 = por %p396, %p397
      %s399 = ssub.s32 %s31, %s38
      %p400 = scmp.eq.s32.totalorder %s399, 0
      %s402 = sadd.s32 %s401, 1
      %s403 = scalar_select %p400, %s401, %s402
      %p406 = pneg %p400
      %p407 = scmp.eq.s32.totalorder %s31, 1
      %p408 = por %p406, %p407
      %p409 = scmp.ne.s32.totalorder %s401, %s404
      %p410 = scmp.eq.s32.totalorder %s31, 0
      %p411 = por %p409, %p410
      %p412 = scmp.ne.s32.totalorder %s401, %s404
      %p413 = scmp.eq.s32.totalorder %s36, 1
      %p414 = por %p412, %p413
      %p415 = scmp.ne.s32.totalorder %s404, %s405
      %p416 = scmp.eq.s32.totalorder %s36, 0
      %p417 = por %p415, %p416
      %p418 = scmp.ne.s32.totalorder %s404, %s405
      %p419 = scmp.eq.s32.totalorder %s37, 1
      %p420 = por %p418, %p419
      %p422 = scmp.ne.s32.totalorder %s405, %s421
      %p423 = scmp.eq.s32.totalorder %s37, 0
      %p424 = por %p422, %p423
      %s425 = ssub.s32 %s31, %s38
      %p426 = scmp.eq.s32.totalorder %s425, 0
      %s428 = sadd.s32 %s427, 1
      %s429 = scalar_select %p426, %s427, %s428
      %p432 = pneg %p426
      %p433 = scmp.eq.s32.totalorder %s31, 1
      %p434 = por %p432, %p433
      %p435 = scmp.ne.s32.totalorder %s427, %s430
      %p436 = scmp.eq.s32.totalorder %s31, 0
      %p437 = por %p435, %p436
      %p438 = scmp.ne.s32.totalorder %s427, %s430
      %p439 = scmp.eq.s32.totalorder %s36, 1
      %p440 = por %p438, %p439
      %p441 = scmp.ne.s32.totalorder %s430, %s431
      %p442 = scmp.eq.s32.totalorder %s36, 0
      %p443 = por %p441, %p442
      %p444 = scmp.ne.s32.totalorder %s430, %s431
      %p445 = scmp.eq.s32.totalorder %s37, 1
      %p446 = por %p444, %p445
      %p448 = scmp.ne.s32.totalorder %s431, %s447
      %p449 = scmp.eq.s32.totalorder %s37, 0
      %p450 = por %p448, %p449
      %s451 = ssub.s32 %s31, %s38
      %p452 = scmp.eq.s32.totalorder %s451, 0
      %s454 = sadd.s32 %s453, 1
      %s455 = scalar_select %p452, %s453, %s454
      %p458 = pneg %p452
      %p459 = scmp.eq.s32.totalorder %s31, 1
      %p460 = por %p458, %p459
      %p461 = scmp.ne.s32.totalorder %s453, %s456
      %p462 = scmp.eq.s32.totalorder %s31, 0
      %p463 = por %p461, %p462
      %p464 = scmp.ne.s32.totalorder %s453, %s456
      %p465 = scmp.eq.s32.totalorder %s36, 1
      %p466 = por %p464, %p465
      %p467 = scmp.ne.s32.totalorder %s456, %s457
      %p468 = scmp.eq.s32.totalorder %s36, 0
      %p469 = por %p467, %p468
      %p470 = scmp.ne.s32.totalorder %s456, %s457
      %p471 = scmp.eq.s32.totalorder %s37, 1
      %p472 = por %p470, %p471
      %p474 = scmp.ne.s32.totalorder %s457, %s473
      %p475 = scmp.eq.s32.totalorder %s37, 0
      %p476 = por %p474, %p475
      %s478 = sadd.s32 %s477, 1
      %p481 = scmp.eq.s32.totalorder %s31, 1
      %p482 = scmp.ne.s32.totalorder %s477, %s479
      %p483 = scmp.eq.s32.totalorder %s31, 0
      %p484 = por %p482, %p483
      %p485 = scmp.ne.s32.totalorder %s477, %s479
      %p486 = scmp.eq.s32.totalorder %s36, 1
      %p487 = por %p485, %p486
      %p488 = scmp.ne.s32.totalorder %s479, %s480
      %p489 = scmp.eq.s32.totalorder %s36, 0
      %p490 = por %p488, %p489
      %p491 = scmp.ne.s32.totalorder %s479, %s480
      %p492 = scmp.eq.s32.totalorder %s37, 1
      %p493 = por %p491, %p492
      %p495 = scmp.ne.s32.totalorder %s480, %s494
      %p496 = scmp.eq.s32.totalorder %s37, 0
      %p497 = por %p495, %p496
      %s499 = sadd.s32 %s498, 1
      %p502 = scmp.eq.s32.totalorder %s31, 1
      %p503 = scmp.ne.s32.totalorder %s498, %s500
      %p504 = scmp.eq.s32.totalorder %s31, 0
      %p505 = por %p503, %p504
      %p506 = scmp.ne.s32.totalorder %s498, %s500
      %p507 = scmp.eq.s32.totalorder %s36, 1
      %p508 = por %p506, %p507
      %p509 = scmp.ne.s32.totalorder %s500, %s501
      %p510 = scmp.eq.s32.totalorder %s36, 0
      %p511 = por %p509, %p510
      %p512 = scmp.ne.s32.totalorder %s500, %s501
      %p513 = scmp.eq.s32.totalorder %s37, 1
      %p514 = por %p512, %p513
      %p516 = scmp.ne.s32.totalorder %s501, %s515
      %p517 = scmp.eq.s32.totalorder %s37, 0
      %p518 = por %p516, %p517
      %s520 = sadd.s32 %s519, 1
      %p523 = scmp.eq.s32.totalorder %s31, 1
      %p524 = scmp.ne.s32.totalorder %s519, %s521
      %p525 = scmp.eq.s32.totalorder %s31, 0
      %p526 = por %p524, %p525
      %p527 = scmp.ne.s32.totalorder %s519, %s521
      %p528 = scmp.eq.s32.totalorder %s36, 1
      %p529 = por %p527, %p528
      %p530 = scmp.ne.s32.totalorder %s521, %s522
      %p531 = scmp.eq.s32.totalorder %s36, 0
      %p532 = por %p530, %p531
      %p533 = scmp.ne.s32.totalorder %s521, %s522
      %p534 = scmp.eq.s32.totalorder %s37, 1
      %p535 = por %p533, %p534
      %p537 = scmp.ne.s32.totalorder %s522, %s536
      %p538 = scmp.eq.s32.totalorder %s37, 0
      %p539 = por %p537, %p538
      %s541 = sadd.s32 %s540, 1
      %p544 = scmp.eq.s32.totalorder %s31, 1
      %p545 = scmp.ne.s32.totalorder %s540, %s542
      %p546 = scmp.eq.s32.totalorder %s31, 0
      %p547 = por %p545, %p546
      %p548 = scmp.ne.s32.totalorder %s540, %s542
      %p549 = scmp.eq.s32.totalorder %s36, 1
      %p550 = por %p548, %p549
      %p551 = scmp.ne.s32.totalorder %s542, %s543
      %p552 = scmp.eq.s32.totalorder %s36, 0
      %p553 = por %p551, %p552
      %p554 = scmp.ne.s32.totalorder %s542, %s543
      %p555 = scmp.eq.s32.totalorder %s37, 1
      %p556 = por %p554, %p555
      %p558 = scmp.ne.s32.totalorder %s543, %s557
      %p559 = scmp.eq.s32.totalorder %s37, 0
      %p560 = por %p558, %p559
      %s562 = sadd.s32 %s561, 1
      %p565 = scmp.eq.s32.totalorder %s31, 1
      %p566 = scmp.ne.s32.totalorder %s561, %s563
      %p567 = scmp.eq.s32.totalorder %s31, 0
      %p568 = por %p566, %p567
      %p569 = scmp.ne.s32.totalorder %s561, %s563
      %p570 = scmp.eq.s32.totalorder %s36, 1
      %p571 = por %p569, %p570
      %p572 = scmp.ne.s32.totalorder %s563, %s564
      %p573 = scmp.eq.s32.totalorder %s36, 0
      %p574 = por %p572, %p573
      %p575 = scmp.ne.s32.totalorder %s563, %s564
      %p576 = scmp.eq.s32.totalorder %s37, 1
      %p577 = por %p575, %p576
      %p579 = scmp.ne.s32.totalorder %s564, %s578
      %p580 = scmp.eq.s32.totalorder %s37, 0
      %p581 = por %p579, %p580
      %p582 = scmp.le.s32.totalorder 1, %s31
      %p583 = scmp.lt.s32.totalorder %s31, 3
      %p584 = pnand %p582, %p583
      %p585 = pneg %p584
      // Predicated region
      $region9: #{clip_vision_forward.3} parent=5 // pred_check
        _
      $region10: #{clip_vision_forward.3} parent=5 // pred_check_branch
        %587 = sbr.rel (%p584) target = $region12
      $region11: #{clip_vision_forward.3} parent=5 // pred_region
        %s588 = ssub.s32 %s31, 1
        // Predicated region
        $region13: #{clip_vision_forward.3} parent=11 // pred_check
          %p589 = pneg %p52
        $region14: #{clip_vision_forward.3} parent=11 // pred_check_branch
          %591 = sbr.rel (%p589) target = $region16
        $region15: #{clip_vision_forward.3} parent=11 // pred_region
          _
        $region16: #{clip_vision_forward.3} parent=11 // pred_fallthru
          _
        // Predicated region
        $region17: #{clip_vision_forward.3} parent=11 // pred_check
          %p592 = pneg %p73
        $region18: #{clip_vision_forward.3} parent=11 // pred_check_branch
          %594 = sbr.rel (%p592) target = $region20
        $region19: #{clip_vision_forward.3} parent=11 // pred_region
          _
        $region20: #{clip_vision_forward.3} parent=11 // pred_fallthru
          _
        // Predicated region
        $region21: #{clip_vision_forward.3} parent=11 // pred_check
          %p595 = pneg %p94
        $region22: #{clip_vision_forward.3} parent=11 // pred_check_branch
          %597 = sbr.rel (%p595) target = $region24
        $region23: #{clip_vision_forward.3} parent=11 // pred_region
          _
        $region24: #{clip_vision_forward.3} parent=11 // pred_fallthru
          _
        // Predicated region
        $region25: #{clip_vision_forward.3} parent=11 // pred_check
          %p598 = pneg %p115
        $region26: #{clip_vision_forward.3} parent=11 // pred_check_branch
          %600 = sbr.rel (%p598) target = $region28
        $region27: #{clip_vision_forward.3} parent=11 // pred_region
          _
        $region28: #{clip_vision_forward.3} parent=11 // pred_fallthru
          _
        // Predicated region
        $region29: #{clip_vision_forward.3} parent=11 // pred_check
          %p601 = pneg %p136
        $region30: #{clip_vision_forward.3} parent=11 // pred_check_branch
          %603 = sbr.rel (%p601) target = $region32
        $region31: #{clip_vision_forward.3} parent=11 // pred_region
          _
        $region32: #{clip_vision_forward.3} parent=11 // pred_fallthru
          _
        // Predicated region
        $region33: #{clip_vision_forward.3} parent=11 // pred_check
          %p604 = pneg %p157
        $region34: #{clip_vision_forward.3} parent=11 // pred_check_branch
          %606 = sbr.rel (%p604) target = $region36
        $region35: #{clip_vision_forward.3} parent=11 // pred_region
          _
        $region36: #{clip_vision_forward.3} parent=11 // pred_fallthru
          _
        // Predicated region
        $region37: #{clip_vision_forward.3} parent=11 // pred_check
          %p607 = pneg %p490
        $region38: #{clip_vision_forward.3} parent=11 // pred_check_branch
          %609 = sbr.rel (%p607) target = $region40
        $region39: #{clip_vision_forward.3} parent=11 // pred_region
          _
        $region40: #{clip_vision_forward.3} parent=11 // pred_fallthru
          _
        // Predicated region
        $region41: #{clip_vision_forward.3} parent=11 // pred_check
          %p610 = pneg %p511
        $region42: #{clip_vision_forward.3} parent=11 // pred_check_branch
          %612 = sbr.rel (%p610) target = $region44
        $region43: #{clip_vision_forward.3} parent=11 // pred_region
          _
        $region44: #{clip_vision_forward.3} parent=11 // pred_fallthru
          _
        // Predicated region
        $region45: #{clip_vision_forward.3} parent=11 // pred_check
          %p613 = pneg %p532
        $region46: #{clip_vision_forward.3} parent=11 // pred_check_branch
          %615 = sbr.rel (%p613) target = $region48
        $region47: #{clip_vision_forward.3} parent=11 // pred_region
          _
        $region48: #{clip_vision_forward.3} parent=11 // pred_fallthru
          _
      $region12: #{clip_vision_forward.3} parent=5 // pred_fallthru
        _
      %p616 = scmp.lt.s32.totalorder %s31, 2
      // Predicated region
      $region49: #{clip_vision_forward.3} parent=5 // pred_check
        %p617 = pneg %p616
      $region50: #{clip_vision_forward.3} parent=5 // pred_check_branch
        %619 = sbr.rel (%p617) target = $region52
      $region51: #{clip_vision_forward.3} parent=5 // pred_region
        // Predicated region
        $region53: #{clip_vision_forward.3} parent=51 // pred_check
          %p620 = pneg %p177
        $region54: #{clip_vision_forward.3} parent=51 // pred_check_branch
          %622 = sbr.rel (%p620) target = $region56
        $region55: #{clip_vision_forward.3} parent=51 // pred_region
          %p623 = scmp.lt.s32.totalorder %s31, 1
          %s624 = scalar_select %p623, %s31, 1
          %s625 = scalar_lea.vmem %s6, %s624
        $region56: #{clip_vision_forward.3} parent=51 // pred_fallthru
          _
        // Predicated region
        $region57: #{clip_vision_forward.3} parent=51 // pred_check
          %p626 = pneg %p203
        $region58: #{clip_vision_forward.3} parent=51 // pred_check_branch
          %628 = sbr.rel (%p626) target = $region60
        $region59: #{clip_vision_forward.3} parent=51 // pred_region
          %p629 = scmp.lt.s32.totalorder %s31, 1
          %s630 = scalar_select %p629, %s31, 1
          %s631 = scalar_lea.vmem %s7, %s630
        $region60: #{clip_vision_forward.3} parent=51 // pred_fallthru
          _
        // Predicated region
        $region61: #{clip_vision_forward.3} parent=51 // pred_check
          %p632 = pneg %p229
        $region62: #{clip_vision_forward.3} parent=51 // pred_check_branch
          %634 = sbr.rel (%p632) target = $region64
        $region63: #{clip_vision_forward.3} parent=51 // pred_region
          %p635 = scmp.lt.s32.totalorder %s31, 1
          %s636 = scalar_select %p635, %s31, 1
          %s637 = smul.addr %s636, 48
          %s638 = smul.addr %s637, 4
          %s639 = scalar_lea.vmem %s8, %s638
        $region64: #{clip_vision_forward.3} parent=51 // pred_fallthru
          _
        // Predicated region
        $region65: #{clip_vision_forward.3} parent=51 // pred_check
          %p640 = pneg %p255
        $region66: #{clip_vision_forward.3} parent=51 // pred_check_branch
          %642 = sbr.rel (%p640) target = $region68
        $region67: #{clip_vision_forward.3} parent=51 // pred_region
          %p643 = scmp.lt.s32.totalorder %s31, 1
          %s644 = scalar_select %p643, %s31, 1
          %s645 = smul.addr %s644, 3
          %s646 = scalar_lea.vmem %s9, %s645
        $region68: #{clip_vision_forward.3} parent=51 // pred_fallthru
          _
        // Predicated region
        $region69: #{clip_vision_forward.3} parent=51 // pred_check
          %p647 = pneg %p281
        $region70: #{clip_vision_forward.3} parent=51 // pred_check_branch
          %649 = sbr.rel (%p647) target = $region72
        $region71: #{clip_vision_forward.3} parent=51 // pred_region
          %p650 = scmp.lt.s32.totalorder %s31, 1
          %s651 = scalar_select %p650, %s31, 1
          %s652 = smul.addr %s651, 8
          %s653 = smul.addr %s652, 4
          %s654 = scalar_lea.vmem %s10, %s653
        $region72: #{clip_vision_forward.3} parent=51 // pred_fallthru
          _
        // Predicated region
        $region73: #{clip_vision_forward.3} parent=51 // pred_check
          %p655 = pneg %p307
        $region74: #{clip_vision_forward.3} parent=51 // pred_check_branch
          %657 = sbr.rel (%p655) target = $region76
        $region75: #{clip_vision_forward.3} parent=51 // pred_region
          %p658 = scmp.lt.s32.totalorder %s31, 1
          %s659 = scalar_select %p658, %s31, 1
          %s660 = scalar_lea.vmem %s11, %s659
        $region76: #{clip_vision_forward.3} parent=51 // pred_fallthru
          _
        // Predicated region
        $region77: #{clip_vision_forward.3} parent=51 // pred_check
          %p661 = pneg %p333
        $region78: #{clip_vision_forward.3} parent=51 // pred_check_branch
          %663 = sbr.rel (%p661) target = $region80
        $region79: #{clip_vision_forward.3} parent=51 // pred_region
          %p664 = scmp.lt.s32.totalorder %s31, 1
          %s665 = scalar_select %p664, %s31, 1
          %s666 = scalar_lea.vmem %s12, %s665
        $region80: #{clip_vision_forward.3} parent=51 // pred_fallthru
          _
        // Predicated region
        $region81: #{clip_vision_forward.3} parent=51 // pred_check
          %p667 = pneg %p359
        $region82: #{clip_vision_forward.3} parent=51 // pred_check_branch
          %669 = sbr.rel (%p667) target = $region84
        $region83: #{clip_vision_forward.3} parent=51 // pred_region
          %p670 = scmp.lt.s32.totalorder %s31, 1
          %s671 = scalar_select %p670, %s31, 1
          %s672 = scalar_lea.vmem %s13, %s671
        $region84: #{clip_vision_forward.3} parent=51 // pred_fallthru
          _
        // Predicated region
        $region85: #{clip_vision_forward.3} parent=51 // pred_check
          %p673 = pneg %p385
        $region86: #{clip_vision_forward.3} parent=51 // pred_check_branch
          %675 = sbr.rel (%p673) target = $region88
        $region87: #{clip_vision_forward.3} parent=51 // pred_region
          %p676 = scmp.lt.s32.totalorder %s31, 1
          %s677 = scalar_select %p676, %s31, 1
          %s678 = smul.addr %s677, 32
          %s679 = smul.addr %s678, 4
          %s680 = scalar_lea.vmem %s14, %s679
        $region88: #{clip_vision_forward.3} parent=51 // pred_fallthru
          _
        // Predicated region
        $region89: #{clip_vision_forward.3} parent=51 // pred_check
          %p681 = pneg %p411
        $region90: #{clip_vision_forward.3} parent=51 // pred_check_branch
          %683 = sbr.rel (%p681) target = $region92
        $region91: #{clip_vision_forward.3} parent=51 // pred_region
          %p684 = scmp.lt.s32.totalorder %s31, 1
          %s685 = scalar_select %p684, %s31, 1
          %s686 = smul.addr %s685, 2
          %s687 = scalar_lea.vmem %s15, %s686
        $region92: #{clip_vision_forward.3} parent=51 // pred_fallthru
          _
        // Predicated region
        $region93: #{clip_vision_forward.3} parent=51 // pred_check
          %p688 = pneg %p437
        $region94: #{clip_vision_forward.3} parent=51 // pred_check_branch
          %690 = sbr.rel (%p688) target = $region96
        $region95: #{clip_vision_forward.3} parent=51 // pred_region
          %p691 = scmp.lt.s32.totalorder %s31, 1
          %s692 = scalar_select %p691, %s31, 1
          %s693 = smul.addr %s692, 32
          %s694 = smul.addr %s693, 4
          %s695 = scalar_lea.vmem %s16, %s694
        $region96: #{clip_vision_forward.3} parent=51 // pred_fallthru
          _
        // Predicated region
        $region97: #{clip_vision_forward.3} parent=51 // pred_check
          %p696 = pneg %p463
        $region98: #{clip_vision_forward.3} parent=51 // pred_check_branch
          %698 = sbr.rel (%p696) target = $region100
        $region99: #{clip_vision_forward.3} parent=51 // pred_region
          %p699 = scmp.lt.s32.totalorder %s31, 1
          %s700 = scalar_select %p699, %s31, 1
          %s701 = scalar_lea.vmem %s17, %s700
        $region100: #{clip_vision_forward.3} parent=51 // pred_fallthru
          _
      $region52: #{clip_vision_forward.3} parent=5 // pred_fallthru
        _
      %p702 = scmp.le.s32.totalorder 1, %s31
      %p703 = scmp.lt.s32.totalorder %s31, 3
      %p704 = pnand %p702, %p703
      %p705 = pneg %p704
      // Predicated region
      $region101: #{clip_vision_forward.3} parent=5 // pred_check
        _
      $region102: #{clip_vision_forward.3} parent=5 // pred_check_branch
        %707 = sbr.rel (%p704) target = $region104
      $region103: #{clip_vision_forward.3} parent=5 // pred_region
        %s708 = ssub.s32 %s31, 1
        %p709 = pneg %p52
        %p710 = pneg %p49
        %p711 = pneg %p73
        %p712 = pneg %p70
        %p713 = pneg %p94
        %p714 = pneg %p91
        %p715 = pneg %p115
        %p716 = pneg %p112
        %p717 = pneg %p136
        %p718 = pneg %p133
        %p719 = pneg %p157
        %p720 = pneg %p154
        %p721 = scmp.lt.s32.totalorder %s36, 1
        %s722 = scalar_select %p721, %s36, 1
        %s723 = scalar_lea.vmem %s6, %s722
        %p724 = pneg %p183
        %p725 = pneg %p180
        %p726 = scmp.lt.s32.totalorder %s36, 1
        %s727 = scalar_select %p726, %s36, 1
        %s728 = scalar_lea.vmem %s7, %s727
        %p729 = pneg %p209
        %p730 = pneg %p206
        %p731 = scmp.lt.s32.totalorder %s36, 1
        %s732 = scalar_select %p731, %s36, 1
        %s733 = smul.addr %s732, 48
        %s734 = smul.addr %s733, 4
        %s735 = scalar_lea.vmem %s8, %s734
        %p736 = pneg %p235
        %p737 = pneg %p232
        %p738 = scmp.lt.s32.totalorder %s36, 1
        %s739 = scalar_select %p738, %s36, 1
        %s740 = smul.addr %s739, 3
        %s741 = scalar_lea.vmem %s9, %s740
        %p742 = pneg %p261
        %p743 = pneg %p258
        %p744 = scmp.lt.s32.totalorder %s36, 1
        %s745 = scalar_select %p744, %s36, 1
        %s746 = smul.addr %s745, 8
        %s747 = smul.addr %s746, 4
        %s748 = scalar_lea.vmem %s10, %s747
        %p749 = pneg %p287
        %p750 = pneg %p284
        %p751 = scmp.lt.s32.totalorder %s36, 1
        %s752 = scalar_select %p751, %s36, 1
        %s753 = scalar_lea.vmem %s11, %s752
        %p754 = pneg %p313
        %p755 = pneg %p310
        %p756 = scmp.lt.s32.totalorder %s36, 1
        %s757 = scalar_select %p756, %s36, 1
        %s758 = scalar_lea.vmem %s12, %s757
        %p759 = pneg %p339
        %p760 = pneg %p336
        %p761 = scmp.lt.s32.totalorder %s36, 1
        %s762 = scalar_select %p761, %s36, 1
        %s763 = scalar_lea.vmem %s13, %s762
        %p764 = pneg %p365
        %p765 = pneg %p362
        %p766 = scmp.lt.s32.totalorder %s36, 1
        %s767 = scalar_select %p766, %s36, 1
        %s768 = smul.addr %s767, 32
        %s769 = smul.addr %s768, 4
        %s770 = scalar_lea.vmem %s14, %s769
        %p771 = pneg %p391
        %p772 = pneg %p388
        %p773 = scmp.lt.s32.totalorder %s36, 1
        %s774 = scalar_select %p773, %s36, 1
        %s775 = smul.addr %s774, 2
        %s776 = scalar_lea.vmem %s15, %s775
        %p777 = pneg %p417
        %p778 = pneg %p414
        %p779 = scmp.lt.s32.totalorder %s36, 1
        %s780 = scalar_select %p779, %s36, 1
        %s781 = smul.addr %s780, 32
        %s782 = smul.addr %s781, 4
        %s783 = scalar_lea.vmem %s16, %s782
        %p784 = pneg %p443
        %p785 = pneg %p440
        %p786 = scmp.lt.s32.totalorder %s36, 1
        %s787 = scalar_select %p786, %s36, 1
        %s788 = scalar_lea.vmem %s17, %s787
        %p789 = pneg %p469
        %p790 = pneg %p466
        %p791 = pneg %p490
        %p792 = pneg %p487
        %p793 = pneg %p511
        %p794 = pneg %p508
        %p795 = pneg %p532
        %p796 = pneg %p529
        %p797 = pneg %p553
        %p798 = pneg %p550
        %p799 = pneg %p574
        %p800 = pneg %p571
        %p801 = scmp.lt.s32.totalorder %s36, 1
        %s802 = scalar_select %p801, %s36, 1
        %s803 = scalar_lea.vmem %s6, %s802
        %p804 = scmp.lt.s32.totalorder %s36, 1
        %s805 = scalar_select %p804, %s36, 1
        %s806 = scalar_lea.vmem %s7, %s805
        %p807 = scmp.lt.s32.totalorder %s36, 1
        %s808 = scalar_select %p807, %s36, 1
        %s809 = smul.addr %s808, 48
        %s810 = smul.addr %s809, 4
        %s811 = scalar_lea.vmem %s8, %s810
        %p812 = scmp.lt.s32.totalorder %s36, 1
        %s813 = scalar_select %p812, %s36, 1
        %s814 = smul.addr %s813, 3
        %s815 = scalar_lea.vmem %s9, %s814
        %p816 = scmp.lt.s32.totalorder %s36, 1
        %s817 = scalar_select %p816, %s36, 1
        %s818 = smul.addr %s817, 8
        %s819 = smul.addr %s818, 4
        %s820 = scalar_lea.vmem %s10, %s819
        %p821 = scmp.lt.s32.totalorder %s36, 1
        %s822 = scalar_select %p821, %s36, 1
        %s823 = scalar_lea.vmem %s11, %s822
        %p824 = scmp.lt.s32.totalorder %s36, 1
        %s825 = scalar_select %p824, %s36, 1
        %s826 = scalar_lea.vmem %s12, %s825
        %p827 = scmp.lt.s32.totalorder %s36, 1
        %s828 = scalar_select %p827, %s36, 1
        %s829 = scalar_lea.vmem %s13, %s828
        %p830 = scmp.lt.s32.totalorder %s36, 1
        %s831 = scalar_select %p830, %s36, 1
        %s832 = smul.addr %s831, 32
        %s833 = smul.addr %s832, 4
        %s834 = scalar_lea.vmem %s14, %s833
        %p835 = scmp.lt.s32.totalorder %s36, 1
        %s836 = scalar_select %p835, %s36, 1
        %s837 = smul.addr %s836, 2
        %s838 = scalar_lea.vmem %s15, %s837
        %p839 = scmp.lt.s32.totalorder %s36, 1
        %s840 = scalar_select %p839, %s36, 1
        %s841 = smul.addr %s840, 32
        %s842 = smul.addr %s841, 4
        %s843 = scalar_lea.vmem %s16, %s842
        %p844 = scmp.lt.s32.totalorder %s36, 1
        %s845 = scalar_select %p844, %s36, 1
        %s846 = scalar_lea.vmem %s17, %s845
        %p848 = scmp.eq.s32.totalorder %s36, 0
        // Predicated region
        $region105: #{clip_vision_forward.3} parent=103 // pred_check
          %p849 = pneg %p848
        $region106: #{clip_vision_forward.3} parent=103 // pred_check_branch
          %851 = sbr.rel (%p849) target = $region108
        $region107: #{clip_vision_forward.3} parent=103 // pred_region
          %v852 = vld [vmem:[%s0] sm:$0xff]
          %v853 = vld [vmem:[%s0 + $0x8] sm:$0xff]
          %v854 = vld [vmem:[%s0 + $0x10] sm:$0xff]
          %v855 = vld [vmem:[%s0 + $0x18] sm:$0xff]
          %v856 = vld [vmem:[%s0 + $0x20] sm:$0xff]
          %v857 = vld [vmem:[%s0 + $0x28] sm:$0xff]
          %v858 = vld [vmem:[%s0 + $0x30] sm:$0xff]
          %v859 = vld [vmem:[%s0 + $0x38] sm:$0xff]
          %v860 = vld [vmem:[%s0 + $0x40] sm:$0xff]
          %v861 = vld [vmem:[%s0 + $0x48] sm:$0xff]
          %v862 = vld [vmem:[%s0 + $0x50] sm:$0xff]
          %v863 = vld [vmem:[%s0 + $0x58] sm:$0xff]
          %v864 = vld [vmem:[%s0 + $0x60] sm:$0xff]
          %v865 = vld [vmem:[%s0 + $0x68] sm:$0xff]
          %v866 = vld [vmem:[%s0 + $0x70] sm:$0xff]
          %v867 = vld [vmem:[%s0 + $0x78] sm:$0xff]
          %v868 = vld [vmem:[%s0 + $0x80] sm:$0xff]
          %v869 = vld [vmem:[%s0 + $0x88] sm:$0xff]
          %v870 = vld [vmem:[%s0 + $0x90] sm:$0xff]
          %v871 = vld [vmem:[%s0 + $0x98] sm:$0xff]
          %v872 = vld [vmem:[%s0 + $0xa0] sm:$0xff]
          %v873 = vld [vmem:[%s0 + $0xa8] sm:$0xff]
          %v874 = vld [vmem:[%s0 + $0xb0] sm:$0xff]
          %v875 = vld [vmem:[%s0 + $0xb8] sm:$0xff]
          %v876 = vld [vmem:[%s0 + $0xc0] sm:$0xff]
          %v877 = vld [vmem:[%s0 + $0xc8] sm:$0xff]
          %v878 = vld [vmem:[%s0 + $0xd0] sm:$0xff]
          %v879 = vld [vmem:[%s0 + $0xd8] sm:$0xff]
          %v880 = vld [vmem:[%s0 + $0xe0] sm:$0xff]
          %v881 = vld [vmem:[%s0 + $0xe8] sm:$0xff]
          %v882 = vld [vmem:[%s0 + $0xf0] sm:$0xff]
          %v883 = vld [vmem:[%s0 + $0xf8] sm:$0xff]
          %v884 = vld [vmem:[%s0 + $0x100] sm:$0xff]
          %v885 = vld [vmem:[%s0 + $0x108] sm:$0xff]
          %v886 = vld [vmem:[%s0 + $0x110] sm:$0xff]
          %v887 = vld [vmem:[%s0 + $0x118] sm:$0xff]
          %v888 = vld [vmem:[%s0 + $0x120] sm:$0xff]
          %v889 = vld [vmem:[%s0 + $0x128] sm:$0xff]
          %v890 = vld [vmem:[%s0 + $0x130] sm:$0xff]
          %v891 = vld [vmem:[%s0 + $0x138] sm:$0xff]
          %v892 = vld [vmem:[%s0 + $0x140] sm:$0xff]
          %v893 = vld [vmem:[%s0 + $0x148] sm:$0xff]
          %v894 = vld [vmem:[%s0 + $0x150] sm:$0xff]
          %v895 = vld [vmem:[%s0 + $0x158] sm:$0xff]
          %v896 = vld [vmem:[%s0 + $0x160] sm:$0xff]
          %v897 = vld [vmem:[%s0 + $0x168] sm:$0xff]
          %v898 = vld [vmem:[%s0 + $0x170] sm:$0xff]
          %v899 = vld [vmem:[%s0 + $0x178] sm:$0xff]
          %v900 = vld [vmem:[%s0 + $0x180] sm:$0xff]
          %v901 = vld [vmem:[%s0 + $0x188] sm:$0xff]
          %v902 = vld [vmem:[%s0 + $0x190] sm:$0xff]
          %v903 = vld [vmem:[%s0 + $0x198] sm:$0xff]
          %v904 = vld [vmem:[%s0 + $0x1a0] sm:$0xff]
          %v905 = vld [vmem:[%s0 + $0x1a8] sm:$0xff]
          %v906 = vld [vmem:[%s0 + $0x1b0] sm:$0xff]
          %v907 = vld [vmem:[%s0 + $0x1b8] sm:$0xff]
          %v908 = vld [vmem:[%s0 + $0x1c0] sm:$0xff]
          %v909 = vld [vmem:[%s0 + $0x1c8] sm:$0xff]
          %v910 = vld [vmem:[%s0 + $0x1d0] sm:$0xff]
          %v911 = vld [vmem:[%s0 + $0x1d8] sm:$0xff]
          %v912 = vld [vmem:[%s0 + $0x1e0] sm:$0xff]
          %v913 = vld [vmem:[%s0 + $0x1e8] sm:$0xff]
          %v914 = vld [vmem:[%s0 + $0x1f0] sm:$0xff]
          %v915 = vld [vmem:[%s0 + $0x1f8] sm:$0xff]
          %v916 = vld [vmem:[%s0 + $0x200] sm:$0xff]
          %v917 = vld [vmem:[%s0 + $0x208] sm:$0xff]
          %v918 = vld [vmem:[%s0 + $0x210] sm:$0xff]
          %v919 = vld [vmem:[%s0 + $0x218] sm:$0xff]
          %v920 = vld [vmem:[%s0 + $0x220] sm:$0xff]
          %v921 = vld [vmem:[%s0 + $0x228] sm:$0xff]
          %v922 = vld [vmem:[%s0 + $0x230] sm:$0xff]
          %v923 = vld [vmem:[%s0 + $0x238] sm:$0xff]
          %v924 = vld [vmem:[%s0 + $0x240] sm:$0xff]
          %v925 = vld [vmem:[%s0 + $0x248] sm:$0xff]
          %v926 = vld [vmem:[%s0 + $0x250] sm:$0xff]
          %v927 = vld [vmem:[%s0 + $0x258] sm:$0xff]
          %v928 = vld [vmem:[%s0 + $0x260] sm:$0xff]
          %v929 = vld [vmem:[%s0 + $0x268] sm:$0xff]
          %v930 = vld [vmem:[%s0 + $0x270] sm:$0xff]
          %v931 = vld [vmem:[%s0 + $0x278] sm:$0xff]
          %v932 = vld [vmem:[%s0 + $0x280] sm:$0xff]
          %v933 = vld [vmem:[%s0 + $0x288] sm:$0xff]
          %v934 = vld [vmem:[%s0 + $0x290] sm:$0xff]
          %v935 = vld [vmem:[%s0 + $0x298] sm:$0xff]
          %v936 = vld [vmem:[%s0 + $0x2a0] sm:$0xff]
          %v937 = vld [vmem:[%s0 + $0x2a8] sm:$0xff]
          %v938 = vld [vmem:[%s0 + $0x2b0] sm:$0xff]
          %v939 = vld [vmem:[%s0 + $0x2b8] sm:$0xff]
          %v940 = vld [vmem:[%s0 + $0x2c0] sm:$0xff]
          %v941 = vld [vmem:[%s0 + $0x2c8] sm:$0xff]
          %v942 = vld [vmem:[%s0 + $0x2d0] sm:$0xff]
          %v943 = vld [vmem:[%s0 + $0x2d8] sm:$0xff]
          %v944 = vld [vmem:[%s0 + $0x2e0] sm:$0xff]
          %v945 = vld [vmem:[%s0 + $0x2e8] sm:$0xff]
          %v946 = vld [vmem:[%s0 + $0x2f0] sm:$0xff]
          %v947 = vld [vmem:[%s0 + $0x2f8] sm:$0xff]
          %v948 = vld [vmem:[%s0 + $0x300] sm:$0xff]
          %v949 = vld [vmem:[%s0 + $0x308] sm:$0xff]
          %v950 = vld [vmem:[%s0 + $0x310] sm:$0xff]
          %v951 = vld [vmem:[%s0 + $0x318] sm:$0xff]
          %v952 = vld [vmem:[%s0 + $0x320] sm:$0xff]
          %v953 = vld [vmem:[%s0 + $0x328] sm:$0xff]
          %v954 = vld [vmem:[%s0 + $0x330] sm:$0xff]
          %v955 = vld [vmem:[%s0 + $0x338] sm:$0xff]
          %v956 = vld [vmem:[%s0 + $0x340] sm:$0xff]
          %v957 = vld [vmem:[%s0 + $0x348] sm:$0xff]
          %v958 = vld [vmem:[%s0 + $0x350] sm:$0xff]
          %v959 = vld [vmem:[%s0 + $0x358] sm:$0xff]
          %v960 = vld [vmem:[%s0 + $0x360] sm:$0xff]
          %v961 = vld [vmem:[%s0 + $0x368] sm:$0xff]
          %v962 = vld [vmem:[%s0 + $0x370] sm:$0xff]
          %v963 = vld [vmem:[%s0 + $0x378] sm:$0xff]
          %v964 = vld [vmem:[%s0 + $0x380] sm:$0xff]
          %v965 = vld [vmem:[%s0 + $0x388] sm:$0xff]
          %v966 = vld [vmem:[%s0 + $0x390] sm:$0xff]
          %v967 = vld [vmem:[%s0 + $0x398] sm:$0xff]
          %v968 = vld [vmem:[%s0 + $0x3a0] sm:$0xff]
          %v969 = vld [vmem:[%s0 + $0x3a8] sm:$0xff]
          %v970 = vld [vmem:[%s0 + $0x3b0] sm:$0xff]
          %v971 = vld [vmem:[%s0 + $0x3b8] sm:$0xff]
          %v972 = vld [vmem:[%s0 + $0x3c0] sm:$0xff]
          %v973 = vld [vmem:[%s0 + $0x3c8] sm:$0xff]
          %v974 = vld [vmem:[%s0 + $0x3d0] sm:$0xff]
          %v975 = vld [vmem:[%s0 + $0x3d8] sm:$0xff]
          %v976 = vld [vmem:[%s0 + $0x3e0] sm:$0xff]
          %v977 = vld [vmem:[%s0 + $0x3e8] sm:$0xff]
          %v978 = vld [vmem:[%s0 + $0x3f0] sm:$0xff]
          %v979 = vld [vmem:[%s0 + $0x3f8] sm:$0xff]
          %v980 = vld [vmem:[%s0 + $0x400] sm:$0xff]
          %v981 = vld [vmem:[%s0 + $0x408] sm:$0xff]
          %v982 = vld [vmem:[%s0 + $0x410] sm:$0xff]
          %v983 = vld [vmem:[%s0 + $0x418] sm:$0xff]
          %v984 = vld [vmem:[%s0 + $0x420] sm:$0xff]
          %v985 = vld [vmem:[%s0 + $0x428] sm:$0xff]
          %v986 = vld [vmem:[%s0 + $0x430] sm:$0xff]
          %v987 = vld [vmem:[%s0 + $0x438] sm:$0xff]
          %v988 = vld [vmem:[%s0 + $0x440] sm:$0xff]
          %v989 = vld [vmem:[%s0 + $0x448] sm:$0xff]
          %v990 = vld [vmem:[%s0 + $0x450] sm:$0xff]
          %v991 = vld [vmem:[%s0 + $0x458] sm:$0xff]
          %v992 = vld [vmem:[%s0 + $0x460] sm:$0xff]
          %v993 = vld [vmem:[%s0 + $0x468] sm:$0xff]
          %v994 = vld [vmem:[%s0 + $0x470] sm:$0xff]
          %v995 = vld [vmem:[%s0 + $0x478] sm:$0xff]
          %v996 = vld [vmem:[%s0 + $0x480] sm:$0xff]
          %v997 = vld [vmem:[%s0 + $0x488] sm:$0xff]
          %v998 = vld [vmem:[%s0 + $0x490] sm:$0xff]
          %v999 = vld [vmem:[%s0 + $0x498] sm:$0xff]
          %v1000 = vld [vmem:[%s0 + $0x4a0] sm:$0xff]
          %v1001 = vld [vmem:[%s0 + $0x4a8] sm:$0xff]
          %v1002 = vld [vmem:[%s0 + $0x4b0] sm:$0xff]
          %v1003 = vld [vmem:[%s0 + $0x4b8] sm:$0xff]
          %v1004 = vld [vmem:[%s0 + $0x4c0] sm:$0xff]
          %v1005 = vld [vmem:[%s0 + $0x4c8] sm:$0xff]
          %v1006 = vld [vmem:[%s0 + $0x4d0] sm:$0xff]
          %v1007 = vld [vmem:[%s0 + $0x4d8] sm:$0xff]
          %v1008 = vld [vmem:[%s0 + $0x4e0] sm:$0xff]
          %v1009 = vld [vmem:[%s0 + $0x4e8] sm:$0xff]
          %v1010 = vld [vmem:[%s0 + $0x4f0] sm:$0xff]
          %v1011 = vld [vmem:[%s0 + $0x4f8] sm:$0xff]
          %v1012 = vld [vmem:[%s0 + $0x500] sm:$0xff]
          %v1013 = vld [vmem:[%s0 + $0x508] sm:$0xff]
          %v1014 = vld [vmem:[%s0 + $0x510] sm:$0xff]
          %v1015 = vld [vmem:[%s0 + $0x518] sm:$0xff]
          %v1016 = vld [vmem:[%s0 + $0x520] sm:$0xff]
          %v1017 = vld [vmem:[%s0 + $0x528] sm:$0xff]
          %v1018 = vld [vmem:[%s0 + $0x530] sm:$0xff]
          %v1019 = vld [vmem:[%s0 + $0x538] sm:$0xff]
          %v1020 = vld [vmem:[%s1] sm:$0xf]
          %v1021 = vld [vmem:[%s1 + $0x4] sm:$0xf]
          %v1022 = vld [vmem:[%s1 + $0x8] sm:$0xf]
          %v1023 = vld [vmem:[%s1 + $0xc] sm:$0xf]
          %v1024 = vld [vmem:[%s1 + $0x10] sm:$0xf]
          %v1025 = vld [vmem:[%s1 + $0x14] sm:$0xf]
          %v1026 = vld [vmem:[%s1 + $0x18] sm:$0xf]
          %v1027 = vld [vmem:[%s1 + $0x1c] sm:$0xf]
          %v1028 = vld [vmem:[%s1 + $0x20] sm:$0xf]
          %v1029 = vld [vmem:[%s1 + $0x24] sm:$0xf]
          %v1030 = vld [vmem:[%s1 + $0x28] sm:$0xf]
          %v1031 = vld [vmem:[%s1 + $0x2c] sm:$0xf]
          %v1032 = vld [vmem:[%s1 + $0x30] sm:$0xf]
          %v1033 = vld [vmem:[%s1 + $0x34] sm:$0xf]
          %v1034 = vld [vmem:[%s1 + $0x38] sm:$0xf]
          %v1035 = vld [vmem:[%s1 + $0x3c] sm:$0xf]
          %v1036 = vld [vmem:[%s1 + $0x40] sm:$0xf]
          %v1037 = vld [vmem:[%s1 + $0x44] sm:$0xf]
          %v1038 = vld [vmem:[%s1 + $0x48] sm:$0xf]
          %v1039 = vld [vmem:[%s1 + $0x4c] sm:$0xf]
          %v1040 = vld [vmem:[%s1 + $0x50] sm:$0xf]
          %v1041 = vld [vmem:[%s1 + $0x54] sm:$0xf]
          %v1042 = vld [vmem:[%s1 + $0x58] sm:$0xf]
          %v1043 = vld [vmem:[%s1 + $0x5c] sm:$0xf]
          %v1044 = vld [vmem:[%s1 + $0x60] sm:$0xf]
          %v1045 = vld [vmem:[%s1 + $0x64] sm:$0xf]
          %v1046 = vld [vmem:[%s1 + $0x68] sm:$0xf]
          %v1047 = vld [vmem:[%s1 + $0x6c] sm:$0xf]
          %v1048 = vld [vmem:[%s1 + $0x70] sm:$0xf]
          %v1049 = vld [vmem:[%s1 + $0x74] sm:$0xf]
          %v1050 = vld [vmem:[%s1 + $0x78] sm:$0xf]
          %v1051 = vld [vmem:[%s1 + $0x7c] sm:$0xf]
          %v1052 = vld [vmem:[%s1 + $0x80] sm:$0xf]
          %v1053 = vld [vmem:[%s1 + $0x84] sm:$0xf]
          %v1054 = vld [vmem:[%s1 + $0x88] sm:$0xf]
          %v1055 = vld [vmem:[%s1 + $0x8c] sm:$0xf]
          %v1056 = vld [vmem:[%s1 + $0x90] sm:$0xf]
          %v1057 = vld [vmem:[%s1 + $0x94] sm:$0xf]
          %v1058 = vld [vmem:[%s1 + $0x98] sm:$0xf]
          %v1059 = vld [vmem:[%s1 + $0x9c] sm:$0xf]
          %v1060 = vld [vmem:[%s1 + $0xa0] sm:$0xf]
          %v1061 = vld [vmem:[%s1 + $0xa4] sm:$0xf]
          %v1062 = vld [vmem:[%s1 + $0xa8] sm:$0xf]
          %v1063 = vld [vmem:[%s1 + $0xac] sm:$0xf]
          %v1064 = vld [vmem:[%s1 + $0xb0] sm:$0xf]
          %v1065 = vld [vmem:[%s1 + $0xb4] sm:$0xf]
          %v1066 = vld [vmem:[%s1 + $0xb8] sm:$0xf]
          %v1067 = vld [vmem:[%s1 + $0xbc] sm:$0xf]
          %v1068 = vld [vmem:[%s1 + $0xc0] sm:$0xf]
          %v1069 = vld [vmem:[%s1 + $0xc4] sm:$0xf]
          %v1070 = vld [vmem:[%s1 + $0xc8] sm:$0xf]
          %v1071 = vld [vmem:[%s1 + $0xcc] sm:$0xf]
          %v1072 = vld [vmem:[%s1 + $0xd0] sm:$0xf]
          %v1073 = vld [vmem:[%s1 + $0xd4] sm:$0xf]
          %v1074 = vld [vmem:[%s1 + $0xd8] sm:$0xf]
          %v1075 = vld [vmem:[%s1 + $0xdc] sm:$0xf]
          %v1076 = vld [vmem:[%s1 + $0xe0] sm:$0xf]
          %v1077 = vld [vmem:[%s1 + $0xe4] sm:$0xf]
          %v1078 = vld [vmem:[%s1 + $0xe8] sm:$0xf]
          %v1079 = vld [vmem:[%s1 + $0xec] sm:$0xf]
          %v1080 = vld [vmem:[%s1 + $0xf0] sm:$0xf]
          %v1081 = vld [vmem:[%s1 + $0xf4] sm:$0xf]
          %v1082 = vld [vmem:[%s1 + $0xf8] sm:$0xf]
          %v1083 = vld [vmem:[%s1 + $0xfc] sm:$0xf]
          %v1084 = vld [vmem:[%s1 + $0x100] sm:$0xf]
          %v1085 = vld [vmem:[%s1 + $0x104] sm:$0xf]
          %v1086 = vld [vmem:[%s1 + $0x108] sm:$0xf]
          %v1087 = vld [vmem:[%s1 + $0x10c] sm:$0xf]
          %v1088 = vld [vmem:[%s1 + $0x110] sm:$0xf]
          %v1089 = vld [vmem:[%s1 + $0x114] sm:$0xf]
          %v1090 = vld [vmem:[%s1 + $0x118] sm:$0xf]
          %v1091 = vld [vmem:[%s1 + $0x11c] sm:$0xf]
          %v1092 = vld [vmem:[%s1 + $0x120] sm:$0xf]
          %v1093 = vld [vmem:[%s1 + $0x124] sm:$0xf]
          %v1094 = vld [vmem:[%s1 + $0x128] sm:$0xf]
          %v1095 = vld [vmem:[%s1 + $0x12c] sm:$0xf]
          %v1096 = vld [vmem:[%s1 + $0x130] sm:$0xf]
          %v1097 = vld [vmem:[%s1 + $0x134] sm:$0xf]
          %v1098 = vld [vmem:[%s1 + $0x138] sm:$0xf]
          %v1099 = vld [vmem:[%s1 + $0x13c] sm:$0xf]
          %v1100 = vld [vmem:[%s1 + $0x140] sm:$0xf]
          %v1101 = vld [vmem:[%s1 + $0x144] sm:$0xf]
          %v1102 = vld [vmem:[%s1 + $0x148] sm:$0xf]
          %v1103 = vld [vmem:[%s1 + $0x14c] sm:$0xf]
          %v1104 = vld [vmem:[%s1 + $0x150] sm:$0xf]
          %v1105 = vld [vmem:[%s1 + $0x154] sm:$0xf]
          %v1106 = vld [vmem:[%s1 + $0x158] sm:$0xf]
          %v1107 = vld [vmem:[%s1 + $0x15c] sm:$0xf]
          %v1108 = vld [vmem:[%s1 + $0x160] sm:$0xf]
          %v1109 = vld [vmem:[%s1 + $0x164] sm:$0xf]
          %v1110 = vld [vmem:[%s1 + $0x168] sm:$0xf]
          %v1111 = vld [vmem:[%s1 + $0x16c] sm:$0xf]
          %v1112 = vld [vmem:[%s1 + $0x170] sm:$0xf]
          %v1113 = vld [vmem:[%s1 + $0x174] sm:$0xf]
          %v1114 = vld [vmem:[%s1 + $0x178] sm:$0xf]
          %v1115 = vld [vmem:[%s1 + $0x17c] sm:$0xf]
          %v1116 = vld [vmem:[%s1 + $0x180] sm:$0xf]
          %v1117 = vld [vmem:[%s1 + $0x184] sm:$0xf]
          %v1118 = vld [vmem:[%s1 + $0x188] sm:$0xf]
          %v1119 = vld [vmem:[%s1 + $0x18c] sm:$0xf]
          %v1120 = vld [vmem:[%s1 + $0x190] sm:$0xf]
          %v1121 = vld [vmem:[%s1 + $0x194] sm:$0xf]
          %v1122 = vld [vmem:[%s1 + $0x198] sm:$0xf]
          %v1123 = vld [vmem:[%s1 + $0x19c] sm:$0xf]
          %v1124 = vld [vmem:[%s1 + $0x1a0] sm:$0xf]
          %v1125 = vld [vmem:[%s1 + $0x1a4] sm:$0xf]
          %v1126 = vld [vmem:[%s1 + $0x1a8] sm:$0xf]
          %v1127 = vld [vmem:[%s1 + $0x1ac] sm:$0xf]
          %v1128 = vld [vmem:[%s1 + $0x1b0] sm:$0xf]
          %v1129 = vld [vmem:[%s1 + $0x1b4] sm:$0xf]
          %v1130 = vld [vmem:[%s1 + $0x1b8] sm:$0xf]
          %v1131 = vld [vmem:[%s1 + $0x1bc] sm:$0xf]
          %v1132 = vld [vmem:[%s1 + $0x1c0] sm:$0xf]
          %v1133 = vld [vmem:[%s1 + $0x1c4] sm:$0xf]
          %v1134 = vld [vmem:[%s1 + $0x1c8] sm:$0xf]
          %v1135 = vld [vmem:[%s1 + $0x1cc] sm:$0xf]
          %v1136 = vld [vmem:[%s1 + $0x1d0] sm:$0xf]
          %v1137 = vld [vmem:[%s1 + $0x1d4] sm:$0xf]
          %v1138 = vld [vmem:[%s1 + $0x1d8] sm:$0xf]
          %v1139 = vld [vmem:[%s1 + $0x1dc] sm:$0xf]
          %v1140 = vld [vmem:[%s1 + $0x1e0] sm:$0xf]
          %v1141 = vld [vmem:[%s1 + $0x1e4] sm:$0xf]
          %v1142 = vld [vmem:[%s1 + $0x1e8] sm:$0xf]
          %v1143 = vld [vmem:[%s1 + $0x1ec] sm:$0xf]
          %v1144 = vld [vmem:[%s1 + $0x1f0] sm:$0xf]
          %v1145 = vld [vmem:[%s1 + $0x1f4] sm:$0xf]
          %v1146 = vld [vmem:[%s1 + $0x1f8] sm:$0xf]
          %v1147 = vld [vmem:[%s1 + $0x1fc] sm:$0xf]
          %v1148 = vld [vmem:[%s1 + $0x200] sm:$0xf]
          %v1149 = vld [vmem:[%s1 + $0x204] sm:$0xf]
          %v1150 = vld [vmem:[%s1 + $0x208] sm:$0xf]
          %v1151 = vld [vmem:[%s1 + $0x20c] sm:$0xf]
          %v1152 = vld [vmem:[%s1 + $0x210] sm:$0xf]
          %v1153 = vld [vmem:[%s1 + $0x214] sm:$0xf]
          %v1154 = vld [vmem:[%s1 + $0x218] sm:$0xf]
          %v1155 = vld [vmem:[%s1 + $0x21c] sm:$0xf]
          %v1156 = vld [vmem:[%s1 + $0x220] sm:$0xf]
          %v1157 = vld [vmem:[%s1 + $0x224] sm:$0xf]
          %v1158 = vld [vmem:[%s1 + $0x228] sm:$0xf]
          %v1159 = vld [vmem:[%s1 + $0x22c] sm:$0xf]
          %v1160 = vld [vmem:[%s1 + $0x230] sm:$0xf]
          %v1161 = vld [vmem:[%s1 + $0x234] sm:$0xf]
          %v1162 = vld [vmem:[%s1 + $0x238] sm:$0xf]
          %v1163 = vld [vmem:[%s1 + $0x23c] sm:$0xf]
          %v1164 = vld [vmem:[%s1 + $0x240] sm:$0xf]
          %v1165 = vld [vmem:[%s1 + $0x244] sm:$0xf]
          %v1166 = vld [vmem:[%s1 + $0x248] sm:$0xf]
          %v1167 = vld [vmem:[%s1 + $0x24c] sm:$0xf]
          %v1168 = vld [vmem:[%s1 + $0x250] sm:$0xf]
          %v1169 = vld [vmem:[%s1 + $0x254] sm:$0xf]
          %v1170 = vld [vmem:[%s1 + $0x258] sm:$0xf]
          %v1171 = vld [vmem:[%s1 + $0x25c] sm:$0xf]
          %v1172 = vld [vmem:[%s1 + $0x260] sm:$0xf]
          %v1173 = vld [vmem:[%s1 + $0x264] sm:$0xf]
          %v1174 = vld [vmem:[%s1 + $0x268] sm:$0xf]
          %v1175 = vld [vmem:[%s1 + $0x26c] sm:$0xf]
          %v1176 = vld [vmem:[%s1 + $0x270] sm:$0xf]
          %v1177 = vld [vmem:[%s1 + $0x274] sm:$0xf]
          %v1178 = vld [vmem:[%s1 + $0x278] sm:$0xf]
          %v1179 = vld [vmem:[%s1 + $0x27c] sm:$0xf]
          %v1180 = vld [vmem:[%s1 + $0x280] sm:$0xf]
          %v1181 = vld [vmem:[%s1 + $0x284] sm:$0xf]
          %v1182 = vld [vmem:[%s1 + $0x288] sm:$0xf]
          %v1183 = vld [vmem:[%s1 + $0x28c] sm:$0xf]
          %v1184 = vld [vmem:[%s1 + $0x290] sm:$0xf]
          %v1185 = vld [vmem:[%s1 + $0x294] sm:$0xf]
          %v1186 = vld [vmem:[%s1 + $0x298] sm:$0xf]
          %v1187 = vld [vmem:[%s1 + $0x29c] sm:$0xf]
          %v1188 = vld [vmem:[%s1 + $0x2a0] sm:$0xf]
          %v1189 = vld [vmem:[%s1 + $0x2a4] sm:$0xf]
          %v1190 = vld [vmem:[%s1 + $0x2a8] sm:$0xf]
          %v1191 = vld [vmem:[%s1 + $0x2ac] sm:$0xf]
          %v1192 = vld [vmem:[%s1 + $0x2b0] sm:$0xf]
          %v1193 = vld [vmem:[%s1 + $0x2b4] sm:$0xf]
          %v1194 = vld [vmem:[%s1 + $0x2b8] sm:$0xf]
          %v1195 = vld [vmem:[%s1 + $0x2bc] sm:$0xf]
          %v1196 = vld [vmem:[%s1 + $0x2c0] sm:$0xf]
          %v1197 = vld [vmem:[%s1 + $0x2c4] sm:$0xf]
          %v1198 = vld [vmem:[%s1 + $0x2c8] sm:$0xf]
          %v1199 = vld [vmem:[%s1 + $0x2cc] sm:$0xf]
          %v1200 = vld [vmem:[%s1 + $0x2d0] sm:$0xf]
          %v1201 = vld [vmem:[%s1 + $0x2d4] sm:$0xf]
          %v1202 = vld [vmem:[%s1 + $0x2d8] sm:$0xf]
          %v1203 = vld [vmem:[%s1 + $0x2dc] sm:$0xf]
          %v1204 = vld [vmem:[%s1 + $0x2e0] sm:$0xf]
          %v1205 = vld [vmem:[%s1 + $0x2e4] sm:$0xf]
          %v1206 = vld [vmem:[%s1 + $0x2e8] sm:$0xf]
          %v1207 = vld [vmem:[%s1 + $0x2ec] sm:$0xf]
          %v1208 = vld [vmem:[%s1 + $0x2f0] sm:$0xf]
          %v1209 = vld [vmem:[%s1 + $0x2f4] sm:$0xf]
          %v1210 = vld [vmem:[%s1 + $0x2f8] sm:$0xf]
          %v1211 = vld [vmem:[%s1 + $0x2fc] sm:$0xf]
          %v1212 = vld [vmem:[%s1 + $0x300] sm:$0xf]
          %v1213 = vld [vmem:[%s1 + $0x304] sm:$0xf]
          %v1214 = vld [vmem:[%s1 + $0x308] sm:$0xf]
          %v1215 = vld [vmem:[%s1 + $0x30c] sm:$0xf]
          %v1216 = vld [vmem:[%s1 + $0x310] sm:$0xf]
          %v1217 = vld [vmem:[%s1 + $0x314] sm:$0xf]
          %v1218 = vld [vmem:[%s1 + $0x318] sm:$0xf]
          %v1219 = vld [vmem:[%s1 + $0x31c] sm:$0xf]
          %v1220 = vld [vmem:[%s1 + $0x320] sm:$0xf]
          %v1221 = vld [vmem:[%s1 + $0x324] sm:$0xf]
          %v1222 = vld [vmem:[%s1 + $0x328] sm:$0xf]
          %v1223 = vld [vmem:[%s1 + $0x32c] sm:$0xf]
          %v1224 = vld [vmem:[%s1 + $0x330] sm:$0xf]
          %v1225 = vld [vmem:[%s1 + $0x334] sm:$0xf]
          %v1226 = vld [vmem:[%s1 + $0x338] sm:$0xf]
          %v1227 = vld [vmem:[%s1 + $0x33c] sm:$0xf]
          %v1228 = vld [vmem:[%s1 + $0x340] sm:$0xf]
          %v1229 = vld [vmem:[%s1 + $0x344] sm:$0xf]
          %v1230 = vld [vmem:[%s1 + $0x348] sm:$0xf]
          %v1231 = vld [vmem:[%s1 + $0x34c] sm:$0xf]
          %v1232 = vld [vmem:[%s1 + $0x350] sm:$0xf]
          %v1233 = vld [vmem:[%s1 + $0x354] sm:$0xf]
          %v1234 = vld [vmem:[%s1 + $0x358] sm:$0xf]
          %v1235 = vld [vmem:[%s1 + $0x35c] sm:$0xf]
          %v1236 = vld [vmem:[%s1 + $0x360] sm:$0xf]
          %v1237 = vld [vmem:[%s1 + $0x364] sm:$0xf]
          %v1238 = vld [vmem:[%s1 + $0x368] sm:$0xf]
          %v1239 = vld [vmem:[%s1 + $0x36c] sm:$0xf]
          %v1240 = vld [vmem:[%s1 + $0x370] sm:$0xf]
          %v1241 = vld [vmem:[%s1 + $0x374] sm:$0xf]
          %v1242 = vld [vmem:[%s1 + $0x378] sm:$0xf]
          %v1243 = vld [vmem:[%s1 + $0x37c] sm:$0xf]
          %v1244 = vld [vmem:[%s1 + $0x380] sm:$0xf]
          %v1245 = vld [vmem:[%s1 + $0x384] sm:$0xf]
          %v1246 = vld [vmem:[%s1 + $0x388] sm:$0xf]
          %v1247 = vld [vmem:[%s1 + $0x38c] sm:$0xf]
          %v1248 = vld [vmem:[%s1 + $0x390] sm:$0xf]
          %v1249 = vld [vmem:[%s1 + $0x394] sm:$0xf]
          %v1250 = vld [vmem:[%s1 + $0x398] sm:$0xf]
          %v1251 = vld [vmem:[%s1 + $0x39c] sm:$0xf]
          %v1252 = vld [vmem:[%s1 + $0x3a0] sm:$0xf]
          %v1253 = vld [vmem:[%s1 + $0x3a4] sm:$0xf]
          %v1254 = vld [vmem:[%s1 + $0x3a8] sm:$0xf]
          %v1255 = vld [vmem:[%s1 + $0x3ac] sm:$0xf]
          %v1256 = vld [vmem:[%s1 + $0x3b0] sm:$0xf]
          %v1257 = vld [vmem:[%s1 + $0x3b4] sm:$0xf]
          %v1258 = vld [vmem:[%s1 + $0x3b8] sm:$0xf]
          %v1259 = vld [vmem:[%s1 + $0x3bc] sm:$0xf]
          %v1260 = vld [vmem:[%s1 + $0x3c0] sm:$0xf]
          %v1261 = vld [vmem:[%s1 + $0x3c4] sm:$0xf]
          %v1262 = vld [vmem:[%s1 + $0x3c8] sm:$0xf]
          %v1263 = vld [vmem:[%s1 + $0x3cc] sm:$0xf]
          %v1264 = vld [vmem:[%s1 + $0x3d0] sm:$0xf]
          %v1265 = vld [vmem:[%s1 + $0x3d4] sm:$0xf]
          %v1266 = vld [vmem:[%s1 + $0x3d8] sm:$0xf]
          %v1267 = vld [vmem:[%s1 + $0x3dc] sm:$0xf]
          %v1268 = vld [vmem:[%s1 + $0x3e0] sm:$0xf]
          %v1269 = vld [vmem:[%s1 + $0x3e4] sm:$0xf]
          %v1270 = vld [vmem:[%s1 + $0x3e8] sm:$0xf]
          %v1271 = vld [vmem:[%s1 + $0x3ec] sm:$0xf]
          %v1272 = vld [vmem:[%s1 + $0x3f0] sm:$0xf]
          %v1273 = vld [vmem:[%s1 + $0x3f4] sm:$0xf]
          %v1274 = vld [vmem:[%s1 + $0x3f8] sm:$0xf]
          %v1275 = vld [vmem:[%s1 + $0x3fc] sm:$0xf]
          %v1276 = vld [vmem:[%s1 + $0x400] sm:$0xf]
          %v1277 = vld [vmem:[%s1 + $0x404] sm:$0xf]
          %v1278 = vld [vmem:[%s1 + $0x408] sm:$0xf]
          %v1279 = vld [vmem:[%s1 + $0x40c] sm:$0xf]
          %v1280 = vld [vmem:[%s1 + $0x410] sm:$0xf]
          %v1281 = vld [vmem:[%s1 + $0x414] sm:$0xf]
          %v1282 = vld [vmem:[%s1 + $0x418] sm:$0xf]
          %v1283 = vld [vmem:[%s1 + $0x41c] sm:$0xf]
          %v1284 = vld [vmem:[%s1 + $0x420] sm:$0xf]
          %v1285 = vld [vmem:[%s1 + $0x424] sm:$0xf]
          %v1286 = vld [vmem:[%s1 + $0x428] sm:$0xf]
          %v1287 = vld [vmem:[%s1 + $0x42c] sm:$0xf]
          %v1288 = vld [vmem:[%s1 + $0x430] sm:$0xf]
          %v1289 = vld [vmem:[%s1 + $0x434] sm:$0xf]
          %v1290 = vld [vmem:[%s1 + $0x438] sm:$0xf]
          %v1291 = vld [vmem:[%s1 + $0x43c] sm:$0xf]
          %v1292 = vld [vmem:[%s1 + $0x440] sm:$0xf]
          %v1293 = vld [vmem:[%s1 + $0x444] sm:$0xf]
          %v1294 = vld [vmem:[%s1 + $0x448] sm:$0xf]
          %v1295 = vld [vmem:[%s1 + $0x44c] sm:$0xf]
          %v1296 = vld [vmem:[%s1 + $0x450] sm:$0xf]
          %v1297 = vld [vmem:[%s1 + $0x454] sm:$0xf]
          %v1298 = vld [vmem:[%s1 + $0x458] sm:$0xf]
          %v1299 = vld [vmem:[%s1 + $0x45c] sm:$0xf]
          %v1300 = vld [vmem:[%s1 + $0x460] sm:$0xf]
          %v1301 = vld [vmem:[%s1 + $0x464] sm:$0xf]
          %v1302 = vld [vmem:[%s1 + $0x468] sm:$0xf]
          %v1303 = vld [vmem:[%s1 + $0x46c] sm:$0xf]
          %v1304 = vld [vmem:[%s1 + $0x470] sm:$0xf]
          %v1305 = vld [vmem:[%s1 + $0x474] sm:$0xf]
          %v1306 = vld [vmem:[%s1 + $0x478] sm:$0xf]
          %v1307 = vld [vmem:[%s1 + $0x47c] sm:$0xf]
          %v1308 = vld [vmem:[%s1 + $0x480] sm:$0xf]
          %v1309 = vld [vmem:[%s1 + $0x484] sm:$0xf]
          %v1310 = vld [vmem:[%s1 + $0x488] sm:$0xf]
          %v1311 = vld [vmem:[%s1 + $0x48c] sm:$0xf]
          %v1312 = vld [vmem:[%s1 + $0x490] sm:$0xf]
          %v1313 = vld [vmem:[%s1 + $0x494] sm:$0xf]
          %v1314 = vld [vmem:[%s1 + $0x498] sm:$0xf]
          %v1315 = vld [vmem:[%s1 + $0x49c] sm:$0xf]
          %v1316 = vld [vmem:[%s1 + $0x4a0] sm:$0xf]
          %v1317 = vld [vmem:[%s1 + $0x4a4] sm:$0xf]
          %v1318 = vld [vmem:[%s1 + $0x4a8] sm:$0xf]
          %v1319 = vld [vmem:[%s1 + $0x4ac] sm:$0xf]
          %v1320 = vld [vmem:[%s1 + $0x4b0] sm:$0xf]
          %v1321 = vld [vmem:[%s1 + $0x4b4] sm:$0xf]
          %v1322 = vld [vmem:[%s1 + $0x4b8] sm:$0xf]
          %v1323 = vld [vmem:[%s1 + $0x4bc] sm:$0xf]
          %v1324 = vld [vmem:[%s1 + $0x4c0] sm:$0xf]
          %v1325 = vld [vmem:[%s1 + $0x4c4] sm:$0xf]
          %v1326 = vld [vmem:[%s1 + $0x4c8] sm:$0xf]
          %v1327 = vld [vmem:[%s1 + $0x4cc] sm:$0xf]
          %v1328 = vld [vmem:[%s1 + $0x4d0] sm:$0xf]
          %v1329 = vld [vmem:[%s1 + $0x4d4] sm:$0xf]
          %v1330 = vld [vmem:[%s1 + $0x4d8] sm:$0xf]
          %v1331 = vld [vmem:[%s1 + $0x4dc] sm:$0xf]
          %v1332 = vld [vmem:[%s1 + $0x4e0] sm:$0xf]
          %v1333 = vld [vmem:[%s1 + $0x4e4] sm:$0xf]
          %v1334 = vld [vmem:[%s1 + $0x4e8] sm:$0xf]
          %v1335 = vld [vmem:[%s1 + $0x4ec] sm:$0xf]
          %v1336 = vld [vmem:[%s1 + $0x4f0] sm:$0xf]
          %v1337 = vld [vmem:[%s1 + $0x4f4] sm:$0xf]
          %v1338 = vld [vmem:[%s1 + $0x4f8] sm:$0xf]
          %v1339 = vld [vmem:[%s1 + $0x4fc] sm:$0xf]
          %v1340 = vld [vmem:[%s1 + $0x500] sm:$0xf]
          %v1341 = vld [vmem:[%s1 + $0x504] sm:$0xf]
          %v1342 = vld [vmem:[%s1 + $0x508] sm:$0xf]
          %v1343 = vld [vmem:[%s1 + $0x50c] sm:$0xf]
          %v1344 = vld [vmem:[%s1 + $0x510] sm:$0xf]
          %v1345 = vld [vmem:[%s1 + $0x514] sm:$0xf]
          %v1346 = vld [vmem:[%s1 + $0x518] sm:$0xf]
          %v1347 = vld [vmem:[%s1 + $0x51c] sm:$0xf]
          %v1348 = vld [vmem:[%s1 + $0x520] sm:$0xf]
          %v1349 = vld [vmem:[%s1 + $0x524] sm:$0xf]
          %v1350 = vld [vmem:[%s1 + $0x528] sm:$0xf]
          %v1351 = vld [vmem:[%s1 + $0x52c] sm:$0xf]
          %v1352 = vld [vmem:[%s1 + $0x530] sm:$0xf]
          %v1353 = vld [vmem:[%s1 + $0x534] sm:$0xf]
          %v1354 = vld [vmem:[%s1 + $0x538] sm:$0xf]
          %v1355 = vld [vmem:[%s1 + $0x53c] sm:$0xf]
          %v1356 = vld [vmem:[%s1 + $0x540] sm:$0xf]
          %v1357 = vld [vmem:[%s1 + $0x544] sm:$0xf]
          %v1358 = vld [vmem:[%s1 + $0x548] sm:$0xf]
          %v1359 = vld [vmem:[%s1 + $0x54c] sm:$0xf]
          %v1360 = vld [vmem:[%s1 + $0x550] sm:$0xf]
          %v1361 = vld [vmem:[%s1 + $0x554] sm:$0xf]
          %v1362 = vld [vmem:[%s1 + $0x558] sm:$0xf]
          %v1363 = vld [vmem:[%s1 + $0x55c] sm:$0xf]
          %v1364 = vld [vmem:[%s1 + $0x560] sm:$0xf]
          %v1365 = vld [vmem:[%s1 + $0x564] sm:$0xf]
          %v1366 = vld [vmem:[%s1 + $0x568] sm:$0xf]
          %v1367 = vld [vmem:[%s1 + $0x56c] sm:$0xf]
          %v1368 = vld [vmem:[%s1 + $0x570] sm:$0xf]
          %v1369 = vld [vmem:[%s1 + $0x574] sm:$0xf]
          %v1370 = vld [vmem:[%s1 + $0x578] sm:$0xf]
          %v1371 = vld [vmem:[%s1 + $0x57c] sm:$0xf]
          %v1372 = vld [vmem:[%s1 + $0x580] sm:$0xf]
          %v1373 = vld [vmem:[%s1 + $0x584] sm:$0xf]
          %v1374 = vld [vmem:[%s1 + $0x588] sm:$0xf]
          %v1375 = vld [vmem:[%s1 + $0x58c] sm:$0xf]
          %v1376 = vld [vmem:[%s1 + $0x590] sm:$0xf]
          %v1377 = vld [vmem:[%s1 + $0x594] sm:$0xf]
          %v1378 = vld [vmem:[%s1 + $0x598] sm:$0xf]
          %v1379 = vld [vmem:[%s1 + $0x59c] sm:$0xf]
          %v1380 = vld [vmem:[%s1 + $0x5a0] sm:$0xf]
          %v1381 = vld [vmem:[%s1 + $0x5a4] sm:$0xf]
          %v1382 = vld [vmem:[%s1 + $0x5a8] sm:$0xf]
          %v1383 = vld [vmem:[%s1 + $0x5ac] sm:$0xf]
          %v1384 = vld [vmem:[%s1 + $0x5b0] sm:$0xf]
          %v1385 = vld [vmem:[%s1 + $0x5b4] sm:$0xf]
          %v1386 = vld [vmem:[%s1 + $0x5b8] sm:$0xf]
          %v1387 = vld [vmem:[%s1 + $0x5bc] sm:$0xf]
          %v1388 = vld [vmem:[%s1 + $0x5c0] sm:$0xf]
          %v1389 = vld [vmem:[%s1 + $0x5c4] sm:$0xf]
          %v1390 = vld [vmem:[%s1 + $0x5c8] sm:$0xf]
          %v1391 = vld [vmem:[%s1 + $0x5cc] sm:$0xf]
          %v1392 = vld [vmem:[%s1 + $0x5d0] sm:$0xf]
          %v1393 = vld [vmem:[%s1 + $0x5d4] sm:$0xf]
          %v1394 = vld [vmem:[%s1 + $0x5d8] sm:$0xf]
          %v1395 = vld [vmem:[%s1 + $0x5dc] sm:$0xf]
          %v1396 = vld [vmem:[%s1 + $0x5e0] sm:$0xf]
          %v1397 = vld [vmem:[%s1 + $0x5e4] sm:$0xf]
          %v1398 = vld [vmem:[%s1 + $0x5e8] sm:$0xf]
          %v1399 = vld [vmem:[%s1 + $0x5ec] sm:$0xf]
          %v1400 = vld [vmem:[%s1 + $0x5f0] sm:$0xf]
          %v1401 = vld [vmem:[%s1 + $0x5f4] sm:$0xf]
          %v1402 = vld [vmem:[%s1 + $0x5f8] sm:$0xf]
          %v1403 = vld [vmem:[%s1 + $0x5fc] sm:$0xf]
          %v1404 = vld [vmem:[%s2] sm:$0xff]
          %v1405 = vld [vmem:[%s2 + $0x8] sm:$0xff]
          %v1406 = vld [vmem:[%s2 + $0x10] sm:$0xff]
          %v1407 = vld [vmem:[%s2 + $0x18] sm:$0xff]
          %v1408 = vld [vmem:[%s2 + $0x20] sm:$0xff]
          %v1409 = vld [vmem:[%s2 + $0x28] sm:$0xff]
          %v1410 = vld [vmem:[%s2 + $0x30] sm:$0xff]
          %v1579 = vunpack.c.l.b16 %v852
          %v1580 = vunpack.c.h.b16 %v852
          %v1581 = vunpack.c.l.b16 %v853
          %v1582 = vunpack.c.h.b16 %v853
          %v1583 = vunpack.c.l.b16 %v854
          %v1584 = vunpack.c.h.b16 %v854
          %v1585 = vunpack.c.l.b16 %v855
          %v1586 = vunpack.c.h.b16 %v855
          %v1587 = vunpack.c.l.b16 %v856
          %v1588 = vunpack.c.h.b16 %v856
          %v1589 = vunpack.c.l.b16 %v857
          %v1590 = vunpack.c.h.b16 %v857
          %v1591 = vunpack.c.l.b16 %v858
          %v1592 = vunpack.c.h.b16 %v858
          %v1593 = vunpack.c.l.b16 %v859
          %v1594 = vunpack.c.h.b16 %v859
          %v1595 = vunpack.c.l.b16 %v860
          %v1596 = vunpack.c.h.b16 %v860
          %v1597 = vunpack.c.l.b16 %v861
          %v1598 = vunpack.c.h.b16 %v861
          %v1599 = vunpack.c.l.b16 %v862
          %v1600 = vunpack.c.h.b16 %v862
          %v1601 = vunpack.c.l.b16 %v863
          %v1602 = vunpack.c.h.b16 %v863
          %v1603 = vunpack.c.l.b16 %v864
          %v1604 = vunpack.c.h.b16 %v864
          %v1605 = vunpack.c.l.b16 %v865
          %v1606 = vunpack.c.h.b16 %v865
          %v1607 = vunpack.c.l.b16 %v866
          %v1608 = vunpack.c.h.b16 %v866
          %v1609 = vunpack.c.l.b16 %v867
          %v1610 = vunpack.c.h.b16 %v867
          %v1611 = vunpack.c.l.b16 %v868
          %v1612 = vunpack.c.h.b16 %v868
          %v1613 = vunpack.c.l.b16 %v869
          %v1614 = vunpack.c.h.b16 %v869
          %v1615 = vunpack.c.l.b16 %v870
          %v1616 = vunpack.c.h.b16 %v870
          %v1617 = vunpack.c.l.b16 %v871
          %v1618 = vunpack.c.h.b16 %v871
          %v1619 = vunpack.c.l.b16 %v872
          %v1620 = vunpack.c.h.b16 %v872
          %v1621 = vunpack.c.l.b16 %v873
          %v1622 = vunpack.c.h.b16 %v873
          %v1623 = vunpack.c.l.b16 %v874
          %v1624 = vunpack.c.h.b16 %v874
          %v1625 = vunpack.c.l.b16 %v875
          %v1626 = vunpack.c.h.b16 %v875
          %v1627 = vunpack.c.l.b16 %v876
          %v1628 = vunpack.c.h.b16 %v876
          %v1629 = vunpack.c.l.b16 %v877
          %v1630 = vunpack.c.h.b16 %v877
          %v1631 = vunpack.c.l.b16 %v878
          %v1632 = vunpack.c.h.b16 %v878
          %v1633 = vunpack.c.l.b16 %v879
          %v1634 = vunpack.c.h.b16 %v879
          %v1635 = vunpack.c.l.b16 %v880
          %v1636 = vunpack.c.h.b16 %v880
          %v1637 = vunpack.c.l.b16 %v881
          %v1638 = vunpack.c.h.b16 %v881
          %v1639 = vunpack.c.l.b16 %v882
          %v1640 = vunpack.c.h.b16 %v882
          %v1641 = vunpack.c.l.b16 %v883
          %v1642 = vunpack.c.h.b16 %v883
          %v1643 = vunpack.c.l.b16 %v884
          %v1644 = vunpack.c.h.b16 %v884
          %v1645 = vunpack.c.l.b16 %v885
          %v1646 = vunpack.c.h.b16 %v885
          %v1647 = vunpack.c.l.b16 %v886
          %v1648 = vunpack.c.h.b16 %v886
          %v1649 = vunpack.c.l.b16 %v887
          %v1650 = vunpack.c.h.b16 %v887
          %v1651 = vunpack.c.l.b16 %v888
          %v1652 = vunpack.c.h.b16 %v888
          %v1653 = vunpack.c.l.b16 %v889
          %v1654 = vunpack.c.h.b16 %v889
          %v1655 = vunpack.c.l.b16 %v890
          %v1656 = vunpack.c.h.b16 %v890
          %v1657 = vunpack.c.l.b16 %v891
          %v1658 = vunpack.c.h.b16 %v891
          %v1659 = vunpack.c.l.b16 %v892
          %v1660 = vunpack.c.h.b16 %v892
          %v1661 = vunpack.c.l.b16 %v893
          %v1662 = vunpack.c.h.b16 %v893
          %v1663 = vunpack.c.l.b16 %v894
          %v1664 = vunpack.c.h.b16 %v894
          %v1665 = vunpack.c.l.b16 %v895
          %v1666 = vunpack.c.h.b16 %v895
          %v1667 = vunpack.c.l.b16 %v896
          %v1668 = vunpack.c.h.b16 %v896
          %v1669 = vunpack.c.l.b16 %v897
          %v1670 = vunpack.c.h.b16 %v897
          %v1671 = vunpack.c.l.b16 %v898
          %v1672 = vunpack.c.h.b16 %v898
          %v1673 = vunpack.c.l.b16 %v899
          %v1674 = vunpack.c.h.b16 %v899
          %v1675 = vunpack.c.l.b16 %v900
          %v1676 = vunpack.c.h.b16 %v900
          %v1677 = vunpack.c.l.b16 %v901
          %v1678 = vunpack.c.h.b16 %v901
          %v1679 = vunpack.c.l.b16 %v902
          %v1680 = vunpack.c.h.b16 %v902
          %v1681 = vunpack.c.l.b16 %v903
          %v1682 = vunpack.c.h.b16 %v903
          %v1683 = vunpack.c.l.b16 %v904
          %v1684 = vunpack.c.h.b16 %v904
          %v1685 = vunpack.c.l.b16 %v905
          %v1686 = vunpack.c.h.b16 %v905
          %v1687 = vunpack.c.l.b16 %v906
          %v1688 = vunpack.c.h.b16 %v906
          %v1689 = vunpack.c.l.b16 %v907
          %v1690 = vunpack.c.h.b16 %v907
          %v1691 = vunpack.c.l.b16 %v908
          %v1692 = vunpack.c.h.b16 %v908
          %v1693 = vunpack.c.l.b16 %v909
          %v1694 = vunpack.c.h.b16 %v909
          %v1695 = vunpack.c.l.b16 %v910
          %v1696 = vunpack.c.h.b16 %v910
          %v1697 = vunpack.c.l.b16 %v911
          %v1698 = vunpack.c.h.b16 %v911
          %v1699 = vunpack.c.l.b16 %v912
          %v1700 = vunpack.c.h.b16 %v912
          %v1701 = vunpack.c.l.b16 %v913
          %v1702 = vunpack.c.h.b16 %v913
          %v1703 = vunpack.c.l.b16 %v914
          %v1704 = vunpack.c.h.b16 %v914
          %v1705 = vunpack.c.l.b16 %v915
          %v1706 = vunpack.c.h.b16 %v915
          %v1707 = vunpack.c.l.b16 %v916
          %v1708 = vunpack.c.h.b16 %v916
          %v1709 = vunpack.c.l.b16 %v917
          %v1710 = vunpack.c.h.b16 %v917
          %v1711 = vunpack.c.l.b16 %v918
          %v1712 = vunpack.c.h.b16 %v918
          %v1713 = vunpack.c.l.b16 %v919
          %v1714 = vunpack.c.h.b16 %v919
          %v1715 = vunpack.c.l.b16 %v920
          %v1716 = vunpack.c.h.b16 %v920
          %v1717 = vunpack.c.l.b16 %v921
          %v1718 = vunpack.c.h.b16 %v921
          %v1719 = vunpack.c.l.b16 %v922
          %v1720 = vunpack.c.h.b16 %v922
          %v1721 = vunpack.c.l.b16 %v923
          %v1722 = vunpack.c.h.b16 %v923
          %v1723 = vunpack.c.l.b16 %v924
          %v1724 = vunpack.c.h.b16 %v924
          %v1725 = vunpack.c.l.b16 %v925
          %v1726 = vunpack.c.h.b16 %v925
          %v1727 = vunpack.c.l.b16 %v926
          %v1728 = vunpack.c.h.b16 %v926
          %v1729 = vunpack.c.l.b16 %v927
          %v1730 = vunpack.c.h.b16 %v927
          %v1731 = vunpack.c.l.b16 %v928
          %v1732 = vunpack.c.h.b16 %v928
          %v1733 = vunpack.c.l.b16 %v929
          %v1734 = vunpack.c.h.b16 %v929
          %v1735 = vunpack.c.l.b16 %v930
          %v1736 = vunpack.c.h.b16 %v930
          %v1737 = vunpack.c.l.b16 %v931
          %v1738 = vunpack.c.h.b16 %v931
          %v1739 = vunpack.c.l.b16 %v932
          %v1740 = vunpack.c.h.b16 %v932
          %v1741 = vunpack.c.l.b16 %v933
          %v1742 = vunpack.c.h.b16 %v933
          %v1743 = vunpack.c.l.b16 %v934
          %v1744 = vunpack.c.h.b16 %v934
          %v1745 = vunpack.c.l.b16 %v935
          %v1746 = vunpack.c.h.b16 %v935
          %v1747 = vunpack.c.l.b16 %v936
          %v1748 = vunpack.c.h.b16 %v936
          %v1749 = vunpack.c.l.b16 %v937
          %v1750 = vunpack.c.h.b16 %v937
          %v1751 = vunpack.c.l.b16 %v938
          %v1752 = vunpack.c.h.b16 %v938
          %v1753 = vunpack.c.l.b16 %v939
          %v1754 = vunpack.c.h.b16 %v939
          %v1755 = vunpack.c.l.b16 %v940
          %v1756 = vunpack.c.h.b16 %v940
          %v1757 = vunpack.c.l.b16 %v941
          %v1758 = vunpack.c.h.b16 %v941
          %v1759 = vunpack.c.l.b16 %v942
          %v1760 = vunpack.c.h.b16 %v942
          %v1761 = vunpack.c.l.b16 %v943
          %v1762 = vunpack.c.h.b16 %v943
          %v1763 = vunpack.c.l.b16 %v944
          %v1764 = vunpack.c.h.b16 %v944
          %v1765 = vunpack.c.l.b16 %v945
          %v1766 = vunpack.c.h.b16 %v945
          %v1767 = vunpack.c.l.b16 %v946
          %v1768 = vunpack.c.h.b16 %v946
          %v1769 = vunpack.c.l.b16 %v947
          %v1770 = vunpack.c.h.b16 %v947
          %v1771 = vunpack.c.l.b16 %v948
          %v1772 = vunpack.c.h.b16 %v948
          %v1773 = vunpack.c.l.b16 %v949
          %v1774 = vunpack.c.h.b16 %v949
          %v1775 = vunpack.c.l.b16 %v950
          %v1776 = vunpack.c.h.b16 %v950
          %v1777 = vunpack.c.l.b16 %v951
          %v1778 = vunpack.c.h.b16 %v951
          %v1779 = vunpack.c.l.b16 %v952
          %v1780 = vunpack.c.h.b16 %v952
          %v1781 = vunpack.c.l.b16 %v953
          %v1782 = vunpack.c.h.b16 %v953
          %v1783 = vunpack.c.l.b16 %v954
          %v1784 = vunpack.c.h.b16 %v954
          %v1785 = vunpack.c.l.b16 %v955
          %v1786 = vunpack.c.h.b16 %v955
          %v1787 = vunpack.c.l.b16 %v956
          %v1788 = vunpack.c.h.b16 %v956
          %v1789 = vunpack.c.l.b16 %v957
          %v1790 = vunpack.c.h.b16 %v957
          %v1791 = vunpack.c.l.b16 %v958
          %v1792 = vunpack.c.h.b16 %v958
          %v1793 = vunpack.c.l.b16 %v959
          %v1794 = vunpack.c.h.b16 %v959
          %v1795 = vunpack.c.l.b16 %v960
          %v1796 = vunpack.c.h.b16 %v960
          %v1797 = vunpack.c.l.b16 %v961
          %v1798 = vunpack.c.h.b16 %v961
          %v1799 = vunpack.c.l.b16 %v962
          %v1800 = vunpack.c.h.b16 %v962
          %v1801 = vunpack.c.l.b16 %v963
          %v1802 = vunpack.c.h.b16 %v963
          %v1803 = vunpack.c.l.b16 %v964
          %v1804 = vunpack.c.h.b16 %v964
          %v1805 = vunpack.c.l.b16 %v965
          %v1806 = vunpack.c.h.b16 %v965
          %v1807 = vunpack.c.l.b16 %v966
          %v1808 = vunpack.c.h.b16 %v966
          %v1809 = vunpack.c.l.b16 %v967
          %v1810 = vunpack.c.h.b16 %v967
          %v1811 = vunpack.c.l.b16 %v968
          %v1812 = vunpack.c.h.b16 %v968
          %v1813 = vunpack.c.l.b16 %v969
          %v1814 = vunpack.c.h.b16 %v969
          %v1815 = vunpack.c.l.b16 %v970
          %v1816 = vunpack.c.h.b16 %v970
          %v1817 = vunpack.c.l.b16 %v971
          %v1818 = vunpack.c.h.b16 %v971
          %v1819 = vunpack.c.l.b16 %v972
          %v1820 = vunpack.c.h.b16 %v972
          %v1821 = vunpack.c.l.b16 %v973
          %v1822 = vunpack.c.h.b16 %v973
          %v1823 = vunpack.c.l.b16 %v974
          %v1824 = vunpack.c.h.b16 %v974
          %v1825 = vunpack.c.l.b16 %v975
          %v1826 = vunpack.c.h.b16 %v975
          %v1827 = vunpack.c.l.b16 %v976
          %v1828 = vunpack.c.h.b16 %v976
          %v1829 = vunpack.c.l.b16 %v977
          %v1830 = vunpack.c.h.b16 %v977
          %v1831 = vunpack.c.l.b16 %v978
          %v1832 = vunpack.c.h.b16 %v978
          %v1833 = vunpack.c.l.b16 %v979
          %v1834 = vunpack.c.h.b16 %v979
          %v1835 = vunpack.c.l.b16 %v980
          %v1836 = vunpack.c.h.b16 %v980
          %v1837 = vunpack.c.l.b16 %v981
          %v1838 = vunpack.c.h.b16 %v981
          %v1839 = vunpack.c.l.b16 %v982
          %v1840 = vunpack.c.h.b16 %v982
          %v1841 = vunpack.c.l.b16 %v983
          %v1842 = vunpack.c.h.b16 %v983
          %v1843 = vunpack.c.l.b16 %v984
          %v1844 = vunpack.c.h.b16 %v984
          %v1845 = vunpack.c.l.b16 %v985
          %v1846 = vunpack.c.h.b16 %v985
          %v1847 = vunpack.c.l.b16 %v986
          %v1848 = vunpack.c.h.b16 %v986
          %v1849 = vunpack.c.l.b16 %v987
          %v1850 = vunpack.c.h.b16 %v987
          %v1851 = vunpack.c.l.b16 %v988
          %v1852 = vunpack.c.h.b16 %v988
          %v1853 = vunpack.c.l.b16 %v989
          %v1854 = vunpack.c.h.b16 %v989
          %v1855 = vunpack.c.l.b16 %v990
          %v1856 = vunpack.c.h.b16 %v990
          %v1857 = vunpack.c.l.b16 %v991
          %v1858 = vunpack.c.h.b16 %v991
          %v1859 = vunpack.c.l.b16 %v992
          %v1860 = vunpack.c.h.b16 %v992
          %v1861 = vunpack.c.l.b16 %v993
          %v1862 = vunpack.c.h.b16 %v993
          %v1863 = vunpack.c.l.b16 %v994
          %v1864 = vunpack.c.h.b16 %v994
          %v1865 = vunpack.c.l.b16 %v995
          %v1866 = vunpack.c.h.b16 %v995
          %v1867 = vunpack.c.l.b16 %v996
          %v1868 = vunpack.c.h.b16 %v996
          %v1869 = vunpack.c.l.b16 %v997
          %v1870 = vunpack.c.h.b16 %v997
          %v1871 = vunpack.c.l.b16 %v998
          %v1872 = vunpack.c.h.b16 %v998
          %v1873 = vunpack.c.l.b16 %v999
          %v1874 = vunpack.c.h.b16 %v999
          %v1875 = vunpack.c.l.b16 %v1000
          %v1876 = vunpack.c.h.b16 %v1000
          %v1877 = vunpack.c.l.b16 %v1001
          %v1878 = vunpack.c.h.b16 %v1001
          %v1879 = vunpack.c.l.b16 %v1002
          %v1880 = vunpack.c.h.b16 %v1002
          %v1881 = vunpack.c.l.b16 %v1003
          %v1882 = vunpack.c.h.b16 %v1003
          %v1883 = vunpack.c.l.b16 %v1004
          %v1884 = vunpack.c.h.b16 %v1004
          %v1885 = vunpack.c.l.b16 %v1005
          %v1886 = vunpack.c.h.b16 %v1005
          %v1887 = vunpack.c.l.b16 %v1006
          %v1888 = vunpack.c.h.b16 %v1006
          %v1889 = vunpack.c.l.b16 %v1007
          %v1890 = vunpack.c.h.b16 %v1007
          %v1891 = vunpack.c.l.b16 %v1008
          %v1892 = vunpack.c.h.b16 %v1008
          %v1893 = vunpack.c.l.b16 %v1009
          %v1894 = vunpack.c.h.b16 %v1009
          %v1895 = vunpack.c.l.b16 %v1010
          %v1896 = vunpack.c.h.b16 %v1010
          %v1897 = vunpack.c.l.b16 %v1011
          %v1898 = vunpack.c.h.b16 %v1011
          %v1899 = vunpack.c.l.b16 %v1012
          %v1900 = vunpack.c.h.b16 %v1012
          %v1901 = vunpack.c.l.b16 %v1013
          %v1902 = vunpack.c.h.b16 %v1013
          %v1903 = vunpack.c.l.b16 %v1014
          %v1904 = vunpack.c.h.b16 %v1014
          %v1905 = vunpack.c.l.b16 %v1015
          %v1906 = vunpack.c.h.b16 %v1015
          %v1907 = vunpack.c.l.b16 %v1016
          %v1908 = vunpack.c.h.b16 %v1016
          %v1909 = vunpack.c.l.b16 %v1017
          %v1910 = vunpack.c.h.b16 %v1017
          %v1911 = vunpack.c.l.b16 %v1018
          %v1912 = vunpack.c.h.b16 %v1018
          %v1913 = vunpack.c.l.b16 %v1019
          %v1914 = vunpack.c.h.b16 %v1019
          %v1915 = vpack.c.b16 %v1603, %v1579
          %v1916 = vpack.c.b16 %v1604, %v1580
          %v1917 = vpack.c.b16 %v1605, %v1581
          %v1918 = vpack.c.b16 %v1606, %v1582
          %v1919 = vpack.c.b16 %v1607, %v1583
          %v1920 = vpack.c.b16 %v1608, %v1584
          %v1921 = vpack.c.b16 %v1609, %v1585
          %v1922 = vpack.c.b16 %v1610, %v1586
          %v1923 = vpack.c.b16 %v1611, %v1587
          %v1924 = vpack.c.b16 %v1612, %v1588
          %v1925 = vpack.c.b16 %v1613, %v1589
          %v1926 = vpack.c.b16 %v1614, %v1590
          %v1927 = vpack.c.b16 %v1615, %v1591
          %v1928 = vpack.c.b16 %v1616, %v1592
          %v1929 = vpack.c.b16 %v1617, %v1593
          %v1930 = vpack.c.b16 %v1618, %v1594
          %v1931 = vpack.c.b16 %v1619, %v1595
          %v1932 = vpack.c.b16 %v1620, %v1596
          %v1933 = vpack.c.b16 %v1621, %v1597
          %v1934 = vpack.c.b16 %v1622, %v1598
          %v1935 = vpack.c.b16 %v1623, %v1599
          %v1936 = vpack.c.b16 %v1624, %v1600
          %v1937 = vpack.c.b16 %v1625, %v1601
          %v1938 = vpack.c.b16 %v1626, %v1602
          %v1939 = vpack.c.b16 %v1651, %v1627
          %v1940 = vpack.c.b16 %v1652, %v1628
          %v1941 = vpack.c.b16 %v1653, %v1629
          %v1942 = vpack.c.b16 %v1654, %v1630
          %v1943 = vpack.c.b16 %v1655, %v1631
          %v1944 = vpack.c.b16 %v1656, %v1632
          %v1945 = vpack.c.b16 %v1657, %v1633
          %v1946 = vpack.c.b16 %v1658, %v1634
          %v1947 = vpack.c.b16 %v1659, %v1635
          %v1948 = vpack.c.b16 %v1660, %v1636
          %v1949 = vpack.c.b16 %v1661, %v1637
          %v1950 = vpack.c.b16 %v1662, %v1638
          %v1951 = vpack.c.b16 %v1663, %v1639
          %v1952 = vpack.c.b16 %v1664, %v1640
          %v1953 = vpack.c.b16 %v1665, %v1641
          %v1954 = vpack.c.b16 %v1666, %v1642
          %v1955 = vpack.c.b16 %v1667, %v1643
          %v1956 = vpack.c.b16 %v1668, %v1644
          %v1957 = vpack.c.b16 %v1669, %v1645
          %v1958 = vpack.c.b16 %v1670, %v1646
          %v1959 = vpack.c.b16 %v1671, %v1647
          %v1960 = vpack.c.b16 %v1672, %v1648
          %v1961 = vpack.c.b16 %v1673, %v1649
          %v1962 = vpack.c.b16 %v1674, %v1650
          %v1963 = vpack.c.b16 %v1699, %v1675
          %v1964 = vpack.c.b16 %v1700, %v1676
          %v1965 = vpack.c.b16 %v1701, %v1677
          %v1966 = vpack.c.b16 %v1702, %v1678
          %v1967 = vpack.c.b16 %v1703, %v1679
          %v1968 = vpack.c.b16 %v1704, %v1680
          %v1969 = vpack.c.b16 %v1705, %v1681
          %v1970 = vpack.c.b16 %v1706, %v1682
          %v1971 = vpack.c.b16 %v1707, %v1683
          %v1972 = vpack.c.b16 %v1708, %v1684
          %v1973 = vpack.c.b16 %v1709, %v1685
          %v1974 = vpack.c.b16 %v1710, %v1686
          %v1975 = vpack.c.b16 %v1711, %v1687
          %v1976 = vpack.c.b16 %v1712, %v1688
          %v1977 = vpack.c.b16 %v1713, %v1689
          %v1978 = vpack.c.b16 %v1714, %v1690
          %v1979 = vpack.c.b16 %v1715, %v1691
          %v1980 = vpack.c.b16 %v1716, %v1692
          %v1981 = vpack.c.b16 %v1717, %v1693
          %v1982 = vpack.c.b16 %v1718, %v1694
          %v1983 = vpack.c.b16 %v1719, %v1695
          %v1984 = vpack.c.b16 %v1720, %v1696
          %v1985 = vpack.c.b16 %v1721, %v1697
          %v1986 = vpack.c.b16 %v1722, %v1698
          %v1987 = vpack.c.b16 %v1747, %v1723
          %v1988 = vpack.c.b16 %v1748, %v1724
          %v1989 = vpack.c.b16 %v1749, %v1725
          %v1990 = vpack.c.b16 %v1750, %v1726
          %v1991 = vpack.c.b16 %v1751, %v1727
          %v1992 = vpack.c.b16 %v1752, %v1728
          %v1993 = vpack.c.b16 %v1753, %v1729
          %v1994 = vpack.c.b16 %v1754, %v1730
          %v1995 = vpack.c.b16 %v1755, %v1731
          %v1996 = vpack.c.b16 %v1756, %v1732
          %v1997 = vpack.c.b16 %v1757, %v1733
          %v1998 = vpack.c.b16 %v1758, %v1734
          %v1999 = vpack.c.b16 %v1759, %v1735
          %v2000 = vpack.c.b16 %v1760, %v1736
          %v2001 = vpack.c.b16 %v1761, %v1737
          %v2002 = vpack.c.b16 %v1762, %v1738
          %v2003 = vpack.c.b16 %v1763, %v1739
          %v2004 = vpack.c.b16 %v1764, %v1740
          %v2005 = vpack.c.b16 %v1765, %v1741
          %v2006 = vpack.c.b16 %v1766, %v1742
          %v2007 = vpack.c.b16 %v1767, %v1743
          %v2008 = vpack.c.b16 %v1768, %v1744
          %v2009 = vpack.c.b16 %v1769, %v1745
          %v2010 = vpack.c.b16 %v1770, %v1746
          %v2011 = vpack.c.b16 %v1795, %v1771
          %v2012 = vpack.c.b16 %v1796, %v1772
          %v2013 = vpack.c.b16 %v1797, %v1773
          %v2014 = vpack.c.b16 %v1798, %v1774
          %v2015 = vpack.c.b16 %v1799, %v1775
          %v2016 = vpack.c.b16 %v1800, %v1776
          %v2017 = vpack.c.b16 %v1801, %v1777
          %v2018 = vpack.c.b16 %v1802, %v1778
          %v2019 = vpack.c.b16 %v1803, %v1779
          %v2020 = vpack.c.b16 %v1804, %v1780
          %v2021 = vpack.c.b16 %v1805, %v1781
          %v2022 = vpack.c.b16 %v1806, %v1782
          %v2023 = vpack.c.b16 %v1807, %v1783
          %v2024 = vpack.c.b16 %v1808, %v1784
          %v2025 = vpack.c.b16 %v1809, %v1785
          %v2026 = vpack.c.b16 %v1810, %v1786
          %v2027 = vpack.c.b16 %v1811, %v1787
          %v2028 = vpack.c.b16 %v1812, %v1788
          %v2029 = vpack.c.b16 %v1813, %v1789
          %v2030 = vpack.c.b16 %v1814, %v1790
          %v2031 = vpack.c.b16 %v1815, %v1791
          %v2032 = vpack.c.b16 %v1816, %v1792
          %v2033 = vpack.c.b16 %v1817, %v1793
          %v2034 = vpack.c.b16 %v1818, %v1794
          %v2035 = vpack.c.b16 %v1843, %v1819
          %v2036 = vpack.c.b16 %v1844, %v1820
          %v2037 = vpack.c.b16 %v1845, %v1821
          %v2038 = vpack.c.b16 %v1846, %v1822
          %v2039 = vpack.c.b16 %v1847, %v1823
          %v2040 = vpack.c.b16 %v1848, %v1824
          %v2041 = vpack.c.b16 %v1849, %v1825
          %v2042 = vpack.c.b16 %v1850, %v1826
          %v2043 = vpack.c.b16 %v1851, %v1827
          %v2044 = vpack.c.b16 %v1852, %v1828
          %v2045 = vpack.c.b16 %v1853, %v1829
          %v2046 = vpack.c.b16 %v1854, %v1830
          %v2047 = vpack.c.b16 %v1855, %v1831
          %v2048 = vpack.c.b16 %v1856, %v1832
          %v2049 = vpack.c.b16 %v1857, %v1833
          %v2050 = vpack.c.b16 %v1858, %v1834
          %v2051 = vpack.c.b16 %v1859, %v1835
          %v2052 = vpack.c.b16 %v1860, %v1836
          %v2053 = vpack.c.b16 %v1861, %v1837
          %v2054 = vpack.c.b16 %v1862, %v1838
          %v2055 = vpack.c.b16 %v1863, %v1839
          %v2056 = vpack.c.b16 %v1864, %v1840
          %v2057 = vpack.c.b16 %v1865, %v1841
          %v2058 = vpack.c.b16 %v1866, %v1842
          %v2059 = vpack.c.b16 %v1891, %v1867
          %v2060 = vpack.c.b16 %v1892, %v1868
          %v2061 = vpack.c.b16 %v1893, %v1869
          %v2062 = vpack.c.b16 %v1894, %v1870
          %v2063 = vpack.c.b16 %v1895, %v1871
          %v2064 = vpack.c.b16 %v1896, %v1872
          %v2065 = vpack.c.b16 %v1897, %v1873
          %v2066 = vpack.c.b16 %v1898, %v1874
          %v2067 = vpack.c.b16 %v1899, %v1875
          %v2068 = vpack.c.b16 %v1900, %v1876
          %v2069 = vpack.c.b16 %v1901, %v1877
          %v2070 = vpack.c.b16 %v1902, %v1878
          %v2071 = vpack.c.b16 %v1903, %v1879
          %v2072 = vpack.c.b16 %v1904, %v1880
          %v2073 = vpack.c.b16 %v1905, %v1881
          %v2074 = vpack.c.b16 %v1906, %v1882
          %v2075 = vpack.c.b16 %v1907, %v1883
          %v2076 = vpack.c.b16 %v1908, %v1884
          %v2077 = vpack.c.b16 %v1909, %v1885
          %v2078 = vpack.c.b16 %v1910, %v1886
          %v2079 = vpack.c.b16 %v1911, %v1887
          %v2080 = vpack.c.b16 %v1912, %v1888
          %v2081 = vpack.c.b16 %v1913, %v1889
          %v2082 = vpack.c.b16 %v1914, %v1890
          %v2635 = vunpack.c.l.b16 %v1020
          %v2636 = vunpack.c.l.b16 %v1021
          %v2637 = vunpack.c.l.b16 %v1022
          %v2638 = vunpack.c.l.b16 %v1023
          %v2639 = vunpack.c.l.b16 %v1024
          %v2640 = vunpack.c.l.b16 %v1025
          %v2641 = vunpack.c.l.b16 %v1026
          %v2642 = vunpack.c.l.b16 %v1027
          %v2643 = vunpack.c.l.b16 %v1028
          %v2644 = vunpack.c.l.b16 %v1029
          %v2645 = vunpack.c.l.b16 %v1030
          %v2646 = vunpack.c.l.b16 %v1031
          %v2647 = vunpack.c.l.b16 %v1032
          %v2648 = vunpack.c.l.b16 %v1033
          %v2649 = vunpack.c.l.b16 %v1034
          %v2650 = vunpack.c.l.b16 %v1035
          %v2651 = vunpack.c.l.b16 %v1036
          %v2652 = vunpack.c.l.b16 %v1037
          %v2653 = vunpack.c.l.b16 %v1038
          %v2654 = vunpack.c.l.b16 %v1039
          %v2655 = vunpack.c.l.b16 %v1040
          %v2656 = vunpack.c.l.b16 %v1041
          %v2657 = vunpack.c.l.b16 %v1042
          %v2658 = vunpack.c.l.b16 %v1043
          %v2659 = vunpack.c.l.b16 %v1044
          %v2660 = vunpack.c.l.b16 %v1045
          %v2661 = vunpack.c.l.b16 %v1046
          %v2662 = vunpack.c.l.b16 %v1047
          %v2663 = vunpack.c.l.b16 %v1048
          %v2664 = vunpack.c.l.b16 %v1049
          %v2665 = vunpack.c.l.b16 %v1050
          %v2666 = vunpack.c.l.b16 %v1051
          %v2667 = vunpack.c.l.b16 %v1052
          %v2668 = vunpack.c.l.b16 %v1053
          %v2669 = vunpack.c.l.b16 %v1054
          %v2670 = vunpack.c.l.b16 %v1055
          %v2671 = vunpack.c.l.b16 %v1056
          %v2672 = vunpack.c.l.b16 %v1057
          %v2673 = vunpack.c.l.b16 %v1058
          %v2674 = vunpack.c.l.b16 %v1059
          %v2675 = vunpack.c.l.b16 %v1060
          %v2676 = vunpack.c.l.b16 %v1061
          %v2677 = vunpack.c.l.b16 %v1062
          %v2678 = vunpack.c.l.b16 %v1063
          %v2679 = vunpack.c.l.b16 %v1064
          %v2680 = vunpack.c.l.b16 %v1065
          %v2681 = vunpack.c.l.b16 %v1066
          %v2682 = vunpack.c.l.b16 %v1067
          %v2683 = vunpack.c.l.b16 %v1068
          %v2684 = vunpack.c.l.b16 %v1069
          %v2685 = vunpack.c.l.b16 %v1070
          %v2686 = vunpack.c.l.b16 %v1071
          %v2687 = vunpack.c.l.b16 %v1072
          %v2688 = vunpack.c.l.b16 %v1073
          %v2689 = vunpack.c.l.b16 %v1074
          %v2690 = vunpack.c.l.b16 %v1075
          %v2691 = vunpack.c.l.b16 %v1076
          %v2692 = vunpack.c.l.b16 %v1077
          %v2693 = vunpack.c.l.b16 %v1078
          %v2694 = vunpack.c.l.b16 %v1079
          %v2695 = vunpack.c.l.b16 %v1080
          %v2696 = vunpack.c.l.b16 %v1081
          %v2697 = vunpack.c.l.b16 %v1082
          %v2698 = vunpack.c.l.b16 %v1083
          %v2699 = vunpack.c.l.b16 %v1084
          %v2700 = vunpack.c.l.b16 %v1085
          %v2701 = vunpack.c.l.b16 %v1086
          %v2702 = vunpack.c.l.b16 %v1087
          %v2703 = vunpack.c.l.b16 %v1088
          %v2704 = vunpack.c.l.b16 %v1089
          %v2705 = vunpack.c.l.b16 %v1090
          %v2706 = vunpack.c.l.b16 %v1091
          %v2707 = vunpack.c.l.b16 %v1092
          %v2708 = vunpack.c.l.b16 %v1093
          %v2709 = vunpack.c.l.b16 %v1094
          %v2710 = vunpack.c.l.b16 %v1095
          %v2711 = vunpack.c.l.b16 %v1096
          %v2712 = vunpack.c.l.b16 %v1097
          %v2713 = vunpack.c.l.b16 %v1098
          %v2714 = vunpack.c.l.b16 %v1099
          %v2715 = vunpack.c.l.b16 %v1100
          %v2716 = vunpack.c.l.b16 %v1101
          %v2717 = vunpack.c.l.b16 %v1102
          %v2718 = vunpack.c.l.b16 %v1103
          %v2719 = vunpack.c.l.b16 %v1104
          %v2720 = vunpack.c.l.b16 %v1105
          %v2721 = vunpack.c.l.b16 %v1106
          %v2722 = vunpack.c.l.b16 %v1107
          %v2723 = vunpack.c.l.b16 %v1108
          %v2724 = vunpack.c.l.b16 %v1109
          %v2725 = vunpack.c.l.b16 %v1110
          %v2726 = vunpack.c.l.b16 %v1111
          %v2727 = vunpack.c.l.b16 %v1112
          %v2728 = vunpack.c.l.b16 %v1113
          %v2729 = vunpack.c.l.b16 %v1114
          %v2730 = vunpack.c.l.b16 %v1115
          %v2731 = vunpack.c.l.b16 %v1116
          %v2732 = vunpack.c.l.b16 %v1117
          %v2733 = vunpack.c.l.b16 %v1118
          %v2734 = vunpack.c.l.b16 %v1119
          %v2735 = vunpack.c.l.b16 %v1120
          %v2736 = vunpack.c.l.b16 %v1121
          %v2737 = vunpack.c.l.b16 %v1122
          %v2738 = vunpack.c.l.b16 %v1123
          %v2739 = vunpack.c.l.b16 %v1124
          %v2740 = vunpack.c.l.b16 %v1125
          %v2741 = vunpack.c.l.b16 %v1126
          %v2742 = vunpack.c.l.b16 %v1127
          %v2743 = vunpack.c.l.b16 %v1128
          %v2744 = vunpack.c.l.b16 %v1129
          %v2745 = vunpack.c.l.b16 %v1130
          %v2746 = vunpack.c.l.b16 %v1131
          %v2747 = vunpack.c.l.b16 %v1132
          %v2748 = vunpack.c.l.b16 %v1133
          %v2749 = vunpack.c.l.b16 %v1134
          %v2750 = vunpack.c.l.b16 %v1135
          %v2751 = vunpack.c.l.b16 %v1136
          %v2752 = vunpack.c.l.b16 %v1137
          %v2753 = vunpack.c.l.b16 %v1138
          %v2754 = vunpack.c.l.b16 %v1139
          %v2755 = vunpack.c.l.b16 %v1140
          %v2756 = vunpack.c.l.b16 %v1141
          %v2757 = vunpack.c.l.b16 %v1142
          %v2758 = vunpack.c.l.b16 %v1143
          %v2759 = vunpack.c.l.b16 %v1144
          %v2760 = vunpack.c.l.b16 %v1145
          %v2761 = vunpack.c.l.b16 %v1146
          %v2762 = vunpack.c.l.b16 %v1147
          %v2763 = vunpack.c.l.b16 %v1148
          %v2764 = vunpack.c.l.b16 %v1149
          %v2765 = vunpack.c.l.b16 %v1150
          %v2766 = vunpack.c.l.b16 %v1151
          %v2767 = vunpack.c.l.b16 %v1152
          %v2768 = vunpack.c.l.b16 %v1153
          %v2769 = vunpack.c.l.b16 %v1154
          %v2770 = vunpack.c.l.b16 %v1155
          %v2771 = vunpack.c.l.b16 %v1156
          %v2772 = vunpack.c.l.b16 %v1157
          %v2773 = vunpack.c.l.b16 %v1158
          %v2774 = vunpack.c.l.b16 %v1159
          %v2775 = vunpack.c.l.b16 %v1160
          %v2776 = vunpack.c.l.b16 %v1161
          %v2777 = vunpack.c.l.b16 %v1162
          %v2778 = vunpack.c.l.b16 %v1163
          %v2779 = vunpack.c.l.b16 %v1164
          %v2780 = vunpack.c.l.b16 %v1165
          %v2781 = vunpack.c.l.b16 %v1166
          %v2782 = vunpack.c.l.b16 %v1167
          %v2783 = vunpack.c.l.b16 %v1168
          %v2784 = vunpack.c.l.b16 %v1169
          %v2785 = vunpack.c.l.b16 %v1170
          %v2786 = vunpack.c.l.b16 %v1171
          %v2787 = vunpack.c.l.b16 %v1172
          %v2788 = vunpack.c.l.b16 %v1173
          %v2789 = vunpack.c.l.b16 %v1174
          %v2790 = vunpack.c.l.b16 %v1175
          %v2791 = vunpack.c.l.b16 %v1176
          %v2792 = vunpack.c.l.b16 %v1177
          %v2793 = vunpack.c.l.b16 %v1178
          %v2794 = vunpack.c.l.b16 %v1179
          %v2795 = vunpack.c.l.b16 %v1180
          %v2796 = vunpack.c.l.b16 %v1181
          %v2797 = vunpack.c.l.b16 %v1182
          %v2798 = vunpack.c.l.b16 %v1183
          %v2799 = vunpack.c.l.b16 %v1184
          %v2800 = vunpack.c.l.b16 %v1185
          %v2801 = vunpack.c.l.b16 %v1186
          %v2802 = vunpack.c.l.b16 %v1187
          %v2803 = vunpack.c.l.b16 %v1188
          %v2804 = vunpack.c.l.b16 %v1189
          %v2805 = vunpack.c.l.b16 %v1190
          %v2806 = vunpack.c.l.b16 %v1191
          %v2807 = vunpack.c.l.b16 %v1192
          %v2808 = vunpack.c.l.b16 %v1193
          %v2809 = vunpack.c.l.b16 %v1194
          %v2810 = vunpack.c.l.b16 %v1195
          %v2811 = vunpack.c.l.b16 %v1196
          %v2812 = vunpack.c.l.b16 %v1197
          %v2813 = vunpack.c.l.b16 %v1198
          %v2814 = vunpack.c.l.b16 %v1199
          %v2815 = vunpack.c.l.b16 %v1200
          %v2816 = vunpack.c.l.b16 %v1201
          %v2817 = vunpack.c.l.b16 %v1202
          %v2818 = vunpack.c.l.b16 %v1203
          %v2819 = vunpack.c.l.b16 %v1204
          %v2820 = vunpack.c.l.b16 %v1205
          %v2821 = vunpack.c.l.b16 %v1206
          %v2822 = vunpack.c.l.b16 %v1207
          %v2823 = vunpack.c.l.b16 %v1208
          %v2824 = vunpack.c.l.b16 %v1209
          %v2825 = vunpack.c.l.b16 %v1210
          %v2826 = vunpack.c.l.b16 %v1211
          %v2827 = vunpack.c.l.b16 %v1212
          %v2828 = vunpack.c.l.b16 %v1213
          %v2829 = vunpack.c.l.b16 %v1214
          %v2830 = vunpack.c.l.b16 %v1215
          %v2831 = vunpack.c.l.b16 %v1216
          %v2832 = vunpack.c.l.b16 %v1217
          %v2833 = vunpack.c.l.b16 %v1218
          %v2834 = vunpack.c.l.b16 %v1219
          %v2835 = vunpack.c.l.b16 %v1220
          %v2836 = vunpack.c.l.b16 %v1221
          %v2837 = vunpack.c.l.b16 %v1222
          %v2838 = vunpack.c.l.b16 %v1223
          %v2839 = vunpack.c.l.b16 %v1224
          %v2840 = vunpack.c.l.b16 %v1225
          %v2841 = vunpack.c.l.b16 %v1226
          %v2842 = vunpack.c.l.b16 %v1227
          %v2843 = vunpack.c.l.b16 %v1228
          %v2844 = vunpack.c.l.b16 %v1229
          %v2845 = vunpack.c.l.b16 %v1230
          %v2846 = vunpack.c.l.b16 %v1231
          %v2847 = vunpack.c.l.b16 %v1232
          %v2848 = vunpack.c.l.b16 %v1233
          %v2849 = vunpack.c.l.b16 %v1234
          %v2850 = vunpack.c.l.b16 %v1235
          %v2851 = vunpack.c.l.b16 %v1236
          %v2852 = vunpack.c.l.b16 %v1237
          %v2853 = vunpack.c.l.b16 %v1238
          %v2854 = vunpack.c.l.b16 %v1239
          %v2855 = vunpack.c.l.b16 %v1240
          %v2856 = vunpack.c.l.b16 %v1241
          %v2857 = vunpack.c.l.b16 %v1242
          %v2858 = vunpack.c.l.b16 %v1243
          %v2859 = vunpack.c.l.b16 %v1244
          %v2860 = vunpack.c.l.b16 %v1245
          %v2861 = vunpack.c.l.b16 %v1246
          %v2862 = vunpack.c.l.b16 %v1247
          %v2863 = vunpack.c.l.b16 %v1248
          %v2864 = vunpack.c.l.b16 %v1249
          %v2865 = vunpack.c.l.b16 %v1250
          %v2866 = vunpack.c.l.b16 %v1251
          %v2867 = vunpack.c.l.b16 %v1252
          %v2868 = vunpack.c.l.b16 %v1253
          %v2869 = vunpack.c.l.b16 %v1254
          %v2870 = vunpack.c.l.b16 %v1255
          %v2871 = vunpack.c.l.b16 %v1256
          %v2872 = vunpack.c.l.b16 %v1257
          %v2873 = vunpack.c.l.b16 %v1258
          %v2874 = vunpack.c.l.b16 %v1259
          %v2875 = vunpack.c.l.b16 %v1260
          %v2876 = vunpack.c.l.b16 %v1261
          %v2877 = vunpack.c.l.b16 %v1262
          %v2878 = vunpack.c.l.b16 %v1263
          %v2879 = vunpack.c.l.b16 %v1264
          %v2880 = vunpack.c.l.b16 %v1265
          %v2881 = vunpack.c.l.b16 %v1266
          %v2882 = vunpack.c.l.b16 %v1267
          %v2883 = vunpack.c.l.b16 %v1268
          %v2884 = vunpack.c.l.b16 %v1269
          %v2885 = vunpack.c.l.b16 %v1270
          %v2886 = vunpack.c.l.b16 %v1271
          %v2887 = vunpack.c.l.b16 %v1272
          %v2888 = vunpack.c.l.b16 %v1273
          %v2889 = vunpack.c.l.b16 %v1274
          %v2890 = vunpack.c.l.b16 %v1275
          %v2891 = vunpack.c.l.b16 %v1276
          %v2892 = vunpack.c.l.b16 %v1277
          %v2893 = vunpack.c.l.b16 %v1278
          %v2894 = vunpack.c.l.b16 %v1279
          %v2895 = vunpack.c.l.b16 %v1280
          %v2896 = vunpack.c.l.b16 %v1281
          %v2897 = vunpack.c.l.b16 %v1282
          %v2898 = vunpack.c.l.b16 %v1283
          %v2899 = vunpack.c.l.b16 %v1284
          %v2900 = vunpack.c.l.b16 %v1285
          %v2901 = vunpack.c.l.b16 %v1286
          %v2902 = vunpack.c.l.b16 %v1287
          %v2903 = vunpack.c.l.b16 %v1288
          %v2904 = vunpack.c.l.b16 %v1289
          %v2905 = vunpack.c.l.b16 %v1290
          %v2906 = vunpack.c.l.b16 %v1291
          %v2907 = vunpack.c.l.b16 %v1292
          %v2908 = vunpack.c.l.b16 %v1293
          %v2909 = vunpack.c.l.b16 %v1294
          %v2910 = vunpack.c.l.b16 %v1295
          %v2911 = vunpack.c.l.b16 %v1296
          %v2912 = vunpack.c.l.b16 %v1297
          %v2913 = vunpack.c.l.b16 %v1298
          %v2914 = vunpack.c.l.b16 %v1299
          %v2915 = vunpack.c.l.b16 %v1300
          %v2916 = vunpack.c.l.b16 %v1301
          %v2917 = vunpack.c.l.b16 %v1302
          %v2918 = vunpack.c.l.b16 %v1303
          %v2919 = vunpack.c.l.b16 %v1304
          %v2920 = vunpack.c.l.b16 %v1305
          %v2921 = vunpack.c.l.b16 %v1306
          %v2922 = vunpack.c.l.b16 %v1307
          %v2923 = vunpack.c.l.b16 %v1308
          %v2924 = vunpack.c.l.b16 %v1309
          %v2925 = vunpack.c.l.b16 %v1310
          %v2926 = vunpack.c.l.b16 %v1311
          %v2927 = vunpack.c.l.b16 %v1312
          %v2928 = vunpack.c.l.b16 %v1313
          %v2929 = vunpack.c.l.b16 %v1314
          %v2930 = vunpack.c.l.b16 %v1315
          %v2931 = vunpack.c.l.b16 %v1316
          %v2932 = vunpack.c.l.b16 %v1317
          %v2933 = vunpack.c.l.b16 %v1318
          %v2934 = vunpack.c.l.b16 %v1319
          %v2935 = vunpack.c.l.b16 %v1320
          %v2936 = vunpack.c.l.b16 %v1321
          %v2937 = vunpack.c.l.b16 %v1322
          %v2938 = vunpack.c.l.b16 %v1323
          %v2939 = vunpack.c.l.b16 %v1324
          %v2940 = vunpack.c.l.b16 %v1325
          %v2941 = vunpack.c.l.b16 %v1326
          %v2942 = vunpack.c.l.b16 %v1327
          %v2943 = vunpack.c.l.b16 %v1328
          %v2944 = vunpack.c.l.b16 %v1329
          %v2945 = vunpack.c.l.b16 %v1330
          %v2946 = vunpack.c.l.b16 %v1331
          %v2947 = vunpack.c.l.b16 %v1332
          %v2948 = vunpack.c.l.b16 %v1333
          %v2949 = vunpack.c.l.b16 %v1334
          %v2950 = vunpack.c.l.b16 %v1335
          %v2951 = vunpack.c.l.b16 %v1336
          %v2952 = vunpack.c.l.b16 %v1337
          %v2953 = vunpack.c.l.b16 %v1338
          %v2954 = vunpack.c.l.b16 %v1339
          %v2955 = vunpack.c.l.b16 %v1340
          %v2956 = vunpack.c.l.b16 %v1341
          %v2957 = vunpack.c.l.b16 %v1342
          %v2958 = vunpack.c.l.b16 %v1343
          %v2959 = vunpack.c.l.b16 %v1344
          %v2960 = vunpack.c.l.b16 %v1345
          %v2961 = vunpack.c.l.b16 %v1346
          %v2962 = vunpack.c.l.b16 %v1347
          %v2963 = vunpack.c.l.b16 %v1348
          %v2964 = vunpack.c.l.b16 %v1349
          %v2965 = vunpack.c.l.b16 %v1350
          %v2966 = vunpack.c.l.b16 %v1351
          %v2967 = vunpack.c.l.b16 %v1352
          %v2968 = vunpack.c.l.b16 %v1353
          %v2969 = vunpack.c.l.b16 %v1354
          %v2970 = vunpack.c.l.b16 %v1355
          %v2971 = vunpack.c.l.b16 %v1356
          %v2972 = vunpack.c.l.b16 %v1357
          %v2973 = vunpack.c.l.b16 %v1358
          %v2974 = vunpack.c.l.b16 %v1359
          %v2975 = vunpack.c.l.b16 %v1360
          %v2976 = vunpack.c.l.b16 %v1361
          %v2977 = vunpack.c.l.b16 %v1362
          %v2978 = vunpack.c.l.b16 %v1363
          %v2979 = vunpack.c.l.b16 %v1364
          %v2980 = vunpack.c.l.b16 %v1365
          %v2981 = vunpack.c.l.b16 %v1366
          %v2982 = vunpack.c.l.b16 %v1367
          %v2983 = vunpack.c.l.b16 %v1368
          %v2984 = vunpack.c.l.b16 %v1369
          %v2985 = vunpack.c.l.b16 %v1370
          %v2986 = vunpack.c.l.b16 %v1371
          %v2987 = vunpack.c.l.b16 %v1372
          %v2988 = vunpack.c.l.b16 %v1373
          %v2989 = vunpack.c.l.b16 %v1374
          %v2990 = vunpack.c.l.b16 %v1375
          %v2991 = vunpack.c.l.b16 %v1376
          %v2992 = vunpack.c.l.b16 %v1377
          %v2993 = vunpack.c.l.b16 %v1378
          %v2994 = vunpack.c.l.b16 %v1379
          %v2995 = vunpack.c.l.b16 %v1380
          %v2996 = vunpack.c.l.b16 %v1381
          %v2997 = vunpack.c.l.b16 %v1382
          %v2998 = vunpack.c.l.b16 %v1383
          %v2999 = vunpack.c.l.b16 %v1384
          %v3000 = vunpack.c.l.b16 %v1385
          %v3001 = vunpack.c.l.b16 %v1386
          %v3002 = vunpack.c.l.b16 %v1387
          %v3003 = vunpack.c.l.b16 %v1388
          %v3004 = vunpack.c.l.b16 %v1389
          %v3005 = vunpack.c.l.b16 %v1390
          %v3006 = vunpack.c.l.b16 %v1391
          %v3007 = vunpack.c.l.b16 %v1392
          %v3008 = vunpack.c.l.b16 %v1393
          %v3009 = vunpack.c.l.b16 %v1394
          %v3010 = vunpack.c.l.b16 %v1395
          %v3011 = vunpack.c.l.b16 %v1396
          %v3012 = vunpack.c.l.b16 %v1397
          %v3013 = vunpack.c.l.b16 %v1398
          %v3014 = vunpack.c.l.b16 %v1399
          %v3015 = vunpack.c.l.b16 %v1400
          %v3016 = vunpack.c.l.b16 %v1401
          %v3017 = vunpack.c.l.b16 %v1402
          %v3018 = vunpack.c.l.b16 %v1403
          %v3019 = vpack.c.b16 %v2636, %v2635
          %v3020 = vpack.c.b16 %v2638, %v2637
          %v3021 = vpack.c.b16 %v2640, %v2639
          %v3022 = vpack.c.b16 %v2642, %v2641
          %v3023 = vpack.c.b16 %v2644, %v2643
          %v3024 = vpack.c.b16 %v2646, %v2645
          %v3025 = vpack.c.b16 %v2648, %v2647
          %v3026 = vpack.c.b16 %v2650, %v2649
          %v3027 = vpack.c.b16 %v2652, %v2651
          %v3028 = vpack.c.b16 %v2654, %v2653
          %v3029 = vpack.c.b16 %v2656, %v2655
          %v3030 = vpack.c.b16 %v2658, %v2657
          %v3031 = vpack.c.b16 %v2660, %v2659
          %v3032 = vpack.c.b16 %v2662, %v2661
          %v3033 = vpack.c.b16 %v2664, %v2663
          %v3034 = vpack.c.b16 %v2666, %v2665
          %v3035 = vpack.c.b16 %v2668, %v2667
          %v3036 = vpack.c.b16 %v2670, %v2669
          %v3037 = vpack.c.b16 %v2672, %v2671
          %v3038 = vpack.c.b16 %v2674, %v2673
          %v3039 = vpack.c.b16 %v2676, %v2675
          %v3040 = vpack.c.b16 %v2678, %v2677
          %v3041 = vpack.c.b16 %v2680, %v2679
          %v3042 = vpack.c.b16 %v2682, %v2681
          %v3043 = vpack.c.b16 %v2684, %v2683
          %v3044 = vpack.c.b16 %v2686, %v2685
          %v3045 = vpack.c.b16 %v2688, %v2687
          %v3046 = vpack.c.b16 %v2690, %v2689
          %v3047 = vpack.c.b16 %v2692, %v2691
          %v3048 = vpack.c.b16 %v2694, %v2693
          %v3049 = vpack.c.b16 %v2696, %v2695
          %v3050 = vpack.c.b16 %v2698, %v2697
          %v3051 = vpack.c.b16 %v2700, %v2699
          %v3052 = vpack.c.b16 %v2702, %v2701
          %v3053 = vpack.c.b16 %v2704, %v2703
          %v3054 = vpack.c.b16 %v2706, %v2705
          %v3055 = vpack.c.b16 %v2708, %v2707
          %v3056 = vpack.c.b16 %v2710, %v2709
          %v3057 = vpack.c.b16 %v2712, %v2711
          %v3058 = vpack.c.b16 %v2714, %v2713
          %v3059 = vpack.c.b16 %v2716, %v2715
          %v3060 = vpack.c.b16 %v2718, %v2717
          %v3061 = vpack.c.b16 %v2720, %v2719
          %v3062 = vpack.c.b16 %v2722, %v2721
          %v3063 = vpack.c.b16 %v2724, %v2723
          %v3064 = vpack.c.b16 %v2726, %v2725
          %v3065 = vpack.c.b16 %v2728, %v2727
          %v3066 = vpack.c.b16 %v2730, %v2729
          %v3067 = vpack.c.b16 %v2732, %v2731
          %v3068 = vpack.c.b16 %v2734, %v2733
          %v3069 = vpack.c.b16 %v2736, %v2735
          %v3070 = vpack.c.b16 %v2738, %v2737
          %v3071 = vpack.c.b16 %v2740, %v2739
          %v3072 = vpack.c.b16 %v2742, %v2741
          %v3073 = vpack.c.b16 %v2744, %v2743
          %v3074 = vpack.c.b16 %v2746, %v2745
          %v3075 = vpack.c.b16 %v2748, %v2747
          %v3076 = vpack.c.b16 %v2750, %v2749
          %v3077 = vpack.c.b16 %v2752, %v2751
          %v3078 = vpack.c.b16 %v2754, %v2753
          %v3079 = vpack.c.b16 %v2756, %v2755
          %v3080 = vpack.c.b16 %v2758, %v2757
          %v3081 = vpack.c.b16 %v2760, %v2759
          %v3082 = vpack.c.b16 %v2762, %v2761
          %v3083 = vpack.c.b16 %v2764, %v2763
          %v3084 = vpack.c.b16 %v2766, %v2765
          %v3085 = vpack.c.b16 %v2768, %v2767
          %v3086 = vpack.c.b16 %v2770, %v2769
          %v3087 = vpack.c.b16 %v2772, %v2771
          %v3088 = vpack.c.b16 %v2774, %v2773
          %v3089 = vpack.c.b16 %v2776, %v2775
          %v3090 = vpack.c.b16 %v2778, %v2777
          %v3091 = vpack.c.b16 %v2780, %v2779
          %v3092 = vpack.c.b16 %v2782, %v2781
          %v3093 = vpack.c.b16 %v2784, %v2783
          %v3094 = vpack.c.b16 %v2786, %v2785
          %v3095 = vpack.c.b16 %v2788, %v2787
          %v3096 = vpack.c.b16 %v2790, %v2789
          %v3097 = vpack.c.b16 %v2792, %v2791
          %v3098 = vpack.c.b16 %v2794, %v2793
          %v3099 = vpack.c.b16 %v2796, %v2795
          %v3100 = vpack.c.b16 %v2798, %v2797
          %v3101 = vpack.c.b16 %v2800, %v2799
          %v3102 = vpack.c.b16 %v2802, %v2801
          %v3103 = vpack.c.b16 %v2804, %v2803
          %v3104 = vpack.c.b16 %v2806, %v2805
          %v3105 = vpack.c.b16 %v2808, %v2807
          %v3106 = vpack.c.b16 %v2810, %v2809
          %v3107 = vpack.c.b16 %v2812, %v2811
          %v3108 = vpack.c.b16 %v2814, %v2813
          %v3109 = vpack.c.b16 %v2816, %v2815
          %v3110 = vpack.c.b16 %v2818, %v2817
          %v3111 = vpack.c.b16 %v2820, %v2819
          %v3112 = vpack.c.b16 %v2822, %v2821
          %v3113 = vpack.c.b16 %v2824, %v2823
          %v3114 = vpack.c.b16 %v2826, %v2825
          %v3115 = vpack.c.b16 %v2828, %v2827
          %v3116 = vpack.c.b16 %v2830, %v2829
          %v3117 = vpack.c.b16 %v2832, %v2831
          %v3118 = vpack.c.b16 %v2834, %v2833
          %v3119 = vpack.c.b16 %v2836, %v2835
          %v3120 = vpack.c.b16 %v2838, %v2837
          %v3121 = vpack.c.b16 %v2840, %v2839
          %v3122 = vpack.c.b16 %v2842, %v2841
          %v3123 = vpack.c.b16 %v2844, %v2843
          %v3124 = vpack.c.b16 %v2846, %v2845
          %v3125 = vpack.c.b16 %v2848, %v2847
          %v3126 = vpack.c.b16 %v2850, %v2849
          %v3127 = vpack.c.b16 %v2852, %v2851
          %v3128 = vpack.c.b16 %v2854, %v2853
          %v3129 = vpack.c.b16 %v2856, %v2855
          %v3130 = vpack.c.b16 %v2858, %v2857
          %v3131 = vpack.c.b16 %v2860, %v2859
          %v3132 = vpack.c.b16 %v2862, %v2861
          %v3133 = vpack.c.b16 %v2864, %v2863
          %v3134 = vpack.c.b16 %v2866, %v2865
          %v3135 = vpack.c.b16 %v2868, %v2867
          %v3136 = vpack.c.b16 %v2870, %v2869
          %v3137 = vpack.c.b16 %v2872, %v2871
          %v3138 = vpack.c.b16 %v2874, %v2873
          %v3139 = vpack.c.b16 %v2876, %v2875
          %v3140 = vpack.c.b16 %v2878, %v2877
          %v3141 = vpack.c.b16 %v2880, %v2879
          %v3142 = vpack.c.b16 %v2882, %v2881
          %v3143 = vpack.c.b16 %v2884, %v2883
          %v3144 = vpack.c.b16 %v2886, %v2885
          %v3145 = vpack.c.b16 %v2888, %v2887
          %v3146 = vpack.c.b16 %v2890, %v2889
          %v3147 = vpack.c.b16 %v2892, %v2891
          %v3148 = vpack.c.b16 %v2894, %v2893
          %v3149 = vpack.c.b16 %v2896, %v2895
          %v3150 = vpack.c.b16 %v2898, %v2897
          %v3151 = vpack.c.b16 %v2900, %v2899
          %v3152 = vpack.c.b16 %v2902, %v2901
          %v3153 = vpack.c.b16 %v2904, %v2903
          %v3154 = vpack.c.b16 %v2906, %v2905
          %v3155 = vpack.c.b16 %v2908, %v2907
          %v3156 = vpack.c.b16 %v2910, %v2909
          %v3157 = vpack.c.b16 %v2912, %v2911
          %v3158 = vpack.c.b16 %v2914, %v2913
          %v3159 = vpack.c.b16 %v2916, %v2915
          %v3160 = vpack.c.b16 %v2918, %v2917
          %v3161 = vpack.c.b16 %v2920, %v2919
          %v3162 = vpack.c.b16 %v2922, %v2921
          %v3163 = vpack.c.b16 %v2924, %v2923
          %v3164 = vpack.c.b16 %v2926, %v2925
          %v3165 = vpack.c.b16 %v2928, %v2927
          %v3166 = vpack.c.b16 %v2930, %v2929
          %v3167 = vpack.c.b16 %v2932, %v2931
          %v3168 = vpack.c.b16 %v2934, %v2933
          %v3169 = vpack.c.b16 %v2936, %v2935
          %v3170 = vpack.c.b16 %v2938, %v2937
          %v3171 = vpack.c.b16 %v2940, %v2939
          %v3172 = vpack.c.b16 %v2942, %v2941
          %v3173 = vpack.c.b16 %v2944, %v2943
          %v3174 = vpack.c.b16 %v2946, %v2945
          %v3175 = vpack.c.b16 %v2948, %v2947
          %v3176 = vpack.c.b16 %v2950, %v2949
          %v3177 = vpack.c.b16 %v2952, %v2951
          %v3178 = vpack.c.b16 %v2954, %v2953
          %v3179 = vpack.c.b16 %v2956, %v2955
          %v3180 = vpack.c.b16 %v2958, %v2957
          %v3181 = vpack.c.b16 %v2960, %v2959
          %v3182 = vpack.c.b16 %v2962, %v2961
          %v3183 = vpack.c.b16 %v2964, %v2963
          %v3184 = vpack.c.b16 %v2966, %v2965
          %v3185 = vpack.c.b16 %v2968, %v2967
          %v3186 = vpack.c.b16 %v2970, %v2969
          %v3187 = vpack.c.b16 %v2972, %v2971
          %v3188 = vpack.c.b16 %v2974, %v2973
          %v3189 = vpack.c.b16 %v2976, %v2975
          %v3190 = vpack.c.b16 %v2978, %v2977
          %v3191 = vpack.c.b16 %v2980, %v2979
          %v3192 = vpack.c.b16 %v2982, %v2981
          %v3193 = vpack.c.b16 %v2984, %v2983
          %v3194 = vpack.c.b16 %v2986, %v2985
          %v3195 = vpack.c.b16 %v2988, %v2987
          %v3196 = vpack.c.b16 %v2990, %v2989
          %v3197 = vpack.c.b16 %v2992, %v2991
          %v3198 = vpack.c.b16 %v2994, %v2993
          %v3199 = vpack.c.b16 %v2996, %v2995
          %v3200 = vpack.c.b16 %v2998, %v2997
          %v3201 = vpack.c.b16 %v3000, %v2999
          %v3202 = vpack.c.b16 %v3002, %v3001
          %v3203 = vpack.c.b16 %v3004, %v3003
          %v3204 = vpack.c.b16 %v3006, %v3005
          %v3205 = vpack.c.b16 %v3008, %v3007
          %v3206 = vpack.c.b16 %v3010, %v3009
          %v3207 = vpack.c.b16 %v3012, %v3011
          %v3208 = vpack.c.b16 %v3014, %v3013
          %v3209 = vpack.c.b16 %v3016, %v3015
          %v3210 = vpack.c.b16 %v3018, %v3017
          %3403 = vmatprep.subr.bf16.mxu0 0
          %3404 = vmatpush1.bf16.msra.mxu0 %v3019
          %3405 = vmatprep.subr.bf16.mxu0 0
          %3406 = vmatpush1.bf16.msra.mxu0 %v3020
          %3407 = vmatprep.subr.bf16.mxu0 0
          %3408 = vmatpush1.bf16.msra.mxu0 %v3021
          %3409 = vmatprep.subr.bf16.mxu0 0
          %3410 = vmatpush1.bf16.msra.mxu0 %v3022
          %3411 = vmatprep.subr.bf16.mxu0 0
          %3412 = vmatpush1.bf16.msra.mxu0 %v3023
          %3413 = vmatprep.subr.bf16.mxu0 0
          %3414 = vmatpush1.bf16.msra.mxu0 %v3024
          %3415 = vmatprep.subr.bf16.mxu0 0
          %3416 = vmatpush1.bf16.msra.mxu0 %v3025
          %3417 = vmatprep.subr.bf16.mxu0 0
          %3418 = vmatpush1.bf16.msra.mxu0 %v3026
          %3419 = vmatprep.subr.bf16.mxu0 0
          %3420 = vmatpush1.bf16.msra.mxu0 %v3027
          %3421 = vmatprep.subr.bf16.mxu0 0
          %3422 = vmatpush1.bf16.msra.mxu0 %v3028
          %3423 = vmatprep.subr.bf16.mxu0 0
          %3424 = vmatpush1.bf16.msra.mxu0 %v3029
          %3425 = vmatprep.subr.bf16.mxu0 0
          %3426 = vmatpush1.bf16.msra.mxu0 %v3030
          %3427 = vmatprep.subr.bf16.mxu0 0
          %3428 = vmatpush1.bf16.msra.mxu0 %v3031
          %3429 = vmatprep.subr.bf16.mxu0 0
          %3430 = vmatpush1.bf16.msra.mxu0 %v3032
          %3431 = vmatprep.subr.bf16.mxu0 0
          %3432 = vmatpush1.bf16.msra.mxu0 %v3033
          %3433 = vmatprep.subr.bf16.mxu0 0
          %3434 = vmatpush1.bf16.msra.mxu0 %v3034
          %3435 = vmatprep.mubr.bf16.mxu0 %v1916
          %3436 = vmatmul.mubr.bf16.gmra.mrb[0].mxu0 %v1915
          %v3437 = vpop.f32.mrb[0].mxu0
          %v3438 = vadd.f32 %v1404, %v3437
          %v3439 = vpop.f32.mrb[0].mxu0
          %v3440 = vpop.f32.mrb[0].mxu0
          %v3441 = vadd.f32 %v1405, %v3440
          %v3442 = vpop.f32.mrb[0].mxu0
          %3443 = vmatprep.mubr.bf16.mxu0 %v1940
          %3444 = vmatmul.mubr.bf16.gmra.mrb[0].mxu0 %v1939
          %v3445 = vpop.f32.mrb[0].mxu0
          %v3446 = vadd.f32 %v1406, %v3445
          %v3447 = vpop.f32.mrb[0].mxu0
          %v3448 = vpop.f32.mrb[0].mxu0
          %v3449 = vadd.f32 %v1407, %v3448
          %v3450 = vpop.f32.mrb[0].mxu0
          %3451 = vmatprep.mubr.bf16.mxu0 %v1964
          %3452 = vmatmul.mubr.bf16.gmra.mrb[0].mxu0 %v1963
          %v3453 = vpop.f32.mrb[0].mxu0
          %v3454 = vadd.f32 %v1408, %v3453
          %v3455 = vpop.f32.mrb[0].mxu0
          %v3456 = vpop.f32.mrb[0].mxu0
          %v3457 = vadd.f32 %v1409, %v3456
          %v3458 = vpop.f32.mrb[0].mxu0
          %3459 = vmatprep.mubr.bf16.mxu0 %v1988
          %3460 = vmatmul.mubr.bf16.gmra.mrb[0].mxu0 %v1987
          %v3461 = vpop.f32.mrb[0].mxu0
          %v3462 = vadd.f32 %v1410, %v3461
          %v3463 = vpop.f32.mrb[0].mxu0
          %v3464 = vpop.f32.mrb[0].mxu0
          %v3465 = vadd.f32 %v1404, %v3464
          %v3466 = vpop.f32.mrb[0].mxu0
          %3467 = vmatprep.mubr.bf16.mxu0 %v2012
          %3468 = vmatmul.mubr.bf16.gmra.mrb[0].mxu0 %v2011
          %v3469 = vpop.f32.mrb[0].mxu0
          %v3470 = vadd.f32 %v1405, %v3469
          %v3471 = vpop.f32.mrb[0].mxu0
          %v3472 = vpop.f32.mrb[0].mxu0
          %v3473 = vadd.f32 %v1406, %v3472
          %v3474 = vpop.f32.mrb[0].mxu0
          %3475 = vmatprep.mubr.bf16.mxu0 %v2036
          %3476 = vmatmul.mubr.bf16.gmra.mrb[0].mxu0 %v2035
          %v3477 = vpop.f32.mrb[0].mxu0
          %v3478 = vadd.f32 %v1407, %v3477
          %v3479 = vpop.f32.mrb[0].mxu0
          %v3480 = vpop.f32.mrb[0].mxu0
          %v3481 = vadd.f32 %v1408, %v3480
          %v3482 = vpop.f32.mrb[0].mxu0
          %3483 = vmatprep.mubr.bf16.mxu0 %v2060
          %3484 = vmatmul.mubr.bf16.gmra.mrb[0].mxu0 %v2059
          %v3485 = vpop.f32.mrb[0].mxu0
          %v3486 = vadd.f32 %v1409, %v3485
          %v3487 = vpop.f32.mrb[0].mxu0
          %v3488 = vpop.f32.mrb[0].mxu0
          %v3489 = vadd.f32 %v1410, %v3488
          %v3490 = vpop.f32.mrb[0].mxu0
          %3491 = vdwg.mxu0
          %3492 = vmatprep.subr.bf16.mxu0 0
          %3493 = vmatpush1.bf16.msra.mxu0 %v3035
          %3494 = vmatprep.subr.bf16.mxu0 0
          %3495 = vmatpush1.bf16.msra.mxu0 %v3036
          %3496 = vmatprep.subr.bf16.mxu0 0
          %3497 = vmatpush1.bf16.msra.mxu0 %v3037
          %3498 = vmatprep.subr.bf16.mxu0 0
          %3499 = vmatpush1.bf16.msra.mxu0 %v3038
          %3500 = vmatprep.subr.bf16.mxu0 0
          %3501 = vmatpush1.bf16.msra.mxu0 %v3039
          %3502 = vmatprep.subr.bf16.mxu0 0
          %3503 = vmatpush1.bf16.msra.mxu0 %v3040
          %3504 = vmatprep.subr.bf16.mxu0 0
          %3505 = vmatpush1.bf16.msra.mxu0 %v3041
          %3506 = vmatprep.subr.bf16.mxu0 0
          %3507 = vmatpush1.bf16.msra.mxu0 %v3042
          %3508 = vmatprep.subr.bf16.mxu0 0
          %3509 = vmatpush1.bf16.msra.mxu0 %v3043
          %3510 = vmatprep.subr.bf16.mxu0 0
          %3511 = vmatpush1.bf16.msra.mxu0 %v3044
          %3512 = vmatprep.subr.bf16.mxu0 0
          %3513 = vmatpush1.bf16.msra.mxu0 %v3045
          %3514 = vmatprep.subr.bf16.mxu0 0
          %3515 = vmatpush1.bf16.msra.mxu0 %v3046
          %3516 = vmatprep.subr.bf16.mxu0 0
          %3517 = vmatpush1.bf16.msra.mxu0 %v3047
          %3518 = vmatprep.subr.bf16.mxu0 0
          %3519 = vmatpush1.bf16.msra.mxu0 %v3048
          %3520 = vmatprep.subr.bf16.mxu0 0
          %3521 = vmatpush1.bf16.msra.mxu0 %v3049
          %3522 = vmatprep.subr.bf16.mxu0 0
          %3523 = vmatpush1.bf16.msra.mxu0 %v3050
          %3524 = vmatprep.mubr.bf16.mxu0 %v1918
          %3525 = vmatmul.mubr.bf16.gmra.mrb[0].mxu0 %v1917
          %v3526 = vpop.f32.mrb[0].mxu0
          %v3527 = vadd.f32 %v3438, %v3526
          %v3528 = vpop.f32.mrb[0].mxu0
          %v3529 = vpop.f32.mrb[0].mxu0
          %v3530 = vadd.f32 %v3441, %v3529
          %v3531 = vpop.f32.mrb[0].mxu0
          %3532 = vmatprep.mubr.bf16.mxu0 %v1942
          %3533 = vmatmul.mubr.bf16.gmra.mrb[0].mxu0 %v1941
          %v3534 = vpop.f32.mrb[0].mxu0
          %v3535 = vadd.f32 %v3446, %v3534
          %v3536 = vpop.f32.mrb[0].mxu0
          %v3537 = vpop.f32.mrb[0].mxu0
          %v3538 = vadd.f32 %v3449, %v3537
          %v3539 = vpop.f32.mrb[0].mxu0
          %3540 = vmatprep.mubr.bf16.mxu0 %v1966
          %3541 = vmatmul.mubr.bf16.gmra.mrb[0].mxu0 %v1965
          %v3542 = vpop.f32.mrb[0].mxu0
          %v3543 = vadd.f32 %v3454, %v3542
          %v3544 = vpop.f32.mrb[0].mxu0
          %v3545 = vpop.f32.mrb[0].mxu0
          %v3546 = vadd.f32 %v3457, %v3545
          %v3547 = vpop.f32.mrb[0].mxu0
          %3548 = vmatprep.mubr.bf16.mxu0 %v1990
          %3549 = vmatmul.mubr.bf16.gmra.mrb[0].mxu0 %v1989
          %v3550 = vpop.f32.mrb[0].mxu0
          %v3551 = vadd.f32 %v3462, %v3550
          %v3552 = vpop.f32.mrb[0].mxu0
          %v3553 = vpop.f32.mrb[0].mxu0
          %v3554 = vadd.f32 %v3465, %v3553
          %v3555 = vpop.f32.mrb[0].mxu0
          %3556 = vmatprep.mubr.bf16.mxu0 %v2014
          %3557 = vmatmul.mubr.bf16.gmra.mrb[0].mxu0 %v2013
          %v3558 = vpop.f32.mrb[0].mxu0
          %v3559 = vadd.f32 %v3470, %v3558
          %v3560 = vpop.f32.mrb[0].mxu0
          %v3561 = vpop.f32.mrb[0].mxu0
          %v3562 = vadd.f32 %v3473, %v3561
          %v3563 = vpop.f32.mrb[0].mxu0
          %3564 = vmatprep.mubr.bf16.mxu0 %v2038
          %3565 = vmatmul.mubr.bf16.gmra.mrb[0].mxu0 %v2037
          %v3566 = vpop.f32.mrb[0].mxu0
          %v3567 = vadd.f32 %v3478, %v3566
          %v3568 = vpop.f32.mrb[0].mxu0
          %v3569 = vpop.f32.mrb[0].mxu0
          %v3570 = vadd.f32 %v3481, %v3569
          %v3571 = vpop.f32.mrb[0].mxu0
          %3572 = vmatprep.mubr.bf16.mxu0 %v2062
          %3573 = vmatmul.mubr.bf16.gmra.mrb[0].mxu0 %v2061
          %v3574 = vpop.f32.mrb[0].mxu0
          %v3575 = vadd.f32 %v3486, %v3574
          %v3576 = vpop.f32.mrb[0].mxu0
          %v3577 = vpop.f32.mrb[0].mxu0
          %v3578 = vadd.f32 %v3489, %v3577
          %v3579 = vpop.f32.mrb[0].mxu0
          %3580 = vdwg.mxu0
          %3581 = vmatprep.subr.bf16.mxu0 0
          %3582 = vmatpush1.bf16.msra.mxu0 %v3051
          %3583 = vmatprep.subr.bf16.mxu0 0
          %3584 = vmatpush1.bf16.msra.mxu0 %v3052
          %3585 = vmatprep.subr.bf16.mxu0 0
          %3586 = vmatpush1.bf16.msra.mxu0 %v3053
          %3587 = vmatprep.subr.bf16.mxu0 0
          %3588 = vmatpush1.bf16.msra.mxu0 %v3054
          %3589 = vmatprep.subr.bf16.mxu0 0
          %3590 = vmatpush1.bf16.msra.mxu0 %v3055
          %3591 = vmatprep.subr.bf16.mxu0 0
          %3592 = vmatpush1.bf16.msra.mxu0 %v3056
          %3593 = vmatprep.subr.bf16.mxu0 0
          %3594 = vmatpush1.bf16.msra.mxu0 %v3057
          %3595 = vmatprep.subr.bf16.mxu0 0
          %3596 = vmatpush1.bf16.msra.mxu0 %v3058
          %3597 = vmatprep.subr.bf16.mxu0 0
          %3598 = vmatpush1.bf16.msra.mxu0 %v3059
          %3599 = vmatprep.subr.bf16.mxu0 0
          %3600 = vmatpush1.bf16.msra.mxu0 %v3060
          %3601 = vmatprep.subr.bf16.mxu0 0
          %3602 = vmatpush1.bf16.msra.mxu0 %v3061
          %3603 = vmatprep.subr.bf16.mxu0 0
          %3604 = vmatpush1.bf16.msra.mxu0 %v3062
          %3605 = vmatprep.subr.bf16.mxu0 0
          %3606 = vmatpush1.bf16.msra.mxu0 %v3063
          %3607 = vmatprep.subr.bf16.mxu0 0
          %3608 = vmatpush1.bf16.msra.mxu0 %v3064
          %3609 = vmatprep.subr.bf16.mxu0 0
          %3610 = vmatpush1.bf16.msra.mxu0 %v3065
          %3611 = vmatprep.subr.bf16.mxu0 0
          %3612 = vmatpush1.bf16.msra.mxu0 %v3066
          %3613 = vmatprep.mubr.bf16.mxu0 %v1920
          %3614 = vmatmul.mubr.bf16.gmra.mrb[0].mxu0 %v1919
          %v3615 = vpop.f32.mrb[0].mxu0
          %v3616 = vadd.f32 %v3527, %v3615
          %v3617 = vpop.f32.mrb[0].mxu0
          %v3618 = vpop.f32.mrb[0].mxu0
          %v3619 = vadd.f32 %v3530, %v3618
          %v3620 = vpop.f32.mrb[0].mxu0
          %3621 = vmatprep.mubr.bf16.mxu0 %v1944
          %3622 = vmatmul.mubr.bf16.gmra.mrb[0].mxu0 %v1943
          %v3623 = vpop.f32.mrb[0].mxu0
          %v3624 = vadd.f32 %v3535, %v3623
          %v3625 = vpop.f32.mrb[0].mxu0
          %v3626 = vpop.f32.mrb[0].mxu0
          %v3627 = vadd.f32 %v3538, %v3626
          %v3628 = vpop.f32.mrb[0].mxu0
          %3629 = vmatprep.mubr.bf16.mxu0 %v1968
          %3630 = vmatmul.mubr.bf16.gmra.mrb[0].mxu0 %v1967
          %v3631 = vpop.f32.mrb[0].mxu0
          %v3632 = vadd.f32 %v3543, %v3631
          %v3633 = vpop.f32.mrb[0].mxu0
          %v3634 = vpop.f32.mrb[0].mxu0
          %v3635 = vadd.f32 %v3546, %v3634
          %v3636 = vpop.f32.mrb[0].mxu0
          %3637 = vmatprep.mubr.bf16.mxu0 %v1992
          %3638 = vmatmul.mubr.bf16.gmra.mrb[0].mxu0 %v1991
          %v3639 = vpop.f32.mrb[0].mxu0
          %v3640 = vadd.f32 %v3551, %v3639
          %v3641 = vpop.f32.mrb[0].mxu0
          %v3642 = vpop.f32.mrb[0].mxu0
          %v3643 = vadd.f32 %v3554, %v3642
          %v3644 = vpop.f32.mrb[0].mxu0
          %3645 = vmatprep.mubr.bf16.mxu0 %v2016
          %3646 = vmatmul.mubr.bf16.gmra.mrb[0].mxu0 %v2015
          %v3647 = vpop.f32.mrb[0].mxu0
          %v3648 = vadd.f32 %v3559, %v3647
          %v3649 = vpop.f32.mrb[0].mxu0
          %v3650 = vpop.f32.mrb[0].mxu0
          %v3651 = vadd.f32 %v3562, %v3650
          %v3652 = vpop.f32.mrb[0].mxu0
          %3653 = vmatprep.mubr.bf16.mxu0 %v2040
          %3654 = vmatmul.mubr.bf16.gmra.mrb[0].mxu0 %v2039
          %v3655 = vpop.f32.mrb[0].mxu0
          %v3656 = vadd.f32 %v3567, %v3655
          %v3657 = vpop.f32.mrb[0].mxu0
          %v3658 = vpop.f32.mrb[0].mxu0
          %v3659 = vadd.f32 %v3570, %v3658
          %v3660 = vpop.f32.mrb[0].mxu0
          %3661 = vmatprep.mubr.bf16.mxu0 %v2064
          %3662 = vmatmul.mubr.bf16.gmra.mrb[0].mxu0 %v2063
          %v3663 = vpop.f32.mrb[0].mxu0
          %v3664 = vadd.f32 %v3575, %v3663
          %v3665 = vpop.f32.mrb[0].mxu0
          %v3666 = vpop.f32.mrb[0].mxu0
          %v3667 = vadd.f32 %v3578, %v3666
          %v3668 = vpop.f32.mrb[0].mxu0
          %3669 = vdwg.mxu0
          %3670 = vmatprep.subr.bf16.mxu0 0
          %3671 = vmatpush1.bf16.msra.mxu0 %v3067
          %3672 = vmatprep.subr.bf16.mxu0 0
          %3673 = vmatpush1.bf16.msra.mxu0 %v3068
          %3674 = vmatprep.subr.bf16.mxu0 0
          %3675 = vmatpush1.bf16.msra.mxu0 %v3069
          %3676 = vmatprep.subr.bf16.mxu0 0
          %3677 = vmatpush1.bf16.msra.mxu0 %v3070
          %3678 = vmatprep.subr.bf16.mxu0 0
          %3679 = vmatpush1.bf16.msra.mxu0 %v3071
          %3680 = vmatprep.subr.bf16.mxu0 0
          %3681 = vmatpush1.bf16.msra.mxu0 %v3072
          %3682 = vmatprep.subr.bf16.mxu0 0
          %3683 = vmatpush1.bf16.msra.mxu0 %v3073
          %3684 = vmatprep.subr.bf16.mxu0 0
          %3685 = vmatpush1.bf16.msra.mxu0 %v3074
          %3686 = vmatprep.subr.bf16.mxu0 0
          %3687 = vmatpush1.bf16.msra.mxu0 %v3075
          %3688 = vmatprep.subr.bf16.mxu0 0
          %3689 = vmatpush1.bf16.msra.mxu0 %v3076
          %3690 = vmatprep.subr.bf16.mxu0 0
          %3691 = vmatpush1.bf16.msra.mxu0 %v3077
          %3692 = vmatprep.subr.bf16.mxu0 0
          %3693 = vmatpush1.bf16.msra.mxu0 %v3078
          %3694 = vmatprep.subr.bf16.mxu0 0
          %3695 = vmatpush1.bf16.msra.mxu0 %v3079
          %3696 = vmatprep.subr.bf16.mxu0 0
          %3697 = vmatpush1.bf16.msra.mxu0 %v3080
          %3698 = vmatprep.subr.bf16.mxu0 0
          %3699 = vmatpush1.bf16.msra.mxu0 %v3081
          %3700 = vmatprep.subr.bf16.mxu0 0
          %3701 = vmatpush1.bf16.msra.mxu0 %v3082
          %3702 = vmatprep.mubr.bf16.mxu0 %v1922
          %3703 = vmatmul.mubr.bf16.gmra.mrb[0].mxu0 %v1921
          %v3704 = vpop.f32.mrb[0].mxu0
          %v3705 = vadd.f32 %v3616, %v3704
          %v3706 = vpop.f32.mrb[0].mxu0
          %v3707 = vpop.f32.mrb[0].mxu0
          %v3708 = vadd.f32 %v3619, %v3707
          %v3709 = vpop.f32.mrb[0].mxu0
          %3710 = vmatprep.mubr.bf16.mxu0 %v1946
          %3711 = vmatmul.mubr.bf16.gmra.mrb[0].mxu0 %v1945
          %v3712 = vpop.f32.mrb[0].mxu0
          %v3713 = vadd.f32 %v3624, %v3712
          %v3714 = vpop.f32.mrb[0].mxu0
          %v3715 = vpop.f32.mrb[0].mxu0
          %v3716 = vadd.f32 %v3627, %v3715
          %v3717 = vpop.f32.mrb[0].mxu0
          %3718 = vmatprep.mubr.bf16.mxu0 %v1970
          %3719 = vmatmul.mubr.bf16.gmra.mrb[0].mxu0 %v1969
          %v3720 = vpop.f32.mrb[0].mxu0
          %v3721 = vadd.f32 %v3632, %v3720
          %v3722 = vpop.f32.mrb[0].mxu0
          %v3723 = vpop.f32.mrb[0].mxu0
          %v3724 = vadd.f32 %v3635, %v3723
          %v3725 = vpop.f32.mrb[0].mxu0
          %3726 = vmatprep.mubr.bf16.mxu0 %v1994
          %3727 = vmatmul.mubr.bf16.gmra.mrb[0].mxu0 %v1993
          %v3728 = vpop.f32.mrb[0].mxu0
          %v3729 = vadd.f32 %v3640, %v3728
          %v3730 = vpop.f32.mrb[0].mxu0
          %v3731 = vpop.f32.mrb[0].mxu0
          %v3732 = vadd.f32 %v3643, %v3731
          %v3733 = vpop.f32.mrb[0].mxu0
          %3734 = vmatprep.mubr.bf16.mxu0 %v2018
          %3735 = vmatmul.mubr.bf16.gmra.mrb[0].mxu0 %v2017
          %v3736 = vpop.f32.mrb[0].mxu0
          %v3737 = vadd.f32 %v3648, %v3736
          %v3738 = vpop.f32.mrb[0].mxu0
          %v3739 = vpop.f32.mrb[0].mxu0
          %v3740 = vadd.f32 %v3651, %v3739
          %v3741 = vpop.f32.mrb[0].mxu0
          %3742 = vmatprep.mubr.bf16.mxu0 %v2042
          %3743 = vmatmul.mubr.bf16.gmra.mrb[0].mxu0 %v2041
          %v3744 = vpop.f32.mrb[0].mxu0
          %v3745 = vadd.f32 %v3656, %v3744
          %v3746 = vpop.f32.mrb[0].mxu0
          %v3747 = vpop.f32.mrb[0].mxu0
          %v3748 = vadd.f32 %v3659, %v3747
          %v3749 = vpop.f32.mrb[0].mxu0
          %3750 = vmatprep.mubr.bf16.mxu0 %v2066
          %3751 = vmatmul.mubr.bf16.gmra.mrb[0].mxu0 %v2065
          %v3752 = vpop.f32.mrb[0].mxu0
          %v3753 = vadd.f32 %v3664, %v3752
          %v3754 = vpop.f32.mrb[0].mxu0
          %v3755 = vpop.f32.mrb[0].mxu0
          %v3756 = vadd.f32 %v3667, %v3755
          %v3757 = vpop.f32.mrb[0].mxu0
          %3758 = vdwg.mxu0
          %3759 = vmatprep.subr.bf16.mxu0 0
          %3760 = vmatpush1.bf16.msra.mxu0 %v3083
          %3761 = vmatprep.subr.bf16.mxu0 0
          %3762 = vmatpush1.bf16.msra.mxu0 %v3084
          %3763 = vmatprep.subr.bf16.mxu0 0
          %3764 = vmatpush1.bf16.msra.mxu0 %v3085
          %3765 = vmatprep.subr.bf16.mxu0 0
          %3766 = vmatpush1.bf16.msra.mxu0 %v3086
          %3767 = vmatprep.subr.bf16.mxu0 0
          %3768 = vmatpush1.bf16.msra.mxu0 %v3087
          %3769 = vmatprep.subr.bf16.mxu0 0
          %3770 = vmatpush1.bf16.msra.mxu0 %v3088
          %3771 = vmatprep.subr.bf16.mxu0 0
          %3772 = vmatpush1.bf16.msra.mxu0 %v3089
          %3773 = vmatprep.subr.bf16.mxu0 0
          %3774 = vmatpush1.bf16.msra.mxu0 %v3090
          %3775 = vmatprep.subr.bf16.mxu0 0
          %3776 = vmatpush1.bf16.msra.mxu0 %v3091
          %3777 = vmatprep.subr.bf16.mxu0 0
          %3778 = vmatpush1.bf16.msra.mxu0 %v3092
          %3779 = vmatprep.subr.bf16.mxu0 0
          %3780 = vmatpush1.bf16.msra.mxu0 %v3093
          %3781 = vmatprep.subr.bf16.mxu0 0
          %3782 = vmatpush1.bf16.msra.mxu0 %v3094
          %3783 = vmatprep.subr.bf16.mxu0 0
          %3784 = vmatpush1.bf16.msra.mxu0 %v3095
          %3785 = vmatprep.subr.bf16.mxu0 0
          %3786 = vmatpush1.bf16.msra.mxu0 %v3096
          %3787 = vmatprep.subr.bf16.mxu0 0
          %3788 = vmatpush1.bf16.msra.mxu0 %v3097
          %3789 = vmatprep.subr.bf16.mxu0 0
          %3790 = vmatpush1.bf16.msra.mxu0 %v3098
          %3791 = vmatprep.mubr.bf16.mxu0 %v1924
          %3792 = vmatmul.mubr.bf16.gmra.mrb[0].mxu0 %v1923
          %v3793 = vpop.f32.mrb[0].mxu0
          %v3794 = vadd.f32 %v3705, %v3793
          %v3795 = vpop.f32.mrb[0].mxu0
          %v3796 = vpop.f32.mrb[0].mxu0
          %v3797 = vadd.f32 %v3708, %v3796
          %v3798 = vpop.f32.mrb[0].mxu0
          %3799 = vmatprep.mubr.bf16.mxu0 %v1948
          %3800 = vmatmul.mubr.bf16.gmra.mrb[0].mxu0 %v1947
          %v3801 = vpop.f32.mrb[0].mxu0
          %v3802 = vadd.f32 %v3713, %v3801
          %v3803 = vpop.f32.mrb[0].mxu0
          %v3804 = vpop.f32.mrb[0].mxu0
          %v3805 = vadd.f32 %v3716, %v3804
          %v3806 = vpop.f32.mrb[0].mxu0
          %3807 = vmatprep.mubr.bf16.mxu0 %v1972
          %3808 = vmatmul.mubr.bf16.gmra.mrb[0].mxu0 %v1971
          %v3809 = vpop.f32.mrb[0].mxu0
          %v3810 = vadd.f32 %v3721, %v3809
          %v3811 = vpop.f32.mrb[0].mxu0
          %v3812 = vpop.f32.mrb[0].mxu0
          %v3813 = vadd.f32 %v3724, %v3812
          %v3814 = vpop.f32.mrb[0].mxu0
          %3815 = vmatprep.mubr.bf16.mxu0 %v1996
          %3816 = vmatmul.mubr.bf16.gmra.mrb[0].mxu0 %v1995
          %v3817 = vpop.f32.mrb[0].mxu0
          %v3818 = vadd.f32 %v3729, %v3817
          %v3819 = vpop.f32.mrb[0].mxu0
          %v3820 = vpop.f32.mrb[0].mxu0
          %v3821 = vadd.f32 %v3732, %v3820
          %v3822 = vpop.f32.mrb[0].mxu0
          %3823 = vmatprep.mubr.bf16.mxu0 %v2020
          %3824 = vmatmul.mubr.bf16.gmra.mrb[0].mxu0 %v2019
          %v3825 = vpop.f32.mrb[0].mxu0
          %v3826 = vadd.f32 %v3737, %v3825
          %v3827 = vpop.f32.mrb[0].mxu0
          %v3828 = vpop.f32.mrb[0].mxu0
          %v3829 = vadd.f32 %v3740, %v3828
          %v3830 = vpop.f32.mrb[0].mxu0
          %3831 = vmatprep.mubr.bf16.mxu0 %v2044
          %3832 = vmatmul.mubr.bf16.gmra.mrb[0].mxu0 %v2043
          %v3833 = vpop.f32.mrb[0].mxu0
          %v3834 = vadd.f32 %v3745, %v3833
          %v3835 = vpop.f32.mrb[0].mxu0
          %v3836 = vpop.f32.mrb[0].mxu0
          %v3837 = vadd.f32 %v3748, %v3836
          %v3838 = vpop.f32.mrb[0].mxu0
          %3839 = vmatprep.mubr.bf16.mxu0 %v2068
          %3840 = vmatmul.mubr.bf16.gmra.mrb[0].mxu0 %v2067
          %v3841 = vpop.f32.mrb[0].mxu0
          %v3842 = vadd.f32 %v3753, %v3841
          %v3843 = vpop.f32.mrb[0].mxu0
          %v3844 = vpop.f32.mrb[0].mxu0
          %v3845 = vadd.f32 %v3756, %v3844
          %v3846 = vpop.f32.mrb[0].mxu0
          %3847 = vdwg.mxu0
          %3848 = vmatprep.subr.bf16.mxu0 0
          %3849 = vmatpush1.bf16.msra.mxu0 %v3099
          %3850 = vmatprep.subr.bf16.mxu0 0
          %3851 = vmatpush1.bf16.msra.mxu0 %v3100
          %3852 = vmatprep.subr.bf16.mxu0 0
          %3853 = vmatpush1.bf16.msra.mxu0 %v3101
          %3854 = vmatprep.subr.bf16.mxu0 0
          %3855 = vmatpush1.bf16.msra.mxu0 %v3102
          %3856 = vmatprep.subr.bf16.mxu0 0
          %3857 = vmatpush1.bf16.msra.mxu0 %v3103
          %3858 = vmatprep.subr.bf16.mxu0 0
          %3859 = vmatpush1.bf16.msra.mxu0 %v3104
          %3860 = vmatprep.subr.bf16.mxu0 0
          %3861 = vmatpush1.bf16.msra.mxu0 %v3105
          %3862 = vmatprep.subr.bf16.mxu0 0
          %3863 = vmatpush1.bf16.msra.mxu0 %v3106
          %3864 = vmatprep.subr.bf16.mxu0 0
          %3865 = vmatpush1.bf16.msra.mxu0 %v3107
          %3866 = vmatprep.subr.bf16.mxu0 0
          %3867 = vmatpush1.bf16.msra.mxu0 %v3108
          %3868 = vmatprep.subr.bf16.mxu0 0
          %3869 = vmatpush1.bf16.msra.mxu0 %v3109
          %3870 = vmatprep.subr.bf16.mxu0 0
          %3871 = vmatpush1.bf16.msra.mxu0 %v3110
          %3872 = vmatprep.subr.bf16.mxu0 0
          %3873 = vmatpush1.bf16.msra.mxu0 %v3111
          %3874 = vmatprep.subr.bf16.mxu0 0
          %3875 = vmatpush1.bf16.msra.mxu0 %v3112
          %3876 = vmatprep.subr.bf16.mxu0 0
          %3877 = vmatpush1.bf16.msra.mxu0 %v3113
          %3878 = vmatprep.subr.bf16.mxu0 0
          %3879 = vmatpush1.bf16.msra.mxu0 %v3114
          %3880 = vmatprep.mubr.bf16.mxu0 %v1926
          %3881 = vmatmul.mubr.bf16.gmra.mrb[0].mxu0 %v1925
          %v3882 = vpop.f32.mrb[0].mxu0
          %v3883 = vadd.f32 %v3794, %v3882
          %v3884 = vpop.f32.mrb[0].mxu0
          %v3885 = vpop.f32.mrb[0].mxu0
          %v3886 = vadd.f32 %v3797, %v3885
          %v3887 = vpop.f32.mrb[0].mxu0
          %3888 = vmatprep.mubr.bf16.mxu0 %v1950
          %3889 = vmatmul.mubr.bf16.gmra.mrb[0].mxu0 %v1949
          %v3890 = vpop.f32.mrb[0].mxu0
          %v3891 = vadd.f32 %v3802, %v3890
          %v3892 = vpop.f32.mrb[0].mxu0
          %v3893 = vpop.f32.mrb[0].mxu0
          %v3894 = vadd.f32 %v3805, %v3893
          %v3895 = vpop.f32.mrb[0].mxu0
          %3896 = vmatprep.mubr.bf16.mxu0 %v1974
          %3897 = vmatmul.mubr.bf16.gmra.mrb[0].mxu0 %v1973
          %v3898 = vpop.f32.mrb[0].mxu0
          %v3899 = vadd.f32 %v3810, %v3898
          %v3900 = vpop.f32.mrb[0].mxu0
          %v3901 = vpop.f32.mrb[0].mxu0
          %v3902 = vadd.f32 %v3813, %v3901
          %v3903 = vpop.f32.mrb[0].mxu0
          %3904 = vmatprep.mubr.bf16.mxu0 %v1998
          %3905 = vmatmul.mubr.bf16.gmra.mrb[0].mxu0 %v1997
          %v3906 = vpop.f32.mrb[0].mxu0
          %v3907 = vadd.f32 %v3818, %v3906
          %v3908 = vpop.f32.mrb[0].mxu0
          %v3909 = vpop.f32.mrb[0].mxu0
          %v3910 = vadd.f32 %v3821, %v3909
          %v3911 = vpop.f32.mrb[0].mxu0
          %3912 = vmatprep.mubr.bf16.mxu0 %v2022
          %3913 = vmatmul.mubr.bf16.gmra.mrb[0].mxu0 %v2021
          %v3914 = vpop.f32.mrb[0].mxu0
          %v3915 = vadd.f32 %v3826, %v3914
          %v3916 = vpop.f32.mrb[0].mxu0
          %v3917 = vpop.f32.mrb[0].mxu0
          %v3918 = vadd.f32 %v3829, %v3917
          %v3919 = vpop.f32.mrb[0].mxu0
          %3920 = vmatprep.mubr.bf16.mxu0 %v2046
          %3921 = vmatmul.mubr.bf16.gmra.mrb[0].mxu0 %v2045
          %v3922 = vpop.f32.mrb[0].mxu0
          %v3923 = vadd.f32 %v3834, %v3922
          %v3924 = vpop.f32.mrb[0].mxu0
          %v3925 = vpop.f32.mrb[0].mxu0
          %v3926 = vadd.f32 %v3837, %v3925
          %v3927 = vpop.f32.mrb[0].mxu0
          %3928 = vmatprep.mubr.bf16.mxu0 %v2070
          %3929 = vmatmul.mubr.bf16.gmra.mrb[0].mxu0 %v2069
          %v3930 = vpop.f32.mrb[0].mxu0
          %v3931 = vadd.f32 %v3842, %v3930
          %v3932 = vpop.f32.mrb[0].mxu0
          %v3933 = vpop.f32.mrb[0].mxu0
          %v3934 = vadd.f32 %v3845, %v3933
          %v3935 = vpop.f32.mrb[0].mxu0
          %3936 = vdwg.mxu0
          %3937 = vmatprep.subr.bf16.mxu0 0
          %3938 = vmatpush1.bf16.msra.mxu0 %v3115
          %3939 = vmatprep.subr.bf16.mxu0 0
          %3940 = vmatpush1.bf16.msra.mxu0 %v3116
          %3941 = vmatprep.subr.bf16.mxu0 0
          %3942 = vmatpush1.bf16.msra.mxu0 %v3117
          %3943 = vmatprep.subr.bf16.mxu0 0
          %3944 = vmatpush1.bf16.msra.mxu0 %v3118
          %3945 = vmatprep.subr.bf16.mxu0 0
          %3946 = vmatpush1.bf16.msra.mxu0 %v3119
          %3947 = vmatprep.subr.bf16.mxu0 0
          %3948 = vmatpush1.bf16.msra.mxu0 %v3120
          %3949 = vmatprep.subr.bf16.mxu0 0
          %3950 = vmatpush1.bf16.msra.mxu0 %v3121
          %3951 = vmatprep.subr.bf16.mxu0 0
          %3952 = vmatpush1.bf16.msra.mxu0 %v3122
          %3953 = vmatprep.subr.bf16.mxu0 0
          %3954 = vmatpush1.bf16.msra.mxu0 %v3123
          %3955 = vmatprep.subr.bf16.mxu0 0
          %3956 = vmatpush1.bf16.msra.mxu0 %v3124
          %3957 = vmatprep.subr.bf16.mxu0 0
          %3958 = vmatpush1.bf16.msra.mxu0 %v3125
          %3959 = vmatprep.subr.bf16.mxu0 0
          %3960 = vmatpush1.bf16.msra.mxu0 %v3126
          %3961 = vmatprep.subr.bf16.mxu0 0
          %3962 = vmatpush1.bf16.msra.mxu0 %v3127
          %3963 = vmatprep.subr.bf16.mxu0 0
          %3964 = vmatpush1.bf16.msra.mxu0 %v3128
          %3965 = vmatprep.subr.bf16.mxu0 0
          %3966 = vmatpush1.bf16.msra.mxu0 %v3129
          %3967 = vmatprep.subr.bf16.mxu0 0
          %3968 = vmatpush1.bf16.msra.mxu0 %v3130
          %3969 = vmatprep.mubr.bf16.mxu0 %v1928
          %3970 = vmatmul.mubr.bf16.gmra.mrb[0].mxu0 %v1927
          %v3971 = vpop.f32.mrb[0].mxu0
          %v3972 = vadd.f32 %v3883, %v3971
          %v3973 = vpop.f32.mrb[0].mxu0
          %v3974 = vpop.f32.mrb[0].mxu0
          %v3975 = vadd.f32 %v3886, %v3974
          %v3976 = vpop.f32.mrb[0].mxu0
          %3977 = vmatprep.mubr.bf16.mxu0 %v1952
          %3978 = vmatmul.mubr.bf16.gmra.mrb[0].mxu0 %v1951
          %v3979 = vpop.f32.mrb[0].mxu0
          %v3980 = vadd.f32 %v3891, %v3979
          %v3981 = vpop.f32.mrb[0].mxu0
          %v3982 = vpop.f32.mrb[0].mxu0
          %v3983 = vadd.f32 %v3894, %v3982
          %v3984 = vpop.f32.mrb[0].mxu0
          %3985 = vmatprep.mubr.bf16.mxu0 %v1976
          %3986 = vmatmul.mubr.bf16.gmra.mrb[0].mxu0 %v1975
          %v3987 = vpop.f32.mrb[0].mxu0
          %v3988 = vadd.f32 %v3899, %v3987
          %v3989 = vpop.f32.mrb[0].mxu0
          %v3990 = vpop.f32.mrb[0].mxu0
          %v3991 = vadd.f32 %v3902, %v3990
          %v3992 = vpop.f32.mrb[0].mxu0
          %3993 = vmatprep.mubr.bf16.mxu0 %v2000
          %3994 = vmatmul.mubr.bf16.gmra.mrb[0].mxu0 %v1999
          %v3995 = vpop.f32.mrb[0].mxu0
          %v3996 = vadd.f32 %v3907, %v3995
          %v3997 = vpop.f32.mrb[0].mxu0
          %v3998 = vpop.f32.mrb[0].mxu0
          %v3999 = vadd.f32 %v3910, %v3998
          %v4000 = vpop.f32.mrb[0].mxu0
          %4001 = vmatprep.mubr.bf16.mxu0 %v2024
          %4002 = vmatmul.mubr.bf16.gmra.mrb[0].mxu0 %v2023
          %v4003 = vpop.f32.mrb[0].mxu0
          %v4004 = vadd.f32 %v3915, %v4003
          %v4005 = vpop.f32.mrb[0].mxu0
          %v4006 = vpop.f32.mrb[0].mxu0
          %v4007 = vadd.f32 %v3918, %v4006
          %v4008 = vpop.f32.mrb[0].mxu0
          %4009 = vmatprep.mubr.bf16.mxu0 %v2048
          %4010 = vmatmul.mubr.bf16.gmra.mrb[0].mxu0 %v2047
          %v4011 = vpop.f32.mrb[0].mxu0
          %v4012 = vadd.f32 %v3923, %v4011
          %v4013 = vpop.f32.mrb[0].mxu0
          %v4014 = vpop.f32.mrb[0].mxu0
          %v4015 = vadd.f32 %v3926, %v4014
          %v4016 = vpop.f32.mrb[0].mxu0
          %4017 = vmatprep.mubr.bf16.mxu0 %v2072
          %4018 = vmatmul.mubr.bf16.gmra.mrb[0].mxu0 %v2071
          %v4019 = vpop.f32.mrb[0].mxu0
          %v4020 = vadd.f32 %v3931, %v4019
          %v4021 = vpop.f32.mrb[0].mxu0
          %v4022 = vpop.f32.mrb[0].mxu0
          %v4023 = vadd.f32 %v3934, %v4022
          %v4024 = vpop.f32.mrb[0].mxu0
          %4025 = vdwg.mxu0
          %4026 = vmatprep.subr.bf16.mxu0 0
          %4027 = vmatpush1.bf16.msra.mxu0 %v3131
          %4028 = vmatprep.subr.bf16.mxu0 0
          %4029 = vmatpush1.bf16.msra.mxu0 %v3132
          %4030 = vmatprep.subr.bf16.mxu0 0
          %4031 = vmatpush1.bf16.msra.mxu0 %v3133
          %4032 = vmatprep.subr.bf16.mxu0 0
          %4033 = vmatpush1.bf16.msra.mxu0 %v3134
          %4034 = vmatprep.subr.bf16.mxu0 0
          %4035 = vmatpush1.bf16.msra.mxu0 %v3135
          %4036 = vmatprep.subr.bf16.mxu0 0
          %4037 = vmatpush1.bf16.msra.mxu0 %v3136
          %4038 = vmatprep.subr.bf16.mxu0 0
          %4039 = vmatpush1.bf16.msra.mxu0 %v3137
          %4040 = vmatprep.subr.bf16.mxu0 0
          %4041 = vmatpush1.bf16.msra.mxu0 %v3138
          %4042 = vmatprep.subr.bf16.mxu0 0
          %4043 = vmatpush1.bf16.msra.mxu0 %v3139
          %4044 = vmatprep.subr.bf16.mxu0 0
          %4045 = vmatpush1.bf16.msra.mxu0 %v3140
          %4046 = vmatprep.subr.bf16.mxu0 0
          %4047 = vmatpush1.bf16.msra.mxu0 %v3141
          %4048 = vmatprep.subr.bf16.mxu0 0
          %4049 = vmatpush1.bf16.msra.mxu0 %v3142
          %4050 = vmatprep.subr.bf16.mxu0 0
          %4051 = vmatpush1.bf16.msra.mxu0 %v3143
          %4052 = vmatprep.subr.bf16.mxu0 0
          %4053 = vmatpush1.bf16.msra.mxu0 %v3144
          %4054 = vmatprep.subr.bf16.mxu0 0
          %4055 = vmatpush1.bf16.msra.mxu0 %v3145
          %4056 = vmatprep.subr.bf16.mxu0 0
          %4057 = vmatpush1.bf16.msra.mxu0 %v3146
          %4058 = vmatprep.mubr.bf16.mxu0 %v1930
          %4059 = vmatmul.mubr.bf16.gmra.mrb[0].mxu0 %v1929
          %v4060 = vpop.f32.mrb[0].mxu0
          %v4061 = vadd.f32 %v3972, %v4060
          %v4062 = vpop.f32.mrb[0].mxu0
          %v4063 = vpop.f32.mrb[0].mxu0
          %v4064 = vadd.f32 %v3975, %v4063
          %v4065 = vpop.f32.mrb[0].mxu0
          %4066 = vmatprep.mubr.bf16.mxu0 %v1954
          %4067 = vmatmul.mubr.bf16.gmra.mrb[0].mxu0 %v1953
          %v4068 = vpop.f32.mrb[0].mxu0
          %v4069 = vadd.f32 %v3980, %v4068
          %v4070 = vpop.f32.mrb[0].mxu0
          %v4071 = vpop.f32.mrb[0].mxu0
          %v4072 = vadd.f32 %v3983, %v4071
          %v4073 = vpop.f32.mrb[0].mxu0
          %4074 = vmatprep.mubr.bf16.mxu0 %v1978
          %4075 = vmatmul.mubr.bf16.gmra.mrb[0].mxu0 %v1977
          %v4076 = vpop.f32.mrb[0].mxu0
          %v4077 = vadd.f32 %v3988, %v4076
          %v4078 = vpop.f32.mrb[0].mxu0
          %v4079 = vpop.f32.mrb[0].mxu0
          %v4080 = vadd.f32 %v3991, %v4079
          %v4081 = vpop.f32.mrb[0].mxu0
          %4082 = vmatprep.mubr.bf16.mxu0 %v2002
          %4083 = vmatmul.mubr.bf16.gmra.mrb[0].mxu0 %v2001
          %v4084 = vpop.f32.mrb[0].mxu0
          %v4085 = vadd.f32 %v3996, %v4084
          %v4086 = vpop.f32.mrb[0].mxu0
          %v4087 = vpop.f32.mrb[0].mxu0
          %v4088 = vadd.f32 %v3999, %v4087
          %v4089 = vpop.f32.mrb[0].mxu0
          %4090 = vmatprep.mubr.bf16.mxu0 %v2026
          %4091 = vmatmul.mubr.bf16.gmra.mrb[0].mxu0 %v2025
          %v4092 = vpop.f32.mrb[0].mxu0
          %v4093 = vadd.f32 %v4004, %v4092
          %v4094 = vpop.f32.mrb[0].mxu0
          %v4095 = vpop.f32.mrb[0].mxu0
          %v4096 = vadd.f32 %v4007, %v4095
          %v4097 = vpop.f32.mrb[0].mxu0
          %4098 = vmatprep.mubr.bf16.mxu0 %v2050
          %4099 = vmatmul.mubr.bf16.gmra.mrb[0].mxu0 %v2049
          %v4100 = vpop.f32.mrb[0].mxu0
          %v4101 = vadd.f32 %v4012, %v4100
          %v4102 = vpop.f32.mrb[0].mxu0
          %v4103 = vpop.f32.mrb[0].mxu0
          %v4104 = vadd.f32 %v4015, %v4103
          %v4105 = vpop.f32.mrb[0].mxu0
          %4106 = vmatprep.mubr.bf16.mxu0 %v2074
          %4107 = vmatmul.mubr.bf16.gmra.mrb[0].mxu0 %v2073
          %v4108 = vpop.f32.mrb[0].mxu0
          %v4109 = vadd.f32 %v4020, %v4108
          %v4110 = vpop.f32.mrb[0].mxu0
          %v4111 = vpop.f32.mrb[0].mxu0
          %v4112 = vadd.f32 %v4023, %v4111
          %v4113 = vpop.f32.mrb[0].mxu0
          %4114 = vdwg.mxu0
          %4115 = vmatprep.subr.bf16.mxu0 0
          %4116 = vmatpush1.bf16.msra.mxu0 %v3147
          %4117 = vmatprep.subr.bf16.mxu0 0
          %4118 = vmatpush1.bf16.msra.mxu0 %v3148
          %4119 = vmatprep.subr.bf16.mxu0 0
          %4120 = vmatpush1.bf16.msra.mxu0 %v3149
          %4121 = vmatprep.subr.bf16.mxu0 0
          %4122 = vmatpush1.bf16.msra.mxu0 %v3150
          %4123 = vmatprep.subr.bf16.mxu0 0
          %4124 = vmatpush1.bf16.msra.mxu0 %v3151
          %4125 = vmatprep.subr.bf16.mxu0 0
          %4126 = vmatpush1.bf16.msra.mxu0 %v3152
          %4127 = vmatprep.subr.bf16.mxu0 0
          %4128 = vmatpush1.bf16.msra.mxu0 %v3153
          %4129 = vmatprep.subr.bf16.mxu0 0
          %4130 = vmatpush1.bf16.msra.mxu0 %v3154
          %4131 = vmatprep.subr.bf16.mxu0 0
          %4132 = vmatpush1.bf16.msra.mxu0 %v3155
          %4133 = vmatprep.subr.bf16.mxu0 0
          %4134 = vmatpush1.bf16.msra.mxu0 %v3156
          %4135 = vmatprep.subr.bf16.mxu0 0
          %4136 = vmatpush1.bf16.msra.mxu0 %v3157
          %4137 = vmatprep.subr.bf16.mxu0 0
          %4138 = vmatpush1.bf16.msra.mxu0 %v3158
          %4139 = vmatprep.subr.bf16.mxu0 0
          %4140 = vmatpush1.bf16.msra.mxu0 %v3159
          %4141 = vmatprep.subr.bf16.mxu0 0
          %4142 = vmatpush1.bf16.msra.mxu0 %v3160
          %4143 = vmatprep.subr.bf16.mxu0 0
          %4144 = vmatpush1.bf16.msra.mxu0 %v3161
          %4145 = vmatprep.subr.bf16.mxu0 0
          %4146 = vmatpush1.bf16.msra.mxu0 %v3162
          %4147 = vmatprep.mubr.bf16.mxu0 %v1932
          %4148 = vmatmul.mubr.bf16.gmra.mrb[0].mxu0 %v1931
          %v4149 = vpop.f32.mrb[0].mxu0
          %v4150 = vadd.f32 %v4061, %v4149
          %v4151 = vpop.f32.mrb[0].mxu0
          %v4152 = vpop.f32.mrb[0].mxu0
          %v4153 = vadd.f32 %v4064, %v4152
          %v4154 = vpop.f32.mrb[0].mxu0
          %4155 = vmatprep.mubr.bf16.mxu0 %v1956
          %4156 = vmatmul.mubr.bf16.gmra.mrb[0].mxu0 %v1955
          %v4157 = vpop.f32.mrb[0].mxu0
          %v4158 = vadd.f32 %v4069, %v4157
          %v4159 = vpop.f32.mrb[0].mxu0
          %v4160 = vpop.f32.mrb[0].mxu0
          %v4161 = vadd.f32 %v4072, %v4160
          %v4162 = vpop.f32.mrb[0].mxu0
          %4163 = vmatprep.mubr.bf16.mxu0 %v1980
          %4164 = vmatmul.mubr.bf16.gmra.mrb[0].mxu0 %v1979
          %v4165 = vpop.f32.mrb[0].mxu0
          %v4166 = vadd.f32 %v4077, %v4165
          %v4167 = vpop.f32.mrb[0].mxu0
          %v4168 = vpop.f32.mrb[0].mxu0
          %v4169 = vadd.f32 %v4080, %v4168
          %v4170 = vpop.f32.mrb[0].mxu0
          %4171 = vmatprep.mubr.bf16.mxu0 %v2004
          %4172 = vmatmul.mubr.bf16.gmra.mrb[0].mxu0 %v2003
          %v4173 = vpop.f32.mrb[0].mxu0
          %v4174 = vadd.f32 %v4085, %v4173
          %v4175 = vpop.f32.mrb[0].mxu0
          %v4176 = vpop.f32.mrb[0].mxu0
          %v4177 = vadd.f32 %v4088, %v4176
          %v4178 = vpop.f32.mrb[0].mxu0
          %4179 = vmatprep.mubr.bf16.mxu0 %v2028
          %4180 = vmatmul.mubr.bf16.gmra.mrb[0].mxu0 %v2027
          %v4181 = vpop.f32.mrb[0].mxu0
          %v4182 = vadd.f32 %v4093, %v4181
          %v4183 = vpop.f32.mrb[0].mxu0
          %v4184 = vpop.f32.mrb[0].mxu0
          %v4185 = vadd.f32 %v4096, %v4184
          %v4186 = vpop.f32.mrb[0].mxu0
          %4187 = vmatprep.mubr.bf16.mxu0 %v2052
          %4188 = vmatmul.mubr.bf16.gmra.mrb[0].mxu0 %v2051
          %v4189 = vpop.f32.mrb[0].mxu0
          %v4190 = vadd.f32 %v4101, %v4189
          %v4191 = vpop.f32.mrb[0].mxu0
          %v4192 = vpop.f32.mrb[0].mxu0
          %v4193 = vadd.f32 %v4104, %v4192
          %v4194 = vpop.f32.mrb[0].mxu0
          %4195 = vmatprep.mubr.bf16.mxu0 %v2076
          %4196 = vmatmul.mubr.bf16.gmra.mrb[0].mxu0 %v2075
          %v4197 = vpop.f32.mrb[0].mxu0
          %v4198 = vadd.f32 %v4109, %v4197
          %v4199 = vpop.f32.mrb[0].mxu0
          %v4200 = vpop.f32.mrb[0].mxu0
          %v4201 = vadd.f32 %v4112, %v4200
          %v4202 = vpop.f32.mrb[0].mxu0
          %4203 = vdwg.mxu0
          %4204 = vmatprep.subr.bf16.mxu0 0
          %4205 = vmatpush1.bf16.msra.mxu0 %v3163
          %4206 = vmatprep.subr.bf16.mxu0 0
          %4207 = vmatpush1.bf16.msra.mxu0 %v3164
          %4208 = vmatprep.subr.bf16.mxu0 0
          %4209 = vmatpush1.bf16.msra.mxu0 %v3165
          %4210 = vmatprep.subr.bf16.mxu0 0
          %4211 = vmatpush1.bf16.msra.mxu0 %v3166
          %4212 = vmatprep.subr.bf16.mxu0 0
          %4213 = vmatpush1.bf16.msra.mxu0 %v3167
          %4214 = vmatprep.subr.bf16.mxu0 0
          %4215 = vmatpush1.bf16.msra.mxu0 %v3168
          %4216 = vmatprep.subr.bf16.mxu0 0
          %4217 = vmatpush1.bf16.msra.mxu0 %v3169
          %4218 = vmatprep.subr.bf16.mxu0 0
          %4219 = vmatpush1.bf16.msra.mxu0 %v3170
          %4220 = vmatprep.subr.bf16.mxu0 0
          %4221 = vmatpush1.bf16.msra.mxu0 %v3171
          %4222 = vmatprep.subr.bf16.mxu0 0
          %4223 = vmatpush1.bf16.msra.mxu0 %v3172
          %4224 = vmatprep.subr.bf16.mxu0 0
          %4225 = vmatpush1.bf16.msra.mxu0 %v3173
          %4226 = vmatprep.subr.bf16.mxu0 0
          %4227 = vmatpush1.bf16.msra.mxu0 %v3174
          %4228 = vmatprep.subr.bf16.mxu0 0
          %4229 = vmatpush1.bf16.msra.mxu0 %v3175
          %4230 = vmatprep.subr.bf16.mxu0 0
          %4231 = vmatpush1.bf16.msra.mxu0 %v3176
          %4232 = vmatprep.subr.bf16.mxu0 0
          %4233 = vmatpush1.bf16.msra.mxu0 %v3177
          %4234 = vmatprep.subr.bf16.mxu0 0
          %4235 = vmatpush1.bf16.msra.mxu0 %v3178
          %4236 = vmatprep.mubr.bf16.mxu0 %v1934
          %4237 = vmatmul.mubr.bf16.gmra.mrb[0].mxu0 %v1933
          %v4238 = vpop.f32.mrb[0].mxu0
          %v4239 = vadd.f32 %v4150, %v4238
          %v4240 = vpop.f32.mrb[0].mxu0
          %v4241 = vpop.f32.mrb[0].mxu0
          %v4242 = vadd.f32 %v4153, %v4241
          %v4243 = vpop.f32.mrb[0].mxu0
          %4244 = vmatprep.mubr.bf16.mxu0 %v1958
          %4245 = vmatmul.mubr.bf16.gmra.mrb[0].mxu0 %v1957
          %v4246 = vpop.f32.mrb[0].mxu0
          %v4247 = vadd.f32 %v4158, %v4246
          %v4248 = vpop.f32.mrb[0].mxu0
          %v4249 = vpop.f32.mrb[0].mxu0
          %v4250 = vadd.f32 %v4161, %v4249
          %v4251 = vpop.f32.mrb[0].mxu0
          %4252 = vmatprep.mubr.bf16.mxu0 %v1982
          %4253 = vmatmul.mubr.bf16.gmra.mrb[0].mxu0 %v1981
          %v4254 = vpop.f32.mrb[0].mxu0
          %v4255 = vadd.f32 %v4166, %v4254
          %v4256 = vpop.f32.mrb[0].mxu0
          %v4257 = vpop.f32.mrb[0].mxu0
          %v4258 = vadd.f32 %v4169, %v4257
          %v4259 = vpop.f32.mrb[0].mxu0
          %4260 = vmatprep.mubr.bf16.mxu0 %v2006
          %4261 = vmatmul.mubr.bf16.gmra.mrb[0].mxu0 %v2005
          %v4262 = vpop.f32.mrb[0].mxu0
          %v4263 = vadd.f32 %v4174, %v4262
          %v4264 = vpop.f32.mrb[0].mxu0
          %v4265 = vpop.f32.mrb[0].mxu0
          %v4266 = vadd.f32 %v4177, %v4265
          %v4267 = vpop.f32.mrb[0].mxu0
          %4268 = vmatprep.mubr.bf16.mxu0 %v2030
          %4269 = vmatmul.mubr.bf16.gmra.mrb[0].mxu0 %v2029
          %v4270 = vpop.f32.mrb[0].mxu0
          %v4271 = vadd.f32 %v4182, %v4270
          %v4272 = vpop.f32.mrb[0].mxu0
          %v4273 = vpop.f32.mrb[0].mxu0
          %v4274 = vadd.f32 %v4185, %v4273
          %v4275 = vpop.f32.mrb[0].mxu0
          %4276 = vmatprep.mubr.bf16.mxu0 %v2054
          %4277 = vmatmul.mubr.bf16.gmra.mrb[0].mxu0 %v2053
          %v4278 = vpop.f32.mrb[0].mxu0
          %v4279 = vadd.f32 %v4190, %v4278
          %v4280 = vpop.f32.mrb[0].mxu0
          %v4281 = vpop.f32.mrb[0].mxu0
          %v4282 = vadd.f32 %v4193, %v4281
          %v4283 = vpop.f32.mrb[0].mxu0
          %4284 = vmatprep.mubr.bf16.mxu0 %v2078
          %4285 = vmatmul.mubr.bf16.gmra.mrb[0].mxu0 %v2077
          %v4286 = vpop.f32.mrb[0].mxu0
          %v4287 = vadd.f32 %v4198, %v4286
          %v4288 = vpop.f32.mrb[0].mxu0
          %v4289 = vpop.f32.mrb[0].mxu0
          %v4290 = vadd.f32 %v4201, %v4289
          %v4291 = vpop.f32.mrb[0].mxu0
          %4292 = vdwg.mxu0
          %4293 = vmatprep.subr.bf16.mxu0 0
          %4294 = vmatpush1.bf16.msra.mxu0 %v3179
          %4295 = vmatprep.subr.bf16.mxu0 0
          %4296 = vmatpush1.bf16.msra.mxu0 %v3180
          %4297 = vmatprep.subr.bf16.mxu0 0
          %4298 = vmatpush1.bf16.msra.mxu0 %v3181
          %4299 = vmatprep.subr.bf16.mxu0 0
          %4300 = vmatpush1.bf16.msra.mxu0 %v3182
          %4301 = vmatprep.subr.bf16.mxu0 0
          %4302 = vmatpush1.bf16.msra.mxu0 %v3183
          %4303 = vmatprep.subr.bf16.mxu0 0
          %4304 = vmatpush1.bf16.msra.mxu0 %v3184
          %4305 = vmatprep.subr.bf16.mxu0 0
          %4306 = vmatpush1.bf16.msra.mxu0 %v3185
          %4307 = vmatprep.subr.bf16.mxu0 0
          %4308 = vmatpush1.bf16.msra.mxu0 %v3186
          %4309 = vmatprep.subr.bf16.mxu0 0
          %4310 = vmatpush1.bf16.msra.mxu0 %v3187
          %4311 = vmatprep.subr.bf16.mxu0 0
          %4312 = vmatpush1.bf16.msra.mxu0 %v3188
          %4313 = vmatprep.subr.bf16.mxu0 0
          %4314 = vmatpush1.bf16.msra.mxu0 %v3189
          %4315 = vmatprep.subr.bf16.mxu0 0
          %4316 = vmatpush1.bf16.msra.mxu0 %v3190
          %4317 = vmatprep.subr.bf16.mxu0 0
          %4318 = vmatpush1.bf16.msra.mxu0 %v3191
          %4319 = vmatprep.subr.bf16.mxu0 0
          %4320 = vmatpush1.bf16.msra.mxu0 %v3192
          %4321 = vmatprep.subr.bf16.mxu0 0
          %4322 = vmatpush1.bf16.msra.mxu0 %v3193
          %4323 = vmatprep.subr.bf16.mxu0 0
          %4324 = vmatpush1.bf16.msra.mxu0 %v3194
          %4325 = vmatprep.mubr.bf16.mxu0 %v1936
          %4326 = vmatmul.mubr.bf16.gmra.mrb[0].mxu0 %v1935
          %v4327 = vpop.f32.mrb[0].mxu0
          %v4328 = vadd.f32 %v4239, %v4327
          %v4329 = vpop.f32.mrb[0].mxu0
          %v4330 = vpop.f32.mrb[0].mxu0
          %v4331 = vadd.f32 %v4242, %v4330
          %v4332 = vpop.f32.mrb[0].mxu0
          %4333 = vmatprep.mubr.bf16.mxu0 %v1960
          %4334 = vmatmul.mubr.bf16.gmra.mrb[0].mxu0 %v1959
          %v4335 = vpop.f32.mrb[0].mxu0
          %v4336 = vadd.f32 %v4247, %v4335
          %v4337 = vpop.f32.mrb[0].mxu0
          %v4338 = vpop.f32.mrb[0].mxu0
          %v4339 = vadd.f32 %v4250, %v4338
          %v4340 = vpop.f32.mrb[0].mxu0
          %4341 = vmatprep.mubr.bf16.mxu0 %v1984
          %4342 = vmatmul.mubr.bf16.gmra.mrb[0].mxu0 %v1983
          %v4343 = vpop.f32.mrb[0].mxu0
          %v4344 = vadd.f32 %v4255, %v4343
          %v4345 = vpop.f32.mrb[0].mxu0
          %v4346 = vpop.f32.mrb[0].mxu0
          %v4347 = vadd.f32 %v4258, %v4346
          %v4348 = vpop.f32.mrb[0].mxu0
          %4349 = vmatprep.mubr.bf16.mxu0 %v2008
          %4350 = vmatmul.mubr.bf16.gmra.mrb[0].mxu0 %v2007
          %v4351 = vpop.f32.mrb[0].mxu0
          %v4352 = vadd.f32 %v4263, %v4351
          %v4353 = vpop.f32.mrb[0].mxu0
          %v4354 = vpop.f32.mrb[0].mxu0
          %v4355 = vadd.f32 %v4266, %v4354
          %v4356 = vpop.f32.mrb[0].mxu0
          %4357 = vmatprep.mubr.bf16.mxu0 %v2032
          %4358 = vmatmul.mubr.bf16.gmra.mrb[0].mxu0 %v2031
          %v4359 = vpop.f32.mrb[0].mxu0
          %v4360 = vadd.f32 %v4271, %v4359
          %v4361 = vpop.f32.mrb[0].mxu0
          %v4362 = vpop.f32.mrb[0].mxu0
          %v4363 = vadd.f32 %v4274, %v4362
          %v4364 = vpop.f32.mrb[0].mxu0
          %4365 = vmatprep.mubr.bf16.mxu0 %v2056
          %4366 = vmatmul.mubr.bf16.gmra.mrb[0].mxu0 %v2055
          %v4367 = vpop.f32.mrb[0].mxu0
          %v4368 = vadd.f32 %v4279, %v4367
          %v4369 = vpop.f32.mrb[0].mxu0
          %v4370 = vpop.f32.mrb[0].mxu0
          %v4371 = vadd.f32 %v4282, %v4370
          %v4372 = vpop.f32.mrb[0].mxu0
          %4373 = vmatprep.mubr.bf16.mxu0 %v2080
          %4374 = vmatmul.mubr.bf16.gmra.mrb[0].mxu0 %v2079
          %v4375 = vpop.f32.mrb[0].mxu0
          %v4376 = vadd.f32 %v4287, %v4375
          %v4377 = vpop.f32.mrb[0].mxu0
          %v4378 = vpop.f32.mrb[0].mxu0
          %v4379 = vadd.f32 %v4290, %v4378
          %v4380 = vpop.f32.mrb[0].mxu0
          %4381 = vdwg.mxu0
          %4382 = vmatprep.subr.bf16.mxu0 0
          %4383 = vmatpush1.bf16.msra.mxu0 %v3195
          %4384 = vmatprep.subr.bf16.mxu0 0
          %4385 = vmatpush1.bf16.msra.mxu0 %v3196
          %4386 = vmatprep.subr.bf16.mxu0 0
          %4387 = vmatpush1.bf16.msra.mxu0 %v3197
          %4388 = vmatprep.subr.bf16.mxu0 0
          %4389 = vmatpush1.bf16.msra.mxu0 %v3198
          %4390 = vmatprep.subr.bf16.mxu0 0
          %4391 = vmatpush1.bf16.msra.mxu0 %v3199
          %4392 = vmatprep.subr.bf16.mxu0 0
          %4393 = vmatpush1.bf16.msra.mxu0 %v3200
          %4394 = vmatprep.subr.bf16.mxu0 0
          %4395 = vmatpush1.bf16.msra.mxu0 %v3201
          %4396 = vmatprep.subr.bf16.mxu0 0
          %4397 = vmatpush1.bf16.msra.mxu0 %v3202
          %4398 = vmatprep.subr.bf16.mxu0 0
          %4399 = vmatpush1.bf16.msra.mxu0 %v3203
          %4400 = vmatprep.subr.bf16.mxu0 0
          %4401 = vmatpush1.bf16.msra.mxu0 %v3204
          %4402 = vmatprep.subr.bf16.mxu0 0
          %4403 = vmatpush1.bf16.msra.mxu0 %v3205
          %4404 = vmatprep.subr.bf16.mxu0 0
          %4405 = vmatpush1.bf16.msra.mxu0 %v3206
          %4406 = vmatprep.subr.bf16.mxu0 0
          %4407 = vmatpush1.bf16.msra.mxu0 %v3207
          %4408 = vmatprep.subr.bf16.mxu0 0
          %4409 = vmatpush1.bf16.msra.mxu0 %v3208
          %4410 = vmatprep.subr.bf16.mxu0 0
          %4411 = vmatpush1.bf16.msra.mxu0 %v3209
          %4412 = vmatprep.subr.bf16.mxu0 0
          %4413 = vmatpush1.bf16.msra.mxu0 %v3210
          %4414 = vmatprep.mubr.bf16.mxu0 %v1938
          %4415 = vmatmul.mubr.bf16.gmra.mrb[0].mxu0 %v1937
          %v4416 = vpop.f32.mrb[0].mxu0
          %v4417 = vadd.f32 %v4328, %v4416
          %v4418 = vpop.f32.mrb[0].mxu0
          %v4419 = vpop.f32.mrb[0].mxu0
          %v4420 = vadd.f32 %v4331, %v4419
          %v4421 = vpop.f32.mrb[0].mxu0
          %4422 = vmatprep.mubr.bf16.mxu0 %v1962
          %4423 = vmatmul.mubr.bf16.gmra.mrb[0].mxu0 %v1961
          %v4424 = vpop.f32.mrb[0].mxu0
          %v4425 = vadd.f32 %v4336, %v4424
          %v4426 = vpop.f32.mrb[0].mxu0
          %v4427 = vpop.f32.mrb[0].mxu0
          %v4428 = vadd.f32 %v4339, %v4427
          %v4429 = vpop.f32.mrb[0].mxu0
          %4430 = vmatprep.mubr.bf16.mxu0 %v1986
          %4431 = vmatmul.mubr.bf16.gmra.mrb[0].mxu0 %v1985
          %v4432 = vpop.f32.mrb[0].mxu0
          %v4433 = vadd.f32 %v4344, %v4432
          %v4434 = vpop.f32.mrb[0].mxu0
          %v4435 = vpop.f32.mrb[0].mxu0
          %v4436 = vadd.f32 %v4347, %v4435
          %v4437 = vpop.f32.mrb[0].mxu0
          %4438 = vmatprep.mubr.bf16.mxu0 %v2010
          %4439 = vmatmul.mubr.bf16.gmra.mrb[0].mxu0 %v2009
          %v4440 = vpop.f32.mrb[0].mxu0
          %v4441 = vadd.f32 %v4352, %v4440
          %v4442 = vpop.f32.mrb[0].mxu0
          %v4443 = vpop.f32.mrb[0].mxu0
          %v4444 = vadd.f32 %v4355, %v4443
          %v4445 = vpop.f32.mrb[0].mxu0
          %4446 = vmatprep.mubr.bf16.mxu0 %v2034
          %4447 = vmatmul.mubr.bf16.gmra.mrb[0].mxu0 %v2033
          %v4448 = vpop.f32.mrb[0].mxu0
          %v4449 = vadd.f32 %v4360, %v4448
          %v4450 = vpop.f32.mrb[0].mxu0
          %v4451 = vpop.f32.mrb[0].mxu0
          %v4452 = vadd.f32 %v4363, %v4451
          %v4453 = vpop.f32.mrb[0].mxu0
          %4454 = vmatprep.mubr.bf16.mxu0 %v2058
          %4455 = vmatmul.mubr.bf16.gmra.mrb[0].mxu0 %v2057
          %v4456 = vpop.f32.mrb[0].mxu0
          %v4457 = vadd.f32 %v4368, %v4456
          %v4458 = vpop.f32.mrb[0].mxu0
          %v4459 = vpop.f32.mrb[0].mxu0
          %v4460 = vadd.f32 %v4371, %v4459
          %v4461 = vpop.f32.mrb[0].mxu0
          %4462 = vmatprep.mubr.bf16.mxu0 %v2082
          %4463 = vmatmul.mubr.bf16.gmra.mrb[0].mxu0 %v2081
          %v4464 = vpop.f32.mrb[0].mxu0
          %v4465 = vadd.f32 %v4376, %v4464
          %v4466 = vpop.f32.mrb[0].mxu0
          %v4467 = vpop.f32.mrb[0].mxu0
          %v4468 = vadd.f32 %v4379, %v4467
          %v4469 = vpop.f32.mrb[0].mxu0
          %4470 = vdwg.mxu0
          %v4471 = vld [vmem:[%s3] sm:$0x1]
          %v4472 = vld [vmem:[%s4] sm:$0x1]
          %4473 = vadd.xlane.f32.xlu0 %v4417
          %v4474 = vpop.xlane.xlu0 %4473
          %4475 = vadd.xlane.f32.xlu0 %v4420
          %v4476 = vpop.xlane.xlu0 %4475
          %4477 = vadd.xlane.f32.xlu0 %v4425
          %v4478 = vpop.xlane.xlu0 %4477
          %4479 = vadd.xlane.f32.xlu0 %v4428
          %v4480 = vpop.xlane.xlu0 %4479
          %4481 = vadd.xlane.f32.xlu0 %v4433
          %v4482 = vpop.xlane.xlu0 %4481
          %4483 = vadd.xlane.f32.xlu0 %v4436
          %v4484 = vpop.xlane.xlu0 %4483
          %4485 = vadd.xlane.f32.xlu0 %v4441
          %v4486 = vpop.xlane.xlu0 %4485
          %4487 = vadd.xlane.f32.xlu0 %v4444
          %v4488 = vpop.xlane.xlu0 %4487
          %4489 = vadd.xlane.f32.xlu0 %v4449
          %v4490 = vpop.xlane.xlu0 %4489
          %4491 = vadd.xlane.f32.xlu0 %v4452
          %v4492 = vpop.xlane.xlu0 %4491
          %4493 = vadd.xlane.f32.xlu0 %v4457
          %v4494 = vpop.xlane.xlu0 %4493
          %4495 = vadd.xlane.f32.xlu0 %v4460
          %v4496 = vpop.xlane.xlu0 %4495
          %4497 = vadd.xlane.f32.xlu0 %v4465
          %v4498 = vpop.xlane.xlu0 %4497
          %4499 = vadd.xlane.f32.xlu0 %v4468
          %v4500 = vpop.xlane.xlu0 %4499
          %v4501 = vmul.f32 %v4474, 0.015625
          %v4502 = vmul.f32 %v4476, 0.015625
          %v4503 = vmul.f32 %v4478, 0.015625
          %v4504 = vmul.f32 %v4480, 0.015625
          %v4505 = vmul.f32 %v4482, 0.015625
          %v4506 = vmul.f32 %v4484, 0.015625
          %v4507 = vmul.f32 %v4486, 0.015625
          %v4508 = vmul.f32 %v4488, 0.015625
          %v4509 = vmul.f32 %v4490, 0.015625
          %v4510 = vmul.f32 %v4492, 0.015625
          %v4511 = vmul.f32 %v4494, 0.015625
          %v4512 = vmul.f32 %v4496, 0.015625
          %v4513 = vmul.f32 %v4498, 0.015625
          %v4514 = vmul.f32 %v4500, 0.015625
          %v4515 = vmul.f32 %v4417, %v4417
          %v4516 = vmul.f32 %v4420, %v4420
          %v4517 = vmul.f32 %v4425, %v4425
          %v4518 = vmul.f32 %v4428, %v4428
          %v4519 = vmul.f32 %v4433, %v4433
          %v4520 = vmul.f32 %v4436, %v4436
          %v4521 = vmul.f32 %v4441, %v4441
          %v4522 = vmul.f32 %v4444, %v4444
          %v4523 = vmul.f32 %v4449, %v4449
          %v4524 = vmul.f32 %v4452, %v4452
          %v4525 = vmul.f32 %v4457, %v4457
          %v4526 = vmul.f32 %v4460, %v4460
          %v4527 = vmul.f32 %v4465, %v4465
          %v4528 = vmul.f32 %v4468, %v4468
          %4529 = vadd.xlane.f32.xlu0 %v4515
          %v4530 = vpop.xlane.xlu0 %4529
          %4531 = vadd.xlane.f32.xlu0 %v4516
          %v4532 = vpop.xlane.xlu0 %4531
          %4533 = vadd.xlane.f32.xlu0 %v4517
          %v4534 = vpop.xlane.xlu0 %4533
          %4535 = vadd.xlane.f32.xlu0 %v4518
          %v4536 = vpop.xlane.xlu0 %4535
          %4537 = vadd.xlane.f32.xlu0 %v4519
          %v4538 = vpop.xlane.xlu0 %4537
          %4539 = vadd.xlane.f32.xlu0 %v4520
          %v4540 = vpop.xlane.xlu0 %4539
          %4541 = vadd.xlane.f32.xlu0 %v4521
          %v4542 = vpop.xlane.xlu0 %4541
          %4543 = vadd.xlane.f32.xlu0 %v4522
          %v4544 = vpop.xlane.xlu0 %4543
          %4545 = vadd.xlane.f32.xlu0 %v4523
          %v4546 = vpop.xlane.xlu0 %4545
          %4547 = vadd.xlane.f32.xlu0 %v4524
          %v4548 = vpop.xlane.xlu0 %4547
          %4549 = vadd.xlane.f32.xlu0 %v4525
          %v4550 = vpop.xlane.xlu0 %4549
          %4551 = vadd.xlane.f32.xlu0 %v4526
          %v4552 = vpop.xlane.xlu0 %4551
          %4553 = vadd.xlane.f32.xlu0 %v4527
          %v4554 = vpop.xlane.xlu0 %4553
          %4555 = vadd.xlane.f32.xlu0 %v4528
          %v4556 = vpop.xlane.xlu0 %4555
          %v4557 = vmul.f32 %v4530, 0.015625
          %v4558 = vmul.f32 %v4532, 0.015625
          %v4559 = vmul.f32 %v4534, 0.015625
          %v4560 = vmul.f32 %v4536, 0.015625
          %v4561 = vmul.f32 %v4538, 0.015625
          %v4562 = vmul.f32 %v4540, 0.015625
          %v4563 = vmul.f32 %v4542, 0.015625
          %v4564 = vmul.f32 %v4544, 0.015625
          %v4565 = vmul.f32 %v4546, 0.015625
          %v4566 = vmul.f32 %v4548, 0.015625
          %v4567 = vmul.f32 %v4550, 0.015625
          %v4568 = vmul.f32 %v4552, 0.015625
          %v4569 = vmul.f32 %v4554, 0.015625
          %v4570 = vmul.f32 %v4556, 0.015625
          %v4571 = vmul.f32 %v4501, %v4501
          %v4572 = vmul.f32 %v4502, %v4502
          %v4573 = vmul.f32 %v4503, %v4503
          %v4574 = vmul.f32 %v4504, %v4504
          %v4575 = vmul.f32 %v4505, %v4505
          %v4576 = vmul.f32 %v4506, %v4506
          %v4577 = vmul.f32 %v4507, %v4507
          %v4578 = vmul.f32 %v4508, %v4508
          %v4579 = vmul.f32 %v4509, %v4509
          %v4580 = vmul.f32 %v4510, %v4510
          %v4581 = vmul.f32 %v4511, %v4511
          %v4582 = vmul.f32 %v4512, %v4512
          %v4583 = vmul.f32 %v4513, %v4513
          %v4584 = vmul.f32 %v4514, %v4514
          %v4585 = vsub.f32 %v4557, %v4571
          %v4586 = vsub.f32 %v4558, %v4572
          %v4587 = vsub.f32 %v4559, %v4573
          %v4588 = vsub.f32 %v4560, %v4574
          %v4589 = vsub.f32 %v4561, %v4575
          %v4590 = vsub.f32 %v4562, %v4576
          %v4591 = vsub.f32 %v4563, %v4577
          %v4592 = vsub.f32 %v4564, %v4578
          %v4593 = vsub.f32 %v4565, %v4579
          %v4594 = vsub.f32 %v4566, %v4580
          %v4595 = vsub.f32 %v4567, %v4581
          %v4596 = vsub.f32 %v4568, %v4582
          %v4597 = vsub.f32 %v4569, %v4583
          %v4598 = vsub.f32 %v4570, %v4584
          %v4599 = vmax.f32 %v4585, 0.0
          %v4600 = vmax.f32 %v4586, 0.0
          %v4601 = vmax.f32 %v4587, 0.0
          %v4602 = vmax.f32 %v4588, 0.0
          %v4603 = vmax.f32 %v4589, 0.0
          %v4604 = vmax.f32 %v4590, 0.0
          %v4605 = vmax.f32 %v4591, 0.0
          %v4606 = vmax.f32 %v4592, 0.0
          %v4607 = vmax.f32 %v4593, 0.0
          %v4608 = vmax.f32 %v4594, 0.0
          %v4609 = vmax.f32 %v4595, 0.0
          %v4610 = vmax.f32 %v4596, 0.0
          %v4611 = vmax.f32 %v4597, 0.0
          %v4612 = vmax.f32 %v4598, 0.0
          %v4613 = vsub.f32 %v4417, %v4501
          %v4614 = vsub.f32 %v4420, %v4502
          %v4615 = vsub.f32 %v4425, %v4503
          %v4616 = vsub.f32 %v4428, %v4504
          %v4617 = vsub.f32 %v4433, %v4505
          %v4618 = vsub.f32 %v4436, %v4506
          %v4619 = vsub.f32 %v4441, %v4507
          %v4620 = vsub.f32 %v4444, %v4508
          %v4621 = vsub.f32 %v4449, %v4509
          %v4622 = vsub.f32 %v4452, %v4510
          %v4623 = vsub.f32 %v4457, %v4511
          %v4624 = vsub.f32 %v4460, %v4512
          %v4625 = vsub.f32 %v4465, %v4513
          %v4626 = vsub.f32 %v4468, %v4514
          %v4627 = vadd.f32 %v4599, 1e-05
          %v4628 = vadd.f32 %v4600, 1e-05
          %v4629 = vadd.f32 %v4601, 1e-05
          %v4630 = vadd.f32 %v4602, 1e-05
          %v4631 = vadd.f32 %v4603, 1e-05
          %v4632 = vadd.f32 %v4604, 1e-05
          %v4633 = vadd.f32 %v4605, 1e-05
          %v4634 = vadd.f32 %v4606, 1e-05
          %v4635 = vadd.f32 %v4607, 1e-05
          %v4636 = vadd.f32 %v4608, 1e-05
          %v4637 = vadd.f32 %v4609, 1e-05
          %v4638 = vadd.f32 %v4610, 1e-05
          %v4639 = vadd.f32 %v4611, 1e-05
          %v4640 = vadd.f32 %v4612, 1e-05
          %v4641 = vrsqrt.pop %v4627
          %v4642 = vrsqrt.pop %v4628
          %v4643 = vrsqrt.pop %v4629
          %v4644 = vrsqrt.pop %v4630
          %v4645 = vrsqrt.pop %v4631
          %v4646 = vrsqrt.pop %v4632
          %v4647 = vrsqrt.pop %v4633
          %v4648 = vrsqrt.pop %v4634
          %v4649 = vrsqrt.pop %v4635
          %v4650 = vrsqrt.pop %v4636
          %v4651 = vrsqrt.pop %v4637
          %v4652 = vrsqrt.pop %v4638
          %v4653 = vrsqrt.pop %v4639
          %v4654 = vrsqrt.pop %v4640
          %v4655 = vmul.f32 %v4613, %v4641
          %v4656 = vmul.f32 %v4614, %v4642
          %v4657 = vmul.f32 %v4615, %v4643
          %v4658 = vmul.f32 %v4616, %v4644
          %v4659 = vmul.f32 %v4617, %v4645
          %v4660 = vmul.f32 %v4618, %v4646
          %v4661 = vmul.f32 %v4619, %v4647
          %v4662 = vmul.f32 %v4620, %v4648
          %v4663 = vmul.f32 %v4621, %v4649
          %v4664 = vmul.f32 %v4622, %v4650
          %v4665 = vmul.f32 %v4623, %v4651
          %v4666 = vmul.f32 %v4624, %v4652
          %v4667 = vmul.f32 %v4625, %v4653
          %v4668 = vmul.f32 %v4626, %v4654
          %v4670 = vlaneseq
          %v4671 = vshrl.u32 %v4670, 7
          %v4672 = vsub.s32 0, %v4671
          %v4673 = vrot.slane %v4471, %v4672
          %v4675 = vmul.f32 %v4655, %v4673
          %v4676 = vmul.f32 %v4656, %v4673
          %v4677 = vmul.f32 %v4657, %v4673
          %v4678 = vmul.f32 %v4658, %v4673
          %v4679 = vmul.f32 %v4659, %v4673
          %v4680 = vmul.f32 %v4660, %v4673
          %v4681 = vmul.f32 %v4661, %v4673
          %v4682 = vmul.f32 %v4662, %v4673
          %v4683 = vmul.f32 %v4663, %v4673
          %v4684 = vmul.f32 %v4664, %v4673
          %v4685 = vmul.f32 %v4665, %v4673
          %v4686 = vmul.f32 %v4666, %v4673
          %v4687 = vmul.f32 %v4667, %v4673
          %v4688 = vmul.f32 %v4668, %v4673
          %v4690 = vlaneseq
          %v4691 = vshrl.u32 %v4690, 7
          %v4692 = vsub.s32 0, %v4691
          %v4693 = vrot.slane %v4472, %v4692
          %v4695 = vadd.f32 %v4675, %v4693
          %v4696 = vadd.f32 %v4676, %v4693
          %v4697 = vadd.f32 %v4677, %v4693
          %v4698 = vadd.f32 %v4678, %v4693
          %v4699 = vadd.f32 %v4679, %v4693
          %v4700 = vadd.f32 %v4680, %v4693
          %v4701 = vadd.f32 %v4681, %v4693
          %v4702 = vadd.f32 %v4682, %v4693
          %v4703 = vadd.f32 %v4683, %v4693
          %v4704 = vadd.f32 %v4684, %v4693
          %v4705 = vadd.f32 %v4685, %v4693
          %v4706 = vadd.f32 %v4686, %v4693
          %v4707 = vadd.f32 %v4687, %v4693
          %v4708 = vadd.f32 %v4688, %v4693
          %4709 = vst [vmem:[#allocation4] sm:$0xff] %v4695
          %4710 = vst [vmem:[#allocation4 + $0x8] sm:$0xff] %v4696
          %4711 = vst [vmem:[#allocation4 + $0x10] sm:$0xff] %v4697
          %4712 = vst [vmem:[#allocation4 + $0x18] sm:$0xff] %v4698
          %4713 = vst [vmem:[#allocation4 + $0x20] sm:$0xff] %v4699
          %4714 = vst [vmem:[#allocation4 + $0x28] sm:$0xff] %v4700
          %4715 = vst [vmem:[#allocation4 + $0x30] sm:$0xff] %v4701
          %4716 = vst [vmem:[#allocation4 + $0x38] sm:$0xff] %v4702
          %4717 = vst [vmem:[#allocation4 + $0x40] sm:$0xff] %v4703
          %4718 = vst [vmem:[#allocation4 + $0x48] sm:$0xff] %v4704
          %4719 = vst [vmem:[#allocation4 + $0x50] sm:$0xff] %v4705
          %4720 = vst [vmem:[#allocation4 + $0x58] sm:$0xff] %v4706
          %4721 = vst [vmem:[#allocation4 + $0x60] sm:$0xff] %v4707
          %4722 = vst [vmem:[#allocation4 + $0x68] sm:$0xff] %v4708
        $region108: #{clip_vision_forward.3} parent=103 // pred_fallthru
          _
        %v4723 = vld [vmem:[#allocation4] sm:$0xff]
        %v4724 = vld [vmem:[#allocation4 + $0x8] sm:$0xff]
        %v4725 = vld [vmem:[#allocation4 + $0x10] sm:$0xff]
        %v4726 = vld [vmem:[#allocation4 + $0x18] sm:$0xff]
        %v4727 = vld [vmem:[#allocation4 + $0x20] sm:$0xff]
        %v4728 = vld [vmem:[#allocation4 + $0x28] sm:$0xff]
        %v4729 = vld [vmem:[#allocation4 + $0x30] sm:$0xff]
        %v4730 = vld [vmem:[#allocation4 + $0x38] sm:$0xff]
        %v4731 = vld [vmem:[#allocation4 + $0x40] sm:$0xff]
        %v4732 = vld [vmem:[#allocation4 + $0x48] sm:$0xff]
        %v4733 = vld [vmem:[#allocation4 + $0x50] sm:$0xff]
        %v4734 = vld [vmem:[#allocation4 + $0x58] sm:$0xff]
        %v4735 = vld [vmem:[#allocation4 + $0x60] sm:$0xff]
        %v4736 = vld [vmem:[#allocation4 + $0x68] sm:$0xff]
        %v4737 = vld [vmem:[%s803] sm:$0x1]
        %v4738 = vld [vmem:[%s806] sm:$0x1]
        %4739 = vadd.xlane.f32.xlu0 %v4723
        %v4740 = vpop.xlane.xlu0 %4739
        %4741 = vadd.xlane.f32.xlu0 %v4724
        %v4742 = vpop.xlane.xlu0 %4741
        %4743 = vadd.xlane.f32.xlu0 %v4725
        %v4744 = vpop.xlane.xlu0 %4743
        %4745 = vadd.xlane.f32.xlu0 %v4726
        %v4746 = vpop.xlane.xlu0 %4745
        %4747 = vadd.xlane.f32.xlu0 %v4727
        %v4748 = vpop.xlane.xlu0 %4747
        %4749 = vadd.xlane.f32.xlu0 %v4728
        %v4750 = vpop.xlane.xlu0 %4749
        %4751 = vadd.xlane.f32.xlu0 %v4729
        %v4752 = vpop.xlane.xlu0 %4751
        %4753 = vadd.xlane.f32.xlu0 %v4730
        %v4754 = vpop.xlane.xlu0 %4753
        %4755 = vadd.xlane.f32.xlu0 %v4731
        %v4756 = vpop.xlane.xlu0 %4755
        %4757 = vadd.xlane.f32.xlu0 %v4732
        %v4758 = vpop.xlane.xlu0 %4757
        %4759 = vadd.xlane.f32.xlu0 %v4733
        %v4760 = vpop.xlane.xlu0 %4759
        %4761 = vadd.xlane.f32.xlu0 %v4734
        %v4762 = vpop.xlane.xlu0 %4761
        %4763 = vadd.xlane.f32.xlu0 %v4735
        %v4764 = vpop.xlane.xlu0 %4763
        %4765 = vadd.xlane.f32.xlu0 %v4736
        %v4766 = vpop.xlane.xlu0 %4765
        %v4767 = vmul.f32 %v4740, 0.015625
        %v4768 = vmul.f32 %v4742, 0.015625
        %v4769 = vmul.f32 %v4744, 0.015625
        %v4770 = vmul.f32 %v4746, 0.015625
        %v4771 = vmul.f32 %v4748, 0.015625
        %v4772 = vmul.f32 %v4750, 0.015625
        %v4773 = vmul.f32 %v4752, 0.015625
        %v4774 = vmul.f32 %v4754, 0.015625
        %v4775 = vmul.f32 %v4756, 0.015625
        %v4776 = vmul.f32 %v4758, 0.015625
        %v4777 = vmul.f32 %v4760, 0.015625
        %v4778 = vmul.f32 %v4762, 0.015625
        %v4779 = vmul.f32 %v4764, 0.015625
        %v4780 = vmul.f32 %v4766, 0.015625
        %v4781 = vmul.f32 %v4723, %v4723
        %v4782 = vmul.f32 %v4724, %v4724
        %v4783 = vmul.f32 %v4725, %v4725
        %v4784 = vmul.f32 %v4726, %v4726
        %v4785 = vmul.f32 %v4727, %v4727
        %v4786 = vmul.f32 %v4728, %v4728
        %v4787 = vmul.f32 %v4729, %v4729
        %v4788 = vmul.f32 %v4730, %v4730
        %v4789 = vmul.f32 %v4731, %v4731
        %v4790 = vmul.f32 %v4732, %v4732
        %v4791 = vmul.f32 %v4733, %v4733
        %v4792 = vmul.f32 %v4734, %v4734
        %v4793 = vmul.f32 %v4735, %v4735
        %v4794 = vmul.f32 %v4736, %v4736
        %4795 = vadd.xlane.f32.xlu0 %v4781
        %v4796 = vpop.xlane.xlu0 %4795
        %4797 = vadd.xlane.f32.xlu0 %v4782
        %v4798 = vpop.xlane.xlu0 %4797
        %4799 = vadd.xlane.f32.xlu0 %v4783
        %v4800 = vpop.xlane.xlu0 %4799
        %4801 = vadd.xlane.f32.xlu0 %v4784
        %v4802 = vpop.xlane.xlu0 %4801
        %4803 = vadd.xlane.f32.xlu0 %v4785
        %v4804 = vpop.xlane.xlu0 %4803
        %4805 = vadd.xlane.f32.xlu0 %v4786
        %v4806 = vpop.xlane.xlu0 %4805
        %4807 = vadd.xlane.f32.xlu0 %v4787
        %v4808 = vpop.xlane.xlu0 %4807
        %4809 = vadd.xlane.f32.xlu0 %v4788
        %v4810 = vpop.xlane.xlu0 %4809
        %4811 = vadd.xlane.f32.xlu0 %v4789
        %v4812 = vpop.xlane.xlu0 %4811
        %4813 = vadd.xlane.f32.xlu0 %v4790
        %v4814 = vpop.xlane.xlu0 %4813
        %4815 = vadd.xlane.f32.xlu0 %v4791
        %v4816 = vpop.xlane.xlu0 %4815
        %4817 = vadd.xlane.f32.xlu0 %v4792
        %v4818 = vpop.xlane.xlu0 %4817
        %4819 = vadd.xlane.f32.xlu0 %v4793
        %v4820 = vpop.xlane.xlu0 %4819
        %4821 = vadd.xlane.f32.xlu0 %v4794
        %v4822 = vpop.xlane.xlu0 %4821
        %v4823 = vmul.f32 %v4796, 0.015625
        %v4824 = vmul.f32 %v4798, 0.015625
        %v4825 = vmul.f32 %v4800, 0.015625
        %v4826 = vmul.f32 %v4802, 0.015625
        %v4827 = vmul.f32 %v4804, 0.015625
        %v4828 = vmul.f32 %v4806, 0.015625
        %v4829 = vmul.f32 %v4808, 0.015625
        %v4830 = vmul.f32 %v4810, 0.015625
        %v4831 = vmul.f32 %v4812, 0.015625
        %v4832 = vmul.f32 %v4814, 0.015625
        %v4833 = vmul.f32 %v4816, 0.015625
        %v4834 = vmul.f32 %v4818, 0.015625
        %v4835 = vmul.f32 %v4820, 0.015625
        %v4836 = vmul.f32 %v4822, 0.015625
        %v4837 = vmul.f32 %v4767, %v4767
        %v4838 = vmul.f32 %v4768, %v4768
        %v4839 = vmul.f32 %v4769, %v4769
        %v4840 = vmul.f32 %v4770, %v4770
        %v4841 = vmul.f32 %v4771, %v4771
        %v4842 = vmul.f32 %v4772, %v4772
        %v4843 = vmul.f32 %v4773, %v4773
        %v4844 = vmul.f32 %v4774, %v4774
        %v4845 = vmul.f32 %v4775, %v4775
        %v4846 = vmul.f32 %v4776, %v4776
        %v4847 = vmul.f32 %v4777, %v4777
        %v4848 = vmul.f32 %v4778, %v4778
        %v4849 = vmul.f32 %v4779, %v4779
        %v4850 = vmul.f32 %v4780, %v4780
        %v4851 = vsub.f32 %v4823, %v4837
        %v4852 = vsub.f32 %v4824, %v4838
        %v4853 = vsub.f32 %v4825, %v4839
        %v4854 = vsub.f32 %v4826, %v4840
        %v4855 = vsub.f32 %v4827, %v4841
        %v4856 = vsub.f32 %v4828, %v4842
        %v4857 = vsub.f32 %v4829, %v4843
        %v4858 = vsub.f32 %v4830, %v4844
        %v4859 = vsub.f32 %v4831, %v4845
        %v4860 = vsub.f32 %v4832, %v4846
        %v4861 = vsub.f32 %v4833, %v4847
        %v4862 = vsub.f32 %v4834, %v4848
        %v4863 = vsub.f32 %v4835, %v4849
        %v4864 = vsub.f32 %v4836, %v4850
        %v4865 = vmax.f32 %v4851, 0.0
        %v4866 = vmax.f32 %v4852, 0.0
        %v4867 = vmax.f32 %v4853, 0.0
        %v4868 = vmax.f32 %v4854, 0.0
        %v4869 = vmax.f32 %v4855, 0.0
        %v4870 = vmax.f32 %v4856, 0.0
        %v4871 = vmax.f32 %v4857, 0.0
        %v4872 = vmax.f32 %v4858, 0.0
        %v4873 = vmax.f32 %v4859, 0.0
        %v4874 = vmax.f32 %v4860, 0.0
        %v4875 = vmax.f32 %v4861, 0.0
        %v4876 = vmax.f32 %v4862, 0.0
        %v4877 = vmax.f32 %v4863, 0.0
        %v4878 = vmax.f32 %v4864, 0.0
        %v4879 = vsub.f32 %v4723, %v4767
        %v4880 = vsub.f32 %v4724, %v4768
        %v4881 = vsub.f32 %v4725, %v4769
        %v4882 = vsub.f32 %v4726, %v4770
        %v4883 = vsub.f32 %v4727, %v4771
        %v4884 = vsub.f32 %v4728, %v4772
        %v4885 = vsub.f32 %v4729, %v4773
        %v4886 = vsub.f32 %v4730, %v4774
        %v4887 = vsub.f32 %v4731, %v4775
        %v4888 = vsub.f32 %v4732, %v4776
        %v4889 = vsub.f32 %v4733, %v4777
        %v4890 = vsub.f32 %v4734, %v4778
        %v4891 = vsub.f32 %v4735, %v4779
        %v4892 = vsub.f32 %v4736, %v4780
        %v4893 = vadd.f32 %v4865, 1e-05
        %v4894 = vadd.f32 %v4866, 1e-05
        %v4895 = vadd.f32 %v4867, 1e-05
        %v4896 = vadd.f32 %v4868, 1e-05
        %v4897 = vadd.f32 %v4869, 1e-05
        %v4898 = vadd.f32 %v4870, 1e-05
        %v4899 = vadd.f32 %v4871, 1e-05
        %v4900 = vadd.f32 %v4872, 1e-05
        %v4901 = vadd.f32 %v4873, 1e-05
        %v4902 = vadd.f32 %v4874, 1e-05
        %v4903 = vadd.f32 %v4875, 1e-05
        %v4904 = vadd.f32 %v4876, 1e-05
        %v4905 = vadd.f32 %v4877, 1e-05
        %v4906 = vadd.f32 %v4878, 1e-05
        %v4907 = vrsqrt.pop %v4893
        %v4908 = vrsqrt.pop %v4894
        %v4909 = vrsqrt.pop %v4895
        %v4910 = vrsqrt.pop %v4896
        %v4911 = vrsqrt.pop %v4897
        %v4912 = vrsqrt.pop %v4898
        %v4913 = vrsqrt.pop %v4899
        %v4914 = vrsqrt.pop %v4900
        %v4915 = vrsqrt.pop %v4901
        %v4916 = vrsqrt.pop %v4902
        %v4917 = vrsqrt.pop %v4903
        %v4918 = vrsqrt.pop %v4904
        %v4919 = vrsqrt.pop %v4905
        %v4920 = vrsqrt.pop %v4906
        %v4921 = vmul.f32 %v4879, %v4907
        %v4922 = vmul.f32 %v4880, %v4908
        %v4923 = vmul.f32 %v4881, %v4909
        %v4924 = vmul.f32 %v4882, %v4910
        %v4925 = vmul.f32 %v4883, %v4911
        %v4926 = vmul.f32 %v4884, %v4912
        %v4927 = vmul.f32 %v4885, %v4913
        %v4928 = vmul.f32 %v4886, %v4914
        %v4929 = vmul.f32 %v4887, %v4915
        %v4930 = vmul.f32 %v4888, %v4916
        %v4931 = vmul.f32 %v4889, %v4917
        %v4932 = vmul.f32 %v4890, %v4918
        %v4933 = vmul.f32 %v4891, %v4919
        %v4934 = vmul.f32 %v4892, %v4920
        %v4936 = vlaneseq
        %v4937 = vshrl.u32 %v4936, 7
        %v4938 = vsub.s32 0, %v4937
        %v4939 = vrot.slane %v4737, %v4938
        %v4941 = vmul.f32 %v4921, %v4939
        %v4942 = vmul.f32 %v4922, %v4939
        %v4943 = vmul.f32 %v4923, %v4939
        %v4944 = vmul.f32 %v4924, %v4939
        %v4945 = vmul.f32 %v4925, %v4939
        %v4946 = vmul.f32 %v4926, %v4939
        %v4947 = vmul.f32 %v4927, %v4939
        %v4948 = vmul.f32 %v4928, %v4939
        %v4949 = vmul.f32 %v4929, %v4939
        %v4950 = vmul.f32 %v4930, %v4939
        %v4951 = vmul.f32 %v4931, %v4939
        %v4952 = vmul.f32 %v4932, %v4939
        %v4953 = vmul.f32 %v4933, %v4939
        %v4954 = vmul.f32 %v4934, %v4939
        %v4956 = vlaneseq
        %v4957 = vshrl.u32 %v4956, 7
        %v4958 = vsub.s32 0, %v4957
        %v4959 = vrot.slane %v4738, %v4958
        %v4961 = vadd.f32 %v4941, %v4959
        %v4962 = vadd.f32 %v4942, %v4959
        %v4963 = vadd.f32 %v4943, %v4959
        %v4964 = vadd.f32 %v4944, %v4959
        %v4965 = vadd.f32 %v4945, %v4959
        %v4966 = vadd.f32 %v4946, %v4959
        %v4967 = vadd.f32 %v4947, %v4959
        %v4968 = vadd.f32 %v4948, %v4959
        %v4969 = vadd.f32 %v4949, %v4959
        %v4970 = vadd.f32 %v4950, %v4959
        %v4971 = vadd.f32 %v4951, %v4959
        %v4972 = vadd.f32 %v4952, %v4959
        %v4973 = vadd.f32 %v4953, %v4959
        %v4974 = vadd.f32 %v4954, %v4959
        %v4975 = vpack.c.bf16 %v4962, %v4961
        %v4976 = vpack.c.bf16 %v4964, %v4963
        %v4977 = vpack.c.bf16 %v4966, %v4965
        %v4978 = vpack.c.bf16 %v4968, %v4967
        %v4979 = vpack.c.bf16 %v4970, %v4969
        %v4980 = vpack.c.bf16 %v4972, %v4971
        %v4981 = vpack.c.bf16 %v4974, %v4973
        %v4982 = vld [vmem:[%s811] sm:$0xff]
        %v4983 = vld [vmem:[%s811 + $0x8] sm:$0xf]
        %v4984 = vld [vmem:[%s811 + $0xc] sm:$0xff]
        %v4985 = vld [vmem:[%s811 + $0x14] sm:$0xf]
        %v4986 = vld [vmem:[%s811 + $0x18] sm:$0xff]
        %v4987 = vld [vmem:[%s811 + $0x20] sm:$0xf]
        %v4988 = vld [vmem:[%s811 + $0x24] sm:$0xff]
        %v4989 = vld [vmem:[%s811 + $0x2c] sm:$0xf]
        %v4990 = vld [vmem:[%s811 + $0x30] sm:$0xff]
        %v4991 = vld [vmem:[%s811 + $0x38] sm:$0xf]
        %v4992 = vld [vmem:[%s811 + $0x3c] sm:$0xff]
        %v4993 = vld [vmem:[%s811 + $0x44] sm:$0xf]
        %v4994 = vld [vmem:[%s811 + $0x48] sm:$0xff]
        %v4995 = vld [vmem:[%s811 + $0x50] sm:$0xf]
        %v4996 = vld [vmem:[%s811 + $0x54] sm:$0xff]
        %v4997 = vld [vmem:[%s811 + $0x5c] sm:$0xf]
        %v4998 = vld [vmem:[%s811 + $0x60] sm:$0xff]
        %v4999 = vld [vmem:[%s811 + $0x68] sm:$0xf]
        %v5000 = vld [vmem:[%s811 + $0x6c] sm:$0xff]
        %v5001 = vld [vmem:[%s811 + $0x74] sm:$0xf]
        %v5002 = vld [vmem:[%s811 + $0x78] sm:$0xff]
        %v5003 = vld [vmem:[%s811 + $0x80] sm:$0xf]
        %v5004 = vld [vmem:[%s811 + $0x84] sm:$0xff]
        %v5005 = vld [vmem:[%s811 + $0x8c] sm:$0xf]
        %v5006 = vld [vmem:[%s811 + $0x90] sm:$0xff]
        %v5007 = vld [vmem:[%s811 + $0x98] sm:$0xf]
        %v5008 = vld [vmem:[%s811 + $0x9c] sm:$0xff]
        %v5009 = vld [vmem:[%s811 + $0xa4] sm:$0xf]
        %v5010 = vld [vmem:[%s811 + $0xa8] sm:$0xff]
        %v5011 = vld [vmem:[%s811 + $0xb0] sm:$0xf]
        %v5012 = vld [vmem:[%s811 + $0xb4] sm:$0xff]
        %v5013 = vld [vmem:[%s811 + $0xbc] sm:$0xf]
        %v5014 = vld [vmem:[%s815] sm:$0x7]
        %v5016 = vlaneseq
        %v5017 = vshrl.u32 %v5016, 7
        %v5018 = vsub.s32 0, %v5017
        %v5019 = vrot.slane %v5014, %v5018
        %v5020 = vlaneseq
        %v5021 = vshrl.u32 %v5020, 7
        %v5022 = vsub.s32 1, %v5021
        %v5023 = vrot.slane %v5014, %v5022
        %v5024 = vlaneseq
        %v5025 = vshrl.u32 %v5024, 7
        %v5026 = vsub.s32 2, %v5025
        %v5027 = vrot.slane %v5014, %v5026
        %v5063 = vunpack.c.l.b16 %v4982
        %v5064 = vunpack.c.h.b16 %v4982
        %v5065 = vunpack.c.l.b16 %v4983
        %v5066 = vunpack.c.l.b16 %v4984
        %v5067 = vunpack.c.h.b16 %v4984
        %v5068 = vunpack.c.l.b16 %v4985
        %v5069 = vunpack.c.l.b16 %v4986
        %v5070 = vunpack.c.h.b16 %v4986
        %v5071 = vunpack.c.l.b16 %v4987
        %v5072 = vunpack.c.l.b16 %v4988
        %v5073 = vunpack.c.h.b16 %v4988
        %v5074 = vunpack.c.l.b16 %v4989
        %v5075 = vunpack.c.l.b16 %v4990
        %v5076 = vunpack.c.h.b16 %v4990
        %v5077 = vunpack.c.l.b16 %v4991
        %v5078 = vunpack.c.l.b16 %v4992
        %v5079 = vunpack.c.h.b16 %v4992
        %v5080 = vunpack.c.l.b16 %v4993
        %v5081 = vunpack.c.l.b16 %v4994
        %v5082 = vunpack.c.h.b16 %v4994
        %v5083 = vunpack.c.l.b16 %v4995
        %v5084 = vunpack.c.l.b16 %v4996
        %v5085 = vunpack.c.h.b16 %v4996
        %v5086 = vunpack.c.l.b16 %v4997
        %v5087 = vunpack.c.l.b16 %v4998
        %v5088 = vunpack.c.h.b16 %v4998
        %v5089 = vunpack.c.l.b16 %v4999
        %v5090 = vunpack.c.l.b16 %v5000
        %v5091 = vunpack.c.h.b16 %v5000
        %v5092 = vunpack.c.l.b16 %v5001
        %v5093 = vunpack.c.l.b16 %v5002
        %v5094 = vunpack.c.h.b16 %v5002
        %v5095 = vunpack.c.l.b16 %v5003
        %v5096 = vunpack.c.l.b16 %v5004
        %v5097 = vunpack.c.h.b16 %v5004
        %v5098 = vunpack.c.l.b16 %v5005
        %v5099 = vunpack.c.l.b16 %v5006
        %v5100 = vunpack.c.h.b16 %v5006
        %v5101 = vunpack.c.l.b16 %v5007
        %v5102 = vunpack.c.l.b16 %v5008
        %v5103 = vunpack.c.h.b16 %v5008
        %v5104 = vunpack.c.l.b16 %v5009
        %v5105 = vunpack.c.l.b16 %v5010
        %v5106 = vunpack.c.h.b16 %v5010
        %v5107 = vunpack.c.l.b16 %v5011
        %v5108 = vunpack.c.l.b16 %v5012
        %v5109 = vunpack.c.h.b16 %v5012
        %v5110 = vunpack.c.l.b16 %v5013
        %v5111 = vpack.c.b16 %v5066, %v5063
        %v5112 = vpack.c.b16 %v5067, %v5064
        %v5113 = vpack.c.b16 %v5068, %v5065
        %v5114 = vpack.c.b16 %v5072, %v5069
        %v5115 = vpack.c.b16 %v5073, %v5070
        %v5116 = vpack.c.b16 %v5074, %v5071
        %v5117 = vpack.c.b16 %v5078, %v5075
        %v5118 = vpack.c.b16 %v5079, %v5076
        %v5119 = vpack.c.b16 %v5080, %v5077
        %v5120 = vpack.c.b16 %v5084, %v5081
        %v5121 = vpack.c.b16 %v5085, %v5082
        %v5122 = vpack.c.b16 %v5086, %v5083
        %v5123 = vpack.c.b16 %v5090, %v5087
        %v5124 = vpack.c.b16 %v5091, %v5088
        %v5125 = vpack.c.b16 %v5092, %v5089
        %v5126 = vpack.c.b16 %v5096, %v5093
        %v5127 = vpack.c.b16 %v5097, %v5094
        %v5128 = vpack.c.b16 %v5098, %v5095
        %v5129 = vpack.c.b16 %v5102, %v5099
        %v5130 = vpack.c.b16 %v5103, %v5100
        %v5131 = vpack.c.b16 %v5104, %v5101
        %v5132 = vpack.c.b16 %v5108, %v5105
        %v5133 = vpack.c.b16 %v5109, %v5106
        %v5134 = vpack.c.b16 %v5110, %v5107
        %5159 = vmatprep.subr.bf16.mxu0 %v5112
        %5160 = vmatpush1.bf16.msra.mxu0 %v5111
        %5161 = vmatprep.subr.bf16.mxu0 %v5115
        %5162 = vmatpush1.bf16.msra.mxu0 %v5114
        %5163 = vmatprep.subr.bf16.mxu0 %v5118
        %5164 = vmatpush1.bf16.msra.mxu0 %v5117
        %5165 = vmatprep.subr.bf16.mxu0 %v5121
        %5166 = vmatpush1.bf16.msra.mxu0 %v5120
        %5167 = vmatprep.subr.bf16.mxu0 %v5124
        %5168 = vmatpush1.bf16.msra.mxu0 %v5123
        %5169 = vmatprep.subr.bf16.mxu0 %v5127
        %5170 = vmatpush1.bf16.msra.mxu0 %v5126
        %5171 = vmatprep.subr.bf16.mxu0 %v5130
        %5172 = vmatpush1.bf16.msra.mxu0 %v5129
        %5173 = vmatprep.subr.bf16.mxu0 %v5133
        %5174 = vmatpush1.bf16.msra.mxu0 %v5132
        %5175 = vmatprep.subr.bf16.mxu0 0
        %5176 = vmatpush1.bf16.msra.mxu0 0
        %5177 = vmatprep.subr.bf16.mxu0 0
        %5178 = vmatpush1.bf16.msra.mxu0 0
        %5179 = vmatprep.subr.bf16.mxu0 0
        %5180 = vmatpush1.bf16.msra.mxu0 0
        %5181 = vmatprep.subr.bf16.mxu0 0
        %5182 = vmatpush1.bf16.msra.mxu0 0
        %5183 = vmatprep.subr.bf16.mxu0 0
        %5184 = vmatpush1.bf16.msra.mxu0 0
        %5185 = vmatprep.subr.bf16.mxu0 0
        %5186 = vmatpush1.bf16.msra.mxu0 0
        %5187 = vmatprep.subr.bf16.mxu0 0
        %5188 = vmatpush1.bf16.msra.mxu0 0
        %5189 = vmatprep.subr.bf16.mxu0 0
        %5190 = vmatpush1.bf16.msra.mxu0 0
        %5191 = vmatprep.mubr.bf16.mxu0 0
        %5192 = vmatmul.mubr.bf16.gmra.mrb[0].mxu0 %v4975
        %v5193 = vpop.f32.mrb[0].mxu0
        %v5194 = vadd.f32 %v5019, %v5193
        %v5195 = vpop.f32.mrb[0].mxu0
        %v5196 = vadd.f32 %v5023, %v5195
        %v5197 = vpop.f32.mrb[0].mxu0
        %v5198 = vadd.f32 %v5019, %v5197
        %v5199 = vpop.f32.mrb[0].mxu0
        %v5200 = vadd.f32 %v5023, %v5199
        %5201 = vmatprep.mubr.bf16.mxu0 0
        %5202 = vmatmul.mubr.bf16.gmra.mrb[0].mxu0 %v4976
        %v5203 = vpop.f32.mrb[0].mxu0
        %v5204 = vadd.f32 %v5019, %v5203
        %v5205 = vpop.f32.mrb[0].mxu0
        %v5206 = vadd.f32 %v5023, %v5205
        %v5207 = vpop.f32.mrb[0].mxu0
        %v5208 = vadd.f32 %v5019, %v5207
        %v5209 = vpop.f32.mrb[0].mxu0
        %v5210 = vadd.f32 %v5023, %v5209
        %5211 = vmatprep.mubr.bf16.mxu0 0
        %5212 = vmatmul.mubr.bf16.gmra.mrb[0].mxu0 %v4977
        %v5213 = vpop.f32.mrb[0].mxu0
        %v5214 = vadd.f32 %v5019, %v5213
        %v5215 = vpop.f32.mrb[0].mxu0
        %v5216 = vadd.f32 %v5023, %v5215
        %v5217 = vpop.f32.mrb[0].mxu0
        %v5218 = vadd.f32 %v5019, %v5217
        %v5219 = vpop.f32.mrb[0].mxu0
        %v5220 = vadd.f32 %v5023, %v5219
        %5221 = vmatprep.mubr.bf16.mxu0 0
        %5222 = vmatmul.mubr.bf16.gmra.mrb[0].mxu0 %v4978
        %v5223 = vpop.f32.mrb[0].mxu0
        %v5224 = vadd.f32 %v5019, %v5223
        %v5225 = vpop.f32.mrb[0].mxu0
        %v5226 = vadd.f32 %v5023, %v5225
        %v5227 = vpop.f32.mrb[0].mxu0
        %v5228 = vadd.f32 %v5019, %v5227
        %v5229 = vpop.f32.mrb[0].mxu0
        %v5230 = vadd.f32 %v5023, %v5229
        %5231 = vmatprep.mubr.bf16.mxu0 0
        %5232 = vmatmul.mubr.bf16.gmra.mrb[0].mxu0 %v4979
        %v5233 = vpop.f32.mrb[0].mxu0
        %v5234 = vadd.f32 %v5019, %v5233
        %v5235 = vpop.f32.mrb[0].mxu0
        %v5236 = vadd.f32 %v5023, %v5235
        %v5237 = vpop.f32.mrb[0].mxu0
        %v5238 = vadd.f32 %v5019, %v5237
        %v5239 = vpop.f32.mrb[0].mxu0
        %v5240 = vadd.f32 %v5023, %v5239
        %5241 = vmatprep.mubr.bf16.mxu0 0
        %5242 = vmatmul.mubr.bf16.gmra.mrb[0].mxu0 %v4980
        %v5243 = vpop.f32.mrb[0].mxu0
        %v5244 = vadd.f32 %v5019, %v5243
        %v5245 = vpop.f32.mrb[0].mxu0
        %v5246 = vadd.f32 %v5023, %v5245
        %v5247 = vpop.f32.mrb[0].mxu0
        %v5248 = vadd.f32 %v5019, %v5247
        %v5249 = vpop.f32.mrb[0].mxu0
        %v5250 = vadd.f32 %v5023, %v5249
        %5251 = vmatprep.mubr.bf16.mxu0 0
        %5252 = vmatmul.mubr.bf16.gmra.mrb[0].mxu0 %v4981
        %v5253 = vpop.f32.mrb[0].mxu0
        %v5254 = vadd.f32 %v5019, %v5253
        %v5255 = vpop.f32.mrb[0].mxu0
        %v5256 = vadd.f32 %v5023, %v5255
        %v5257 = vpop.f32.mrb[0].mxu0
        %v5258 = vadd.f32 %v5019, %v5257
        %v5259 = vpop.f32.mrb[0].mxu0
        %v5260 = vadd.f32 %v5023, %v5259
        %5261 = vdwg.mxu0
        %5262 = vmatprep.subr.bf16.mxu0 0
        %5263 = vmatpush1.bf16.msra.mxu0 %v5113
        %5264 = vmatprep.subr.bf16.mxu0 0
        %5265 = vmatpush1.bf16.msra.mxu0 %v5116
        %5266 = vmatprep.subr.bf16.mxu0 0
        %5267 = vmatpush1.bf16.msra.mxu0 %v5119
        %5268 = vmatprep.subr.bf16.mxu0 0
        %5269 = vmatpush1.bf16.msra.mxu0 %v5122
        %5270 = vmatprep.subr.bf16.mxu0 0
        %5271 = vmatpush1.bf16.msra.mxu0 %v5125
        %5272 = vmatprep.subr.bf16.mxu0 0
        %5273 = vmatpush1.bf16.msra.mxu0 %v5128
        %5274 = vmatprep.subr.bf16.mxu0 0
        %5275 = vmatpush1.bf16.msra.mxu0 %v5131
        %5276 = vmatprep.subr.bf16.mxu0 0
        %5277 = vmatpush1.bf16.msra.mxu0 %v5134
        %5278 = vmatprep.subr.bf16.mxu0 0
        %5279 = vmatpush1.bf16.msra.mxu0 0
        %5280 = vmatprep.subr.bf16.mxu0 0
        %5281 = vmatpush1.bf16.msra.mxu0 0
        %5282 = vmatprep.subr.bf16.mxu0 0
        %5283 = vmatpush1.bf16.msra.mxu0 0
        %5284 = vmatprep.subr.bf16.mxu0 0
        %5285 = vmatpush1.bf16.msra.mxu0 0
        %5286 = vmatprep.subr.bf16.mxu0 0
        %5287 = vmatpush1.bf16.msra.mxu0 0
        %5288 = vmatprep.subr.bf16.mxu0 0
        %5289 = vmatpush1.bf16.msra.mxu0 0
        %5290 = vmatprep.subr.bf16.mxu0 0
        %5291 = vmatpush1.bf16.msra.mxu0 0
        %5292 = vmatprep.subr.bf16.mxu0 0
        %5293 = vmatpush1.bf16.msra.mxu0 0
        %5294 = vmatprep.mubr.bf16.mxu0 0
        %5295 = vmatmul.mubr.bf16.gmra.mrb[0].mxu0 %v4975
        %v5296 = vpop.f32.mrb[0].mxu0
        %v5297 = vadd.f32 %v5027, %v5296
        %v5298 = vpop.f32.mrb[0].mxu0
        %v5299 = vpop.f32.mrb[0].mxu0
        %v5300 = vadd.f32 %v5027, %v5299
        %v5301 = vpop.f32.mrb[0].mxu0
        %5302 = vmatprep.mubr.bf16.mxu0 0
        %5303 = vmatmul.mubr.bf16.gmra.mrb[0].mxu0 %v4976
        %v5304 = vpop.f32.mrb[0].mxu0
        %v5305 = vadd.f32 %v5027, %v5304
        %v5306 = vpop.f32.mrb[0].mxu0
        %v5307 = vpop.f32.mrb[0].mxu0
        %v5308 = vadd.f32 %v5027, %v5307
        %v5309 = vpop.f32.mrb[0].mxu0
        %5310 = vmatprep.mubr.bf16.mxu0 0
        %5311 = vmatmul.mubr.bf16.gmra.mrb[0].mxu0 %v4977
        %v5312 = vpop.f32.mrb[0].mxu0
        %v5313 = vadd.f32 %v5027, %v5312
        %v5314 = vpop.f32.mrb[0].mxu0
        %v5315 = vpop.f32.mrb[0].mxu0
        %v5316 = vadd.f32 %v5027, %v5315
        %v5317 = vpop.f32.mrb[0].mxu0
        %5318 = vmatprep.mubr.bf16.mxu0 0
        %5319 = vmatmul.mubr.bf16.gmra.mrb[0].mxu0 %v4978
        %v5320 = vpop.f32.mrb[0].mxu0
        %v5321 = vadd.f32 %v5027, %v5320
        %v5322 = vpop.f32.mrb[0].mxu0
        %v5323 = vpop.f32.mrb[0].mxu0
        %v5324 = vadd.f32 %v5027, %v5323
        %v5325 = vpop.f32.mrb[0].mxu0
        %5326 = vmatprep.mubr.bf16.mxu0 0
        %5327 = vmatmul.mubr.bf16.gmra.mrb[0].mxu0 %v4979
        %v5328 = vpop.f32.mrb[0].mxu0
        %v5329 = vadd.f32 %v5027, %v5328
        %v5330 = vpop.f32.mrb[0].mxu0
        %v5331 = vpop.f32.mrb[0].mxu0
        %v5332 = vadd.f32 %v5027, %v5331
        %v5333 = vpop.f32.mrb[0].mxu0
        %5334 = vmatprep.mubr.bf16.mxu0 0
        %5335 = vmatmul.mubr.bf16.gmra.mrb[0].mxu0 %v4980
        %v5336 = vpop.f32.mrb[0].mxu0
        %v5337 = vadd.f32 %v5027, %v5336
        %v5338 = vpop.f32.mrb[0].mxu0
        %v5339 = vpop.f32.mrb[0].mxu0
        %v5340 = vadd.f32 %v5027, %v5339
        %v5341 = vpop.f32.mrb[0].mxu0
        %5342 = vmatprep.mubr.bf16.mxu0 0
        %5343 = vmatmul.mubr.bf16.gmra.mrb[0].mxu0 %v4981
        %v5344 = vpop.f32.mrb[0].mxu0
        %v5345 = vadd.f32 %v5027, %v5344
        %v5346 = vpop.f32.mrb[0].mxu0
        %v5347 = vpop.f32.mrb[0].mxu0
        %v5348 = vadd.f32 %v5027, %v5347
        %v5349 = vpop.f32.mrb[0].mxu0
        %5350 = vdwg.mxu0
        %v5351 = vpack.c.bf16 %v5198, %v5194
        %v5352 = vpack.c.bf16 %v5200, %v5196
        %v5353 = vpack.c.bf16 %v5300, %v5297
        %v5354 = vpack.c.bf16 %v5208, %v5204
        %v5355 = vpack.c.bf16 %v5210, %v5206
        %v5356 = vpack.c.bf16 %v5308, %v5305
        %v5357 = vpack.c.bf16 %v5218, %v5214
        %v5358 = vpack.c.bf16 %v5220, %v5216
        %v5359 = vpack.c.bf16 %v5316, %v5313
        %v5360 = vpack.c.bf16 %v5228, %v5224
        %v5361 = vpack.c.bf16 %v5230, %v5226
        %v5362 = vpack.c.bf16 %v5324, %v5321
        %v5363 = vpack.c.bf16 %v5238, %v5234
        %v5364 = vpack.c.bf16 %v5240, %v5236
        %v5365 = vpack.c.bf16 %v5332, %v5329
        %v5366 = vpack.c.bf16 %v5248, %v5244
        %v5367 = vpack.c.bf16 %v5250, %v5246
        %v5368 = vpack.c.bf16 %v5340, %v5337
        %v5369 = vpack.c.bf16 %v5258, %v5254
        %v5370 = vpack.c.bf16 %v5260, %v5256
        %v5371 = vpack.c.bf16 %v5348, %v5345
        %5372 = vst [vmem:[#allocation2] sm:$0xff] %v5351
        %5373 = vst [vmem:[#allocation2 + $0x8] sm:$0xff] %v5352
        %5374 = vst [vmem:[#allocation2 + $0x10] sm:$0xff] %v5353
        %5375 = vst [vmem:[#allocation2 + $0x18] sm:$0xff] %v5354
        %5376 = vst [vmem:[#allocation2 + $0x20] sm:$0xff] %v5355
        %5377 = vst [vmem:[#allocation2 + $0x28] sm:$0xff] %v5356
        %5378 = vst [vmem:[#allocation2 + $0x30] sm:$0xff] %v5357
        %5379 = vst [vmem:[#allocation2 + $0x38] sm:$0xff] %v5358
        %5380 = vst [vmem:[#allocation2 + $0x40] sm:$0xff] %v5359
        %5381 = vst [vmem:[#allocation2 + $0x48] sm:$0xff] %v5360
        %5382 = vst [vmem:[#allocation2 + $0x50] sm:$0xff] %v5361
        %5383 = vst [vmem:[#allocation2 + $0x58] sm:$0xff] %v5362
        %5384 = vst [vmem:[#allocation2 + $0x60] sm:$0xff] %v5363
        %5385 = vst [vmem:[#allocation2 + $0x68] sm:$0xff] %v5364
        %5386 = vst [vmem:[#allocation2 + $0x70] sm:$0xff] %v5365
        %5387 = vst [vmem:[#allocation2 + $0x78] sm:$0xff] %v5366
        %5388 = vst [vmem:[#allocation2 + $0x80] sm:$0xff] %v5367
        %5389 = vst [vmem:[#allocation2 + $0x88] sm:$0xff] %v5368
        %5390 = vst [vmem:[#allocation2 + $0x90] sm:$0xff] %v5369
        %5391 = vst [vmem:[#allocation2 + $0x98] sm:$0xff] %v5370
        %5392 = vst [vmem:[#allocation2 + $0xa0] sm:$0xff] %v5371
        %v5393 = vld [vmem:[%s5] sm:$0x1]
        %v5394 = vld [vmem:[#allocation2] sm:$0xff]
        %v5395 = vld [vmem:[#allocation2 + $0x18] sm:$0xff]
        %v5396 = vld [vmem:[#allocation2 + $0x30] sm:$0xff]
        %v5397 = vld [vmem:[#allocation2 + $0x48] sm:$0xf]
        %v5398 = vld [vmem:[#allocation2 + $0x8] sm:$0xff]
        %v5399 = vld [vmem:[#allocation2 + $0x20] sm:$0xff]
        %v5400 = vld [vmem:[#allocation2 + $0x38] sm:$0xff]
        %v5401 = vld [vmem:[#allocation2 + $0x50] sm:$0xf]
        %v5402 = vld [vmem:[#allocation2 + $0x10] sm:$0xff]
        %v5403 = vld [vmem:[#allocation2 + $0x28] sm:$0xff]
        %v5404 = vld [vmem:[#allocation2 + $0x40] sm:$0xff]
        %v5405 = vld [vmem:[#allocation2 + $0x58] sm:$0xf]
        %vm5406 = vcmask 130048
        %v5408 = vsel %vm5406, %v5394, 0
        %v5411 = vsel %vm5406, %v5395, 0
        %v5414 = vsel %vm5406, %v5396, 0
        %v5417 = vsel %vm5406, %v5397, 0
        %v5420 = vsel %vm5406, %v5398, 0
        %v5423 = vsel %vm5406, %v5399, 0
        %v5426 = vsel %vm5406, %v5400, 0
        %v5429 = vsel %vm5406, %v5401, 0
        %5431 = vmatprep.subr.bf16.mxu0 0
        %5432 = vmatpush1.bf16.xpose.msra.mxu0 %v5420
        %5433 = vmatprep.subr.bf16.mxu0 0
        %5434 = vmatpush1.bf16.xpose.msra.mxu0 %v5423
        %5435 = vmatprep.subr.bf16.mxu0 0
        %5436 = vmatpush1.bf16.xpose.msra.mxu0 %v5426
        %5437 = vmatprep.subr.bf16.mxu0 0
        %5438 = vmatpush1.bf16.xpose.msra.mxu0 %v5429
        %5439 = vmatprep.subr.bf16.mxu0 0
        %5440 = vmatpush1.bf16.xpose.msra.mxu0 0
        %5441 = vmatprep.subr.bf16.mxu0 0
        %5442 = vmatpush1.bf16.xpose.msra.mxu0 0
        %5443 = vmatprep.subr.bf16.mxu0 0
        %5444 = vmatpush1.bf16.xpose.msra.mxu0 0
        %5445 = vmatprep.subr.bf16.mxu0 0
        %5446 = vmatpush1.bf16.xpose.msra.mxu0 0
        %5447 = vmatprep.subr.bf16.mxu0 0
        %5448 = vmatpush1.bf16.xpose.msra.mxu0 0
        %5449 = vmatprep.subr.bf16.mxu0 0
        %5450 = vmatpush1.bf16.xpose.msra.mxu0 0
        %5451 = vmatprep.subr.bf16.mxu0 0
        %5452 = vmatpush1.bf16.xpose.msra.mxu0 0
        %5453 = vmatprep.subr.bf16.mxu0 0
        %5454 = vmatpush1.bf16.xpose.msra.mxu0 0
        %5455 = vmatprep.subr.bf16.mxu0 0
        %5456 = vmatpush1.bf16.xpose.msra.mxu0 0
        %5457 = vmatprep.subr.bf16.mxu0 0
        %5458 = vmatpush1.bf16.xpose.msra.mxu0 0
        %5459 = vmatprep.subr.bf16.mxu0 0
        %5460 = vmatpush1.bf16.xpose.msra.mxu0 0
        %5461 = vmatprep.subr.bf16.mxu0 0
        %5462 = vmatpush1.bf16.xpose.msra.mxu0 0
        %5463 = vmatprep.mubr.bf16.mxu0 0
        %5464 = vmatmul.mubr.bf16.gmra.mrb[0].mxu0 %v5408
        %v5465 = vpop.f32.mrb[0].mxu0
        %v5466 = vadd.f32 0.0, %v5465
        %v5467 = vpop.f32.mrb[0].mxu0
        %v5468 = vpop.f32.mrb[0].mxu0
        %v5469 = vadd.f32 0.0, %v5468
        %v5470 = vpop.f32.mrb[0].mxu0
        %5471 = vmatprep.mubr.bf16.mxu0 0
        %5472 = vmatmul.mubr.bf16.gmra.mrb[0].mxu0 %v5411
        %v5473 = vpop.f32.mrb[0].mxu0
        %v5474 = vadd.f32 0.0, %v5473
        %v5475 = vpop.f32.mrb[0].mxu0
        %v5476 = vpop.f32.mrb[0].mxu0
        %v5477 = vadd.f32 0.0, %v5476
        %v5478 = vpop.f32.mrb[0].mxu0
        %5479 = vmatprep.mubr.bf16.mxu0 0
        %5480 = vmatmul.mubr.bf16.gmra.mrb[0].mxu0 %v5414
        %v5481 = vpop.f32.mrb[0].mxu0
        %v5482 = vadd.f32 0.0, %v5481
        %v5483 = vpop.f32.mrb[0].mxu0
        %v5484 = vpop.f32.mrb[0].mxu0
        %v5485 = vadd.f32 0.0, %v5484
        %v5486 = vpop.f32.mrb[0].mxu0
        %5487 = vmatprep.mubr.bf16.mxu0 0
        %5488 = vmatmul.mubr.bf16.gmra.mrb[0].mxu0 %v5417
        %v5489 = vpop.f32.mrb[0].mxu0
        %v5490 = vadd.f32 0.0, %v5489
        %v5491 = vpop.f32.mrb[0].mxu0
        %v5492 = vpop.f32.mrb[0].mxu0
        %v5493 = vpop.f32.mrb[0].mxu0
        %5494 = vdwg.mxu0
        %v5495 = vmul.f32 %v5466, 0.25
        %v5496 = vmul.f32 %v5469, 0.25
        %v5497 = vmul.f32 %v5474, 0.25
        %v5498 = vmul.f32 %v5477, 0.25
        %v5499 = vmul.f32 %v5482, 0.25
        %v5500 = vmul.f32 %v5485, 0.25
        %v5501 = vmul.f32 %v5490, 0.25
        %v5503 = vlaneseq
        %v5504 = vshrl.u32 %v5503, 7
        %v5505 = vsub.s32 0, %v5504
        %v5506 = vrot.slane %v5393, %v5505
        %v5508 = vadd.f32 %v5495, %v5506
        %v5509 = vadd.f32 %v5496, %v5506
        %v5510 = vadd.f32 %v5497, %v5506
        %v5511 = vadd.f32 %v5498, %v5506
        %v5512 = vadd.f32 %v5499, %v5506
        %v5513 = vadd.f32 %v5500, %v5506
        %v5514 = vadd.f32 %v5501, %v5506
        %vm5515 = vcmask 457728
        %v5516 = vsel %vm5515, %v5508, -inf
        %5517 = vmax.xlane.f32.xlu0 %v5516
        %v5518 = vpop.xlane.xlu0 %5517
        %v5519 = vsel %vm5515, %v5509, -inf
        %5520 = vmax.xlane.f32.xlu0 %v5519
        %v5521 = vpop.xlane.xlu0 %5520
        %v5522 = vsel %vm5515, %v5510, -inf
        %5523 = vmax.xlane.f32.xlu0 %v5522
        %v5524 = vpop.xlane.xlu0 %5523
        %v5525 = vsel %vm5515, %v5511, -inf
        %5526 = vmax.xlane.f32.xlu0 %v5525
        %v5527 = vpop.xlane.xlu0 %5526
        %v5528 = vsel %vm5515, %v5512, -inf
        %5529 = vmax.xlane.f32.xlu0 %v5528
        %v5530 = vpop.xlane.xlu0 %5529
        %v5531 = vsel %vm5515, %v5513, -inf
        %5532 = vmax.xlane.f32.xlu0 %v5531
        %v5533 = vpop.xlane.xlu0 %5532
        %v5534 = vsel %vm5515, %v5514, -inf
        %5535 = vmax.xlane.f32.xlu0 %v5534
        %v5536 = vpop.xlane.xlu0 %5535
        %v5537 = vsub.f32 %v5508, %v5518
        %v5538 = vsub.f32 %v5509, %v5521
        %v5539 = vsub.f32 %v5510, %v5524
        %v5540 = vsub.f32 %v5511, %v5527
        %v5541 = vsub.f32 %v5512, %v5530
        %v5542 = vsub.f32 %v5513, %v5533
        %v5543 = vsub.f32 %v5514, %v5536
        %v5544 = vmul.f32 %v5537, 1.442695
        %v5545 = vpow.pop %v5544
        %v5546 = vmul.f32 %v5538, 1.442695
        %v5547 = vpow.pop %v5546
        %v5548 = vmul.f32 %v5539, 1.442695
        %v5549 = vpow.pop %v5548
        %v5550 = vmul.f32 %v5540, 1.442695
        %v5551 = vpow.pop %v5550
        %v5552 = vmul.f32 %v5541, 1.442695
        %v5553 = vpow.pop %v5552
        %v5554 = vmul.f32 %v5542, 1.442695
        %v5555 = vpow.pop %v5554
        %v5556 = vmul.f32 %v5543, 1.442695
        %v5557 = vpow.pop %v5556
        %v5558 = vsel %vm5515, %v5545, 0.0
        %5559 = vadd.xlane.f32.xlu0 %v5558
        %v5560 = vpop.xlane.xlu0 %5559
        %v5561 = vsel %vm5515, %v5547, 0.0
        %5562 = vadd.xlane.f32.xlu0 %v5561
        %v5563 = vpop.xlane.xlu0 %5562
        %v5564 = vsel %vm5515, %v5549, 0.0
        %5565 = vadd.xlane.f32.xlu0 %v5564
        %v5566 = vpop.xlane.xlu0 %5565
        %v5567 = vsel %vm5515, %v5551, 0.0
        %5568 = vadd.xlane.f32.xlu0 %v5567
        %v5569 = vpop.xlane.xlu0 %5568
        %v5570 = vsel %vm5515, %v5553, 0.0
        %5571 = vadd.xlane.f32.xlu0 %v5570
        %v5572 = vpop.xlane.xlu0 %5571
        %v5573 = vsel %vm5515, %v5555, 0.0
        %5574 = vadd.xlane.f32.xlu0 %v5573
        %v5575 = vpop.xlane.xlu0 %5574
        %v5576 = vsel %vm5515, %v5557, 0.0
        %5577 = vadd.xlane.f32.xlu0 %v5576
        %v5578 = vpop.xlane.xlu0 %5577
        %v5579 = vrcp.pop %v5560
        %v5580 = vrcp.pop %v5563
        %v5581 = vrcp.pop %v5566
        %v5582 = vrcp.pop %v5569
        %v5583 = vrcp.pop %v5572
        %v5584 = vrcp.pop %v5575
        %v5585 = vrcp.pop %v5578
        %v5586 = vmul.f32 %v5545, %v5579
        %v5587 = vmul.f32 %v5547, %v5580
        %v5588 = vmul.f32 %v5549, %v5581
        %v5589 = vmul.f32 %v5551, %v5582
        %v5590 = vmul.f32 %v5553, %v5583
        %v5591 = vmul.f32 %v5555, %v5584
        %v5592 = vmul.f32 %v5557, %v5585
        %v5593 = vpack.c.bf16 %v5587, %v5586
        %v5594 = vpack.c.bf16 %v5589, %v5588
        %v5595 = vpack.c.bf16 %v5591, %v5590
        %v5596 = vpack.c.bf16 %v5592, %v5592
        %v5598 = vsel %vm5515, %v5593, 0
        %v5601 = vsel %vm5515, %v5594, 0
        %v5604 = vsel %vm5515, %v5595, 0
        %v5607 = vsel %vm5515, %v5596, 0
        %vm5609 = vcmask 1043456
        %v5611 = vsel %vm5609, %v5405, 0
        %5613 = vmatprep.subr.bf16.mxu0 0
        %5614 = vmatpush1.bf16.msra.mxu0 %v5402
        %5615 = vmatprep.subr.bf16.mxu0 0
        %5616 = vmatpush1.bf16.msra.mxu0 %v5403
        %5617 = vmatprep.subr.bf16.mxu0 0
        %5618 = vmatpush1.bf16.msra.mxu0 %v5404
        %5619 = vmatprep.subr.bf16.mxu0 0
        %5620 = vmatpush1.bf16.msra.mxu0 %v5611
        %5621 = vmatprep.subr.bf16.mxu0 0
        %5622 = vmatpush1.bf16.msra.mxu0 0
        %5623 = vmatprep.subr.bf16.mxu0 0
        %5624 = vmatpush1.bf16.msra.mxu0 0
        %5625 = vmatprep.subr.bf16.mxu0 0
        %5626 = vmatpush1.bf16.msra.mxu0 0
        %5627 = vmatprep.subr.bf16.mxu0 0
        %5628 = vmatpush1.bf16.msra.mxu0 0
        %5629 = vmatprep.subr.bf16.mxu0 0
        %5630 = vmatpush1.bf16.msra.mxu0 0
        %5631 = vmatprep.subr.bf16.mxu0 0
        %5632 = vmatpush1.bf16.msra.mxu0 0
        %5633 = vmatprep.subr.bf16.mxu0 0
        %5634 = vmatpush1.bf16.msra.mxu0 0
        %5635 = vmatprep.subr.bf16.mxu0 0
        %5636 = vmatpush1.bf16.msra.mxu0 0
        %5637 = vmatprep.subr.bf16.mxu0 0
        %5638 = vmatpush1.bf16.msra.mxu0 0
        %5639 = vmatprep.subr.bf16.mxu0 0
        %5640 = vmatpush1.bf16.msra.mxu0 0
        %5641 = vmatprep.subr.bf16.mxu0 0
        %5642 = vmatpush1.bf16.msra.mxu0 0
        %5643 = vmatprep.subr.bf16.mxu0 0
        %5644 = vmatpush1.bf16.msra.mxu0 0
        %5645 = vmatprep.mubr.bf16.mxu0 0
        %5646 = vmatmul.mubr.bf16.gmra.mrb[0].mxu0 %v5598
        %v5647 = vpop.f32.mrb[0].mxu0
        %v5648 = vadd.f32 0.0, %v5647
        %v5649 = vpop.f32.mrb[0].mxu0
        %v5650 = vpop.f32.mrb[0].mxu0
        %v5651 = vadd.f32 0.0, %v5650
        %v5652 = vpop.f32.mrb[0].mxu0
        %5653 = vmatprep.mubr.bf16.mxu0 0
        %5654 = vmatmul.mubr.bf16.gmra.mrb[0].mxu0 %v5601
        %v5655 = vpop.f32.mrb[0].mxu0
        %v5656 = vadd.f32 0.0, %v5655
        %v5657 = vpop.f32.mrb[0].mxu0
        %v5658 = vpop.f32.mrb[0].mxu0
        %v5659 = vadd.f32 0.0, %v5658
        %v5660 = vpop.f32.mrb[0].mxu0
        %5661 = vmatprep.mubr.bf16.mxu0 0
        %5662 = vmatmul.mubr.bf16.gmra.mrb[0].mxu0 %v5604
        %v5663 = vpop.f32.mrb[0].mxu0
        %v5664 = vadd.f32 0.0, %v5663
        %v5665 = vpop.f32.mrb[0].mxu0
        %v5666 = vpop.f32.mrb[0].mxu0
        %v5667 = vadd.f32 0.0, %v5666
        %v5668 = vpop.f32.mrb[0].mxu0
        %5669 = vmatprep.mubr.bf16.mxu0 0
        %5670 = vmatmul.mubr.bf16.gmra.mrb[0].mxu0 %v5607
        %v5671 = vpop.f32.mrb[0].mxu0
        %v5672 = vadd.f32 0.0, %v5671
        %v5673 = vpop.f32.mrb[0].mxu0
        %v5674 = vpop.f32.mrb[0].mxu0
        %v5675 = vpop.f32.mrb[0].mxu0
        %5676 = vdwg.mxu0
        %v5677 = vpack.c.bf16 %v5651, %v5648
        %v5678 = vpack.c.bf16 %v5659, %v5656
        %v5679 = vpack.c.bf16 %v5667, %v5664
        %v5680 = vpack.c.bf16 %v5672, %v5672
        %5681 = vst.msk [vmem:[#allocation3] sm:$0xff] %vm5406, %v5677
        %5682 = vst.msk [vmem:[#allocation3 + $0x8] sm:$0xff] %vm5406, %v5678
        %5683 = vst.msk [vmem:[#allocation3 + $0x10] sm:$0xff] %vm5406, %v5679
        %vm5684 = vcmask 125952
        %5685 = vst.msk [vmem:[#allocation3 + $0x18] sm:$0xf] %vm5684, %v5680
        %v5686 = vld [vmem:[#allocation2] sm:$0xff]
        %v5687 = vld [vmem:[#allocation2 + $0x18] sm:$0xff]
        %v5688 = vld [vmem:[#allocation2 + $0x30] sm:$0xff]
        %v5689 = vld [vmem:[#allocation2 + $0x48] sm:$0xf]
        %v5690 = vld [vmem:[#allocation2 + $0x8] sm:$0xff]
        %v5691 = vld [vmem:[#allocation2 + $0x20] sm:$0xff]
        %v5692 = vld [vmem:[#allocation2 + $0x38] sm:$0xff]
        %v5693 = vld [vmem:[#allocation2 + $0x50] sm:$0xf]
        %v5694 = vld [vmem:[#allocation2 + $0x10] sm:$0xff]
        %v5695 = vld [vmem:[#allocation2 + $0x28] sm:$0xff]
        %v5696 = vld [vmem:[#allocation2 + $0x40] sm:$0xff]
        %v5697 = vld [vmem:[#allocation2 + $0x58] sm:$0xf]
        %5702 = vrot.lane.b32.xlu0 %v5686, 112
        %v5703 = vpop.permute.xlu0 %5702
        %5704 = vrot.lane.b32.xlu0 %v5687, 112
        %v5705 = vpop.permute.xlu0 %5704
        %5706 = vrot.lane.b32.xlu0 %v5688, 112
        %v5707 = vpop.permute.xlu0 %5706
        %5708 = vrot.lane.b32.xlu0 %v5689, 112
        %v5709 = vpop.permute.xlu0 %5708
        %5714 = vrot.lane.b32.xlu0 %v5690, 112
        %v5715 = vpop.permute.xlu0 %5714
        %5716 = vrot.lane.b32.xlu0 %v5691, 112
        %v5717 = vpop.permute.xlu0 %5716
        %5718 = vrot.lane.b32.xlu0 %v5692, 112
        %v5719 = vpop.permute.xlu0 %5718
        %5720 = vrot.lane.b32.xlu0 %v5693, 112
        %v5721 = vpop.permute.xlu0 %5720
        %v5723 = vsel %vm5406, %v5703, 0
        %v5726 = vsel %vm5406, %v5705, 0
        %v5729 = vsel %vm5406, %v5707, 0
        %v5732 = vsel %vm5406, %v5709, 0
        %v5735 = vsel %vm5406, %v5715, 0
        %v5738 = vsel %vm5406, %v5717, 0
        %v5741 = vsel %vm5406, %v5719, 0
        %v5744 = vsel %vm5406, %v5721, 0
        %5746 = vmatprep.subr.bf16.mxu0 0
        %5747 = vmatpush1.bf16.xpose.msra.mxu0 %v5735
        %5748 = vmatprep.subr.bf16.mxu0 0
        %5749 = vmatpush1.bf16.xpose.msra.mxu0 %v5738
        %5750 = vmatprep.subr.bf16.mxu0 0
        %5751 = vmatpush1.bf16.xpose.msra.mxu0 %v5741
        %5752 = vmatprep.subr.bf16.mxu0 0
        %5753 = vmatpush1.bf16.xpose.msra.mxu0 %v5744
        %5754 = vmatprep.subr.bf16.mxu0 0
        %5755 = vmatpush1.bf16.xpose.msra.mxu0 0
        %5756 = vmatprep.subr.bf16.mxu0 0
        %5757 = vmatpush1.bf16.xpose.msra.mxu0 0
        %5758 = vmatprep.subr.bf16.mxu0 0
        %5759 = vmatpush1.bf16.xpose.msra.mxu0 0
        %5760 = vmatprep.subr.bf16.mxu0 0
        %5761 = vmatpush1.bf16.xpose.msra.mxu0 0
        %5762 = vmatprep.subr.bf16.mxu0 0
        %5763 = vmatpush1.bf16.xpose.msra.mxu0 0
        %5764 = vmatprep.subr.bf16.mxu0 0
        %5765 = vmatpush1.bf16.xpose.msra.mxu0 0
        %5766 = vmatprep.subr.bf16.mxu0 0
        %5767 = vmatpush1.bf16.xpose.msra.mxu0 0
        %5768 = vmatprep.subr.bf16.mxu0 0
        %5769 = vmatpush1.bf16.xpose.msra.mxu0 0
        %5770 = vmatprep.subr.bf16.mxu0 0
        %5771 = vmatpush1.bf16.xpose.msra.mxu0 0
        %5772 = vmatprep.subr.bf16.mxu0 0
        %5773 = vmatpush1.bf16.xpose.msra.mxu0 0
        %5774 = vmatprep.subr.bf16.mxu0 0
        %5775 = vmatpush1.bf16.xpose.msra.mxu0 0
        %5776 = vmatprep.subr.bf16.mxu0 0
        %5777 = vmatpush1.bf16.xpose.msra.mxu0 0
        %5778 = vmatprep.mubr.bf16.mxu0 0
        %5779 = vmatmul.mubr.bf16.gmra.mrb[0].mxu0 %v5723
        %v5780 = vpop.f32.mrb[0].mxu0
        %v5781 = vadd.f32 0.0, %v5780
        %v5782 = vpop.f32.mrb[0].mxu0
        %v5783 = vpop.f32.mrb[0].mxu0
        %v5784 = vadd.f32 0.0, %v5783
        %v5785 = vpop.f32.mrb[0].mxu0
        %5786 = vmatprep.mubr.bf16.mxu0 0
        %5787 = vmatmul.mubr.bf16.gmra.mrb[0].mxu0 %v5726
        %v5788 = vpop.f32.mrb[0].mxu0
        %v5789 = vadd.f32 0.0, %v5788
        %v5790 = vpop.f32.mrb[0].mxu0
        %v5791 = vpop.f32.mrb[0].mxu0
        %v5792 = vadd.f32 0.0, %v5791
        %v5793 = vpop.f32.mrb[0].mxu0
        %5794 = vmatprep.mubr.bf16.mxu0 0
        %5795 = vmatmul.mubr.bf16.gmra.mrb[0].mxu0 %v5729
        %v5796 = vpop.f32.mrb[0].mxu0
        %v5797 = vadd.f32 0.0, %v5796
        %v5798 = vpop.f32.mrb[0].mxu0
        %v5799 = vpop.f32.mrb[0].mxu0
        %v5800 = vadd.f32 0.0, %v5799
        %v5801 = vpop.f32.mrb[0].mxu0
        %5802 = vmatprep.mubr.bf16.mxu0 0
        %5803 = vmatmul.mubr.bf16.gmra.mrb[0].mxu0 %v5732
        %v5804 = vpop.f32.mrb[0].mxu0
        %v5805 = vadd.f32 0.0, %v5804
        %v5806 = vpop.f32.mrb[0].mxu0
        %v5807 = vpop.f32.mrb[0].mxu0
        %v5808 = vpop.f32.mrb[0].mxu0
        %5809 = vdwg.mxu0
        %v5810 = vmul.f32 %v5781, 0.25
        %v5811 = vmul.f32 %v5784, 0.25
        %v5812 = vmul.f32 %v5789, 0.25
        %v5813 = vmul.f32 %v5792, 0.25
        %v5814 = vmul.f32 %v5797, 0.25
        %v5815 = vmul.f32 %v5800, 0.25
        %v5816 = vmul.f32 %v5805, 0.25
        %v5817 = vadd.f32 %v5810, %v5506
        %v5818 = vadd.f32 %v5811, %v5506
        %v5819 = vadd.f32 %v5812, %v5506
        %v5820 = vadd.f32 %v5813, %v5506
        %v5821 = vadd.f32 %v5814, %v5506
        %v5822 = vadd.f32 %v5815, %v5506
        %v5823 = vadd.f32 %v5816, %v5506
        %v5824 = vsel %vm5515, %v5817, -inf
        %5825 = vmax.xlane.f32.xlu0 %v5824
        %v5826 = vpop.xlane.xlu0 %5825
        %v5827 = vsel %vm5515, %v5818, -inf
        %5828 = vmax.xlane.f32.xlu0 %v5827
        %v5829 = vpop.xlane.xlu0 %5828
        %v5830 = vsel %vm5515, %v5819, -inf
        %5831 = vmax.xlane.f32.xlu0 %v5830
        %v5832 = vpop.xlane.xlu0 %5831
        %v5833 = vsel %vm5515, %v5820, -inf
        %5834 = vmax.xlane.f32.xlu0 %v5833
        %v5835 = vpop.xlane.xlu0 %5834
        %v5836 = vsel %vm5515, %v5821, -inf
        %5837 = vmax.xlane.f32.xlu0 %v5836
        %v5838 = vpop.xlane.xlu0 %5837
        %v5839 = vsel %vm5515, %v5822, -inf
        %5840 = vmax.xlane.f32.xlu0 %v5839
        %v5841 = vpop.xlane.xlu0 %5840
        %v5842 = vsel %vm5515, %v5823, -inf
        %5843 = vmax.xlane.f32.xlu0 %v5842
        %v5844 = vpop.xlane.xlu0 %5843
        %v5845 = vsub.f32 %v5817, %v5826
        %v5846 = vsub.f32 %v5818, %v5829
        %v5847 = vsub.f32 %v5819, %v5832
        %v5848 = vsub.f32 %v5820, %v5835
        %v5849 = vsub.f32 %v5821, %v5838
        %v5850 = vsub.f32 %v5822, %v5841
        %v5851 = vsub.f32 %v5823, %v5844
        %v5852 = vmul.f32 %v5845, 1.442695
        %v5853 = vpow.pop %v5852
        %v5854 = vmul.f32 %v5846, 1.442695
        %v5855 = vpow.pop %v5854
        %v5856 = vmul.f32 %v5847, 1.442695
        %v5857 = vpow.pop %v5856
        %v5858 = vmul.f32 %v5848, 1.442695
        %v5859 = vpow.pop %v5858
        %v5860 = vmul.f32 %v5849, 1.442695
        %v5861 = vpow.pop %v5860
        %v5862 = vmul.f32 %v5850, 1.442695
        %v5863 = vpow.pop %v5862
        %v5864 = vmul.f32 %v5851, 1.442695
        %v5865 = vpow.pop %v5864
        %v5866 = vsel %vm5515, %v5853, 0.0
        %5867 = vadd.xlane.f32.xlu0 %v5866
        %v5868 = vpop.xlane.xlu0 %5867
        %v5869 = vsel %vm5515, %v5855, 0.0
        %5870 = vadd.xlane.f32.xlu0 %v5869
        %v5871 = vpop.xlane.xlu0 %5870
        %v5872 = vsel %vm5515, %v5857, 0.0
        %5873 = vadd.xlane.f32.xlu0 %v5872
        %v5874 = vpop.xlane.xlu0 %5873
        %v5875 = vsel %vm5515, %v5859, 0.0
        %5876 = vadd.xlane.f32.xlu0 %v5875
        %v5877 = vpop.xlane.xlu0 %5876
        %v5878 = vsel %vm5515, %v5861, 0.0
        %5879 = vadd.xlane.f32.xlu0 %v5878
        %v5880 = vpop.xlane.xlu0 %5879
        %v5881 = vsel %vm5515, %v5863, 0.0
        %5882 = vadd.xlane.f32.xlu0 %v5881
        %v5883 = vpop.xlane.xlu0 %5882
        %v5884 = vsel %vm5515, %v5865, 0.0
        %5885 = vadd.xlane.f32.xlu0 %v5884
        %v5886 = vpop.xlane.xlu0 %5885
        %v5887 = vrcp.pop %v5868
        %v5888 = vrcp.pop %v5871
        %v5889 = vrcp.pop %v5874
        %v5890 = vrcp.pop %v5877
        %v5891 = vrcp.pop %v5880
        %v5892 = vrcp.pop %v5883
        %v5893 = vrcp.pop %v5886
        %v5894 = vmul.f32 %v5853, %v5887
        %v5895 = vmul.f32 %v5855, %v5888
        %v5896 = vmul.f32 %v5857, %v5889
        %v5897 = vmul.f32 %v5859, %v5890
        %v5898 = vmul.f32 %v5861, %v5891
        %v5899 = vmul.f32 %v5863, %v5892
        %v5900 = vmul.f32 %v5865, %v5893
        %v5901 = vpack.c.bf16 %v5895, %v5894
        %v5902 = vpack.c.bf16 %v5897, %v5896
        %v5903 = vpack.c.bf16 %v5899, %v5898
        %v5904 = vpack.c.bf16 %v5900, %v5900
        %5909 = vrot.lane.b32.xlu0 %v5694, 112
        %v5910 = vpop.permute.xlu0 %5909
        %5911 = vrot.lane.b32.xlu0 %v5695, 112
        %v5912 = vpop.permute.xlu0 %5911
        %5913 = vrot.lane.b32.xlu0 %v5696, 112
        %v5914 = vpop.permute.xlu0 %5913
        %5915 = vrot.lane.b32.xlu0 %v5697, 112
        %v5916 = vpop.permute.xlu0 %5915
        %v5921 = vsel %vm5515, %v5901, 0
        %v5924 = vsel %vm5515, %v5902, 0
        %v5927 = vsel %vm5515, %v5903, 0
        %v5930 = vsel %vm5515, %v5904, 0
        %v5933 = vsel %vm5609, %v5916, 0
        %5935 = vmatprep.subr.bf16.mxu0 0
        %5936 = vmatpush1.bf16.msra.mxu0 %v5910
        %5937 = vmatprep.subr.bf16.mxu0 0
        %5938 = vmatpush1.bf16.msra.mxu0 %v5912
        %5939 = vmatprep.subr.bf16.mxu0 0
        %5940 = vmatpush1.bf16.msra.mxu0 %v5914
        %5941 = vmatprep.subr.bf16.mxu0 0
        %5942 = vmatpush1.bf16.msra.mxu0 %v5933
        %5943 = vmatprep.subr.bf16.mxu0 0
        %5944 = vmatpush1.bf16.msra.mxu0 0
        %5945 = vmatprep.subr.bf16.mxu0 0
        %5946 = vmatpush1.bf16.msra.mxu0 0
        %5947 = vmatprep.subr.bf16.mxu0 0
        %5948 = vmatpush1.bf16.msra.mxu0 0
        %5949 = vmatprep.subr.bf16.mxu0 0
        %5950 = vmatpush1.bf16.msra.mxu0 0
        %5951 = vmatprep.subr.bf16.mxu0 0
        %5952 = vmatpush1.bf16.msra.mxu0 0
        %5953 = vmatprep.subr.bf16.mxu0 0
        %5954 = vmatpush1.bf16.msra.mxu0 0
        %5955 = vmatprep.subr.bf16.mxu0 0
        %5956 = vmatpush1.bf16.msra.mxu0 0
        %5957 = vmatprep.subr.bf16.mxu0 0
        %5958 = vmatpush1.bf16.msra.mxu0 0
        %5959 = vmatprep.subr.bf16.mxu0 0
        %5960 = vmatpush1.bf16.msra.mxu0 0
        %5961 = vmatprep.subr.bf16.mxu0 0
        %5962 = vmatpush1.bf16.msra.mxu0 0
        %5963 = vmatprep.subr.bf16.mxu0 0
        %5964 = vmatpush1.bf16.msra.mxu0 0
        %5965 = vmatprep.subr.bf16.mxu0 0
        %5966 = vmatpush1.bf16.msra.mxu0 0
        %5967 = vmatprep.mubr.bf16.mxu0 0
        %5968 = vmatmul.mubr.bf16.gmra.mrb[0].mxu0 %v5921
        %v5969 = vpop.f32.mrb[0].mxu0
        %v5970 = vadd.f32 0.0, %v5969
        %v5971 = vpop.f32.mrb[0].mxu0
        %v5972 = vpop.f32.mrb[0].mxu0
        %v5973 = vadd.f32 0.0, %v5972
        %v5974 = vpop.f32.mrb[0].mxu0
        %5975 = vmatprep.mubr.bf16.mxu0 0
        %5976 = vmatmul.mubr.bf16.gmra.mrb[0].mxu0 %v5924
        %v5977 = vpop.f32.mrb[0].mxu0
        %v5978 = vadd.f32 0.0, %v5977
        %v5979 = vpop.f32.mrb[0].mxu0
        %v5980 = vpop.f32.mrb[0].mxu0
        %v5981 = vadd.f32 0.0, %v5980
        %v5982 = vpop.f32.mrb[0].mxu0
        %5983 = vmatprep.mubr.bf16.mxu0 0
        %5984 = vmatmul.mubr.bf16.gmra.mrb[0].mxu0 %v5927
        %v5985 = vpop.f32.mrb[0].mxu0
        %v5986 = vadd.f32 0.0, %v5985
        %v5987 = vpop.f32.mrb[0].mxu0
        %v5988 = vpop.f32.mrb[0].mxu0
        %v5989 = vadd.f32 0.0, %v5988
        %v5990 = vpop.f32.mrb[0].mxu0
        %5991 = vmatprep.mubr.bf16.mxu0 0
        %5992 = vmatmul.mubr.bf16.gmra.mrb[0].mxu0 %v5930
        %v5993 = vpop.f32.mrb[0].mxu0
        %v5994 = vadd.f32 0.0, %v5993
        %v5995 = vpop.f32.mrb[0].mxu0
        %v5996 = vpop.f32.mrb[0].mxu0
        %v5997 = vpop.f32.mrb[0].mxu0
        %5998 = vdwg.mxu0
        %v5999 = vpack.c.bf16 %v5973, %v5970
        %v6000 = vpack.c.bf16 %v5981, %v5978
        %v6001 = vpack.c.bf16 %v5989, %v5986
        %v6002 = vpack.c.bf16 %v5994, %v5994
        %6007 = vrot.lane.b32.xlu0 %v5999, 16
        %v6008 = vpop.permute.xlu0 %6007
        %6009 = vrot.lane.b32.xlu0 %v6000, 16
        %v6010 = vpop.permute.xlu0 %6009
        %6011 = vrot.lane.b32.xlu0 %v6001, 16
        %v6012 = vpop.permute.xlu0 %6011
        %6013 = vrot.lane.b32.xlu0 %v6002, 16
        %v6014 = vpop.permute.xlu0 %6013
        %vm6019 = vcmask 261248
        %6020 = vst.msk [vmem:[#allocation3] sm:$0xff] %vm6019, %v6008
        %6021 = vst.msk [vmem:[#allocation3 + $0x8] sm:$0xff] %vm6019, %v6010
        %6022 = vst.msk [vmem:[#allocation3 + $0x10] sm:$0xff] %vm6019, %v6012
        %vm6023 = vcmask 257152
        %6024 = vst.msk [vmem:[#allocation3 + $0x18] sm:$0xf] %vm6023, %v6014
        %v6025 = vld [vmem:[#allocation2] sm:$0xff]
        %v6026 = vld [vmem:[#allocation2 + $0x18] sm:$0xff]
        %v6027 = vld [vmem:[#allocation2 + $0x30] sm:$0xff]
        %v6028 = vld [vmem:[#allocation2 + $0x48] sm:$0xf]
        %v6029 = vld [vmem:[#allocation2 + $0x8] sm:$0xff]
        %v6030 = vld [vmem:[#allocation2 + $0x20] sm:$0xff]
        %v6031 = vld [vmem:[#allocation2 + $0x38] sm:$0xff]
        %v6032 = vld [vmem:[#allocation2 + $0x50] sm:$0xf]
        %v6033 = vld [vmem:[#allocation2 + $0x10] sm:$0xff]
        %v6034 = vld [vmem:[#allocation2 + $0x28] sm:$0xff]
        %v6035 = vld [vmem:[#allocation2 + $0x40] sm:$0xff]
        %v6036 = vld [vmem:[#allocation2 + $0x58] sm:$0xf]
        %6041 = vrot.lane.b32.xlu0 %v6025, 96
        %v6042 = vpop.permute.xlu0 %6041
        %6043 = vrot.lane.b32.xlu0 %v6026, 96
        %v6044 = vpop.permute.xlu0 %6043
        %6045 = vrot.lane.b32.xlu0 %v6027, 96
        %v6046 = vpop.permute.xlu0 %6045
        %6047 = vrot.lane.b32.xlu0 %v6028, 96
        %v6048 = vpop.permute.xlu0 %6047
        %6053 = vrot.lane.b32.xlu0 %v6029, 96
        %v6054 = vpop.permute.xlu0 %6053
        %6055 = vrot.lane.b32.xlu0 %v6030, 96
        %v6056 = vpop.permute.xlu0 %6055
        %6057 = vrot.lane.b32.xlu0 %v6031, 96
        %v6058 = vpop.permute.xlu0 %6057
        %6059 = vrot.lane.b32.xlu0 %v6032, 96
        %v6060 = vpop.permute.xlu0 %6059
        %v6062 = vsel %vm5406, %v6042, 0
        %v6065 = vsel %vm5406, %v6044, 0
        %v6068 = vsel %vm5406, %v6046, 0
        %v6071 = vsel %vm5406, %v6048, 0
        %v6074 = vsel %vm5406, %v6054, 0
        %v6077 = vsel %vm5406, %v6056, 0
        %v6080 = vsel %vm5406, %v6058, 0
        %v6083 = vsel %vm5406, %v6060, 0
        %6085 = vmatprep.subr.bf16.mxu0 0
        %6086 = vmatpush1.bf16.xpose.msra.mxu0 %v6074
        %6087 = vmatprep.subr.bf16.mxu0 0
        %6088 = vmatpush1.bf16.xpose.msra.mxu0 %v6077
        %6089 = vmatprep.subr.bf16.mxu0 0
        %6090 = vmatpush1.bf16.xpose.msra.mxu0 %v6080
        %6091 = vmatprep.subr.bf16.mxu0 0
        %6092 = vmatpush1.bf16.xpose.msra.mxu0 %v6083
        %6093 = vmatprep.subr.bf16.mxu0 0
        %6094 = vmatpush1.bf16.xpose.msra.mxu0 0
        %6095 = vmatprep.subr.bf16.mxu0 0
        %6096 = vmatpush1.bf16.xpose.msra.mxu0 0
        %6097 = vmatprep.subr.bf16.mxu0 0
        %6098 = vmatpush1.bf16.xpose.msra.mxu0 0
        %6099 = vmatprep.subr.bf16.mxu0 0
        %6100 = vmatpush1.bf16.xpose.msra.mxu0 0
        %6101 = vmatprep.subr.bf16.mxu0 0
        %6102 = vmatpush1.bf16.xpose.msra.mxu0 0
        %6103 = vmatprep.subr.bf16.mxu0 0
        %6104 = vmatpush1.bf16.xpose.msra.mxu0 0
        %6105 = vmatprep.subr.bf16.mxu0 0
        %6106 = vmatpush1.bf16.xpose.msra.mxu0 0
        %6107 = vmatprep.subr.bf16.mxu0 0
        %6108 = vmatpush1.bf16.xpose.msra.mxu0 0
        %6109 = vmatprep.subr.bf16.mxu0 0
        %6110 = vmatpush1.bf16.xpose.msra.mxu0 0
        %6111 = vmatprep.subr.bf16.mxu0 0
        %6112 = vmatpush1.bf16.xpose.msra.mxu0 0
        %6113 = vmatprep.subr.bf16.mxu0 0
        %6114 = vmatpush1.bf16.xpose.msra.mxu0 0
        %6115 = vmatprep.subr.bf16.mxu0 0
        %6116 = vmatpush1.bf16.xpose.msra.mxu0 0
        %6117 = vmatprep.mubr.bf16.mxu0 0
        %6118 = vmatmul.mubr.bf16.gmra.mrb[0].mxu0 %v6062
        %v6119 = vpop.f32.mrb[0].mxu0
        %v6120 = vadd.f32 0.0, %v6119
        %v6121 = vpop.f32.mrb[0].mxu0
        %v6122 = vpop.f32.mrb[0].mxu0
        %v6123 = vadd.f32 0.0, %v6122
        %v6124 = vpop.f32.mrb[0].mxu0
        %6125 = vmatprep.mubr.bf16.mxu0 0
        %6126 = vmatmul.mubr.bf16.gmra.mrb[0].mxu0 %v6065
        %v6127 = vpop.f32.mrb[0].mxu0
        %v6128 = vadd.f32 0.0, %v6127
        %v6129 = vpop.f32.mrb[0].mxu0
        %v6130 = vpop.f32.mrb[0].mxu0
        %v6131 = vadd.f32 0.0, %v6130
        %v6132 = vpop.f32.mrb[0].mxu0
        %6133 = vmatprep.mubr.bf16.mxu0 0
        %6134 = vmatmul.mubr.bf16.gmra.mrb[0].mxu0 %v6068
        %v6135 = vpop.f32.mrb[0].mxu0
        %v6136 = vadd.f32 0.0, %v6135
        %v6137 = vpop.f32.mrb[0].mxu0
        %v6138 = vpop.f32.mrb[0].mxu0
        %v6139 = vadd.f32 0.0, %v6138
        %v6140 = vpop.f32.mrb[0].mxu0
        %6141 = vmatprep.mubr.bf16.mxu0 0
        %6142 = vmatmul.mubr.bf16.gmra.mrb[0].mxu0 %v6071
        %v6143 = vpop.f32.mrb[0].mxu0
        %v6144 = vadd.f32 0.0, %v6143
        %v6145 = vpop.f32.mrb[0].mxu0
        %v6146 = vpop.f32.mrb[0].mxu0
        %v6147 = vpop.f32.mrb[0].mxu0
        %6148 = vdwg.mxu0
        %v6149 = vmul.f32 %v6120, 0.25
        %v6150 = vmul.f32 %v6123, 0.25
        %v6151 = vmul.f32 %v6128, 0.25
        %v6152 = vmul.f32 %v6131, 0.25
        %v6153 = vmul.f32 %v6136, 0.25
        %v6154 = vmul.f32 %v6139, 0.25
        %v6155 = vmul.f32 %v6144, 0.25
        %v6156 = vadd.f32 %v6149, %v5506
        %v6157 = vadd.f32 %v6150, %v5506
        %v6158 = vadd.f32 %v6151, %v5506
        %v6159 = vadd.f32 %v6152, %v5506
        %v6160 = vadd.f32 %v6153, %v5506
        %v6161 = vadd.f32 %v6154, %v5506
        %v6162 = vadd.f32 %v6155, %v5506
        %v6163 = vsel %vm5515, %v6156, -inf
        %6164 = vmax.xlane.f32.xlu0 %v6163
        %v6165 = vpop.xlane.xlu0 %6164
        %v6166 = vsel %vm5515, %v6157, -inf
        %6167 = vmax.xlane.f32.xlu0 %v6166
        %v6168 = vpop.xlane.xlu0 %6167
        %v6169 = vsel %vm5515, %v6158, -inf
        %6170 = vmax.xlane.f32.xlu0 %v6169
        %v6171 = vpop.xlane.xlu0 %6170
        %v6172 = vsel %vm5515, %v6159, -inf
        %6173 = vmax.xlane.f32.xlu0 %v6172
        %v6174 = vpop.xlane.xlu0 %6173
        %v6175 = vsel %vm5515, %v6160, -inf
        %6176 = vmax.xlane.f32.xlu0 %v6175
        %v6177 = vpop.xlane.xlu0 %6176
        %v6178 = vsel %vm5515, %v6161, -inf
        %6179 = vmax.xlane.f32.xlu0 %v6178
        %v6180 = vpop.xlane.xlu0 %6179
        %v6181 = vsel %vm5515, %v6162, -inf
        %6182 = vmax.xlane.f32.xlu0 %v6181
        %v6183 = vpop.xlane.xlu0 %6182
        %v6184 = vsub.f32 %v6156, %v6165
        %v6185 = vsub.f32 %v6157, %v6168
        %v6186 = vsub.f32 %v6158, %v6171
        %v6187 = vsub.f32 %v6159, %v6174
        %v6188 = vsub.f32 %v6160, %v6177
        %v6189 = vsub.f32 %v6161, %v6180
        %v6190 = vsub.f32 %v6162, %v6183
        %v6191 = vmul.f32 %v6184, 1.442695
        %v6192 = vpow.pop %v6191
        %v6193 = vmul.f32 %v6185, 1.442695
        %v6194 = vpow.pop %v6193
        %v6195 = vmul.f32 %v6186, 1.442695
        %v6196 = vpow.pop %v6195
        %v6197 = vmul.f32 %v6187, 1.442695
        %v6198 = vpow.pop %v6197
        %v6199 = vmul.f32 %v6188, 1.442695
        %v6200 = vpow.pop %v6199
        %v6201 = vmul.f32 %v6189, 1.442695
        %v6202 = vpow.pop %v6201
        %v6203 = vmul.f32 %v6190, 1.442695
        %v6204 = vpow.pop %v6203
        %v6205 = vsel %vm5515, %v6192, 0.0
        %6206 = vadd.xlane.f32.xlu0 %v6205
        %v6207 = vpop.xlane.xlu0 %6206
        %v6208 = vsel %vm5515, %v6194, 0.0
        %6209 = vadd.xlane.f32.xlu0 %v6208
        %v6210 = vpop.xlane.xlu0 %6209
        %v6211 = vsel %vm5515, %v6196, 0.0
        %6212 = vadd.xlane.f32.xlu0 %v6211
        %v6213 = vpop.xlane.xlu0 %6212
        %v6214 = vsel %vm5515, %v6198, 0.0
        %6215 = vadd.xlane.f32.xlu0 %v6214
        %v6216 = vpop.xlane.xlu0 %6215
        %v6217 = vsel %vm5515, %v6200, 0.0
        %6218 = vadd.xlane.f32.xlu0 %v6217
        %v6219 = vpop.xlane.xlu0 %6218
        %v6220 = vsel %vm5515, %v6202, 0.0
        %6221 = vadd.xlane.f32.xlu0 %v6220
        %v6222 = vpop.xlane.xlu0 %6221
        %v6223 = vsel %vm5515, %v6204, 0.0
        %6224 = vadd.xlane.f32.xlu0 %v6223
        %v6225 = vpop.xlane.xlu0 %6224
        %v6226 = vrcp.pop %v6207
        %v6227 = vrcp.pop %v6210
        %v6228 = vrcp.pop %v6213
        %v6229 = vrcp.pop %v6216
        %v6230 = vrcp.pop %v6219
        %v6231 = vrcp.pop %v6222
        %v6232 = vrcp.pop %v6225
        %v6233 = vmul.f32 %v6192, %v6226
        %v6234 = vmul.f32 %v6194, %v6227
        %v6235 = vmul.f32 %v6196, %v6228
        %v6236 = vmul.f32 %v6198, %v6229
        %v6237 = vmul.f32 %v6200, %v6230
        %v6238 = vmul.f32 %v6202, %v6231
        %v6239 = vmul.f32 %v6204, %v6232
        %v6240 = vpack.c.bf16 %v6234, %v6233
        %v6241 = vpack.c.bf16 %v6236, %v6235
        %v6242 = vpack.c.bf16 %v6238, %v6237
        %v6243 = vpack.c.bf16 %v6239, %v6239
        %6248 = vrot.lane.b32.xlu0 %v6033, 96
        %v6249 = vpop.permute.xlu0 %6248
        %6250 = vrot.lane.b32.xlu0 %v6034, 96
        %v6251 = vpop.permute.xlu0 %6250
        %6252 = vrot.lane.b32.xlu0 %v6035, 96
        %v6253 = vpop.permute.xlu0 %6252
        %6254 = vrot.lane.b32.xlu0 %v6036, 96
        %v6255 = vpop.permute.xlu0 %6254
        %v6260 = vsel %vm5515, %v6240, 0
        %v6263 = vsel %vm5515, %v6241, 0
        %v6266 = vsel %vm5515, %v6242, 0
        %v6269 = vsel %vm5515, %v6243, 0
        %v6272 = vsel %vm5609, %v6255, 0
        %6274 = vmatprep.subr.bf16.mxu0 0
        %6275 = vmatpush1.bf16.msra.mxu0 %v6249
        %6276 = vmatprep.subr.bf16.mxu0 0
        %6277 = vmatpush1.bf16.msra.mxu0 %v6251
        %6278 = vmatprep.subr.bf16.mxu0 0
        %6279 = vmatpush1.bf16.msra.mxu0 %v6253
        %6280 = vmatprep.subr.bf16.mxu0 0
        %6281 = vmatpush1.bf16.msra.mxu0 %v6272
        %6282 = vmatprep.subr.bf16.mxu0 0
        %6283 = vmatpush1.bf16.msra.mxu0 0
        %6284 = vmatprep.subr.bf16.mxu0 0
        %6285 = vmatpush1.bf16.msra.mxu0 0
        %6286 = vmatprep.subr.bf16.mxu0 0
        %6287 = vmatpush1.bf16.msra.mxu0 0
        %6288 = vmatprep.subr.bf16.mxu0 0
        %6289 = vmatpush1.bf16.msra.mxu0 0
        %6290 = vmatprep.subr.bf16.mxu0 0
        %6291 = vmatpush1.bf16.msra.mxu0 0
        %6292 = vmatprep.subr.bf16.mxu0 0
        %6293 = vmatpush1.bf16.msra.mxu0 0
        %6294 = vmatprep.subr.bf16.mxu0 0
        %6295 = vmatpush1.bf16.msra.mxu0 0
        %6296 = vmatprep.subr.bf16.mxu0 0
        %6297 = vmatpush1.bf16.msra.mxu0 0
        %6298 = vmatprep.subr.bf16.mxu0 0
        %6299 = vmatpush1.bf16.msra.mxu0 0
        %6300 = vmatprep.subr.bf16.mxu0 0
        %6301 = vmatpush1.bf16.msra.mxu0 0
        %6302 = vmatprep.subr.bf16.mxu0 0
        %6303 = vmatpush1.bf16.msra.mxu0 0
        %6304 = vmatprep.subr.bf16.mxu0 0
        %6305 = vmatpush1.bf16.msra.mxu0 0
        %6306 = vmatprep.mubr.bf16.mxu0 0
        %6307 = vmatmul.mubr.bf16.gmra.mrb[0].mxu0 %v6260
        %v6308 = vpop.f32.mrb[0].mxu0
        %v6309 = vadd.f32 0.0, %v6308
        %v6310 = vpop.f32.mrb[0].mxu0
        %v6311 = vpop.f32.mrb[0].mxu0
        %v6312 = vadd.f32 0.0, %v6311
        %v6313 = vpop.f32.mrb[0].mxu0
        %6314 = vmatprep.mubr.bf16.mxu0 0
        %6315 = vmatmul.mubr.bf16.gmra.mrb[0].mxu0 %v6263
        %v6316 = vpop.f32.mrb[0].mxu0
        %v6317 = vadd.f32 0.0, %v6316
        %v6318 = vpop.f32.mrb[0].mxu0
        %v6319 = vpop.f32.mrb[0].mxu0
        %v6320 = vadd.f32 0.0, %v6319
        %v6321 = vpop.f32.mrb[0].mxu0
        %6322 = vmatprep.mubr.bf16.mxu0 0
        %6323 = vmatmul.mubr.bf16.gmra.mrb[0].mxu0 %v6266
        %v6324 = vpop.f32.mrb[0].mxu0
        %v6325 = vadd.f32 0.0, %v6324
        %v6326 = vpop.f32.mrb[0].mxu0
        %v6327 = vpop.f32.mrb[0].mxu0
        %v6328 = vadd.f32 0.0, %v6327
        %v6329 = vpop.f32.mrb[0].mxu0
        %6330 = vmatprep.mubr.bf16.mxu0 0
        %6331 = vmatmul.mubr.bf16.gmra.mrb[0].mxu0 %v6269
        %v6332 = vpop.f32.mrb[0].mxu0
        %v6333 = vadd.f32 0.0, %v6332
        %v6334 = vpop.f32.mrb[0].mxu0
        %v6335 = vpop.f32.mrb[0].mxu0
        %v6336 = vpop.f32.mrb[0].mxu0
        %6337 = vdwg.mxu0
        %v6338 = vpack.c.bf16 %v6312, %v6309
        %v6339 = vpack.c.bf16 %v6320, %v6317
        %v6340 = vpack.c.bf16 %v6328, %v6325
        %v6341 = vpack.c.bf16 %v6333, %v6333
        %6346 = vrot.lane.b32.xlu0 %v6338, 32
        %v6347 = vpop.permute.xlu0 %6346
        %6348 = vrot.lane.b32.xlu0 %v6339, 32
        %v6349 = vpop.permute.xlu0 %6348
        %6350 = vrot.lane.b32.xlu0 %v6340, 32
        %v6351 = vpop.permute.xlu0 %6350
        %6352 = vrot.lane.b32.xlu0 %v6341, 32
        %v6353 = vpop.permute.xlu0 %6352
        %vm6358 = vcmask 392448
        %6359 = vst.msk [vmem:[#allocation3] sm:$0xff] %vm6358, %v6347
        %6360 = vst.msk [vmem:[#allocation3 + $0x8] sm:$0xff] %vm6358, %v6349
        %6361 = vst.msk [vmem:[#allocation3 + $0x10] sm:$0xff] %vm6358, %v6351
        %vm6362 = vcmask 388352
        %6363 = vst.msk [vmem:[#allocation3 + $0x18] sm:$0xf] %vm6362, %v6353
        %v6364 = vld [vmem:[#allocation2] sm:$0xff]
        %v6365 = vld [vmem:[#allocation2 + $0x18] sm:$0xff]
        %v6366 = vld [vmem:[#allocation2 + $0x30] sm:$0xff]
        %v6367 = vld [vmem:[#allocation2 + $0x48] sm:$0xf]
        %v6368 = vld [vmem:[#allocation2 + $0x8] sm:$0xff]
        %v6369 = vld [vmem:[#allocation2 + $0x20] sm:$0xff]
        %v6370 = vld [vmem:[#allocation2 + $0x38] sm:$0xff]
        %v6371 = vld [vmem:[#allocation2 + $0x50] sm:$0xf]
        %v6372 = vld [vmem:[#allocation2 + $0x10] sm:$0xff]
        %v6373 = vld [vmem:[#allocation2 + $0x28] sm:$0xff]
        %v6374 = vld [vmem:[#allocation2 + $0x40] sm:$0xff]
        %v6375 = vld [vmem:[#allocation2 + $0x58] sm:$0xf]
        %6380 = vrot.lane.b32.xlu0 %v6364, 80
        %v6381 = vpop.permute.xlu0 %6380
        %6382 = vrot.lane.b32.xlu0 %v6365, 80
        %v6383 = vpop.permute.xlu0 %6382
        %6384 = vrot.lane.b32.xlu0 %v6366, 80
        %v6385 = vpop.permute.xlu0 %6384
        %6386 = vrot.lane.b32.xlu0 %v6367, 80
        %v6387 = vpop.permute.xlu0 %6386
        %6392 = vrot.lane.b32.xlu0 %v6368, 80
        %v6393 = vpop.permute.xlu0 %6392
        %6394 = vrot.lane.b32.xlu0 %v6369, 80
        %v6395 = vpop.permute.xlu0 %6394
        %6396 = vrot.lane.b32.xlu0 %v6370, 80
        %v6397 = vpop.permute.xlu0 %6396
        %6398 = vrot.lane.b32.xlu0 %v6371, 80
        %v6399 = vpop.permute.xlu0 %6398
        %v6401 = vsel %vm5406, %v6381, 0
        %v6404 = vsel %vm5406, %v6383, 0
        %v6407 = vsel %vm5406, %v6385, 0
        %v6410 = vsel %vm5406, %v6387, 0
        %v6413 = vsel %vm5406, %v6393, 0
        %v6416 = vsel %vm5406, %v6395, 0
        %v6419 = vsel %vm5406, %v6397, 0
        %v6422 = vsel %vm5406, %v6399, 0
        %6424 = vmatprep.subr.bf16.mxu0 0
        %6425 = vmatpush1.bf16.xpose.msra.mxu0 %v6413
        %6426 = vmatprep.subr.bf16.mxu0 0
        %6427 = vmatpush1.bf16.xpose.msra.mxu0 %v6416
        %6428 = vmatprep.subr.bf16.mxu0 0
        %6429 = vmatpush1.bf16.xpose.msra.mxu0 %v6419
        %6430 = vmatprep.subr.bf16.mxu0 0
        %6431 = vmatpush1.bf16.xpose.msra.mxu0 %v6422
        %6432 = vmatprep.subr.bf16.mxu0 0
        %6433 = vmatpush1.bf16.xpose.msra.mxu0 0
        %6434 = vmatprep.subr.bf16.mxu0 0
        %6435 = vmatpush1.bf16.xpose.msra.mxu0 0
        %6436 = vmatprep.subr.bf16.mxu0 0
        %6437 = vmatpush1.bf16.xpose.msra.mxu0 0
        %6438 = vmatprep.subr.bf16.mxu0 0
        %6439 = vmatpush1.bf16.xpose.msra.mxu0 0
        %6440 = vmatprep.subr.bf16.mxu0 0
        %6441 = vmatpush1.bf16.xpose.msra.mxu0 0
        %6442 = vmatprep.subr.bf16.mxu0 0
        %6443 = vmatpush1.bf16.xpose.msra.mxu0 0
        %6444 = vmatprep.subr.bf16.mxu0 0
        %6445 = vmatpush1.bf16.xpose.msra.mxu0 0
        %6446 = vmatprep.subr.bf16.mxu0 0
        %6447 = vmatpush1.bf16.xpose.msra.mxu0 0
        %6448 = vmatprep.subr.bf16.mxu0 0
        %6449 = vmatpush1.bf16.xpose.msra.mxu0 0
        %6450 = vmatprep.subr.bf16.mxu0 0
        %6451 = vmatpush1.bf16.xpose.msra.mxu0 0
        %6452 = vmatprep.subr.bf16.mxu0 0
        %6453 = vmatpush1.bf16.xpose.msra.mxu0 0
        %6454 = vmatprep.subr.bf16.mxu0 0
        %6455 = vmatpush1.bf16.xpose.msra.mxu0 0
        %6456 = vmatprep.mubr.bf16.mxu0 0
        %6457 = vmatmul.mubr.bf16.gmra.mrb[0].mxu0 %v6401
        %v6458 = vpop.f32.mrb[0].mxu0
        %v6459 = vadd.f32 0.0, %v6458
        %v6460 = vpop.f32.mrb[0].mxu0
        %v6461 = vpop.f32.mrb[0].mxu0
        %v6462 = vadd.f32 0.0, %v6461
        %v6463 = vpop.f32.mrb[0].mxu0
        %6464 = vmatprep.mubr.bf16.mxu0 0
        %6465 = vmatmul.mubr.bf16.gmra.mrb[0].mxu0 %v6404
        %v6466 = vpop.f32.mrb[0].mxu0
        %v6467 = vadd.f32 0.0, %v6466
        %v6468 = vpop.f32.mrb[0].mxu0
        %v6469 = vpop.f32.mrb[0].mxu0
        %v6470 = vadd.f32 0.0, %v6469
        %v6471 = vpop.f32.mrb[0].mxu0
        %6472 = vmatprep.mubr.bf16.mxu0 0
        %6473 = vmatmul.mubr.bf16.gmra.mrb[0].mxu0 %v6407
        %v6474 = vpop.f32.mrb[0].mxu0
        %v6475 = vadd.f32 0.0, %v6474
        %v6476 = vpop.f32.mrb[0].mxu0
        %v6477 = vpop.f32.mrb[0].mxu0
        %v6478 = vadd.f32 0.0, %v6477
        %v6479 = vpop.f32.mrb[0].mxu0
        %6480 = vmatprep.mubr.bf16.mxu0 0
        %6481 = vmatmul.mubr.bf16.gmra.mrb[0].mxu0 %v6410
        %v6482 = vpop.f32.mrb[0].mxu0
        %v6483 = vadd.f32 0.0, %v6482
        %v6484 = vpop.f32.mrb[0].mxu0
        %v6485 = vpop.f32.mrb[0].mxu0
        %v6486 = vpop.f32.mrb[0].mxu0
        %6487 = vdwg.mxu0
        %v6488 = vmul.f32 %v6459, 0.25
        %v6489 = vmul.f32 %v6462, 0.25
        %v6490 = vmul.f32 %v6467, 0.25
        %v6491 = vmul.f32 %v6470, 0.25
        %v6492 = vmul.f32 %v6475, 0.25
        %v6493 = vmul.f32 %v6478, 0.25
        %v6494 = vmul.f32 %v6483, 0.25
        %v6495 = vadd.f32 %v6488, %v5506
        %v6496 = vadd.f32 %v6489, %v5506
        %v6497 = vadd.f32 %v6490, %v5506
        %v6498 = vadd.f32 %v6491, %v5506
        %v6499 = vadd.f32 %v6492, %v5506
        %v6500 = vadd.f32 %v6493, %v5506
        %v6501 = vadd.f32 %v6494, %v5506
        %v6502 = vsel %vm5515, %v6495, -inf
        %6503 = vmax.xlane.f32.xlu0 %v6502
        %v6504 = vpop.xlane.xlu0 %6503
        %v6505 = vsel %vm5515, %v6496, -inf
        %6506 = vmax.xlane.f32.xlu0 %v6505
        %v6507 = vpop.xlane.xlu0 %6506
        %v6508 = vsel %vm5515, %v6497, -inf
        %6509 = vmax.xlane.f32.xlu0 %v6508
        %v6510 = vpop.xlane.xlu0 %6509
        %v6511 = vsel %vm5515, %v6498, -inf
        %6512 = vmax.xlane.f32.xlu0 %v6511
        %v6513 = vpop.xlane.xlu0 %6512
        %v6514 = vsel %vm5515, %v6499, -inf
        %6515 = vmax.xlane.f32.xlu0 %v6514
        %v6516 = vpop.xlane.xlu0 %6515
        %v6517 = vsel %vm5515, %v6500, -inf
        %6518 = vmax.xlane.f32.xlu0 %v6517
        %v6519 = vpop.xlane.xlu0 %6518
        %v6520 = vsel %vm5515, %v6501, -inf
        %6521 = vmax.xlane.f32.xlu0 %v6520
        %v6522 = vpop.xlane.xlu0 %6521
        %v6523 = vsub.f32 %v6495, %v6504
        %v6524 = vsub.f32 %v6496, %v6507
        %v6525 = vsub.f32 %v6497, %v6510
        %v6526 = vsub.f32 %v6498, %v6513
        %v6527 = vsub.f32 %v6499, %v6516
        %v6528 = vsub.f32 %v6500, %v6519
        %v6529 = vsub.f32 %v6501, %v6522
        %v6530 = vmul.f32 %v6523, 1.442695
        %v6531 = vpow.pop %v6530
        %v6532 = vmul.f32 %v6524, 1.442695
        %v6533 = vpow.pop %v6532
        %v6534 = vmul.f32 %v6525, 1.442695
        %v6535 = vpow.pop %v6534
        %v6536 = vmul.f32 %v6526, 1.442695
        %v6537 = vpow.pop %v6536
        %v6538 = vmul.f32 %v6527, 1.442695
        %v6539 = vpow.pop %v6538
        %v6540 = vmul.f32 %v6528, 1.442695
        %v6541 = vpow.pop %v6540
        %v6542 = vmul.f32 %v6529, 1.442695
        %v6543 = vpow.pop %v6542
        %v6544 = vsel %vm5515, %v6531, 0.0
        %6545 = vadd.xlane.f32.xlu0 %v6544
        %v6546 = vpop.xlane.xlu0 %6545
        %v6547 = vsel %vm5515, %v6533, 0.0
        %6548 = vadd.xlane.f32.xlu0 %v6547
        %v6549 = vpop.xlane.xlu0 %6548
        %v6550 = vsel %vm5515, %v6535, 0.0
        %6551 = vadd.xlane.f32.xlu0 %v6550
        %v6552 = vpop.xlane.xlu0 %6551
        %v6553 = vsel %vm5515, %v6537, 0.0
        %6554 = vadd.xlane.f32.xlu0 %v6553
        %v6555 = vpop.xlane.xlu0 %6554
        %v6556 = vsel %vm5515, %v6539, 0.0
        %6557 = vadd.xlane.f32.xlu0 %v6556
        %v6558 = vpop.xlane.xlu0 %6557
        %v6559 = vsel %vm5515, %v6541, 0.0
        %6560 = vadd.xlane.f32.xlu0 %v6559
        %v6561 = vpop.xlane.xlu0 %6560
        %v6562 = vsel %vm5515, %v6543, 0.0
        %6563 = vadd.xlane.f32.xlu0 %v6562
        %v6564 = vpop.xlane.xlu0 %6563
        %v6565 = vrcp.pop %v6546
        %v6566 = vrcp.pop %v6549
        %v6567 = vrcp.pop %v6552
        %v6568 = vrcp.pop %v6555
        %v6569 = vrcp.pop %v6558
        %v6570 = vrcp.pop %v6561
        %v6571 = vrcp.pop %v6564
        %v6572 = vmul.f32 %v6531, %v6565
        %v6573 = vmul.f32 %v6533, %v6566
        %v6574 = vmul.f32 %v6535, %v6567
        %v6575 = vmul.f32 %v6537, %v6568
        %v6576 = vmul.f32 %v6539, %v6569
        %v6577 = vmul.f32 %v6541, %v6570
        %v6578 = vmul.f32 %v6543, %v6571
        %v6579 = vpack.c.bf16 %v6573, %v6572
        %v6580 = vpack.c.bf16 %v6575, %v6574
        %v6581 = vpack.c.bf16 %v6577, %v6576
        %v6582 = vpack.c.bf16 %v6578, %v6578
        %6587 = vrot.lane.b32.xlu0 %v6372, 80
        %v6588 = vpop.permute.xlu0 %6587
        %6589 = vrot.lane.b32.xlu0 %v6373, 80
        %v6590 = vpop.permute.xlu0 %6589
        %6591 = vrot.lane.b32.xlu0 %v6374, 80
        %v6592 = vpop.permute.xlu0 %6591
        %6593 = vrot.lane.b32.xlu0 %v6375, 80
        %v6594 = vpop.permute.xlu0 %6593
        %v6599 = vsel %vm5515, %v6579, 0
        %v6602 = vsel %vm5515, %v6580, 0
        %v6605 = vsel %vm5515, %v6581, 0
        %v6608 = vsel %vm5515, %v6582, 0
        %v6611 = vsel %vm5609, %v6594, 0
        %6613 = vmatprep.subr.bf16.mxu0 0
        %6614 = vmatpush1.bf16.msra.mxu0 %v6588
        %6615 = vmatprep.subr.bf16.mxu0 0
        %6616 = vmatpush1.bf16.msra.mxu0 %v6590
        %6617 = vmatprep.subr.bf16.mxu0 0
        %6618 = vmatpush1.bf16.msra.mxu0 %v6592
        %6619 = vmatprep.subr.bf16.mxu0 0
        %6620 = vmatpush1.bf16.msra.mxu0 %v6611
        %6621 = vmatprep.subr.bf16.mxu0 0
        %6622 = vmatpush1.bf16.msra.mxu0 0
        %6623 = vmatprep.subr.bf16.mxu0 0
        %6624 = vmatpush1.bf16.msra.mxu0 0
        %6625 = vmatprep.subr.bf16.mxu0 0
        %6626 = vmatpush1.bf16.msra.mxu0 0
        %6627 = vmatprep.subr.bf16.mxu0 0
        %6628 = vmatpush1.bf16.msra.mxu0 0
        %6629 = vmatprep.subr.bf16.mxu0 0
        %6630 = vmatpush1.bf16.msra.mxu0 0
        %6631 = vmatprep.subr.bf16.mxu0 0
        %6632 = vmatpush1.bf16.msra.mxu0 0
        %6633 = vmatprep.subr.bf16.mxu0 0
        %6634 = vmatpush1.bf16.msra.mxu0 0
        %6635 = vmatprep.subr.bf16.mxu0 0
        %6636 = vmatpush1.bf16.msra.mxu0 0
        %6637 = vmatprep.subr.bf16.mxu0 0
        %6638 = vmatpush1.bf16.msra.mxu0 0
        %6639 = vmatprep.subr.bf16.mxu0 0
        %6640 = vmatpush1.bf16.msra.mxu0 0
        %6641 = vmatprep.subr.bf16.mxu0 0
        %6642 = vmatpush1.bf16.msra.mxu0 0
        %6643 = vmatprep.subr.bf16.mxu0 0
        %6644 = vmatpush1.bf16.msra.mxu0 0
        %6645 = vmatprep.mubr.bf16.mxu0 0
        %6646 = vmatmul.mubr.bf16.gmra.mrb[0].mxu0 %v6599
        %v6647 = vpop.f32.mrb[0].mxu0
        %v6648 = vadd.f32 0.0, %v6647
        %v6649 = vpop.f32.mrb[0].mxu0
        %v6650 = vpop.f32.mrb[0].mxu0
        %v6651 = vadd.f32 0.0, %v6650
        %v6652 = vpop.f32.mrb[0].mxu0
        %6653 = vmatprep.mubr.bf16.mxu0 0
        %6654 = vmatmul.mubr.bf16.gmra.mrb[0].mxu0 %v6602
        %v6655 = vpop.f32.mrb[0].mxu0
        %v6656 = vadd.f32 0.0, %v6655
        %v6657 = vpop.f32.mrb[0].mxu0
        %v6658 = vpop.f32.mrb[0].mxu0
        %v6659 = vadd.f32 0.0, %v6658
        %v6660 = vpop.f32.mrb[0].mxu0
        %6661 = vmatprep.mubr.bf16.mxu0 0
        %6662 = vmatmul.mubr.bf16.gmra.mrb[0].mxu0 %v6605
        %v6663 = vpop.f32.mrb[0].mxu0
        %v6664 = vadd.f32 0.0, %v6663
        %v6665 = vpop.f32.mrb[0].mxu0
        %v6666 = vpop.f32.mrb[0].mxu0
        %v6667 = vadd.f32 0.0, %v6666
        %v6668 = vpop.f32.mrb[0].mxu0
        %6669 = vmatprep.mubr.bf16.mxu0 0
        %6670 = vmatmul.mubr.bf16.gmra.mrb[0].mxu0 %v6608
        %v6671 = vpop.f32.mrb[0].mxu0
        %v6672 = vadd.f32 0.0, %v6671
        %v6673 = vpop.f32.mrb[0].mxu0
        %v6674 = vpop.f32.mrb[0].mxu0
        %v6675 = vpop.f32.mrb[0].mxu0
        %6676 = vdwg.mxu0
        %v6677 = vpack.c.bf16 %v6651, %v6648
        %v6678 = vpack.c.bf16 %v6659, %v6656
        %v6679 = vpack.c.bf16 %v6667, %v6664
        %v6680 = vpack.c.bf16 %v6672, %v6672
        %6685 = vrot.lane.b32.xlu0 %v6677, 48
        %v6686 = vpop.permute.xlu0 %6685
        %6687 = vrot.lane.b32.xlu0 %v6678, 48
        %v6688 = vpop.permute.xlu0 %6687
        %6689 = vrot.lane.b32.xlu0 %v6679, 48
        %v6690 = vpop.permute.xlu0 %6689
        %6691 = vrot.lane.b32.xlu0 %v6680, 48
        %v6692 = vpop.permute.xlu0 %6691
        %vm6697 = vcmask 523648
        %6698 = vst.msk [vmem:[#allocation3] sm:$0xff] %vm6697, %v6686
        %6699 = vst.msk [vmem:[#allocation3 + $0x8] sm:$0xff] %vm6697, %v6688
        %6700 = vst.msk [vmem:[#allocation3 + $0x10] sm:$0xff] %vm6697, %v6690
        %vm6701 = vcmask 519552
        %6702 = vst.msk [vmem:[#allocation3 + $0x18] sm:$0xf] %vm6701, %v6692
        %v6703 = vld [vmem:[#allocation2 + $0x48] sm:$0xf0]
        %v6704 = vld [vmem:[#allocation2 + $0x60] sm:$0xff]
        %v6705 = vld [vmem:[#allocation2 + $0x78] sm:$0xff]
        %v6706 = vld [vmem:[#allocation2 + $0x90] sm:$0xff]
        %v6707 = vld [vmem:[#allocation2 + $0x50] sm:$0xf0]
        %v6708 = vld [vmem:[#allocation2 + $0x68] sm:$0xff]
        %v6709 = vld [vmem:[#allocation2 + $0x80] sm:$0xff]
        %v6710 = vld [vmem:[#allocation2 + $0x98] sm:$0xff]
        %v6711 = vld [vmem:[#allocation2 + $0x58] sm:$0xf0]
        %v6712 = vld [vmem:[#allocation2 + $0x70] sm:$0xff]
        %v6713 = vld [vmem:[#allocation2 + $0x88] sm:$0xff]
        %v6714 = vld [vmem:[#allocation2 + $0xa0] sm:$0xff]
        %vm6719 = vcmask 1043456
        %v6720 = vrot.slane %v6703, 4
        %v6721 = vrot.slane %v6704, 4
        %v6722 = vsel %vm6719, %v6720, %v6721
        %v6723 = vrot.slane %v6705, 4
        %v6724 = vsel %vm6719, %v6721, %v6723
        %v6725 = vrot.slane %v6706, 4
        %v6726 = vsel %vm6719, %v6723, %v6725
        %v6731 = vrot.slane %v6707, 4
        %v6732 = vrot.slane %v6708, 4
        %v6733 = vsel %vm6719, %v6731, %v6732
        %v6734 = vrot.slane %v6709, 4
        %v6735 = vsel %vm6719, %v6732, %v6734
        %v6736 = vrot.slane %v6710, 4
        %v6737 = vsel %vm6719, %v6734, %v6736
        %v6739 = vsel %vm5406, %v6722, 0
        %v6742 = vsel %vm5406, %v6724, 0
        %v6745 = vsel %vm5406, %v6726, 0
        %v6748 = vsel %vm5406, %v6725, 0
        %v6751 = vsel %vm5406, %v6733, 0
        %v6754 = vsel %vm5406, %v6735, 0
        %v6757 = vsel %vm5406, %v6737, 0
        %v6760 = vsel %vm5406, %v6736, 0
        %6762 = vmatprep.subr.bf16.mxu0 0
        %6763 = vmatpush1.bf16.xpose.msra.mxu0 %v6751
        %6764 = vmatprep.subr.bf16.mxu0 0
        %6765 = vmatpush1.bf16.xpose.msra.mxu0 %v6754
        %6766 = vmatprep.subr.bf16.mxu0 0
        %6767 = vmatpush1.bf16.xpose.msra.mxu0 %v6757
        %6768 = vmatprep.subr.bf16.mxu0 0
        %6769 = vmatpush1.bf16.xpose.msra.mxu0 %v6760
        %6770 = vmatprep.subr.bf16.mxu0 0
        %6771 = vmatpush1.bf16.xpose.msra.mxu0 0
        %6772 = vmatprep.subr.bf16.mxu0 0
        %6773 = vmatpush1.bf16.xpose.msra.mxu0 0
        %6774 = vmatprep.subr.bf16.mxu0 0
        %6775 = vmatpush1.bf16.xpose.msra.mxu0 0
        %6776 = vmatprep.subr.bf16.mxu0 0
        %6777 = vmatpush1.bf16.xpose.msra.mxu0 0
        %6778 = vmatprep.subr.bf16.mxu0 0
        %6779 = vmatpush1.bf16.xpose.msra.mxu0 0
        %6780 = vmatprep.subr.bf16.mxu0 0
        %6781 = vmatpush1.bf16.xpose.msra.mxu0 0
        %6782 = vmatprep.subr.bf16.mxu0 0
        %6783 = vmatpush1.bf16.xpose.msra.mxu0 0
        %6784 = vmatprep.subr.bf16.mxu0 0
        %6785 = vmatpush1.bf16.xpose.msra.mxu0 0
        %6786 = vmatprep.subr.bf16.mxu0 0
        %6787 = vmatpush1.bf16.xpose.msra.mxu0 0
        %6788 = vmatprep.subr.bf16.mxu0 0
        %6789 = vmatpush1.bf16.xpose.msra.mxu0 0
        %6790 = vmatprep.subr.bf16.mxu0 0
        %6791 = vmatpush1.bf16.xpose.msra.mxu0 0
        %6792 = vmatprep.subr.bf16.mxu0 0
        %6793 = vmatpush1.bf16.xpose.msra.mxu0 0
        %6794 = vmatprep.mubr.bf16.mxu0 0
        %6795 = vmatmul.mubr.bf16.gmra.mrb[0].mxu0 %v6739
        %v6796 = vpop.f32.mrb[0].mxu0
        %v6797 = vadd.f32 0.0, %v6796
        %v6798 = vpop.f32.mrb[0].mxu0
        %v6799 = vpop.f32.mrb[0].mxu0
        %v6800 = vadd.f32 0.0, %v6799
        %v6801 = vpop.f32.mrb[0].mxu0
        %6802 = vmatprep.mubr.bf16.mxu0 0
        %6803 = vmatmul.mubr.bf16.gmra.mrb[0].mxu0 %v6742
        %v6804 = vpop.f32.mrb[0].mxu0
        %v6805 = vadd.f32 0.0, %v6804
        %v6806 = vpop.f32.mrb[0].mxu0
        %v6807 = vpop.f32.mrb[0].mxu0
        %v6808 = vadd.f32 0.0, %v6807
        %v6809 = vpop.f32.mrb[0].mxu0
        %6810 = vmatprep.mubr.bf16.mxu0 0
        %6811 = vmatmul.mubr.bf16.gmra.mrb[0].mxu0 %v6745
        %v6812 = vpop.f32.mrb[0].mxu0
        %v6813 = vadd.f32 0.0, %v6812
        %v6814 = vpop.f32.mrb[0].mxu0
        %v6815 = vpop.f32.mrb[0].mxu0
        %v6816 = vadd.f32 0.0, %v6815
        %v6817 = vpop.f32.mrb[0].mxu0
        %6818 = vmatprep.mubr.bf16.mxu0 0
        %6819 = vmatmul.mubr.bf16.gmra.mrb[0].mxu0 %v6748
        %v6820 = vpop.f32.mrb[0].mxu0
        %v6821 = vadd.f32 0.0, %v6820
        %v6822 = vpop.f32.mrb[0].mxu0
        %v6823 = vpop.f32.mrb[0].mxu0
        %v6824 = vpop.f32.mrb[0].mxu0
        %6825 = vdwg.mxu0
        %v6826 = vmul.f32 %v6797, 0.25
        %v6827 = vmul.f32 %v6800, 0.25
        %v6828 = vmul.f32 %v6805, 0.25
        %v6829 = vmul.f32 %v6808, 0.25
        %v6830 = vmul.f32 %v6813, 0.25
        %v6831 = vmul.f32 %v6816, 0.25
        %v6832 = vmul.f32 %v6821, 0.25
        %v6833 = vadd.f32 %v6826, %v5506
        %v6834 = vadd.f32 %v6827, %v5506
        %v6835 = vadd.f32 %v6828, %v5506
        %v6836 = vadd.f32 %v6829, %v5506
        %v6837 = vadd.f32 %v6830, %v5506
        %v6838 = vadd.f32 %v6831, %v5506
        %v6839 = vadd.f32 %v6832, %v5506
        %v6840 = vsel %vm5515, %v6833, -inf
        %6841 = vmax.xlane.f32.xlu0 %v6840
        %v6842 = vpop.xlane.xlu0 %6841
        %v6843 = vsel %vm5515, %v6834, -inf
        %6844 = vmax.xlane.f32.xlu0 %v6843
        %v6845 = vpop.xlane.xlu0 %6844
        %v6846 = vsel %vm5515, %v6835, -inf
        %6847 = vmax.xlane.f32.xlu0 %v6846
        %v6848 = vpop.xlane.xlu0 %6847
        %v6849 = vsel %vm5515, %v6836, -inf
        %6850 = vmax.xlane.f32.xlu0 %v6849
        %v6851 = vpop.xlane.xlu0 %6850
        %v6852 = vsel %vm5515, %v6837, -inf
        %6853 = vmax.xlane.f32.xlu0 %v6852
        %v6854 = vpop.xlane.xlu0 %6853
        %v6855 = vsel %vm5515, %v6838, -inf
        %6856 = vmax.xlane.f32.xlu0 %v6855
        %v6857 = vpop.xlane.xlu0 %6856
        %v6858 = vsel %vm5515, %v6839, -inf
        %6859 = vmax.xlane.f32.xlu0 %v6858
        %v6860 = vpop.xlane.xlu0 %6859
        %v6861 = vsub.f32 %v6833, %v6842
        %v6862 = vsub.f32 %v6834, %v6845
        %v6863 = vsub.f32 %v6835, %v6848
        %v6864 = vsub.f32 %v6836, %v6851
        %v6865 = vsub.f32 %v6837, %v6854
        %v6866 = vsub.f32 %v6838, %v6857
        %v6867 = vsub.f32 %v6839, %v6860
        %v6868 = vmul.f32 %v6861, 1.442695
        %v6869 = vpow.pop %v6868
        %v6870 = vmul.f32 %v6862, 1.442695
        %v6871 = vpow.pop %v6870
        %v6872 = vmul.f32 %v6863, 1.442695
        %v6873 = vpow.pop %v6872
        %v6874 = vmul.f32 %v6864, 1.442695
        %v6875 = vpow.pop %v6874
        %v6876 = vmul.f32 %v6865, 1.442695
        %v6877 = vpow.pop %v6876
        %v6878 = vmul.f32 %v6866, 1.442695
        %v6879 = vpow.pop %v6878
        %v6880 = vmul.f32 %v6867, 1.442695
        %v6881 = vpow.pop %v6880
        %v6882 = vsel %vm5515, %v6869, 0.0
        %6883 = vadd.xlane.f32.xlu0 %v6882
        %v6884 = vpop.xlane.xlu0 %6883
        %v6885 = vsel %vm5515, %v6871, 0.0
        %6886 = vadd.xlane.f32.xlu0 %v6885
        %v6887 = vpop.xlane.xlu0 %6886
        %v6888 = vsel %vm5515, %v6873, 0.0
        %6889 = vadd.xlane.f32.xlu0 %v6888
        %v6890 = vpop.xlane.xlu0 %6889
        %v6891 = vsel %vm5515, %v6875, 0.0
        %6892 = vadd.xlane.f32.xlu0 %v6891
        %v6893 = vpop.xlane.xlu0 %6892
        %v6894 = vsel %vm5515, %v6877, 0.0
        %6895 = vadd.xlane.f32.xlu0 %v6894
        %v6896 = vpop.xlane.xlu0 %6895
        %v6897 = vsel %vm5515, %v6879, 0.0
        %6898 = vadd.xlane.f32.xlu0 %v6897
        %v6899 = vpop.xlane.xlu0 %6898
        %v6900 = vsel %vm5515, %v6881, 0.0
        %6901 = vadd.xlane.f32.xlu0 %v6900
        %v6902 = vpop.xlane.xlu0 %6901
        %v6903 = vrcp.pop %v6884
        %v6904 = vrcp.pop %v6887
        %v6905 = vrcp.pop %v6890
        %v6906 = vrcp.pop %v6893
        %v6907 = vrcp.pop %v6896
        %v6908 = vrcp.pop %v6899
        %v6909 = vrcp.pop %v6902
        %v6910 = vmul.f32 %v6869, %v6903
        %v6911 = vmul.f32 %v6871, %v6904
        %v6912 = vmul.f32 %v6873, %v6905
        %v6913 = vmul.f32 %v6875, %v6906
        %v6914 = vmul.f32 %v6877, %v6907
        %v6915 = vmul.f32 %v6879, %v6908
        %v6916 = vmul.f32 %v6881, %v6909
        %v6917 = vpack.c.bf16 %v6911, %v6910
        %v6918 = vpack.c.bf16 %v6913, %v6912
        %v6919 = vpack.c.bf16 %v6915, %v6914
        %v6920 = vpack.c.bf16 %v6916, %v6916
        %v6925 = vrot.slane %v6711, 4
        %v6926 = vrot.slane %v6712, 4
        %v6927 = vsel %vm6719, %v6925, %v6926
        %v6928 = vrot.slane %v6713, 4
        %v6929 = vsel %vm6719, %v6926, %v6928
        %v6930 = vrot.slane %v6714, 4
        %v6931 = vsel %vm6719, %v6928, %v6930
        %v6936 = vsel %vm5515, %v6917, 0
        %v6939 = vsel %vm5515, %v6918, 0
        %v6942 = vsel %vm5515, %v6919, 0
        %v6945 = vsel %vm5515, %v6920, 0
        %v6948 = vsel %vm5609, %v6930, 0
        %6950 = vmatprep.subr.bf16.mxu0 0
        %6951 = vmatpush1.bf16.msra.mxu0 %v6927
        %6952 = vmatprep.subr.bf16.mxu0 0
        %6953 = vmatpush1.bf16.msra.mxu0 %v6929
        %6954 = vmatprep.subr.bf16.mxu0 0
        %6955 = vmatpush1.bf16.msra.mxu0 %v6931
        %6956 = vmatprep.subr.bf16.mxu0 0
        %6957 = vmatpush1.bf16.msra.mxu0 %v6948
        %6958 = vmatprep.subr.bf16.mxu0 0
        %6959 = vmatpush1.bf16.msra.mxu0 0
        %6960 = vmatprep.subr.bf16.mxu0 0
        %6961 = vmatpush1.bf16.msra.mxu0 0
        %6962 = vmatprep.subr.bf16.mxu0 0
        %6963 = vmatpush1.bf16.msra.mxu0 0
        %6964 = vmatprep.subr.bf16.mxu0 0
        %6965 = vmatpush1.bf16.msra.mxu0 0
        %6966 = vmatprep.subr.bf16.mxu0 0
        %6967 = vmatpush1.bf16.msra.mxu0 0
        %6968 = vmatprep.subr.bf16.mxu0 0
        %6969 = vmatpush1.bf16.msra.mxu0 0
        %6970 = vmatprep.subr.bf16.mxu0 0
        %6971 = vmatpush1.bf16.msra.mxu0 0
        %6972 = vmatprep.subr.bf16.mxu0 0
        %6973 = vmatpush1.bf16.msra.mxu0 0
        %6974 = vmatprep.subr.bf16.mxu0 0
        %6975 = vmatpush1.bf16.msra.mxu0 0
        %6976 = vmatprep.subr.bf16.mxu0 0
        %6977 = vmatpush1.bf16.msra.mxu0 0
        %6978 = vmatprep.subr.bf16.mxu0 0
        %6979 = vmatpush1.bf16.msra.mxu0 0
        %6980 = vmatprep.subr.bf16.mxu0 0
        %6981 = vmatpush1.bf16.msra.mxu0 0
        %6982 = vmatprep.mubr.bf16.mxu0 0
        %6983 = vmatmul.mubr.bf16.gmra.mrb[0].mxu0 %v6936
        %v6984 = vpop.f32.mrb[0].mxu0
        %v6985 = vadd.f32 0.0, %v6984
        %v6986 = vpop.f32.mrb[0].mxu0
        %v6987 = vpop.f32.mrb[0].mxu0
        %v6988 = vadd.f32 0.0, %v6987
        %v6989 = vpop.f32.mrb[0].mxu0
        %6990 = vmatprep.mubr.bf16.mxu0 0
        %6991 = vmatmul.mubr.bf16.gmra.mrb[0].mxu0 %v6939
        %v6992 = vpop.f32.mrb[0].mxu0
        %v6993 = vadd.f32 0.0, %v6992
        %v6994 = vpop.f32.mrb[0].mxu0
        %v6995 = vpop.f32.mrb[0].mxu0
        %v6996 = vadd.f32 0.0, %v6995
        %v6997 = vpop.f32.mrb[0].mxu0
        %6998 = vmatprep.mubr.bf16.mxu0 0
        %6999 = vmatmul.mubr.bf16.gmra.mrb[0].mxu0 %v6942
        %v7000 = vpop.f32.mrb[0].mxu0
        %v7001 = vadd.f32 0.0, %v7000
        %v7002 = vpop.f32.mrb[0].mxu0
        %v7003 = vpop.f32.mrb[0].mxu0
        %v7004 = vadd.f32 0.0, %v7003
        %v7005 = vpop.f32.mrb[0].mxu0
        %7006 = vmatprep.mubr.bf16.mxu0 0
        %7007 = vmatmul.mubr.bf16.gmra.mrb[0].mxu0 %v6945
        %v7008 = vpop.f32.mrb[0].mxu0
        %v7009 = vadd.f32 0.0, %v7008
        %v7010 = vpop.f32.mrb[0].mxu0
        %v7011 = vpop.f32.mrb[0].mxu0
        %v7012 = vpop.f32.mrb[0].mxu0
        %7013 = vdwg.mxu0
        %v7014 = vpack.c.bf16 %v6988, %v6985
        %v7015 = vpack.c.bf16 %v6996, %v6993
        %v7016 = vpack.c.bf16 %v7004, %v7001
        %v7017 = vpack.c.bf16 %v7009, %v7009
        %v7022 = vrot.slane %v7014, 4
        %v7023 = vrot.slane %v7015, 4
        %v7024 = vsel %vm6719, %v7022, %v7023
        %v7025 = vrot.slane %v7016, 4
        %v7026 = vsel %vm6719, %v7023, %v7025
        %v7027 = vrot.slane %v7017, 4
        %v7028 = vsel %vm6719, %v7025, %v7027
        %vm7033 = vcmask 130052
        %7034 = vst.msk [vmem:[#allocation3 + $0x18] sm:$0xf0] %vm7033, %v7022
        %7035 = vst.msk [vmem:[#allocation3 + $0x20] sm:$0xff] %vm5406, %v7024
        %7036 = vst.msk [vmem:[#allocation3 + $0x28] sm:$0xff] %vm5406, %v7026
        %7037 = vst.msk [vmem:[#allocation3 + $0x30] sm:$0xff] %vm5406, %v7028
        %v7038 = vld [vmem:[#allocation2 + $0x48] sm:$0xf0]
        %v7039 = vld [vmem:[#allocation2 + $0x60] sm:$0xff]
        %v7040 = vld [vmem:[#allocation2 + $0x78] sm:$0xff]
        %v7041 = vld [vmem:[#allocation2 + $0x90] sm:$0xff]
        %v7042 = vld [vmem:[#allocation2 + $0x50] sm:$0xf0]
        %v7043 = vld [vmem:[#allocation2 + $0x68] sm:$0xff]
        %v7044 = vld [vmem:[#allocation2 + $0x80] sm:$0xff]
        %v7045 = vld [vmem:[#allocation2 + $0x98] sm:$0xff]
        %v7046 = vld [vmem:[#allocation2 + $0x58] sm:$0xf0]
        %v7047 = vld [vmem:[#allocation2 + $0x70] sm:$0xff]
        %v7048 = vld [vmem:[#allocation2 + $0x88] sm:$0xff]
        %v7049 = vld [vmem:[#allocation2 + $0xa0] sm:$0xff]
        %v7054 = vrot.slane %v7038, 4
        %v7055 = vrot.slane %v7039, 4
        %v7056 = vsel %vm6719, %v7054, %v7055
        %v7057 = vrot.slane %v7040, 4
        %v7058 = vsel %vm6719, %v7055, %v7057
        %v7059 = vrot.slane %v7041, 4
        %v7060 = vsel %vm6719, %v7057, %v7059
        %7061 = vrot.lane.b32.xlu0 %v7056, 112
        %v7062 = vpop.permute.xlu0 %7061
        %7063 = vrot.lane.b32.xlu0 %v7058, 112
        %v7064 = vpop.permute.xlu0 %7063
        %7065 = vrot.lane.b32.xlu0 %v7060, 112
        %v7066 = vpop.permute.xlu0 %7065
        %7067 = vrot.lane.b32.xlu0 %v7059, 112
        %v7068 = vpop.permute.xlu0 %7067
        %v7073 = vrot.slane %v7042, 4
        %v7074 = vrot.slane %v7043, 4
        %v7075 = vsel %vm6719, %v7073, %v7074
        %v7076 = vrot.slane %v7044, 4
        %v7077 = vsel %vm6719, %v7074, %v7076
        %v7078 = vrot.slane %v7045, 4
        %v7079 = vsel %vm6719, %v7076, %v7078
        %7080 = vrot.lane.b32.xlu0 %v7075, 112
        %v7081 = vpop.permute.xlu0 %7080
        %7082 = vrot.lane.b32.xlu0 %v7077, 112
        %v7083 = vpop.permute.xlu0 %7082
        %7084 = vrot.lane.b32.xlu0 %v7079, 112
        %v7085 = vpop.permute.xlu0 %7084
        %7086 = vrot.lane.b32.xlu0 %v7078, 112
        %v7087 = vpop.permute.xlu0 %7086
        %v7089 = vsel %vm5406, %v7062, 0
        %v7092 = vsel %vm5406, %v7064, 0
        %v7095 = vsel %vm5406, %v7066, 0
        %v7098 = vsel %vm5406, %v7068, 0
        %v7101 = vsel %vm5406, %v7081, 0
        %v7104 = vsel %vm5406, %v7083, 0
        %v7107 = vsel %vm5406, %v7085, 0
        %v7110 = vsel %vm5406, %v7087, 0
        %7112 = vmatprep.subr.bf16.mxu0 0
        %7113 = vmatpush1.bf16.xpose.msra.mxu0 %v7101
        %7114 = vmatprep.subr.bf16.mxu0 0
        %7115 = vmatpush1.bf16.xpose.msra.mxu0 %v7104
        %7116 = vmatprep.subr.bf16.mxu0 0
        %7117 = vmatpush1.bf16.xpose.msra.mxu0 %v7107
        %7118 = vmatprep.subr.bf16.mxu0 0
        %7119 = vmatpush1.bf16.xpose.msra.mxu0 %v7110
        %7120 = vmatprep.subr.bf16.mxu0 0
        %7121 = vmatpush1.bf16.xpose.msra.mxu0 0
        %7122 = vmatprep.subr.bf16.mxu0 0
        %7123 = vmatpush1.bf16.xpose.msra.mxu0 0
        %7124 = vmatprep.subr.bf16.mxu0 0
        %7125 = vmatpush1.bf16.xpose.msra.mxu0 0
        %7126 = vmatprep.subr.bf16.mxu0 0
        %7127 = vmatpush1.bf16.xpose.msra.mxu0 0
        %7128 = vmatprep.subr.bf16.mxu0 0
        %7129 = vmatpush1.bf16.xpose.msra.mxu0 0
        %7130 = vmatprep.subr.bf16.mxu0 0
        %7131 = vmatpush1.bf16.xpose.msra.mxu0 0
        %7132 = vmatprep.subr.bf16.mxu0 0
        %7133 = vmatpush1.bf16.xpose.msra.mxu0 0
        %7134 = vmatprep.subr.bf16.mxu0 0
        %7135 = vmatpush1.bf16.xpose.msra.mxu0 0
        %7136 = vmatprep.subr.bf16.mxu0 0
        %7137 = vmatpush1.bf16.xpose.msra.mxu0 0
        %7138 = vmatprep.subr.bf16.mxu0 0
        %7139 = vmatpush1.bf16.xpose.msra.mxu0 0
        %7140 = vmatprep.subr.bf16.mxu0 0
        %7141 = vmatpush1.bf16.xpose.msra.mxu0 0
        %7142 = vmatprep.subr.bf16.mxu0 0
        %7143 = vmatpush1.bf16.xpose.msra.mxu0 0
        %7144 = vmatprep.mubr.bf16.mxu0 0
        %7145 = vmatmul.mubr.bf16.gmra.mrb[0].mxu0 %v7089
        %v7146 = vpop.f32.mrb[0].mxu0
        %v7147 = vadd.f32 0.0, %v7146
        %v7148 = vpop.f32.mrb[0].mxu0
        %v7149 = vpop.f32.mrb[0].mxu0
        %v7150 = vadd.f32 0.0, %v7149
        %v7151 = vpop.f32.mrb[0].mxu0
        %7152 = vmatprep.mubr.bf16.mxu0 0
        %7153 = vmatmul.mubr.bf16.gmra.mrb[0].mxu0 %v7092
        %v7154 = vpop.f32.mrb[0].mxu0
        %v7155 = vadd.f32 0.0, %v7154
        %v7156 = vpop.f32.mrb[0].mxu0
        %v7157 = vpop.f32.mrb[0].mxu0
        %v7158 = vadd.f32 0.0, %v7157
        %v7159 = vpop.f32.mrb[0].mxu0
        %7160 = vmatprep.mubr.bf16.mxu0 0
        %7161 = vmatmul.mubr.bf16.gmra.mrb[0].mxu0 %v7095
        %v7162 = vpop.f32.mrb[0].mxu0
        %v7163 = vadd.f32 0.0, %v7162
        %v7164 = vpop.f32.mrb[0].mxu0
        %v7165 = vpop.f32.mrb[0].mxu0
        %v7166 = vadd.f32 0.0, %v7165
        %v7167 = vpop.f32.mrb[0].mxu0
        %7168 = vmatprep.mubr.bf16.mxu0 0
        %7169 = vmatmul.mubr.bf16.gmra.mrb[0].mxu0 %v7098
        %v7170 = vpop.f32.mrb[0].mxu0
        %v7171 = vadd.f32 0.0, %v7170
        %v7172 = vpop.f32.mrb[0].mxu0
        %v7173 = vpop.f32.mrb[0].mxu0
        %v7174 = vpop.f32.mrb[0].mxu0
        %7175 = vdwg.mxu0
        %v7176 = vmul.f32 %v7147, 0.25
        %v7177 = vmul.f32 %v7150, 0.25
        %v7178 = vmul.f32 %v7155, 0.25
        %v7179 = vmul.f32 %v7158, 0.25
        %v7180 = vmul.f32 %v7163, 0.25
        %v7181 = vmul.f32 %v7166, 0.25
        %v7182 = vmul.f32 %v7171, 0.25
        %v7183 = vadd.f32 %v7176, %v5506
        %v7184 = vadd.f32 %v7177, %v5506
        %v7185 = vadd.f32 %v7178, %v5506
        %v7186 = vadd.f32 %v7179, %v5506
        %v7187 = vadd.f32 %v7180, %v5506
        %v7188 = vadd.f32 %v7181, %v5506
        %v7189 = vadd.f32 %v7182, %v5506
        %v7190 = vsel %vm5515, %v7183, -inf
        %7191 = vmax.xlane.f32.xlu0 %v7190
        %v7192 = vpop.xlane.xlu0 %7191
        %v7193 = vsel %vm5515, %v7184, -inf
        %7194 = vmax.xlane.f32.xlu0 %v7193
        %v7195 = vpop.xlane.xlu0 %7194
        %v7196 = vsel %vm5515, %v7185, -inf
        %7197 = vmax.xlane.f32.xlu0 %v7196
        %v7198 = vpop.xlane.xlu0 %7197
        %v7199 = vsel %vm5515, %v7186, -inf
        %7200 = vmax.xlane.f32.xlu0 %v7199
        %v7201 = vpop.xlane.xlu0 %7200
        %v7202 = vsel %vm5515, %v7187, -inf
        %7203 = vmax.xlane.f32.xlu0 %v7202
        %v7204 = vpop.xlane.xlu0 %7203
        %v7205 = vsel %vm5515, %v7188, -inf
        %7206 = vmax.xlane.f32.xlu0 %v7205
        %v7207 = vpop.xlane.xlu0 %7206
        %v7208 = vsel %vm5515, %v7189, -inf
        %7209 = vmax.xlane.f32.xlu0 %v7208
        %v7210 = vpop.xlane.xlu0 %7209
        %v7211 = vsub.f32 %v7183, %v7192
        %v7212 = vsub.f32 %v7184, %v7195
        %v7213 = vsub.f32 %v7185, %v7198
        %v7214 = vsub.f32 %v7186, %v7201
        %v7215 = vsub.f32 %v7187, %v7204
        %v7216 = vsub.f32 %v7188, %v7207
        %v7217 = vsub.f32 %v7189, %v7210
        %v7218 = vmul.f32 %v7211, 1.442695
        %v7219 = vpow.pop %v7218
        %v7220 = vmul.f32 %v7212, 1.442695
        %v7221 = vpow.pop %v7220
        %v7222 = vmul.f32 %v7213, 1.442695
        %v7223 = vpow.pop %v7222
        %v7224 = vmul.f32 %v7214, 1.442695
        %v7225 = vpow.pop %v7224
        %v7226 = vmul.f32 %v7215, 1.442695
        %v7227 = vpow.pop %v7226
        %v7228 = vmul.f32 %v7216, 1.442695
        %v7229 = vpow.pop %v7228
        %v7230 = vmul.f32 %v7217, 1.442695
        %v7231 = vpow.pop %v7230
        %v7232 = vsel %vm5515, %v7219, 0.0
        %7233 = vadd.xlane.f32.xlu0 %v7232
        %v7234 = vpop.xlane.xlu0 %7233
        %v7235 = vsel %vm5515, %v7221, 0.0
        %7236 = vadd.xlane.f32.xlu0 %v7235
        %v7237 = vpop.xlane.xlu0 %7236
        %v7238 = vsel %vm5515, %v7223, 0.0
        %7239 = vadd.xlane.f32.xlu0 %v7238
        %v7240 = vpop.xlane.xlu0 %7239
        %v7241 = vsel %vm5515, %v7225, 0.0
        %7242 = vadd.xlane.f32.xlu0 %v7241
        %v7243 = vpop.xlane.xlu0 %7242
        %v7244 = vsel %vm5515, %v7227, 0.0
        %7245 = vadd.xlane.f32.xlu0 %v7244
        %v7246 = vpop.xlane.xlu0 %7245
        %v7247 = vsel %vm5515, %v7229, 0.0
        %7248 = vadd.xlane.f32.xlu0 %v7247
        %v7249 = vpop.xlane.xlu0 %7248
        %v7250 = vsel %vm5515, %v7231, 0.0
        %7251 = vadd.xlane.f32.xlu0 %v7250
        %v7252 = vpop.xlane.xlu0 %7251
        %v7253 = vrcp.pop %v7234
        %v7254 = vrcp.pop %v7237
        %v7255 = vrcp.pop %v7240
        %v7256 = vrcp.pop %v7243
        %v7257 = vrcp.pop %v7246
        %v7258 = vrcp.pop %v7249
        %v7259 = vrcp.pop %v7252
        %v7260 = vmul.f32 %v7219, %v7253
        %v7261 = vmul.f32 %v7221, %v7254
        %v7262 = vmul.f32 %v7223, %v7255
        %v7263 = vmul.f32 %v7225, %v7256
        %v7264 = vmul.f32 %v7227, %v7257
        %v7265 = vmul.f32 %v7229, %v7258
        %v7266 = vmul.f32 %v7231, %v7259
        %v7267 = vpack.c.bf16 %v7261, %v7260
        %v7268 = vpack.c.bf16 %v7263, %v7262
        %v7269 = vpack.c.bf16 %v7265, %v7264
        %v7270 = vpack.c.bf16 %v7266, %v7266
        %v7275 = vrot.slane %v7046, 4
        %v7276 = vrot.slane %v7047, 4
        %v7277 = vsel %vm6719, %v7275, %v7276
        %v7278 = vrot.slane %v7048, 4
        %v7279 = vsel %vm6719, %v7276, %v7278
        %v7280 = vrot.slane %v7049, 4
        %v7281 = vsel %vm6719, %v7278, %v7280
        %7282 = vrot.lane.b32.xlu0 %v7277, 112
        %v7283 = vpop.permute.xlu0 %7282
        %7284 = vrot.lane.b32.xlu0 %v7279, 112
        %v7285 = vpop.permute.xlu0 %7284
        %7286 = vrot.lane.b32.xlu0 %v7281, 112
        %v7287 = vpop.permute.xlu0 %7286
        %7288 = vrot.lane.b32.xlu0 %v7280, 112
        %v7289 = vpop.permute.xlu0 %7288
        %v7294 = vsel %vm5515, %v7267, 0
        %v7297 = vsel %vm5515, %v7268, 0
        %v7300 = vsel %vm5515, %v7269, 0
        %v7303 = vsel %vm5515, %v7270, 0
        %v7306 = vsel %vm5609, %v7289, 0
        %7308 = vmatprep.subr.bf16.mxu0 0
        %7309 = vmatpush1.bf16.msra.mxu0 %v7283
        %7310 = vmatprep.subr.bf16.mxu0 0
        %7311 = vmatpush1.bf16.msra.mxu0 %v7285
        %7312 = vmatprep.subr.bf16.mxu0 0
        %7313 = vmatpush1.bf16.msra.mxu0 %v7287
        %7314 = vmatprep.subr.bf16.mxu0 0
        %7315 = vmatpush1.bf16.msra.mxu0 %v7306
        %7316 = vmatprep.subr.bf16.mxu0 0
        %7317 = vmatpush1.bf16.msra.mxu0 0
        %7318 = vmatprep.subr.bf16.mxu0 0
        %7319 = vmatpush1.bf16.msra.mxu0 0
        %7320 = vmatprep.subr.bf16.mxu0 0
        %7321 = vmatpush1.bf16.msra.mxu0 0
        %7322 = vmatprep.subr.bf16.mxu0 0
        %7323 = vmatpush1.bf16.msra.mxu0 0
        %7324 = vmatprep.subr.bf16.mxu0 0
        %7325 = vmatpush1.bf16.msra.mxu0 0
        %7326 = vmatprep.subr.bf16.mxu0 0
        %7327 = vmatpush1.bf16.msra.mxu0 0
        %7328 = vmatprep.subr.bf16.mxu0 0
        %7329 = vmatpush1.bf16.msra.mxu0 0
        %7330 = vmatprep.subr.bf16.mxu0 0
        %7331 = vmatpush1.bf16.msra.mxu0 0
        %7332 = vmatprep.subr.bf16.mxu0 0
        %7333 = vmatpush1.bf16.msra.mxu0 0
        %7334 = vmatprep.subr.bf16.mxu0 0
        %7335 = vmatpush1.bf16.msra.mxu0 0
        %7336 = vmatprep.subr.bf16.mxu0 0
        %7337 = vmatpush1.bf16.msra.mxu0 0
        %7338 = vmatprep.subr.bf16.mxu0 0
        %7339 = vmatpush1.bf16.msra.mxu0 0
        %7340 = vmatprep.mubr.bf16.mxu0 0
        %7341 = vmatmul.mubr.bf16.gmra.mrb[0].mxu0 %v7294
        %v7342 = vpop.f32.mrb[0].mxu0
        %v7343 = vadd.f32 0.0, %v7342
        %v7344 = vpop.f32.mrb[0].mxu0
        %v7345 = vpop.f32.mrb[0].mxu0
        %v7346 = vadd.f32 0.0, %v7345
        %v7347 = vpop.f32.mrb[0].mxu0
        %7348 = vmatprep.mubr.bf16.mxu0 0
        %7349 = vmatmul.mubr.bf16.gmra.mrb[0].mxu0 %v7297
        %v7350 = vpop.f32.mrb[0].mxu0
        %v7351 = vadd.f32 0.0, %v7350
        %v7352 = vpop.f32.mrb[0].mxu0
        %v7353 = vpop.f32.mrb[0].mxu0
        %v7354 = vadd.f32 0.0, %v7353
        %v7355 = vpop.f32.mrb[0].mxu0
        %7356 = vmatprep.mubr.bf16.mxu0 0
        %7357 = vmatmul.mubr.bf16.gmra.mrb[0].mxu0 %v7300
        %v7358 = vpop.f32.mrb[0].mxu0
        %v7359 = vadd.f32 0.0, %v7358
        %v7360 = vpop.f32.mrb[0].mxu0
        %v7361 = vpop.f32.mrb[0].mxu0
        %v7362 = vadd.f32 0.0, %v7361
        %v7363 = vpop.f32.mrb[0].mxu0
        %7364 = vmatprep.mubr.bf16.mxu0 0
        %7365 = vmatmul.mubr.bf16.gmra.mrb[0].mxu0 %v7303
        %v7366 = vpop.f32.mrb[0].mxu0
        %v7367 = vadd.f32 0.0, %v7366
        %v7368 = vpop.f32.mrb[0].mxu0
        %v7369 = vpop.f32.mrb[0].mxu0
        %v7370 = vpop.f32.mrb[0].mxu0
        %7371 = vdwg.mxu0
        %v7372 = vpack.c.bf16 %v7346, %v7343
        %v7373 = vpack.c.bf16 %v7354, %v7351
        %v7374 = vpack.c.bf16 %v7362, %v7359
        %v7375 = vpack.c.bf16 %v7367, %v7367
        %v7380 = vrot.slane %v7372, 4
        %v7381 = vrot.slane %v7373, 4
        %v7382 = vsel %vm6719, %v7380, %v7381
        %v7383 = vrot.slane %v7374, 4
        %v7384 = vsel %vm6719, %v7381, %v7383
        %v7385 = vrot.slane %v7375, 4
        %v7386 = vsel %vm6719, %v7383, %v7385
        %7387 = vrot.lane.b32.xlu0 %v7380, 16
        %v7388 = vpop.permute.xlu0 %7387
        %7389 = vrot.lane.b32.xlu0 %v7382, 16
        %v7390 = vpop.permute.xlu0 %7389
        %7391 = vrot.lane.b32.xlu0 %v7384, 16
        %v7392 = vpop.permute.xlu0 %7391
        %7393 = vrot.lane.b32.xlu0 %v7386, 16
        %v7394 = vpop.permute.xlu0 %7393
        %vm7399 = vcmask 261252
        %7400 = vst.msk [vmem:[#allocation3 + $0x18] sm:$0xf0] %vm7399, %v7388
        %7401 = vst.msk [vmem:[#allocation3 + $0x20] sm:$0xff] %vm6019, %v7390
        %7402 = vst.msk [vmem:[#allocation3 + $0x28] sm:$0xff] %vm6019, %v7392
        %7403 = vst.msk [vmem:[#allocation3 + $0x30] sm:$0xff] %vm6019, %v7394
        %v7404 = vld [vmem:[#allocation2 + $0x48] sm:$0xf0]
        %v7405 = vld [vmem:[#allocation2 + $0x60] sm:$0xff]
        %v7406 = vld [vmem:[#allocation2 + $0x78] sm:$0xff]
        %v7407 = vld [vmem:[#allocation2 + $0x90] sm:$0xff]
        %v7408 = vld [vmem:[#allocation2 + $0x50] sm:$0xf0]
        %v7409 = vld [vmem:[#allocation2 + $0x68] sm:$0xff]
        %v7410 = vld [vmem:[#allocation2 + $0x80] sm:$0xff]
        %v7411 = vld [vmem:[#allocation2 + $0x98] sm:$0xff]
        %v7412 = vld [vmem:[#allocation2 + $0x58] sm:$0xf0]
        %v7413 = vld [vmem:[#allocation2 + $0x70] sm:$0xff]
        %v7414 = vld [vmem:[#allocation2 + $0x88] sm:$0xff]
        %v7415 = vld [vmem:[#allocation2 + $0xa0] sm:$0xff]
        %v7420 = vrot.slane %v7404, 4
        %v7421 = vrot.slane %v7405, 4
        %v7422 = vsel %vm6719, %v7420, %v7421
        %v7423 = vrot.slane %v7406, 4
        %v7424 = vsel %vm6719, %v7421, %v7423
        %v7425 = vrot.slane %v7407, 4
        %v7426 = vsel %vm6719, %v7423, %v7425
        %7427 = vrot.lane.b32.xlu0 %v7422, 96
        %v7428 = vpop.permute.xlu0 %7427
        %7429 = vrot.lane.b32.xlu0 %v7424, 96
        %v7430 = vpop.permute.xlu0 %7429
        %7431 = vrot.lane.b32.xlu0 %v7426, 96
        %v7432 = vpop.permute.xlu0 %7431
        %7433 = vrot.lane.b32.xlu0 %v7425, 96
        %v7434 = vpop.permute.xlu0 %7433
        %v7439 = vrot.slane %v7408, 4
        %v7440 = vrot.slane %v7409, 4
        %v7441 = vsel %vm6719, %v7439, %v7440
        %v7442 = vrot.slane %v7410, 4
        %v7443 = vsel %vm6719, %v7440, %v7442
        %v7444 = vrot.slane %v7411, 4
        %v7445 = vsel %vm6719, %v7442, %v7444
        %7446 = vrot.lane.b32.xlu0 %v7441, 96
        %v7447 = vpop.permute.xlu0 %7446
        %7448 = vrot.lane.b32.xlu0 %v7443, 96
        %v7449 = vpop.permute.xlu0 %7448
        %7450 = vrot.lane.b32.xlu0 %v7445, 96
        %v7451 = vpop.permute.xlu0 %7450
        %7452 = vrot.lane.b32.xlu0 %v7444, 96
        %v7453 = vpop.permute.xlu0 %7452
        %v7455 = vsel %vm5406, %v7428, 0
        %v7458 = vsel %vm5406, %v7430, 0
        %v7461 = vsel %vm5406, %v7432, 0
        %v7464 = vsel %vm5406, %v7434, 0
        %v7467 = vsel %vm5406, %v7447, 0
        %v7470 = vsel %vm5406, %v7449, 0
        %v7473 = vsel %vm5406, %v7451, 0
        %v7476 = vsel %vm5406, %v7453, 0
        %7478 = vmatprep.subr.bf16.mxu0 0
        %7479 = vmatpush1.bf16.xpose.msra.mxu0 %v7467
        %7480 = vmatprep.subr.bf16.mxu0 0
        %7481 = vmatpush1.bf16.xpose.msra.mxu0 %v7470
        %7482 = vmatprep.subr.bf16.mxu0 0
        %7483 = vmatpush1.bf16.xpose.msra.mxu0 %v7473
        %7484 = vmatprep.subr.bf16.mxu0 0
        %7485 = vmatpush1.bf16.xpose.msra.mxu0 %v7476
        %7486 = vmatprep.subr.bf16.mxu0 0
        %7487 = vmatpush1.bf16.xpose.msra.mxu0 0
        %7488 = vmatprep.subr.bf16.mxu0 0
        %7489 = vmatpush1.bf16.xpose.msra.mxu0 0
        %7490 = vmatprep.subr.bf16.mxu0 0
        %7491 = vmatpush1.bf16.xpose.msra.mxu0 0
        %7492 = vmatprep.subr.bf16.mxu0 0
        %7493 = vmatpush1.bf16.xpose.msra.mxu0 0
        %7494 = vmatprep.subr.bf16.mxu0 0
        %7495 = vmatpush1.bf16.xpose.msra.mxu0 0
        %7496 = vmatprep.subr.bf16.mxu0 0
        %7497 = vmatpush1.bf16.xpose.msra.mxu0 0
        %7498 = vmatprep.subr.bf16.mxu0 0
        %7499 = vmatpush1.bf16.xpose.msra.mxu0 0
        %7500 = vmatprep.subr.bf16.mxu0 0
        %7501 = vmatpush1.bf16.xpose.msra.mxu0 0
        %7502 = vmatprep.subr.bf16.mxu0 0
        %7503 = vmatpush1.bf16.xpose.msra.mxu0 0
        %7504 = vmatprep.subr.bf16.mxu0 0
        %7505 = vmatpush1.bf16.xpose.msra.mxu0 0
        %7506 = vmatprep.subr.bf16.mxu0 0
        %7507 = vmatpush1.bf16.xpose.msra.mxu0 0
        %7508 = vmatprep.subr.bf16.mxu0 0
        %7509 = vmatpush1.bf16.xpose.msra.mxu0 0
        %7510 = vmatprep.mubr.bf16.mxu0 0
        %7511 = vmatmul.mubr.bf16.gmra.mrb[0].mxu0 %v7455
        %v7512 = vpop.f32.mrb[0].mxu0
        %v7513 = vadd.f32 0.0, %v7512
        %v7514 = vpop.f32.mrb[0].mxu0
        %v7515 = vpop.f32.mrb[0].mxu0
        %v7516 = vadd.f32 0.0, %v7515
        %v7517 = vpop.f32.mrb[0].mxu0
        %7518 = vmatprep.mubr.bf16.mxu0 0
        %7519 = vmatmul.mubr.bf16.gmra.mrb[0].mxu0 %v7458
        %v7520 = vpop.f32.mrb[0].mxu0
        %v7521 = vadd.f32 0.0, %v7520
        %v7522 = vpop.f32.mrb[0].mxu0
        %v7523 = vpop.f32.mrb[0].mxu0
        %v7524 = vadd.f32 0.0, %v7523
        %v7525 = vpop.f32.mrb[0].mxu0
        %7526 = vmatprep.mubr.bf16.mxu0 0
        %7527 = vmatmul.mubr.bf16.gmra.mrb[0].mxu0 %v7461
        %v7528 = vpop.f32.mrb[0].mxu0
        %v7529 = vadd.f32 0.0, %v7528
        %v7530 = vpop.f32.mrb[0].mxu0
        %v7531 = vpop.f32.mrb[0].mxu0
        %v7532 = vadd.f32 0.0, %v7531
        %v7533 = vpop.f32.mrb[0].mxu0
        %7534 = vmatprep.mubr.bf16.mxu0 0
        %7535 = vmatmul.mubr.bf16.gmra.mrb[0].mxu0 %v7464
        %v7536 = vpop.f32.mrb[0].mxu0
        %v7537 = vadd.f32 0.0, %v7536
        %v7538 = vpop.f32.mrb[0].mxu0
        %v7539 = vpop.f32.mrb[0].mxu0
        %v7540 = vpop.f32.mrb[0].mxu0
        %7541 = vdwg.mxu0
        %v7542 = vmul.f32 %v7513, 0.25
        %v7543 = vmul.f32 %v7516, 0.25
        %v7544 = vmul.f32 %v7521, 0.25
        %v7545 = vmul.f32 %v7524, 0.25
        %v7546 = vmul.f32 %v7529, 0.25
        %v7547 = vmul.f32 %v7532, 0.25
        %v7548 = vmul.f32 %v7537, 0.25
        %v7549 = vadd.f32 %v7542, %v5506
        %v7550 = vadd.f32 %v7543, %v5506
        %v7551 = vadd.f32 %v7544, %v5506
        %v7552 = vadd.f32 %v7545, %v5506
        %v7553 = vadd.f32 %v7546, %v5506
        %v7554 = vadd.f32 %v7547, %v5506
        %v7555 = vadd.f32 %v7548, %v5506
        %v7556 = vsel %vm5515, %v7549, -inf
        %7557 = vmax.xlane.f32.xlu0 %v7556
        %v7558 = vpop.xlane.xlu0 %7557
        %v7559 = vsel %vm5515, %v7550, -inf
        %7560 = vmax.xlane.f32.xlu0 %v7559
        %v7561 = vpop.xlane.xlu0 %7560
        %v7562 = vsel %vm5515, %v7551, -inf
        %7563 = vmax.xlane.f32.xlu0 %v7562
        %v7564 = vpop.xlane.xlu0 %7563
        %v7565 = vsel %vm5515, %v7552, -inf
        %7566 = vmax.xlane.f32.xlu0 %v7565
        %v7567 = vpop.xlane.xlu0 %7566
        %v7568 = vsel %vm5515, %v7553, -inf
        %7569 = vmax.xlane.f32.xlu0 %v7568
        %v7570 = vpop.xlane.xlu0 %7569
        %v7571 = vsel %vm5515, %v7554, -inf
        %7572 = vmax.xlane.f32.xlu0 %v7571
        %v7573 = vpop.xlane.xlu0 %7572
        %v7574 = vsel %vm5515, %v7555, -inf
        %7575 = vmax.xlane.f32.xlu0 %v7574
        %v7576 = vpop.xlane.xlu0 %7575
        %v7577 = vsub.f32 %v7549, %v7558
        %v7578 = vsub.f32 %v7550, %v7561
        %v7579 = vsub.f32 %v7551, %v7564
        %v7580 = vsub.f32 %v7552, %v7567
        %v7581 = vsub.f32 %v7553, %v7570
        %v7582 = vsub.f32 %v7554, %v7573
        %v7583 = vsub.f32 %v7555, %v7576
        %v7584 = vmul.f32 %v7577, 1.442695
        %v7585 = vpow.pop %v7584
        %v7586 = vmul.f32 %v7578, 1.442695
        %v7587 = vpow.pop %v7586
        %v7588 = vmul.f32 %v7579, 1.442695
        %v7589 = vpow.pop %v7588
        %v7590 = vmul.f32 %v7580, 1.442695
        %v7591 = vpow.pop %v7590
        %v7592 = vmul.f32 %v7581, 1.442695
        %v7593 = vpow.pop %v7592
        %v7594 = vmul.f32 %v7582, 1.442695
        %v7595 = vpow.pop %v7594
        %v7596 = vmul.f32 %v7583, 1.442695
        %v7597 = vpow.pop %v7596
        %v7598 = vsel %vm5515, %v7585, 0.0
        %7599 = vadd.xlane.f32.xlu0 %v7598
        %v7600 = vpop.xlane.xlu0 %7599
        %v7601 = vsel %vm5515, %v7587, 0.0
        %7602 = vadd.xlane.f32.xlu0 %v7601
        %v7603 = vpop.xlane.xlu0 %7602
        %v7604 = vsel %vm5515, %v7589, 0.0
        %7605 = vadd.xlane.f32.xlu0 %v7604
        %v7606 = vpop.xlane.xlu0 %7605
        %v7607 = vsel %vm5515, %v7591, 0.0
        %7608 = vadd.xlane.f32.xlu0 %v7607
        %v7609 = vpop.xlane.xlu0 %7608
        %v7610 = vsel %vm5515, %v7593, 0.0
        %7611 = vadd.xlane.f32.xlu0 %v7610
        %v7612 = vpop.xlane.xlu0 %7611
        %v7613 = vsel %vm5515, %v7595, 0.0
        %7614 = vadd.xlane.f32.xlu0 %v7613
        %v7615 = vpop.xlane.xlu0 %7614
        %v7616 = vsel %vm5515, %v7597, 0.0
        %7617 = vadd.xlane.f32.xlu0 %v7616
        %v7618 = vpop.xlane.xlu0 %7617
        %v7619 = vrcp.pop %v7600
        %v7620 = vrcp.pop %v7603
        %v7621 = vrcp.pop %v7606
        %v7622 = vrcp.pop %v7609
        %v7623 = vrcp.pop %v7612
        %v7624 = vrcp.pop %v7615
        %v7625 = vrcp.pop %v7618
        %v7626 = vmul.f32 %v7585, %v7619
        %v7627 = vmul.f32 %v7587, %v7620
        %v7628 = vmul.f32 %v7589, %v7621
        %v7629 = vmul.f32 %v7591, %v7622
        %v7630 = vmul.f32 %v7593, %v7623
        %v7631 = vmul.f32 %v7595, %v7624
        %v7632 = vmul.f32 %v7597, %v7625
        %v7633 = vpack.c.bf16 %v7627, %v7626
        %v7634 = vpack.c.bf16 %v7629, %v7628
        %v7635 = vpack.c.bf16 %v7631, %v7630
        %v7636 = vpack.c.bf16 %v7632, %v7632
        %v7641 = vrot.slane %v7412, 4
        %v7642 = vrot.slane %v7413, 4
        %v7643 = vsel %vm6719, %v7641, %v7642
        %v7644 = vrot.slane %v7414, 4
        %v7645 = vsel %vm6719, %v7642, %v7644
        %v7646 = vrot.slane %v7415, 4
        %v7647 = vsel %vm6719, %v7644, %v7646
        %7648 = vrot.lane.b32.xlu0 %v7643, 96
        %v7649 = vpop.permute.xlu0 %7648
        %7650 = vrot.lane.b32.xlu0 %v7645, 96
        %v7651 = vpop.permute.xlu0 %7650
        %7652 = vrot.lane.b32.xlu0 %v7647, 96
        %v7653 = vpop.permute.xlu0 %7652
        %7654 = vrot.lane.b32.xlu0 %v7646, 96
        %v7655 = vpop.permute.xlu0 %7654
        %v7660 = vsel %vm5515, %v7633, 0
        %v7663 = vsel %vm5515, %v7634, 0
        %v7666 = vsel %vm5515, %v7635, 0
        %v7669 = vsel %vm5515, %v7636, 0
        %v7672 = vsel %vm5609, %v7655, 0
        %7674 = vmatprep.subr.bf16.mxu0 0
        %7675 = vmatpush1.bf16.msra.mxu0 %v7649
        %7676 = vmatprep.subr.bf16.mxu0 0
        %7677 = vmatpush1.bf16.msra.mxu0 %v7651
        %7678 = vmatprep.subr.bf16.mxu0 0
        %7679 = vmatpush1.bf16.msra.mxu0 %v7653
        %7680 = vmatprep.subr.bf16.mxu0 0
        %7681 = vmatpush1.bf16.msra.mxu0 %v7672
        %7682 = vmatprep.subr.bf16.mxu0 0
        %7683 = vmatpush1.bf16.msra.mxu0 0
        %7684 = vmatprep.subr.bf16.mxu0 0
        %7685 = vmatpush1.bf16.msra.mxu0 0
        %7686 = vmatprep.subr.bf16.mxu0 0
        %7687 = vmatpush1.bf16.msra.mxu0 0
        %7688 = vmatprep.subr.bf16.mxu0 0
        %7689 = vmatpush1.bf16.msra.mxu0 0
        %7690 = vmatprep.subr.bf16.mxu0 0
        %7691 = vmatpush1.bf16.msra.mxu0 0
        %7692 = vmatprep.subr.bf16.mxu0 0
        %7693 = vmatpush1.bf16.msra.mxu0 0
        %7694 = vmatprep.subr.bf16.mxu0 0
        %7695 = vmatpush1.bf16.msra.mxu0 0
        %7696 = vmatprep.subr.bf16.mxu0 0
        %7697 = vmatpush1.bf16.msra.mxu0 0
        %7698 = vmatprep.subr.bf16.mxu0 0
        %7699 = vmatpush1.bf16.msra.mxu0 0
        %7700 = vmatprep.subr.bf16.mxu0 0
        %7701 = vmatpush1.bf16.msra.mxu0 0
        %7702 = vmatprep.subr.bf16.mxu0 0
        %7703 = vmatpush1.bf16.msra.mxu0 0
        %7704 = vmatprep.subr.bf16.mxu0 0
        %7705 = vmatpush1.bf16.msra.mxu0 0
        %7706 = vmatprep.mubr.bf16.mxu0 0
        %7707 = vmatmul.mubr.bf16.gmra.mrb[0].mxu0 %v7660
        %v7708 = vpop.f32.mrb[0].mxu0
        %v7709 = vadd.f32 0.0, %v7708
        %v7710 = vpop.f32.mrb[0].mxu0
        %v7711 = vpop.f32.mrb[0].mxu0
        %v7712 = vadd.f32 0.0, %v7711
        %v7713 = vpop.f32.mrb[0].mxu0
        %7714 = vmatprep.mubr.bf16.mxu0 0
        %7715 = vmatmul.mubr.bf16.gmra.mrb[0].mxu0 %v7663
        %v7716 = vpop.f32.mrb[0].mxu0
        %v7717 = vadd.f32 0.0, %v7716
        %v7718 = vpop.f32.mrb[0].mxu0
        %v7719 = vpop.f32.mrb[0].mxu0
        %v7720 = vadd.f32 0.0, %v7719
        %v7721 = vpop.f32.mrb[0].mxu0
        %7722 = vmatprep.mubr.bf16.mxu0 0
        %7723 = vmatmul.mubr.bf16.gmra.mrb[0].mxu0 %v7666
        %v7724 = vpop.f32.mrb[0].mxu0
        %v7725 = vadd.f32 0.0, %v7724
        %v7726 = vpop.f32.mrb[0].mxu0
        %v7727 = vpop.f32.mrb[0].mxu0
        %v7728 = vadd.f32 0.0, %v7727
        %v7729 = vpop.f32.mrb[0].mxu0
        %7730 = vmatprep.mubr.bf16.mxu0 0
        %7731 = vmatmul.mubr.bf16.gmra.mrb[0].mxu0 %v7669
        %v7732 = vpop.f32.mrb[0].mxu0
        %v7733 = vadd.f32 0.0, %v7732
        %v7734 = vpop.f32.mrb[0].mxu0
        %v7735 = vpop.f32.mrb[0].mxu0
        %v7736 = vpop.f32.mrb[0].mxu0
        %7737 = vdwg.mxu0
        %v7738 = vpack.c.bf16 %v7712, %v7709
        %v7739 = vpack.c.bf16 %v7720, %v7717
        %v7740 = vpack.c.bf16 %v7728, %v7725
        %v7741 = vpack.c.bf16 %v7733, %v7733
        %v7746 = vrot.slane %v7738, 4
        %v7747 = vrot.slane %v7739, 4
        %v7748 = vsel %vm6719, %v7746, %v7747
        %v7749 = vrot.slane %v7740, 4
        %v7750 = vsel %vm6719, %v7747, %v7749
        %v7751 = vrot.slane %v7741, 4
        %v7752 = vsel %vm6719, %v7749, %v7751
        %7753 = vrot.lane.b32.xlu0 %v7746, 32
        %v7754 = vpop.permute.xlu0 %7753
        %7755 = vrot.lane.b32.xlu0 %v7748, 32
        %v7756 = vpop.permute.xlu0 %7755
        %7757 = vrot.lane.b32.xlu0 %v7750, 32
        %v7758 = vpop.permute.xlu0 %7757
        %7759 = vrot.lane.b32.xlu0 %v7752, 32
        %v7760 = vpop.permute.xlu0 %7759
        %vm7765 = vcmask 392452
        %7766 = vst.msk [vmem:[#allocation3 + $0x18] sm:$0xf0] %vm7765, %v7754
        %7767 = vst.msk [vmem:[#allocation3 + $0x20] sm:$0xff] %vm6358, %v7756
        %7768 = vst.msk [vmem:[#allocation3 + $0x28] sm:$0xff] %vm6358, %v7758
        %7769 = vst.msk [vmem:[#allocation3 + $0x30] sm:$0xff] %vm6358, %v7760
        %v7770 = vld [vmem:[#allocation2 + $0x48] sm:$0xf0]
        %v7771 = vld [vmem:[#allocation2 + $0x60] sm:$0xff]
        %v7772 = vld [vmem:[#allocation2 + $0x78] sm:$0xff]
        %v7773 = vld [vmem:[#allocation2 + $0x90] sm:$0xff]
        %v7774 = vld [vmem:[#allocation2 + $0x50] sm:$0xf0]
        %v7775 = vld [vmem:[#allocation2 + $0x68] sm:$0xff]
        %v7776 = vld [vmem:[#allocation2 + $0x80] sm:$0xff]
        %v7777 = vld [vmem:[#allocation2 + $0x98] sm:$0xff]
        %v7778 = vld [vmem:[#allocation2 + $0x58] sm:$0xf0]
        %v7779 = vld [vmem:[#allocation2 + $0x70] sm:$0xff]
        %v7780 = vld [vmem:[#allocation2 + $0x88] sm:$0xff]
        %v7781 = vld [vmem:[#allocation2 + $0xa0] sm:$0xff]
        %v7786 = vrot.slane %v7770, 4
        %v7787 = vrot.slane %v7771, 4
        %v7788 = vsel %vm6719, %v7786, %v7787
        %v7789 = vrot.slane %v7772, 4
        %v7790 = vsel %vm6719, %v7787, %v7789
        %v7791 = vrot.slane %v7773, 4
        %v7792 = vsel %vm6719, %v7789, %v7791
        %7793 = vrot.lane.b32.xlu0 %v7788, 80
        %v7794 = vpop.permute.xlu0 %7793
        %7795 = vrot.lane.b32.xlu0 %v7790, 80
        %v7796 = vpop.permute.xlu0 %7795
        %7797 = vrot.lane.b32.xlu0 %v7792, 80
        %v7798 = vpop.permute.xlu0 %7797
        %7799 = vrot.lane.b32.xlu0 %v7791, 80
        %v7800 = vpop.permute.xlu0 %7799
        %v7805 = vrot.slane %v7774, 4
        %v7806 = vrot.slane %v7775, 4
        %v7807 = vsel %vm6719, %v7805, %v7806
        %v7808 = vrot.slane %v7776, 4
        %v7809 = vsel %vm6719, %v7806, %v7808
        %v7810 = vrot.slane %v7777, 4
        %v7811 = vsel %vm6719, %v7808, %v7810
        %7812 = vrot.lane.b32.xlu0 %v7807, 80
        %v7813 = vpop.permute.xlu0 %7812
        %7814 = vrot.lane.b32.xlu0 %v7809, 80
        %v7815 = vpop.permute.xlu0 %7814
        %7816 = vrot.lane.b32.xlu0 %v7811, 80
        %v7817 = vpop.permute.xlu0 %7816
        %7818 = vrot.lane.b32.xlu0 %v7810, 80
        %v7819 = vpop.permute.xlu0 %7818
        %v7821 = vsel %vm5406, %v7794, 0
        %v7824 = vsel %vm5406, %v7796, 0
        %v7827 = vsel %vm5406, %v7798, 0
        %v7830 = vsel %vm5406, %v7800, 0
        %v7833 = vsel %vm5406, %v7813, 0
        %v7836 = vsel %vm5406, %v7815, 0
        %v7839 = vsel %vm5406, %v7817, 0
        %v7842 = vsel %vm5406, %v7819, 0
        %7844 = vmatprep.subr.bf16.mxu0 0
        %7845 = vmatpush1.bf16.xpose.msra.mxu0 %v7833
        %7846 = vmatprep.subr.bf16.mxu0 0
        %7847 = vmatpush1.bf16.xpose.msra.mxu0 %v7836
        %7848 = vmatprep.subr.bf16.mxu0 0
        %7849 = vmatpush1.bf16.xpose.msra.mxu0 %v7839
        %7850 = vmatprep.subr.bf16.mxu0 0
        %7851 = vmatpush1.bf16.xpose.msra.mxu0 %v7842
        %7852 = vmatprep.subr.bf16.mxu0 0
        %7853 = vmatpush1.bf16.xpose.msra.mxu0 0
        %7854 = vmatprep.subr.bf16.mxu0 0
        %7855 = vmatpush1.bf16.xpose.msra.mxu0 0
        %7856 = vmatprep.subr.bf16.mxu0 0
        %7857 = vmatpush1.bf16.xpose.msra.mxu0 0
        %7858 = vmatprep.subr.bf16.mxu0 0
        %7859 = vmatpush1.bf16.xpose.msra.mxu0 0
        %7860 = vmatprep.subr.bf16.mxu0 0
        %7861 = vmatpush1.bf16.xpose.msra.mxu0 0
        %7862 = vmatprep.subr.bf16.mxu0 0
        %7863 = vmatpush1.bf16.xpose.msra.mxu0 0
        %7864 = vmatprep.subr.bf16.mxu0 0
        %7865 = vmatpush1.bf16.xpose.msra.mxu0 0
        %7866 = vmatprep.subr.bf16.mxu0 0
        %7867 = vmatpush1.bf16.xpose.msra.mxu0 0
        %7868 = vmatprep.subr.bf16.mxu0 0
        %7869 = vmatpush1.bf16.xpose.msra.mxu0 0
        %7870 = vmatprep.subr.bf16.mxu0 0
        %7871 = vmatpush1.bf16.xpose.msra.mxu0 0
        %7872 = vmatprep.subr.bf16.mxu0 0
        %7873 = vmatpush1.bf16.xpose.msra.mxu0 0
        %7874 = vmatprep.subr.bf16.mxu0 0
        %7875 = vmatpush1.bf16.xpose.msra.mxu0 0
        %7876 = vmatprep.mubr.bf16.mxu0 0
        %7877 = vmatmul.mubr.bf16.gmra.mrb[0].mxu0 %v7821
        %v7878 = vpop.f32.mrb[0].mxu0
        %v7879 = vadd.f32 0.0, %v7878
        %v7880 = vpop.f32.mrb[0].mxu0
        %v7881 = vpop.f32.mrb[0].mxu0
        %v7882 = vadd.f32 0.0, %v7881
        %v7883 = vpop.f32.mrb[0].mxu0
        %7884 = vmatprep.mubr.bf16.mxu0 0
        %7885 = vmatmul.mubr.bf16.gmra.mrb[0].mxu0 %v7824
        %v7886 = vpop.f32.mrb[0].mxu0
        %v7887 = vadd.f32 0.0, %v7886
        %v7888 = vpop.f32.mrb[0].mxu0
        %v7889 = vpop.f32.mrb[0].mxu0
        %v7890 = vadd.f32 0.0, %v7889
        %v7891 = vpop.f32.mrb[0].mxu0
        %7892 = vmatprep.mubr.bf16.mxu0 0
        %7893 = vmatmul.mubr.bf16.gmra.mrb[0].mxu0 %v7827
        %v7894 = vpop.f32.mrb[0].mxu0
        %v7895 = vadd.f32 0.0, %v7894
        %v7896 = vpop.f32.mrb[0].mxu0
        %v7897 = vpop.f32.mrb[0].mxu0
        %v7898 = vadd.f32 0.0, %v7897
        %v7899 = vpop.f32.mrb[0].mxu0
        %7900 = vmatprep.mubr.bf16.mxu0 0
        %7901 = vmatmul.mubr.bf16.gmra.mrb[0].mxu0 %v7830
        %v7902 = vpop.f32.mrb[0].mxu0
        %v7903 = vadd.f32 0.0, %v7902
        %v7904 = vpop.f32.mrb[0].mxu0
        %v7905 = vpop.f32.mrb[0].mxu0
        %v7906 = vpop.f32.mrb[0].mxu0
        %7907 = vdwg.mxu0
        %v7908 = vmul.f32 %v7879, 0.25
        %v7909 = vmul.f32 %v7882, 0.25
        %v7910 = vmul.f32 %v7887, 0.25
        %v7911 = vmul.f32 %v7890, 0.25
        %v7912 = vmul.f32 %v7895, 0.25
        %v7913 = vmul.f32 %v7898, 0.25
        %v7914 = vmul.f32 %v7903, 0.25
        %v7915 = vadd.f32 %v7908, %v5506
        %v7916 = vadd.f32 %v7909, %v5506
        %v7917 = vadd.f32 %v7910, %v5506
        %v7918 = vadd.f32 %v7911, %v5506
        %v7919 = vadd.f32 %v7912, %v5506
        %v7920 = vadd.f32 %v7913, %v5506
        %v7921 = vadd.f32 %v7914, %v5506
        %v7922 = vsel %vm5515, %v7915, -inf
        %7923 = vmax.xlane.f32.xlu0 %v7922
        %v7924 = vpop.xlane.xlu0 %7923
        %v7925 = vsel %vm5515, %v7916, -inf
        %7926 = vmax.xlane.f32.xlu0 %v7925
        %v7927 = vpop.xlane.xlu0 %7926
        %v7928 = vsel %vm5515, %v7917, -inf
        %7929 = vmax.xlane.f32.xlu0 %v7928
        %v7930 = vpop.xlane.xlu0 %7929
        %v7931 = vsel %vm5515, %v7918, -inf
        %7932 = vmax.xlane.f32.xlu0 %v7931
        %v7933 = vpop.xlane.xlu0 %7932
        %v7934 = vsel %vm5515, %v7919, -inf
        %7935 = vmax.xlane.f32.xlu0 %v7934
        %v7936 = vpop.xlane.xlu0 %7935
        %v7937 = vsel %vm5515, %v7920, -inf
        %7938 = vmax.xlane.f32.xlu0 %v7937
        %v7939 = vpop.xlane.xlu0 %7938
        %v7940 = vsel %vm5515, %v7921, -inf
        %7941 = vmax.xlane.f32.xlu0 %v7940
        %v7942 = vpop.xlane.xlu0 %7941
        %v7943 = vsub.f32 %v7915, %v7924
        %v7944 = vsub.f32 %v7916, %v7927
        %v7945 = vsub.f32 %v7917, %v7930
        %v7946 = vsub.f32 %v7918, %v7933
        %v7947 = vsub.f32 %v7919, %v7936
        %v7948 = vsub.f32 %v7920, %v7939
        %v7949 = vsub.f32 %v7921, %v7942
        %v7950 = vmul.f32 %v7943, 1.442695
        %v7951 = vpow.pop %v7950
        %v7952 = vmul.f32 %v7944, 1.442695
        %v7953 = vpow.pop %v7952
        %v7954 = vmul.f32 %v7945, 1.442695
        %v7955 = vpow.pop %v7954
        %v7956 = vmul.f32 %v7946, 1.442695
        %v7957 = vpow.pop %v7956
        %v7958 = vmul.f32 %v7947, 1.442695
        %v7959 = vpow.pop %v7958
        %v7960 = vmul.f32 %v7948, 1.442695
        %v7961 = vpow.pop %v7960
        %v7962 = vmul.f32 %v7949, 1.442695
        %v7963 = vpow.pop %v7962
        %v7964 = vsel %vm5515, %v7951, 0.0
        %7965 = vadd.xlane.f32.xlu0 %v7964
        %v7966 = vpop.xlane.xlu0 %7965
        %v7967 = vsel %vm5515, %v7953, 0.0
        %7968 = vadd.xlane.f32.xlu0 %v7967
        %v7969 = vpop.xlane.xlu0 %7968
        %v7970 = vsel %vm5515, %v7955, 0.0
        %7971 = vadd.xlane.f32.xlu0 %v7970
        %v7972 = vpop.xlane.xlu0 %7971
        %v7973 = vsel %vm5515, %v7957, 0.0
        %7974 = vadd.xlane.f32.xlu0 %v7973
        %v7975 = vpop.xlane.xlu0 %7974
        %v7976 = vsel %vm5515, %v7959, 0.0
        %7977 = vadd.xlane.f32.xlu0 %v7976
        %v7978 = vpop.xlane.xlu0 %7977
        %v7979 = vsel %vm5515, %v7961, 0.0
        %7980 = vadd.xlane.f32.xlu0 %v7979
        %v7981 = vpop.xlane.xlu0 %7980
        %v7982 = vsel %vm5515, %v7963, 0.0
        %7983 = vadd.xlane.f32.xlu0 %v7982
        %v7984 = vpop.xlane.xlu0 %7983
        %v7985 = vrcp.pop %v7966
        %v7986 = vrcp.pop %v7969
        %v7987 = vrcp.pop %v7972
        %v7988 = vrcp.pop %v7975
        %v7989 = vrcp.pop %v7978
        %v7990 = vrcp.pop %v7981
        %v7991 = vrcp.pop %v7984
        %v7992 = vmul.f32 %v7951, %v7985
        %v7993 = vmul.f32 %v7953, %v7986
        %v7994 = vmul.f32 %v7955, %v7987
        %v7995 = vmul.f32 %v7957, %v7988
        %v7996 = vmul.f32 %v7959, %v7989
        %v7997 = vmul.f32 %v7961, %v7990
        %v7998 = vmul.f32 %v7963, %v7991
        %v7999 = vpack.c.bf16 %v7993, %v7992
        %v8000 = vpack.c.bf16 %v7995, %v7994
        %v8001 = vpack.c.bf16 %v7997, %v7996
        %v8002 = vpack.c.bf16 %v7998, %v7998
        %v8007 = vrot.slane %v7778, 4
        %v8008 = vrot.slane %v7779, 4
        %v8009 = vsel %vm6719, %v8007, %v8008
        %v8010 = vrot.slane %v7780, 4
        %v8011 = vsel %vm6719, %v8008, %v8010
        %v8012 = vrot.slane %v7781, 4
        %v8013 = vsel %vm6719, %v8010, %v8012
        %8014 = vrot.lane.b32.xlu0 %v8009, 80
        %v8015 = vpop.permute.xlu0 %8014
        %8016 = vrot.lane.b32.xlu0 %v8011, 80
        %v8017 = vpop.permute.xlu0 %8016
        %8018 = vrot.lane.b32.xlu0 %v8013, 80
        %v8019 = vpop.permute.xlu0 %8018
        %8020 = vrot.lane.b32.xlu0 %v8012, 80
        %v8021 = vpop.permute.xlu0 %8020
        %v8026 = vsel %vm5515, %v7999, 0
        %v8029 = vsel %vm5515, %v8000, 0
        %v8032 = vsel %vm5515, %v8001, 0
        %v8035 = vsel %vm5515, %v8002, 0
        %v8038 = vsel %vm5609, %v8021, 0
        %8040 = vmatprep.subr.bf16.mxu0 0
        %8041 = vmatpush1.bf16.msra.mxu0 %v8015
        %8042 = vmatprep.subr.bf16.mxu0 0
        %8043 = vmatpush1.bf16.msra.mxu0 %v8017
        %8044 = vmatprep.subr.bf16.mxu0 0
        %8045 = vmatpush1.bf16.msra.mxu0 %v8019
        %8046 = vmatprep.subr.bf16.mxu0 0
        %8047 = vmatpush1.bf16.msra.mxu0 %v8038
        %8048 = vmatprep.subr.bf16.mxu0 0
        %8049 = vmatpush1.bf16.msra.mxu0 0
        %8050 = vmatprep.subr.bf16.mxu0 0
        %8051 = vmatpush1.bf16.msra.mxu0 0
        %8052 = vmatprep.subr.bf16.mxu0 0
        %8053 = vmatpush1.bf16.msra.mxu0 0
        %8054 = vmatprep.subr.bf16.mxu0 0
        %8055 = vmatpush1.bf16.msra.mxu0 0
        %8056 = vmatprep.subr.bf16.mxu0 0
        %8057 = vmatpush1.bf16.msra.mxu0 0
        %8058 = vmatprep.subr.bf16.mxu0 0
        %8059 = vmatpush1.bf16.msra.mxu0 0
        %8060 = vmatprep.subr.bf16.mxu0 0
        %8061 = vmatpush1.bf16.msra.mxu0 0
        %8062 = vmatprep.subr.bf16.mxu0 0
        %8063 = vmatpush1.bf16.msra.mxu0 0
        %8064 = vmatprep.subr.bf16.mxu0 0
        %8065 = vmatpush1.bf16.msra.mxu0 0
        %8066 = vmatprep.subr.bf16.mxu0 0
        %8067 = vmatpush1.bf16.msra.mxu0 0
        %8068 = vmatprep.subr.bf16.mxu0 0
        %8069 = vmatpush1.bf16.msra.mxu0 0
        %8070 = vmatprep.subr.bf16.mxu0 0
        %8071 = vmatpush1.bf16.msra.mxu0 0
        %8072 = vmatprep.mubr.bf16.mxu0 0
        %8073 = vmatmul.mubr.bf16.gmra.mrb[0].mxu0 %v8026
        %v8074 = vpop.f32.mrb[0].mxu0
        %v8075 = vadd.f32 0.0, %v8074
        %v8076 = vpop.f32.mrb[0].mxu0
        %v8077 = vpop.f32.mrb[0].mxu0
        %v8078 = vadd.f32 0.0, %v8077
        %v8079 = vpop.f32.mrb[0].mxu0
        %8080 = vmatprep.mubr.bf16.mxu0 0
        %8081 = vmatmul.mubr.bf16.gmra.mrb[0].mxu0 %v8029
        %v8082 = vpop.f32.mrb[0].mxu0
        %v8083 = vadd.f32 0.0, %v8082
        %v8084 = vpop.f32.mrb[0].mxu0
        %v8085 = vpop.f32.mrb[0].mxu0
        %v8086 = vadd.f32 0.0, %v8085
        %v8087 = vpop.f32.mrb[0].mxu0
        %8088 = vmatprep.mubr.bf16.mxu0 0
        %8089 = vmatmul.mubr.bf16.gmra.mrb[0].mxu0 %v8032
        %v8090 = vpop.f32.mrb[0].mxu0
        %v8091 = vadd.f32 0.0, %v8090
        %v8092 = vpop.f32.mrb[0].mxu0
        %v8093 = vpop.f32.mrb[0].mxu0
        %v8094 = vadd.f32 0.0, %v8093
        %v8095 = vpop.f32.mrb[0].mxu0
        %8096 = vmatprep.mubr.bf16.mxu0 0
        %8097 = vmatmul.mubr.bf16.gmra.mrb[0].mxu0 %v8035
        %v8098 = vpop.f32.mrb[0].mxu0
        %v8099 = vadd.f32 0.0, %v8098
        %v8100 = vpop.f32.mrb[0].mxu0
        %v8101 = vpop.f32.mrb[0].mxu0
        %v8102 = vpop.f32.mrb[0].mxu0
        %8103 = vdwg.mxu0
        %v8104 = vpack.c.bf16 %v8078, %v8075
        %v8105 = vpack.c.bf16 %v8086, %v8083
        %v8106 = vpack.c.bf16 %v8094, %v8091
        %v8107 = vpack.c.bf16 %v8099, %v8099
        %v8112 = vrot.slane %v8104, 4
        %v8113 = vrot.slane %v8105, 4
        %v8114 = vsel %vm6719, %v8112, %v8113
        %v8115 = vrot.slane %v8106, 4
        %v8116 = vsel %vm6719, %v8113, %v8115
        %v8117 = vrot.slane %v8107, 4
        %v8118 = vsel %vm6719, %v8115, %v8117
        %8119 = vrot.lane.b32.xlu0 %v8112, 48
        %v8120 = vpop.permute.xlu0 %8119
        %8121 = vrot.lane.b32.xlu0 %v8114, 48
        %v8122 = vpop.permute.xlu0 %8121
        %8123 = vrot.lane.b32.xlu0 %v8116, 48
        %v8124 = vpop.permute.xlu0 %8123
        %8125 = vrot.lane.b32.xlu0 %v8118, 48
        %v8126 = vpop.permute.xlu0 %8125
        %vm8131 = vcmask 523652
        %8132 = vst.msk [vmem:[#allocation3 + $0x18] sm:$0xf0] %vm8131, %v8120
        %8133 = vst.msk [vmem:[#allocation3 + $0x20] sm:$0xff] %vm6697, %v8122
        %8134 = vst.msk [vmem:[#allocation3 + $0x28] sm:$0xff] %vm6697, %v8124
        %8135 = vst.msk [vmem:[#allocation3 + $0x30] sm:$0xff] %vm6697, %v8126
        %v8136 = vld [vmem:[#allocation3] sm:$0xff]
        %v8137 = vld [vmem:[#allocation3 + $0x8] sm:$0xff]
        %v8138 = vld [vmem:[#allocation3 + $0x10] sm:$0xff]
        %v8139 = vld [vmem:[#allocation3 + $0x18] sm:$0xff]
        %v8140 = vld [vmem:[#allocation3 + $0x20] sm:$0xff]
        %v8141 = vld [vmem:[#allocation3 + $0x28] sm:$0xff]
        %v8142 = vld [vmem:[#allocation3 + $0x30] sm:$0xff]
        %v8143 = vld [vmem:[%s820] sm:$0xf]
        %v8144 = vld [vmem:[%s820 + $0x4] sm:$0xf]
        %v8145 = vld [vmem:[%s820 + $0x8] sm:$0xf]
        %v8146 = vld [vmem:[%s820 + $0xc] sm:$0xf]
        %v8147 = vld [vmem:[%s820 + $0x10] sm:$0xf]
        %v8148 = vld [vmem:[%s820 + $0x14] sm:$0xf]
        %v8149 = vld [vmem:[%s820 + $0x18] sm:$0xf]
        %v8150 = vld [vmem:[%s820 + $0x1c] sm:$0xf]
        %v8151 = vld [vmem:[%s823] sm:$0x1]
        %v8153 = vlaneseq
        %v8154 = vshrl.u32 %v8153, 7
        %v8155 = vsub.s32 0, %v8154
        %v8156 = vrot.slane %v8151, %v8155
        %v8166 = vunpack.c.l.b16 %v8143
        %v8167 = vunpack.c.l.b16 %v8144
        %v8168 = vunpack.c.l.b16 %v8145
        %v8169 = vunpack.c.l.b16 %v8146
        %v8170 = vunpack.c.l.b16 %v8147
        %v8171 = vunpack.c.l.b16 %v8148
        %v8172 = vunpack.c.l.b16 %v8149
        %v8173 = vunpack.c.l.b16 %v8150
        %v8174 = vpack.c.b16 %v8167, %v8166
        %v8175 = vpack.c.b16 %v8169, %v8168
        %v8176 = vpack.c.b16 %v8171, %v8170
        %v8177 = vpack.c.b16 %v8173, %v8172
        %vm8182 = vcmask 523264
        %v8184 = vsel %vm8182, %v8136, 0
        %v8187 = vsel %vm8182, %v8137, 0
        %v8190 = vsel %vm8182, %v8138, 0
        %v8193 = vsel %vm8182, %v8139, 0
        %v8196 = vsel %vm8182, %v8140, 0
        %v8199 = vsel %vm8182, %v8141, 0
        %v8202 = vsel %vm8182, %v8142, 0
        %8204 = vmatprep.subr.bf16.mxu0 0
        %8205 = vmatpush1.bf16.msra.mxu0 %v8174
        %8206 = vmatprep.subr.bf16.mxu0 0
        %8207 = vmatpush1.bf16.msra.mxu0 %v8175
        %8208 = vmatprep.subr.bf16.mxu0 0
        %8209 = vmatpush1.bf16.msra.mxu0 %v8176
        %8210 = vmatprep.subr.bf16.mxu0 0
        %8211 = vmatpush1.bf16.msra.mxu0 %v8177
        %8212 = vmatprep.subr.bf16.mxu0 0
        %8213 = vmatpush1.bf16.msra.mxu0 0
        %8214 = vmatprep.subr.bf16.mxu0 0
        %8215 = vmatpush1.bf16.msra.mxu0 0
        %8216 = vmatprep.subr.bf16.mxu0 0
        %8217 = vmatpush1.bf16.msra.mxu0 0
        %8218 = vmatprep.subr.bf16.mxu0 0
        %8219 = vmatpush1.bf16.msra.mxu0 0
        %8220 = vmatprep.subr.bf16.mxu0 0
        %8221 = vmatpush1.bf16.msra.mxu0 0
        %8222 = vmatprep.subr.bf16.mxu0 0
        %8223 = vmatpush1.bf16.msra.mxu0 0
        %8224 = vmatprep.subr.bf16.mxu0 0
        %8225 = vmatpush1.bf16.msra.mxu0 0
        %8226 = vmatprep.subr.bf16.mxu0 0
        %8227 = vmatpush1.bf16.msra.mxu0 0
        %8228 = vmatprep.subr.bf16.mxu0 0
        %8229 = vmatpush1.bf16.msra.mxu0 0
        %8230 = vmatprep.subr.bf16.mxu0 0
        %8231 = vmatpush1.bf16.msra.mxu0 0
        %8232 = vmatprep.subr.bf16.mxu0 0
        %8233 = vmatpush1.bf16.msra.mxu0 0
        %8234 = vmatprep.subr.bf16.mxu0 0
        %8235 = vmatpush1.bf16.msra.mxu0 0
        %8236 = vmatprep.mubr.bf16.mxu0 0
        %8237 = vmatmul.mubr.bf16.gmra.mrb[0].mxu0 %v8184
        %v8238 = vpop.f32.mrb[0].mxu0
        %v8239 = vadd.f32 %v8156, %v8238
        %v8240 = vpop.f32.mrb[0].mxu0
        %v8241 = vpop.f32.mrb[0].mxu0
        %v8242 = vadd.f32 %v8156, %v8241
        %v8243 = vpop.f32.mrb[0].mxu0
        %8244 = vmatprep.mubr.bf16.mxu0 0
        %8245 = vmatmul.mubr.bf16.gmra.mrb[0].mxu0 %v8187
        %v8246 = vpop.f32.mrb[0].mxu0
        %v8247 = vadd.f32 %v8156, %v8246
        %v8248 = vpop.f32.mrb[0].mxu0
        %v8249 = vpop.f32.mrb[0].mxu0
        %v8250 = vadd.f32 %v8156, %v8249
        %v8251 = vpop.f32.mrb[0].mxu0
        %8252 = vmatprep.mubr.bf16.mxu0 0
        %8253 = vmatmul.mubr.bf16.gmra.mrb[0].mxu0 %v8190
        %v8254 = vpop.f32.mrb[0].mxu0
        %v8255 = vadd.f32 %v8156, %v8254
        %v8256 = vpop.f32.mrb[0].mxu0
        %v8257 = vpop.f32.mrb[0].mxu0
        %v8258 = vadd.f32 %v8156, %v8257
        %v8259 = vpop.f32.mrb[0].mxu0
        %8260 = vmatprep.mubr.bf16.mxu0 0
        %8261 = vmatmul.mubr.bf16.gmra.mrb[0].mxu0 %v8193
        %v8262 = vpop.f32.mrb[0].mxu0
        %v8263 = vadd.f32 %v8156, %v8262
        %v8264 = vpop.f32.mrb[0].mxu0
        %v8265 = vpop.f32.mrb[0].mxu0
        %v8266 = vadd.f32 %v8156, %v8265
        %v8267 = vpop.f32.mrb[0].mxu0
        %8268 = vmatprep.mubr.bf16.mxu0 0
        %8269 = vmatmul.mubr.bf16.gmra.mrb[0].mxu0 %v8196
        %v8270 = vpop.f32.mrb[0].mxu0
        %v8271 = vadd.f32 %v8156, %v8270
        %v8272 = vpop.f32.mrb[0].mxu0
        %v8273 = vpop.f32.mrb[0].mxu0
        %v8274 = vadd.f32 %v8156, %v8273
        %v8275 = vpop.f32.mrb[0].mxu0
        %8276 = vmatprep.mubr.bf16.mxu0 0
        %8277 = vmatmul.mubr.bf16.gmra.mrb[0].mxu0 %v8199
        %v8278 = vpop.f32.mrb[0].mxu0
        %v8279 = vadd.f32 %v8156, %v8278
        %v8280 = vpop.f32.mrb[0].mxu0
        %v8281 = vpop.f32.mrb[0].mxu0
        %v8282 = vadd.f32 %v8156, %v8281
        %v8283 = vpop.f32.mrb[0].mxu0
        %8284 = vmatprep.mubr.bf16.mxu0 0
        %8285 = vmatmul.mubr.bf16.gmra.mrb[0].mxu0 %v8202
        %v8286 = vpop.f32.mrb[0].mxu0
        %v8287 = vadd.f32 %v8156, %v8286
        %v8288 = vpop.f32.mrb[0].mxu0
        %v8289 = vpop.f32.mrb[0].mxu0
        %v8290 = vadd.f32 %v8156, %v8289
        %v8291 = vpop.f32.mrb[0].mxu0
        %8292 = vdwg.mxu0
        %v8293 = vadd.f32 %v4723, %v8239
        %v8294 = vadd.f32 %v4724, %v8242
        %v8295 = vadd.f32 %v4725, %v8247
        %v8296 = vadd.f32 %v4726, %v8250
        %v8297 = vadd.f32 %v4727, %v8255
        %v8298 = vadd.f32 %v4728, %v8258
        %v8299 = vadd.f32 %v4729, %v8263
        %v8300 = vadd.f32 %v4730, %v8266
        %v8301 = vadd.f32 %v4731, %v8271
        %v8302 = vadd.f32 %v4732, %v8274
        %v8303 = vadd.f32 %v4733, %v8279
        %v8304 = vadd.f32 %v4734, %v8282
        %v8305 = vadd.f32 %v4735, %v8287
        %v8306 = vadd.f32 %v4736, %v8290
        %v8307 = vld [vmem:[%s826] sm:$0x1]
        %v8308 = vld [vmem:[%s829] sm:$0x1]
        %8309 = vadd.xlane.f32.xlu0 %v8293
        %v8310 = vpop.xlane.xlu0 %8309
        %8311 = vadd.xlane.f32.xlu0 %v8294
        %v8312 = vpop.xlane.xlu0 %8311
        %8313 = vadd.xlane.f32.xlu0 %v8295
        %v8314 = vpop.xlane.xlu0 %8313
        %8315 = vadd.xlane.f32.xlu0 %v8296
        %v8316 = vpop.xlane.xlu0 %8315
        %8317 = vadd.xlane.f32.xlu0 %v8297
        %v8318 = vpop.xlane.xlu0 %8317
        %8319 = vadd.xlane.f32.xlu0 %v8298
        %v8320 = vpop.xlane.xlu0 %8319
        %8321 = vadd.xlane.f32.xlu0 %v8299
        %v8322 = vpop.xlane.xlu0 %8321
        %8323 = vadd.xlane.f32.xlu0 %v8300
        %v8324 = vpop.xlane.xlu0 %8323
        %8325 = vadd.xlane.f32.xlu0 %v8301
        %v8326 = vpop.xlane.xlu0 %8325
        %8327 = vadd.xlane.f32.xlu0 %v8302
        %v8328 = vpop.xlane.xlu0 %8327
        %8329 = vadd.xlane.f32.xlu0 %v8303
        %v8330 = vpop.xlane.xlu0 %8329
        %8331 = vadd.xlane.f32.xlu0 %v8304
        %v8332 = vpop.xlane.xlu0 %8331
        %8333 = vadd.xlane.f32.xlu0 %v8305
        %v8334 = vpop.xlane.xlu0 %8333
        %8335 = vadd.xlane.f32.xlu0 %v8306
        %v8336 = vpop.xlane.xlu0 %8335
        %v8337 = vmul.f32 %v8310, 0.015625
        %v8338 = vmul.f32 %v8312, 0.015625
        %v8339 = vmul.f32 %v8314, 0.015625
        %v8340 = vmul.f32 %v8316, 0.015625
        %v8341 = vmul.f32 %v8318, 0.015625
        %v8342 = vmul.f32 %v8320, 0.015625
        %v8343 = vmul.f32 %v8322, 0.015625
        %v8344 = vmul.f32 %v8324, 0.015625
        %v8345 = vmul.f32 %v8326, 0.015625
        %v8346 = vmul.f32 %v8328, 0.015625
        %v8347 = vmul.f32 %v8330, 0.015625
        %v8348 = vmul.f32 %v8332, 0.015625
        %v8349 = vmul.f32 %v8334, 0.015625
        %v8350 = vmul.f32 %v8336, 0.015625
        %v8351 = vmul.f32 %v8293, %v8293
        %v8352 = vmul.f32 %v8294, %v8294
        %v8353 = vmul.f32 %v8295, %v8295
        %v8354 = vmul.f32 %v8296, %v8296
        %v8355 = vmul.f32 %v8297, %v8297
        %v8356 = vmul.f32 %v8298, %v8298
        %v8357 = vmul.f32 %v8299, %v8299
        %v8358 = vmul.f32 %v8300, %v8300
        %v8359 = vmul.f32 %v8301, %v8301
        %v8360 = vmul.f32 %v8302, %v8302
        %v8361 = vmul.f32 %v8303, %v8303
        %v8362 = vmul.f32 %v8304, %v8304
        %v8363 = vmul.f32 %v8305, %v8305
        %v8364 = vmul.f32 %v8306, %v8306
        %8365 = vadd.xlane.f32.xlu0 %v8351
        %v8366 = vpop.xlane.xlu0 %8365
        %8367 = vadd.xlane.f32.xlu0 %v8352
        %v8368 = vpop.xlane.xlu0 %8367
        %8369 = vadd.xlane.f32.xlu0 %v8353
        %v8370 = vpop.xlane.xlu0 %8369
        %8371 = vadd.xlane.f32.xlu0 %v8354
        %v8372 = vpop.xlane.xlu0 %8371
        %8373 = vadd.xlane.f32.xlu0 %v8355
        %v8374 = vpop.xlane.xlu0 %8373
        %8375 = vadd.xlane.f32.xlu0 %v8356
        %v8376 = vpop.xlane.xlu0 %8375
        %8377 = vadd.xlane.f32.xlu0 %v8357
        %v8378 = vpop.xlane.xlu0 %8377
        %8379 = vadd.xlane.f32.xlu0 %v8358
        %v8380 = vpop.xlane.xlu0 %8379
        %8381 = vadd.xlane.f32.xlu0 %v8359
        %v8382 = vpop.xlane.xlu0 %8381
        %8383 = vadd.xlane.f32.xlu0 %v8360
        %v8384 = vpop.xlane.xlu0 %8383
        %8385 = vadd.xlane.f32.xlu0 %v8361
        %v8386 = vpop.xlane.xlu0 %8385
        %8387 = vadd.xlane.f32.xlu0 %v8362
        %v8388 = vpop.xlane.xlu0 %8387
        %8389 = vadd.xlane.f32.xlu0 %v8363
        %v8390 = vpop.xlane.xlu0 %8389
        %8391 = vadd.xlane.f32.xlu0 %v8364
        %v8392 = vpop.xlane.xlu0 %8391
        %v8393 = vmul.f32 %v8366, 0.015625
        %v8394 = vmul.f32 %v8368, 0.015625
        %v8395 = vmul.f32 %v8370, 0.015625
        %v8396 = vmul.f32 %v8372, 0.015625
        %v8397 = vmul.f32 %v8374, 0.015625
        %v8398 = vmul.f32 %v8376, 0.015625
        %v8399 = vmul.f32 %v8378, 0.015625
        %v8400 = vmul.f32 %v8380, 0.015625
        %v8401 = vmul.f32 %v8382, 0.015625
        %v8402 = vmul.f32 %v8384, 0.015625
        %v8403 = vmul.f32 %v8386, 0.015625
        %v8404 = vmul.f32 %v8388, 0.015625
        %v8405 = vmul.f32 %v8390, 0.015625
        %v8406 = vmul.f32 %v8392, 0.015625
        %v8407 = vmul.f32 %v8337, %v8337
        %v8408 = vmul.f32 %v8338, %v8338
        %v8409 = vmul.f32 %v8339, %v8339
        %v8410 = vmul.f32 %v8340, %v8340
        %v8411 = vmul.f32 %v8341, %v8341
        %v8412 = vmul.f32 %v8342, %v8342
        %v8413 = vmul.f32 %v8343, %v8343
        %v8414 = vmul.f32 %v8344, %v8344
        %v8415 = vmul.f32 %v8345, %v8345
        %v8416 = vmul.f32 %v8346, %v8346
        %v8417 = vmul.f32 %v8347, %v8347
        %v8418 = vmul.f32 %v8348, %v8348
        %v8419 = vmul.f32 %v8349, %v8349
        %v8420 = vmul.f32 %v8350, %v8350
        %v8421 = vsub.f32 %v8393, %v8407
        %v8422 = vsub.f32 %v8394, %v8408
        %v8423 = vsub.f32 %v8395, %v8409
        %v8424 = vsub.f32 %v8396, %v8410
        %v8425 = vsub.f32 %v8397, %v8411
        %v8426 = vsub.f32 %v8398, %v8412
        %v8427 = vsub.f32 %v8399, %v8413
        %v8428 = vsub.f32 %v8400, %v8414
        %v8429 = vsub.f32 %v8401, %v8415
        %v8430 = vsub.f32 %v8402, %v8416
        %v8431 = vsub.f32 %v8403, %v8417
        %v8432 = vsub.f32 %v8404, %v8418
        %v8433 = vsub.f32 %v8405, %v8419
        %v8434 = vsub.f32 %v8406, %v8420
        %v8435 = vmax.f32 %v8421, 0.0
        %v8436 = vmax.f32 %v8422, 0.0
        %v8437 = vmax.f32 %v8423, 0.0
        %v8438 = vmax.f32 %v8424, 0.0
        %v8439 = vmax.f32 %v8425, 0.0
        %v8440 = vmax.f32 %v8426, 0.0
        %v8441 = vmax.f32 %v8427, 0.0
        %v8442 = vmax.f32 %v8428, 0.0
        %v8443 = vmax.f32 %v8429, 0.0
        %v8444 = vmax.f32 %v8430, 0.0
        %v8445 = vmax.f32 %v8431, 0.0
        %v8446 = vmax.f32 %v8432, 0.0
        %v8447 = vmax.f32 %v8433, 0.0
        %v8448 = vmax.f32 %v8434, 0.0
        %v8449 = vsub.f32 %v8293, %v8337
        %v8450 = vsub.f32 %v8294, %v8338
        %v8451 = vsub.f32 %v8295, %v8339
        %v8452 = vsub.f32 %v8296, %v8340
        %v8453 = vsub.f32 %v8297, %v8341
        %v8454 = vsub.f32 %v8298, %v8342
        %v8455 = vsub.f32 %v8299, %v8343
        %v8456 = vsub.f32 %v8300, %v8344
        %v8457 = vsub.f32 %v8301, %v8345
        %v8458 = vsub.f32 %v8302, %v8346
        %v8459 = vsub.f32 %v8303, %v8347
        %v8460 = vsub.f32 %v8304, %v8348
        %v8461 = vsub.f32 %v8305, %v8349
        %v8462 = vsub.f32 %v8306, %v8350
        %v8463 = vadd.f32 %v8435, 1e-05
        %v8464 = vadd.f32 %v8436, 1e-05
        %v8465 = vadd.f32 %v8437, 1e-05
        %v8466 = vadd.f32 %v8438, 1e-05
        %v8467 = vadd.f32 %v8439, 1e-05
        %v8468 = vadd.f32 %v8440, 1e-05
        %v8469 = vadd.f32 %v8441, 1e-05
        %v8470 = vadd.f32 %v8442, 1e-05
        %v8471 = vadd.f32 %v8443, 1e-05
        %v8472 = vadd.f32 %v8444, 1e-05
        %v8473 = vadd.f32 %v8445, 1e-05
        %v8474 = vadd.f32 %v8446, 1e-05
        %v8475 = vadd.f32 %v8447, 1e-05
        %v8476 = vadd.f32 %v8448, 1e-05
        %v8477 = vrsqrt.pop %v8463
        %v8478 = vrsqrt.pop %v8464
        %v8479 = vrsqrt.pop %v8465
        %v8480 = vrsqrt.pop %v8466
        %v8481 = vrsqrt.pop %v8467
        %v8482 = vrsqrt.pop %v8468
        %v8483 = vrsqrt.pop %v8469
        %v8484 = vrsqrt.pop %v8470
        %v8485 = vrsqrt.pop %v8471
        %v8486 = vrsqrt.pop %v8472
        %v8487 = vrsqrt.pop %v8473
        %v8488 = vrsqrt.pop %v8474
        %v8489 = vrsqrt.pop %v8475
        %v8490 = vrsqrt.pop %v8476
        %v8491 = vmul.f32 %v8449, %v8477
        %v8492 = vmul.f32 %v8450, %v8478
        %v8493 = vmul.f32 %v8451, %v8479
        %v8494 = vmul.f32 %v8452, %v8480
        %v8495 = vmul.f32 %v8453, %v8481
        %v8496 = vmul.f32 %v8454, %v8482
        %v8497 = vmul.f32 %v8455, %v8483
        %v8498 = vmul.f32 %v8456, %v8484
        %v8499 = vmul.f32 %v8457, %v8485
        %v8500 = vmul.f32 %v8458, %v8486
        %v8501 = vmul.f32 %v8459, %v8487
        %v8502 = vmul.f32 %v8460, %v8488
        %v8503 = vmul.f32 %v8461, %v8489
        %v8504 = vmul.f32 %v8462, %v8490
        %v8506 = vlaneseq
        %v8507 = vshrl.u32 %v8506, 7
        %v8508 = vsub.s32 0, %v8507
        %v8509 = vrot.slane %v8307, %v8508
        %v8511 = vmul.f32 %v8491, %v8509
        %v8512 = vmul.f32 %v8492, %v8509
        %v8513 = vmul.f32 %v8493, %v8509
        %v8514 = vmul.f32 %v8494, %v8509
        %v8515 = vmul.f32 %v8495, %v8509
        %v8516 = vmul.f32 %v8496, %v8509
        %v8517 = vmul.f32 %v8497, %v8509
        %v8518 = vmul.f32 %v8498, %v8509
        %v8519 = vmul.f32 %v8499, %v8509
        %v8520 = vmul.f32 %v8500, %v8509
        %v8521 = vmul.f32 %v8501, %v8509
        %v8522 = vmul.f32 %v8502, %v8509
        %v8523 = vmul.f32 %v8503, %v8509
        %v8524 = vmul.f32 %v8504, %v8509
        %v8526 = vlaneseq
        %v8527 = vshrl.u32 %v8526, 7
        %v8528 = vsub.s32 0, %v8527
        %v8529 = vrot.slane %v8308, %v8528
        %v8531 = vadd.f32 %v8511, %v8529
        %v8532 = vadd.f32 %v8512, %v8529
        %v8533 = vadd.f32 %v8513, %v8529
        %v8534 = vadd.f32 %v8514, %v8529
        %v8535 = vadd.f32 %v8515, %v8529
        %v8536 = vadd.f32 %v8516, %v8529
        %v8537 = vadd.f32 %v8517, %v8529
        %v8538 = vadd.f32 %v8518, %v8529
        %v8539 = vadd.f32 %v8519, %v8529
        %v8540 = vadd.f32 %v8520, %v8529
        %v8541 = vadd.f32 %v8521, %v8529
        %v8542 = vadd.f32 %v8522, %v8529
        %v8543 = vadd.f32 %v8523, %v8529
        %v8544 = vadd.f32 %v8524, %v8529
        %v8545 = vpack.c.bf16 %v8532, %v8531
        %v8546 = vpack.c.bf16 %v8534, %v8533
        %v8547 = vpack.c.bf16 %v8536, %v8535
        %v8548 = vpack.c.bf16 %v8538, %v8537
        %v8549 = vpack.c.bf16 %v8540, %v8539
        %v8550 = vpack.c.bf16 %v8542, %v8541
        %v8551 = vpack.c.bf16 %v8544, %v8543
        %v8552 = vld [vmem:[%s834] sm:$0xff]
        %v8553 = vld [vmem:[%s834 + $0x8] sm:$0xff]
        %v8554 = vld [vmem:[%s834 + $0x10] sm:$0xff]
        %v8555 = vld [vmem:[%s834 + $0x18] sm:$0xff]
        %v8556 = vld [vmem:[%s834 + $0x20] sm:$0xff]
        %v8557 = vld [vmem:[%s834 + $0x28] sm:$0xff]
        %v8558 = vld [vmem:[%s834 + $0x30] sm:$0xff]
        %v8559 = vld [vmem:[%s834 + $0x38] sm:$0xff]
        %v8560 = vld [vmem:[%s834 + $0x40] sm:$0xff]
        %v8561 = vld [vmem:[%s834 + $0x48] sm:$0xff]
        %v8562 = vld [vmem:[%s834 + $0x50] sm:$0xff]
        %v8563 = vld [vmem:[%s834 + $0x58] sm:$0xff]
        %v8564 = vld [vmem:[%s834 + $0x60] sm:$0xff]
        %v8565 = vld [vmem:[%s834 + $0x68] sm:$0xff]
        %v8566 = vld [vmem:[%s834 + $0x70] sm:$0xff]
        %v8567 = vld [vmem:[%s834 + $0x78] sm:$0xff]
        %v8568 = vld [vmem:[%s838] sm:$0x3]
        %v8570 = vlaneseq
        %v8571 = vshrl.u32 %v8570, 7
        %v8572 = vsub.s32 0, %v8571
        %v8573 = vrot.slane %v8568, %v8572
        %v8574 = vlaneseq
        %v8575 = vshrl.u32 %v8574, 7
        %v8576 = vsub.s32 1, %v8575
        %v8577 = vrot.slane %v8568, %v8576
        %v8596 = vunpack.c.l.b16 %v8552
        %v8597 = vunpack.c.h.b16 %v8552
        %v8598 = vunpack.c.l.b16 %v8553
        %v8599 = vunpack.c.h.b16 %v8553
        %v8600 = vunpack.c.l.b16 %v8554
        %v8601 = vunpack.c.h.b16 %v8554
        %v8602 = vunpack.c.l.b16 %v8555
        %v8603 = vunpack.c.h.b16 %v8555
        %v8604 = vunpack.c.l.b16 %v8556
        %v8605 = vunpack.c.h.b16 %v8556
        %v8606 = vunpack.c.l.b16 %v8557
        %v8607 = vunpack.c.h.b16 %v8557
        %v8608 = vunpack.c.l.b16 %v8558
        %v8609 = vunpack.c.h.b16 %v8558
        %v8610 = vunpack.c.l.b16 %v8559
        %v8611 = vunpack.c.h.b16 %v8559
        %v8612 = vunpack.c.l.b16 %v8560
        %v8613 = vunpack.c.h.b16 %v8560
        %v8614 = vunpack.c.l.b16 %v8561
        %v8615 = vunpack.c.h.b16 %v8561
        %v8616 = vunpack.c.l.b16 %v8562
        %v8617 = vunpack.c.h.b16 %v8562
        %v8618 = vunpack.c.l.b16 %v8563
        %v8619 = vunpack.c.h.b16 %v8563
        %v8620 = vunpack.c.l.b16 %v8564
        %v8621 = vunpack.c.h.b16 %v8564
        %v8622 = vunpack.c.l.b16 %v8565
        %v8623 = vunpack.c.h.b16 %v8565
        %v8624 = vunpack.c.l.b16 %v8566
        %v8625 = vunpack.c.h.b16 %v8566
        %v8626 = vunpack.c.l.b16 %v8567
        %v8627 = vunpack.c.h.b16 %v8567
        %v8628 = vpack.c.b16 %v8598, %v8596
        %v8629 = vpack.c.b16 %v8599, %v8597
        %v8630 = vpack.c.b16 %v8602, %v8600
        %v8631 = vpack.c.b16 %v8603, %v8601
        %v8632 = vpack.c.b16 %v8606, %v8604
        %v8633 = vpack.c.b16 %v8607, %v8605
        %v8634 = vpack.c.b16 %v8610, %v8608
        %v8635 = vpack.c.b16 %v8611, %v8609
        %v8636 = vpack.c.b16 %v8614, %v8612
        %v8637 = vpack.c.b16 %v8615, %v8613
        %v8638 = vpack.c.b16 %v8618, %v8616
        %v8639 = vpack.c.b16 %v8619, %v8617
        %v8640 = vpack.c.b16 %v8622, %v8620
        %v8641 = vpack.c.b16 %v8623, %v8621
        %v8642 = vpack.c.b16 %v8626, %v8624
        %v8643 = vpack.c.b16 %v8627, %v8625
        %8660 = vmatprep.subr.bf16.mxu0 %v8629
        %8661 = vmatpush1.bf16.msra.mxu0 %v8628
        %8662 = vmatprep.subr.bf16.mxu0 %v8631
        %8663 = vmatpush1.bf16.msra.mxu0 %v8630
        %8664 = vmatprep.subr.bf16.mxu0 %v8633
        %8665 = vmatpush1.bf16.msra.mxu0 %v8632
        %8666 = vmatprep.subr.bf16.mxu0 %v8635
        %8667 = vmatpush1.bf16.msra.mxu0 %v8634
        %8668 = vmatprep.subr.bf16.mxu0 %v8637
        %8669 = vmatpush1.bf16.msra.mxu0 %v8636
        %8670 = vmatprep.subr.bf16.mxu0 %v8639
        %8671 = vmatpush1.bf16.msra.mxu0 %v8638
        %8672 = vmatprep.subr.bf16.mxu0 %v8641
        %8673 = vmatpush1.bf16.msra.mxu0 %v8640
        %8674 = vmatprep.subr.bf16.mxu0 %v8643
        %8675 = vmatpush1.bf16.msra.mxu0 %v8642
        %8676 = vmatprep.subr.bf16.mxu0 0
        %8677 = vmatpush1.bf16.msra.mxu0 0
        %8678 = vmatprep.subr.bf16.mxu0 0
        %8679 = vmatpush1.bf16.msra.mxu0 0
        %8680 = vmatprep.subr.bf16.mxu0 0
        %8681 = vmatpush1.bf16.msra.mxu0 0
        %8682 = vmatprep.subr.bf16.mxu0 0
        %8683 = vmatpush1.bf16.msra.mxu0 0
        %8684 = vmatprep.subr.bf16.mxu0 0
        %8685 = vmatpush1.bf16.msra.mxu0 0
        %8686 = vmatprep.subr.bf16.mxu0 0
        %8687 = vmatpush1.bf16.msra.mxu0 0
        %8688 = vmatprep.subr.bf16.mxu0 0
        %8689 = vmatpush1.bf16.msra.mxu0 0
        %8690 = vmatprep.subr.bf16.mxu0 0
        %8691 = vmatpush1.bf16.msra.mxu0 0
        %8692 = vmatprep.mubr.bf16.mxu0 0
        %8693 = vmatmul.mubr.bf16.gmra.mrb[0].mxu0 %v8545
        %v8694 = vpop.f32.mrb[0].mxu0
        %v8695 = vadd.f32 %v8573, %v8694
        %v8696 = vpop.f32.mrb[0].mxu0
        %v8697 = vadd.f32 %v8577, %v8696
        %v8698 = vpop.f32.mrb[0].mxu0
        %v8699 = vadd.f32 %v8573, %v8698
        %v8700 = vpop.f32.mrb[0].mxu0
        %v8701 = vadd.f32 %v8577, %v8700
        %8702 = vmatprep.mubr.bf16.mxu0 0
        %8703 = vmatmul.mubr.bf16.gmra.mrb[0].mxu0 %v8546
        %v8704 = vpop.f32.mrb[0].mxu0
        %v8705 = vadd.f32 %v8573, %v8704
        %v8706 = vpop.f32.mrb[0].mxu0
        %v8707 = vadd.f32 %v8577, %v8706
        %v8708 = vpop.f32.mrb[0].mxu0
        %v8709 = vadd.f32 %v8573, %v8708
        %v8710 = vpop.f32.mrb[0].mxu0
        %v8711 = vadd.f32 %v8577, %v8710
        %8712 = vmatprep.mubr.bf16.mxu0 0
        %8713 = vmatmul.mubr.bf16.gmra.mrb[0].mxu0 %v8547
        %v8714 = vpop.f32.mrb[0].mxu0
        %v8715 = vadd.f32 %v8573, %v8714
        %v8716 = vpop.f32.mrb[0].mxu0
        %v8717 = vadd.f32 %v8577, %v8716
        %v8718 = vpop.f32.mrb[0].mxu0
        %v8719 = vadd.f32 %v8573, %v8718
        %v8720 = vpop.f32.mrb[0].mxu0
        %v8721 = vadd.f32 %v8577, %v8720
        %8722 = vmatprep.mubr.bf16.mxu0 0
        %8723 = vmatmul.mubr.bf16.gmra.mrb[0].mxu0 %v8548
        %v8724 = vpop.f32.mrb[0].mxu0
        %v8725 = vadd.f32 %v8573, %v8724
        %v8726 = vpop.f32.mrb[0].mxu0
        %v8727 = vadd.f32 %v8577, %v8726
        %v8728 = vpop.f32.mrb[0].mxu0
        %v8729 = vadd.f32 %v8573, %v8728
        %v8730 = vpop.f32.mrb[0].mxu0
        %v8731 = vadd.f32 %v8577, %v8730
        %8732 = vmatprep.mubr.bf16.mxu0 0
        %8733 = vmatmul.mubr.bf16.gmra.mrb[0].mxu0 %v8549
        %v8734 = vpop.f32.mrb[0].mxu0
        %v8735 = vadd.f32 %v8573, %v8734
        %v8736 = vpop.f32.mrb[0].mxu0
        %v8737 = vadd.f32 %v8577, %v8736
        %v8738 = vpop.f32.mrb[0].mxu0
        %v8739 = vadd.f32 %v8573, %v8738
        %v8740 = vpop.f32.mrb[0].mxu0
        %v8741 = vadd.f32 %v8577, %v8740
        %8742 = vmatprep.mubr.bf16.mxu0 0
        %8743 = vmatmul.mubr.bf16.gmra.mrb[0].mxu0 %v8550
        %v8744 = vpop.f32.mrb[0].mxu0
        %v8745 = vadd.f32 %v8573, %v8744
        %v8746 = vpop.f32.mrb[0].mxu0
        %v8747 = vadd.f32 %v8577, %v8746
        %v8748 = vpop.f32.mrb[0].mxu0
        %v8749 = vadd.f32 %v8573, %v8748
        %v8750 = vpop.f32.mrb[0].mxu0
        %v8751 = vadd.f32 %v8577, %v8750
        %8752 = vmatprep.mubr.bf16.mxu0 0
        %8753 = vmatmul.mubr.bf16.gmra.mrb[0].mxu0 %v8551
        %v8754 = vpop.f32.mrb[0].mxu0
        %v8755 = vadd.f32 %v8573, %v8754
        %v8756 = vpop.f32.mrb[0].mxu0
        %v8757 = vadd.f32 %v8577, %v8756
        %v8758 = vpop.f32.mrb[0].mxu0
        %v8759 = vadd.f32 %v8573, %v8758
        %v8760 = vpop.f32.mrb[0].mxu0
        %v8761 = vadd.f32 %v8577, %v8760
        %8762 = vdwg.mxu0
        %v8763 = vmul.f32 %v8695, 1.702
        %v8764 = vmul.f32 %v8697, 1.702
        %v8765 = vmul.f32 %v8699, 1.702
        %v8766 = vmul.f32 %v8701, 1.702
        %v8767 = vmul.f32 %v8705, 1.702
        %v8768 = vmul.f32 %v8707, 1.702
        %v8769 = vmul.f32 %v8709, 1.702
        %v8770 = vmul.f32 %v8711, 1.702
        %v8771 = vmul.f32 %v8715, 1.702
        %v8772 = vmul.f32 %v8717, 1.702
        %v8773 = vmul.f32 %v8719, 1.702
        %v8774 = vmul.f32 %v8721, 1.702
        %v8775 = vmul.f32 %v8725, 1.702
        %v8776 = vmul.f32 %v8727, 1.702
        %v8777 = vmul.f32 %v8729, 1.702
        %v8778 = vmul.f32 %v8731, 1.702
        %v8779 = vmul.f32 %v8735, 1.702
        %v8780 = vmul.f32 %v8737, 1.702
        %v8781 = vmul.f32 %v8739, 1.702
        %v8782 = vmul.f32 %v8741, 1.702
        %v8783 = vmul.f32 %v8745, 1.702
        %v8784 = vmul.f32 %v8747, 1.702
        %v8785 = vmul.f32 %v8749, 1.702
        %v8786 = vmul.f32 %v8751, 1.702
        %v8787 = vmul.f32 %v8755, 1.702
        %v8788 = vmul.f32 %v8757, 1.702
        %v8789 = vmul.f32 %v8759, 1.702
        %v8790 = vmul.f32 %v8761, 1.702
        %v8791 = vxor.u32 %v8763, 2147483648
        %v8792 = vxor.u32 %v8764, 2147483648
        %v8793 = vxor.u32 %v8765, 2147483648
        %v8794 = vxor.u32 %v8766, 2147483648
        %v8795 = vxor.u32 %v8767, 2147483648
        %v8796 = vxor.u32 %v8768, 2147483648
        %v8797 = vxor.u32 %v8769, 2147483648
        %v8798 = vxor.u32 %v8770, 2147483648
        %v8799 = vxor.u32 %v8771, 2147483648
        %v8800 = vxor.u32 %v8772, 2147483648
        %v8801 = vxor.u32 %v8773, 2147483648
        %v8802 = vxor.u32 %v8774, 2147483648
        %v8803 = vxor.u32 %v8775, 2147483648
        %v8804 = vxor.u32 %v8776, 2147483648
        %v8805 = vxor.u32 %v8777, 2147483648
        %v8806 = vxor.u32 %v8778, 2147483648
        %v8807 = vxor.u32 %v8779, 2147483648
        %v8808 = vxor.u32 %v8780, 2147483648
        %v8809 = vxor.u32 %v8781, 2147483648
        %v8810 = vxor.u32 %v8782, 2147483648
        %v8811 = vxor.u32 %v8783, 2147483648
        %v8812 = vxor.u32 %v8784, 2147483648
        %v8813 = vxor.u32 %v8785, 2147483648
        %v8814 = vxor.u32 %v8786, 2147483648
        %v8815 = vxor.u32 %v8787, 2147483648
        %v8816 = vxor.u32 %v8788, 2147483648
        %v8817 = vxor.u32 %v8789, 2147483648
        %v8818 = vxor.u32 %v8790, 2147483648
        %v8819 = vmul.f32 %v8791, 1.442695
        %v8820 = vpow.pop %v8819
        %v8821 = vmul.f32 %v8792, 1.442695
        %v8822 = vpow.pop %v8821
        %v8823 = vmul.f32 %v8793, 1.442695
        %v8824 = vpow.pop %v8823
        %v8825 = vmul.f32 %v8794, 1.442695
        %v8826 = vpow.pop %v8825
        %v8827 = vmul.f32 %v8795, 1.442695
        %v8828 = vpow.pop %v8827
        %v8829 = vmul.f32 %v8796, 1.442695
        %v8830 = vpow.pop %v8829
        %v8831 = vmul.f32 %v8797, 1.442695
        %v8832 = vpow.pop %v8831
        %v8833 = vmul.f32 %v8798, 1.442695
        %v8834 = vpow.pop %v8833
        %v8835 = vmul.f32 %v8799, 1.442695
        %v8836 = vpow.pop %v8835
        %v8837 = vmul.f32 %v8800, 1.442695
        %v8838 = vpow.pop %v8837
        %v8839 = vmul.f32 %v8801, 1.442695
        %v8840 = vpow.pop %v8839
        %v8841 = vmul.f32 %v8802, 1.442695
        %v8842 = vpow.pop %v8841
        %v8843 = vmul.f32 %v8803, 1.442695
        %v8844 = vpow.pop %v8843
        %v8845 = vmul.f32 %v8804, 1.442695
        %v8846 = vpow.pop %v8845
        %v8847 = vmul.f32 %v8805, 1.442695
        %v8848 = vpow.pop %v8847
        %v8849 = vmul.f32 %v8806, 1.442695
        %v8850 = vpow.pop %v8849
        %v8851 = vmul.f32 %v8807, 1.442695
        %v8852 = vpow.pop %v8851
        %v8853 = vmul.f32 %v8808, 1.442695
        %v8854 = vpow.pop %v8853
        %v8855 = vmul.f32 %v8809, 1.442695
        %v8856 = vpow.pop %v8855
        %v8857 = vmul.f32 %v8810, 1.442695
        %v8858 = vpow.pop %v8857
        %v8859 = vmul.f32 %v8811, 1.442695
        %v8860 = vpow.pop %v8859
        %v8861 = vmul.f32 %v8812, 1.442695
        %v8862 = vpow.pop %v8861
        %v8863 = vmul.f32 %v8813, 1.442695
        %v8864 = vpow.pop %v8863
        %v8865 = vmul.f32 %v8814, 1.442695
        %v8866 = vpow.pop %v8865
        %v8867 = vmul.f32 %v8815, 1.442695
        %v8868 = vpow.pop %v8867
        %v8869 = vmul.f32 %v8816, 1.442695
        %v8870 = vpow.pop %v8869
        %v8871 = vmul.f32 %v8817, 1.442695
        %v8872 = vpow.pop %v8871
        %v8873 = vmul.f32 %v8818, 1.442695
        %v8874 = vpow.pop %v8873
        %v8875 = vadd.f32 %v8820, 1.0
        %v8876 = vadd.f32 %v8822, 1.0
        %v8877 = vadd.f32 %v8824, 1.0
        %v8878 = vadd.f32 %v8826, 1.0
        %v8879 = vadd.f32 %v8828, 1.0
        %v8880 = vadd.f32 %v8830, 1.0
        %v8881 = vadd.f32 %v8832, 1.0
        %v8882 = vadd.f32 %v8834, 1.0
        %v8883 = vadd.f32 %v8836, 1.0
        %v8884 = vadd.f32 %v8838, 1.0
        %v8885 = vadd.f32 %v8840, 1.0
        %v8886 = vadd.f32 %v8842, 1.0
        %v8887 = vadd.f32 %v8844, 1.0
        %v8888 = vadd.f32 %v8846, 1.0
        %v8889 = vadd.f32 %v8848, 1.0
        %v8890 = vadd.f32 %v8850, 1.0
        %v8891 = vadd.f32 %v8852, 1.0
        %v8892 = vadd.f32 %v8854, 1.0
        %v8893 = vadd.f32 %v8856, 1.0
        %v8894 = vadd.f32 %v8858, 1.0
        %v8895 = vadd.f32 %v8860, 1.0
        %v8896 = vadd.f32 %v8862, 1.0
        %v8897 = vadd.f32 %v8864, 1.0
        %v8898 = vadd.f32 %v8866, 1.0
        %v8899 = vadd.f32 %v8868, 1.0
        %v8900 = vadd.f32 %v8870, 1.0
        %v8901 = vadd.f32 %v8872, 1.0
        %v8902 = vadd.f32 %v8874, 1.0
        %v8903 = vrcp.pop %v8875
        %v8904 = vmul.f32 1.0, %v8903
        %v8905 = vrcp.pop %v8876
        %v8906 = vmul.f32 1.0, %v8905
        %v8907 = vrcp.pop %v8877
        %v8908 = vmul.f32 1.0, %v8907
        %v8909 = vrcp.pop %v8878
        %v8910 = vmul.f32 1.0, %v8909
        %v8911 = vrcp.pop %v8879
        %v8912 = vmul.f32 1.0, %v8911
        %v8913 = vrcp.pop %v8880
        %v8914 = vmul.f32 1.0, %v8913
        %v8915 = vrcp.pop %v8881
        %v8916 = vmul.f32 1.0, %v8915
        %v8917 = vrcp.pop %v8882
        %v8918 = vmul.f32 1.0, %v8917
        %v8919 = vrcp.pop %v8883
        %v8920 = vmul.f32 1.0, %v8919
        %v8921 = vrcp.pop %v8884
        %v8922 = vmul.f32 1.0, %v8921
        %v8923 = vrcp.pop %v8885
        %v8924 = vmul.f32 1.0, %v8923
        %v8925 = vrcp.pop %v8886
        %v8926 = vmul.f32 1.0, %v8925
        %v8927 = vrcp.pop %v8887
        %v8928 = vmul.f32 1.0, %v8927
        %v8929 = vrcp.pop %v8888
        %v8930 = vmul.f32 1.0, %v8929
        %v8931 = vrcp.pop %v8889
        %v8932 = vmul.f32 1.0, %v8931
        %v8933 = vrcp.pop %v8890
        %v8934 = vmul.f32 1.0, %v8933
        %v8935 = vrcp.pop %v8891
        %v8936 = vmul.f32 1.0, %v8935
        %v8937 = vrcp.pop %v8892
        %v8938 = vmul.f32 1.0, %v8937
        %v8939 = vrcp.pop %v8893
        %v8940 = vmul.f32 1.0, %v8939
        %v8941 = vrcp.pop %v8894
        %v8942 = vmul.f32 1.0, %v8941
        %v8943 = vrcp.pop %v8895
        %v8944 = vmul.f32 1.0, %v8943
        %v8945 = vrcp.pop %v8896
        %v8946 = vmul.f32 1.0, %v8945
        %v8947 = vrcp.pop %v8897
        %v8948 = vmul.f32 1.0, %v8947
        %v8949 = vrcp.pop %v8898
        %v8950 = vmul.f32 1.0, %v8949
        %v8951 = vrcp.pop %v8899
        %v8952 = vmul.f32 1.0, %v8951
        %v8953 = vrcp.pop %v8900
        %v8954 = vmul.f32 1.0, %v8953
        %v8955 = vrcp.pop %v8901
        %v8956 = vmul.f32 1.0, %v8955
        %v8957 = vrcp.pop %v8902
        %v8958 = vmul.f32 1.0, %v8957
        %v8959 = vmul.f32 %v8695, %v8904
        %v8960 = vmul.f32 %v8697, %v8906
        %v8961 = vmul.f32 %v8699, %v8908
        %v8962 = vmul.f32 %v8701, %v8910
        %v8963 = vmul.f32 %v8705, %v8912
        %v8964 = vmul.f32 %v8707, %v8914
        %v8965 = vmul.f32 %v8709, %v8916
        %v8966 = vmul.f32 %v8711, %v8918
        %v8967 = vmul.f32 %v8715, %v8920
        %v8968 = vmul.f32 %v8717, %v8922
        %v8969 = vmul.f32 %v8719, %v8924
        %v8970 = vmul.f32 %v8721, %v8926
        %v8971 = vmul.f32 %v8725, %v8928
        %v8972 = vmul.f32 %v8727, %v8930
        %v8973 = vmul.f32 %v8729, %v8932
        %v8974 = vmul.f32 %v8731, %v8934
        %v8975 = vmul.f32 %v8735, %v8936
        %v8976 = vmul.f32 %v8737, %v8938
        %v8977 = vmul.f32 %v8739, %v8940
        %v8978 = vmul.f32 %v8741, %v8942
        %v8979 = vmul.f32 %v8745, %v8944
        %v8980 = vmul.f32 %v8747, %v8946
        %v8981 = vmul.f32 %v8749, %v8948
        %v8982 = vmul.f32 %v8751, %v8950
        %v8983 = vmul.f32 %v8755, %v8952
        %v8984 = vmul.f32 %v8757, %v8954
        %v8985 = vmul.f32 %v8759, %v8956
        %v8986 = vmul.f32 %v8761, %v8958
        %v8987 = vpack.c.bf16 %v8961, %v8959
        %v8988 = vpack.c.bf16 %v8962, %v8960
        %v8989 = vpack.c.bf16 %v8965, %v8963
        %v8990 = vpack.c.bf16 %v8966, %v8964
        %v8991 = vpack.c.bf16 %v8969, %v8967
        %v8992 = vpack.c.bf16 %v8970, %v8968
        %v8993 = vpack.c.bf16 %v8973, %v8971
        %v8994 = vpack.c.bf16 %v8974, %v8972
        %v8995 = vpack.c.bf16 %v8977, %v8975
        %v8996 = vpack.c.bf16 %v8978, %v8976
        %v8997 = vpack.c.bf16 %v8981, %v8979
        %v8998 = vpack.c.bf16 %v8982, %v8980
        %v8999 = vpack.c.bf16 %v8985, %v8983
        %v9000 = vpack.c.bf16 %v8986, %v8984
        %v9001 = vld [vmem:[%s843] sm:$0xf]
        %v9002 = vld [vmem:[%s843 + $0x4] sm:$0xf]
        %v9003 = vld [vmem:[%s843 + $0x8] sm:$0xf]
        %v9004 = vld [vmem:[%s843 + $0xc] sm:$0xf]
        %v9005 = vld [vmem:[%s843 + $0x10] sm:$0xf]
        %v9006 = vld [vmem:[%s843 + $0x14] sm:$0xf]
        %v9007 = vld [vmem:[%s843 + $0x18] sm:$0xf]
        %v9008 = vld [vmem:[%s843 + $0x1c] sm:$0xf]
        %v9009 = vld [vmem:[%s843 + $0x20] sm:$0xf]
        %v9010 = vld [vmem:[%s843 + $0x24] sm:$0xf]
        %v9011 = vld [vmem:[%s843 + $0x28] sm:$0xf]
        %v9012 = vld [vmem:[%s843 + $0x2c] sm:$0xf]
        %v9013 = vld [vmem:[%s843 + $0x30] sm:$0xf]
        %v9014 = vld [vmem:[%s843 + $0x34] sm:$0xf]
        %v9015 = vld [vmem:[%s843 + $0x38] sm:$0xf]
        %v9016 = vld [vmem:[%s843 + $0x3c] sm:$0xf]
        %v9017 = vld [vmem:[%s843 + $0x40] sm:$0xf]
        %v9018 = vld [vmem:[%s843 + $0x44] sm:$0xf]
        %v9019 = vld [vmem:[%s843 + $0x48] sm:$0xf]
        %v9020 = vld [vmem:[%s843 + $0x4c] sm:$0xf]
        %v9021 = vld [vmem:[%s843 + $0x50] sm:$0xf]
        %v9022 = vld [vmem:[%s843 + $0x54] sm:$0xf]
        %v9023 = vld [vmem:[%s843 + $0x58] sm:$0xf]
        %v9024 = vld [vmem:[%s843 + $0x5c] sm:$0xf]
        %v9025 = vld [vmem:[%s843 + $0x60] sm:$0xf]
        %v9026 = vld [vmem:[%s843 + $0x64] sm:$0xf]
        %v9027 = vld [vmem:[%s843 + $0x68] sm:$0xf]
        %v9028 = vld [vmem:[%s843 + $0x6c] sm:$0xf]
        %v9029 = vld [vmem:[%s843 + $0x70] sm:$0xf]
        %v9030 = vld [vmem:[%s843 + $0x74] sm:$0xf]
        %v9031 = vld [vmem:[%s843 + $0x78] sm:$0xf]
        %v9032 = vld [vmem:[%s843 + $0x7c] sm:$0xf]
        %v9033 = vld [vmem:[%s846] sm:$0x1]
        %v9035 = vlaneseq
        %v9036 = vshrl.u32 %v9035, 7
        %v9037 = vsub.s32 0, %v9036
        %v9038 = vrot.slane %v9033, %v9037
        %v9072 = vunpack.c.l.b16 %v9001
        %v9073 = vunpack.c.l.b16 %v9002
        %v9074 = vunpack.c.l.b16 %v9003
        %v9075 = vunpack.c.l.b16 %v9004
        %v9076 = vunpack.c.l.b16 %v9005
        %v9077 = vunpack.c.l.b16 %v9006
        %v9078 = vunpack.c.l.b16 %v9007
        %v9079 = vunpack.c.l.b16 %v9008
        %v9080 = vunpack.c.l.b16 %v9009
        %v9081 = vunpack.c.l.b16 %v9010
        %v9082 = vunpack.c.l.b16 %v9011
        %v9083 = vunpack.c.l.b16 %v9012
        %v9084 = vunpack.c.l.b16 %v9013
        %v9085 = vunpack.c.l.b16 %v9014
        %v9086 = vunpack.c.l.b16 %v9015
        %v9087 = vunpack.c.l.b16 %v9016
        %v9088 = vunpack.c.l.b16 %v9017
        %v9089 = vunpack.c.l.b16 %v9018
        %v9090 = vunpack.c.l.b16 %v9019
        %v9091 = vunpack.c.l.b16 %v9020
        %v9092 = vunpack.c.l.b16 %v9021
        %v9093 = vunpack.c.l.b16 %v9022
        %v9094 = vunpack.c.l.b16 %v9023
        %v9095 = vunpack.c.l.b16 %v9024
        %v9096 = vunpack.c.l.b16 %v9025
        %v9097 = vunpack.c.l.b16 %v9026
        %v9098 = vunpack.c.l.b16 %v9027
        %v9099 = vunpack.c.l.b16 %v9028
        %v9100 = vunpack.c.l.b16 %v9029
        %v9101 = vunpack.c.l.b16 %v9030
        %v9102 = vunpack.c.l.b16 %v9031
        %v9103 = vunpack.c.l.b16 %v9032
        %v9104 = vpack.c.b16 %v9073, %v9072
        %v9105 = vpack.c.b16 %v9075, %v9074
        %v9106 = vpack.c.b16 %v9077, %v9076
        %v9107 = vpack.c.b16 %v9079, %v9078
        %v9108 = vpack.c.b16 %v9081, %v9080
        %v9109 = vpack.c.b16 %v9083, %v9082
        %v9110 = vpack.c.b16 %v9085, %v9084
        %v9111 = vpack.c.b16 %v9087, %v9086
        %v9112 = vpack.c.b16 %v9089, %v9088
        %v9113 = vpack.c.b16 %v9091, %v9090
        %v9114 = vpack.c.b16 %v9093, %v9092
        %v9115 = vpack.c.b16 %v9095, %v9094
        %v9116 = vpack.c.b16 %v9097, %v9096
        %v9117 = vpack.c.b16 %v9099, %v9098
        %v9118 = vpack.c.b16 %v9101, %v9100
        %v9119 = vpack.c.b16 %v9103, %v9102
        %9136 = vmatprep.subr.bf16.mxu0 0
        %9137 = vmatpush1.bf16.msra.mxu0 %v9104
        %9138 = vmatprep.subr.bf16.mxu0 0
        %9139 = vmatpush1.bf16.msra.mxu0 %v9105
        %9140 = vmatprep.subr.bf16.mxu0 0
        %9141 = vmatpush1.bf16.msra.mxu0 %v9106
        %9142 = vmatprep.subr.bf16.mxu0 0
        %9143 = vmatpush1.bf16.msra.mxu0 %v9107
        %9144 = vmatprep.subr.bf16.mxu0 0
        %9145 = vmatpush1.bf16.msra.mxu0 %v9108
        %9146 = vmatprep.subr.bf16.mxu0 0
        %9147 = vmatpush1.bf16.msra.mxu0 %v9109
        %9148 = vmatprep.subr.bf16.mxu0 0
        %9149 = vmatpush1.bf16.msra.mxu0 %v9110
        %9150 = vmatprep.subr.bf16.mxu0 0
        %9151 = vmatpush1.bf16.msra.mxu0 %v9111
        %9152 = vmatprep.subr.bf16.mxu0 0
        %9153 = vmatpush1.bf16.msra.mxu0 %v9112
        %9154 = vmatprep.subr.bf16.mxu0 0
        %9155 = vmatpush1.bf16.msra.mxu0 %v9113
        %9156 = vmatprep.subr.bf16.mxu0 0
        %9157 = vmatpush1.bf16.msra.mxu0 %v9114
        %9158 = vmatprep.subr.bf16.mxu0 0
        %9159 = vmatpush1.bf16.msra.mxu0 %v9115
        %9160 = vmatprep.subr.bf16.mxu0 0
        %9161 = vmatpush1.bf16.msra.mxu0 %v9116
        %9162 = vmatprep.subr.bf16.mxu0 0
        %9163 = vmatpush1.bf16.msra.mxu0 %v9117
        %9164 = vmatprep.subr.bf16.mxu0 0
        %9165 = vmatpush1.bf16.msra.mxu0 %v9118
        %9166 = vmatprep.subr.bf16.mxu0 0
        %9167 = vmatpush1.bf16.msra.mxu0 %v9119
        %9168 = vmatprep.mubr.bf16.mxu0 %v8988
        %9169 = vmatmul.mubr.bf16.gmra.mrb[0].mxu0 %v8987
        %v9170 = vpop.f32.mrb[0].mxu0
        %v9171 = vadd.f32 %v9038, %v9170
        %v9172 = vpop.f32.mrb[0].mxu0
        %v9173 = vpop.f32.mrb[0].mxu0
        %v9174 = vadd.f32 %v9038, %v9173
        %v9175 = vpop.f32.mrb[0].mxu0
        %9176 = vmatprep.mubr.bf16.mxu0 %v8990
        %9177 = vmatmul.mubr.bf16.gmra.mrb[0].mxu0 %v8989
        %v9178 = vpop.f32.mrb[0].mxu0
        %v9179 = vadd.f32 %v9038, %v9178
        %v9180 = vpop.f32.mrb[0].mxu0
        %v9181 = vpop.f32.mrb[0].mxu0
        %v9182 = vadd.f32 %v9038, %v9181
        %v9183 = vpop.f32.mrb[0].mxu0
        %9184 = vmatprep.mubr.bf16.mxu0 %v8992
        %9185 = vmatmul.mubr.bf16.gmra.mrb[0].mxu0 %v8991
        %v9186 = vpop.f32.mrb[0].mxu0
        %v9187 = vadd.f32 %v9038, %v9186
        %v9188 = vpop.f32.mrb[0].mxu0
        %v9189 = vpop.f32.mrb[0].mxu0
        %v9190 = vadd.f32 %v9038, %v9189
        %v9191 = vpop.f32.mrb[0].mxu0
        %9192 = vmatprep.mubr.bf16.mxu0 %v8994
        %9193 = vmatmul.mubr.bf16.gmra.mrb[0].mxu0 %v8993
        %v9194 = vpop.f32.mrb[0].mxu0
        %v9195 = vadd.f32 %v9038, %v9194
        %v9196 = vpop.f32.mrb[0].mxu0
        %v9197 = vpop.f32.mrb[0].mxu0
        %v9198 = vadd.f32 %v9038, %v9197
        %v9199 = vpop.f32.mrb[0].mxu0
        %9200 = vmatprep.mubr.bf16.mxu0 %v8996
        %9201 = vmatmul.mubr.bf16.gmra.mrb[0].mxu0 %v8995
        %v9202 = vpop.f32.mrb[0].mxu0
        %v9203 = vadd.f32 %v9038, %v9202
        %v9204 = vpop.f32.mrb[0].mxu0
        %v9205 = vpop.f32.mrb[0].mxu0
        %v9206 = vadd.f32 %v9038, %v9205
        %v9207 = vpop.f32.mrb[0].mxu0
        %9208 = vmatprep.mubr.bf16.mxu0 %v8998
        %9209 = vmatmul.mubr.bf16.gmra.mrb[0].mxu0 %v8997
        %v9210 = vpop.f32.mrb[0].mxu0
        %v9211 = vadd.f32 %v9038, %v9210
        %v9212 = vpop.f32.mrb[0].mxu0
        %v9213 = vpop.f32.mrb[0].mxu0
        %v9214 = vadd.f32 %v9038, %v9213
        %v9215 = vpop.f32.mrb[0].mxu0
        %9216 = vmatprep.mubr.bf16.mxu0 %v9000
        %9217 = vmatmul.mubr.bf16.gmra.mrb[0].mxu0 %v8999
        %v9218 = vpop.f32.mrb[0].mxu0
        %v9219 = vadd.f32 %v9038, %v9218
        %v9220 = vpop.f32.mrb[0].mxu0
        %v9221 = vpop.f32.mrb[0].mxu0
        %v9222 = vadd.f32 %v9038, %v9221
        %v9223 = vpop.f32.mrb[0].mxu0
        %9224 = vdwg.mxu0
        %v9225 = vadd.f32 %v8293, %v9171
        %v9226 = vadd.f32 %v8294, %v9174
        %v9227 = vadd.f32 %v8295, %v9179
        %v9228 = vadd.f32 %v8296, %v9182
        %v9229 = vadd.f32 %v8297, %v9187
        %v9230 = vadd.f32 %v8298, %v9190
        %v9231 = vadd.f32 %v8299, %v9195
        %v9232 = vadd.f32 %v8300, %v9198
        %v9233 = vadd.f32 %v8301, %v9203
        %v9234 = vadd.f32 %v8302, %v9206
        %v9235 = vadd.f32 %v8303, %v9211
        %v9236 = vadd.f32 %v8304, %v9214
        %v9237 = vadd.f32 %v8305, %v9219
        %v9238 = vadd.f32 %v8306, %v9222
        %9239 = vst [vmem:[#allocation4] sm:$0xff] %v9225
        %9240 = vst [vmem:[#allocation4 + $0x8] sm:$0xff] %v9226
        %9241 = vst [vmem:[#allocation4 + $0x10] sm:$0xff] %v9227
        %9242 = vst [vmem:[#allocation4 + $0x18] sm:$0xff] %v9228
        %9243 = vst [vmem:[#allocation4 + $0x20] sm:$0xff] %v9229
        %9244 = vst [vmem:[#allocation4 + $0x28] sm:$0xff] %v9230
        %9245 = vst [vmem:[#allocation4 + $0x30] sm:$0xff] %v9231
        %9246 = vst [vmem:[#allocation4 + $0x38] sm:$0xff] %v9232
        %9247 = vst [vmem:[#allocation4 + $0x40] sm:$0xff] %v9233
        %9248 = vst [vmem:[#allocation4 + $0x48] sm:$0xff] %v9234
        %9249 = vst [vmem:[#allocation4 + $0x50] sm:$0xff] %v9235
        %9250 = vst [vmem:[#allocation4 + $0x58] sm:$0xff] %v9236
        %9251 = vst [vmem:[#allocation4 + $0x60] sm:$0xff] %v9237
        %9252 = vst [vmem:[#allocation4 + $0x68] sm:$0xff] %v9238
        %p9253 = scmp.eq.s32.totalorder %s36, 1
        // Predicated region
        $region109: #{clip_vision_forward.3} parent=103 // pred_check
          %p9254 = pneg %p9253
        $region110: #{clip_vision_forward.3} parent=103 // pred_check_branch
          %9256 = sbr.rel (%p9254) target = $region112
        $region111: #{clip_vision_forward.3} parent=103 // pred_region
          %v9258 = vrot.slane %v9232, 7
          %vm9260 = vcmask 1040384
          %v9261 = vsel %vm9260, %v9225, %v9258
          %v9262 = vld [vmem:[%s18] sm:$0x1]
          %v9263 = vld [vmem:[%s19] sm:$0x1]
          %vm9264 = vcmask 1041408
          %v9265 = vsel %vm9264, %v9261, 0.0
          %9266 = vadd.xlane.f32.xlu0 %v9265
          %v9267 = vpop.xlane.xlu0 %9266
          %v9268 = vmul.f32 %v9267, 0.015625
          %v9269 = vmul.f32 %v9261, %v9261
          %v9270 = vsel %vm9264, %v9269, 0.0
          %9271 = vadd.xlane.f32.xlu0 %v9270
          %v9272 = vpop.xlane.xlu0 %9271
          %v9273 = vmul.f32 %v9272, 0.015625
          %v9274 = vmul.f32 %v9268, %v9268
          %v9275 = vsub.f32 %v9273, %v9274
          %v9276 = vmax.f32 %v9275, 0.0
          %v9277 = vsub.f32 %v9261, %v9268
          %v9278 = vadd.f32 %v9276, 1e-05
          %v9279 = vrsqrt.pop %v9278
          %v9280 = vmul.f32 %v9277, %v9279
          %v9282 = vlaneseq
          %v9283 = vshrl.u32 %v9282, 7
          %v9284 = vsub.s32 0, %v9283
          %v9285 = vrot.slane %v9262, %v9284
          %v9287 = vmul.f32 %v9280, %v9285
          %v9289 = vlaneseq
          %v9290 = vshrl.u32 %v9289, 7
          %v9291 = vsub.s32 0, %v9290
          %v9292 = vrot.slane %v9263, %v9291
          %v9294 = vadd.f32 %v9287, %v9292
          %v9295 = vpack.c.bf16 %v9294, %v9294
          %v9296 = vld [vmem:[%s20] sm:$0xf]
          %v9297 = vld [vmem:[%s20 + $0x4] sm:$0xf]
          %v9298 = vld [vmem:[%s20 + $0x8] sm:$0xf]
          %v9299 = vld [vmem:[%s20 + $0xc] sm:$0xf]
          %v9300 = vld [vmem:[%s20 + $0x10] sm:$0xf]
          %v9301 = vld [vmem:[%s20 + $0x14] sm:$0xf]
          %v9302 = vld [vmem:[%s20 + $0x18] sm:$0xf]
          %v9303 = vld [vmem:[%s20 + $0x1c] sm:$0xf]
          %v9304 = vld [vmem:[%s20 + $0x20] sm:$0xf]
          %v9305 = vld [vmem:[%s20 + $0x24] sm:$0xf]
          %v9306 = vld [vmem:[%s20 + $0x28] sm:$0xf]
          %v9307 = vld [vmem:[%s20 + $0x2c] sm:$0xf]
          %v9308 = vld [vmem:[%s20 + $0x30] sm:$0xf]
          %v9309 = vld [vmem:[%s20 + $0x34] sm:$0xf]
          %v9310 = vld [vmem:[%s20 + $0x38] sm:$0xf]
          %v9311 = vld [vmem:[%s20 + $0x3c] sm:$0xf]
          %v9328 = vunpack.c.l.b16 %v9296
          %v9329 = vunpack.c.l.b16 %v9297
          %v9330 = vunpack.c.l.b16 %v9298
          %v9331 = vunpack.c.l.b16 %v9299
          %v9332 = vunpack.c.l.b16 %v9300
          %v9333 = vunpack.c.l.b16 %v9301
          %v9334 = vunpack.c.l.b16 %v9302
          %v9335 = vunpack.c.l.b16 %v9303
          %v9336 = vunpack.c.l.b16 %v9304
          %v9337 = vunpack.c.l.b16 %v9305
          %v9338 = vunpack.c.l.b16 %v9306
          %v9339 = vunpack.c.l.b16 %v9307
          %v9340 = vunpack.c.l.b16 %v9308
          %v9341 = vunpack.c.l.b16 %v9309
          %v9342 = vunpack.c.l.b16 %v9310
          %v9343 = vunpack.c.l.b16 %v9311
          %v9344 = vpack.c.b16 %v9329, %v9328
          %v9345 = vpack.c.b16 %v9331, %v9330
          %v9346 = vpack.c.b16 %v9333, %v9332
          %v9347 = vpack.c.b16 %v9335, %v9334
          %v9348 = vpack.c.b16 %v9337, %v9336
          %v9349 = vpack.c.b16 %v9339, %v9338
          %v9350 = vpack.c.b16 %v9341, %v9340
          %v9351 = vpack.c.b16 %v9343, %v9342
          %9360 = vmatprep.subr.bf16.mxu0 0
          %9361 = vmatpush1.bf16.msra.mxu0 %v9344
          %9362 = vmatprep.subr.bf16.mxu0 0
          %9363 = vmatpush1.bf16.msra.mxu0 %v9345
          %9364 = vmatprep.subr.bf16.mxu0 0
          %9365 = vmatpush1.bf16.msra.mxu0 %v9346
          %9366 = vmatprep.subr.bf16.mxu0 0
          %9367 = vmatpush1.bf16.msra.mxu0 %v9347
          %9368 = vmatprep.subr.bf16.mxu0 0
          %9369 = vmatpush1.bf16.msra.mxu0 %v9348
          %9370 = vmatprep.subr.bf16.mxu0 0
          %9371 = vmatpush1.bf16.msra.mxu0 %v9349
          %9372 = vmatprep.subr.bf16.mxu0 0
          %9373 = vmatpush1.bf16.msra.mxu0 %v9350
          %9374 = vmatprep.subr.bf16.mxu0 0
          %9375 = vmatpush1.bf16.msra.mxu0 %v9351
          %9376 = vmatprep.subr.bf16.mxu0 0
          %9377 = vmatpush1.bf16.msra.mxu0 0
          %9378 = vmatprep.subr.bf16.mxu0 0
          %9379 = vmatpush1.bf16.msra.mxu0 0
          %9380 = vmatprep.subr.bf16.mxu0 0
          %9381 = vmatpush1.bf16.msra.mxu0 0
          %9382 = vmatprep.subr.bf16.mxu0 0
          %9383 = vmatpush1.bf16.msra.mxu0 0
          %9384 = vmatprep.subr.bf16.mxu0 0
          %9385 = vmatpush1.bf16.msra.mxu0 0
          %9386 = vmatprep.subr.bf16.mxu0 0
          %9387 = vmatpush1.bf16.msra.mxu0 0
          %9388 = vmatprep.subr.bf16.mxu0 0
          %9389 = vmatpush1.bf16.msra.mxu0 0
          %9390 = vmatprep.subr.bf16.mxu0 0
          %9391 = vmatpush1.bf16.msra.mxu0 0
          %9392 = vmatprep.mubr.bf16.mxu0 0
          %9393 = vmatmul.mubr.bf16.gmra.mrb[0].mxu0 %v9295
          %v9394 = vpop.f32.mrb[0].mxu0
          %v9395 = vadd.f32 0.0, %v9394
          %v9396 = vpop.f32.mrb[0].mxu0
          %v9397 = vpop.f32.mrb[0].mxu0
          %v9398 = vpop.f32.mrb[0].mxu0
          %9399 = vdwg.mxu0
          %vm9400 = vcmask 254976
          %9401 = vst.msk [vmem:[#allocation6] sm:$0x3] %vm9400, %v9395
        $region112: #{clip_vision_forward.3} parent=103 // pred_fallthru
          _
        // Predicated region
        $region113: #{clip_vision_forward.3} parent=103 // pred_check
          %p9402 = pneg %p550
        $region114: #{clip_vision_forward.3} parent=103 // pred_check_branch
          %9404 = sbr.rel (%p9402) target = $region116
        $region115: #{clip_vision_forward.3} parent=103 // pred_region
          %s9406 = ssub.s32 1792, 1792
          %9407 = vsyncadd [#allocation5], %s9406
          %s9408 = sshll.u32 [#allocation4], 4
          %s9409 = int_to_ptr.vmem [resolvable:$true] %s9408
          %9414 = dma.vmem_to_hbm [thread:$0]  %s9409, 1792, %s21, [#allocation5], 128, 128, 8
        $region116: #{clip_vision_forward.3} parent=103 // pred_fallthru
          _
        // Predicated region
        $region117: #{clip_vision_forward.3} parent=103 // pred_check
          %p9415 = pneg %p571
        $region118: #{clip_vision_forward.3} parent=103 // pred_check_branch
          %9417 = sbr.rel (%p9415) target = $region120
        $region119: #{clip_vision_forward.3} parent=103 // pred_region
          %s9419 = ssub.s32 32, 32
          %9420 = vsyncadd [#allocation7], %s9419
          %s9422 = sshll.u32 [#allocation6], 4
          %s9423 = int_to_ptr.vmem [resolvable:$true] %s9422
          %9425 = dma.vmem_to_hbm [thread:$0]  %s9423, 32, %s22, [#allocation7]
        $region120: #{clip_vision_forward.3} parent=103 // pred_fallthru
          _
        // Predicated region
        $region121: #{clip_vision_forward.3} parent=103 // pred_check
          %p9426 = pneg %p550
        $region122: #{clip_vision_forward.3} parent=103 // pred_check_branch
          %9428 = sbr.rel (%p9426) target = $region124
        $region123: #{clip_vision_forward.3} parent=103 // pred_region
          %9429 = dma.done [#allocation5], 1792
        $region124: #{clip_vision_forward.3} parent=103 // pred_fallthru
          _
        // Predicated region
        $region125: #{clip_vision_forward.3} parent=103 // pred_check
          %p9430 = pneg %p571
        $region126: #{clip_vision_forward.3} parent=103 // pred_check_branch
          %9432 = sbr.rel (%p9430) target = $region128
        $region127: #{clip_vision_forward.3} parent=103 // pred_region
          %9433 = dma.done [#allocation7], 32
        $region128: #{clip_vision_forward.3} parent=103 // pred_fallthru
          _
      $region104: #{clip_vision_forward.3} parent=5 // pred_fallthru
        _
      %p9434 = scmp.le.s32.totalorder 2, %s31
      // Predicated region
      $region129: #{clip_vision_forward.3} parent=5 // pred_check
        %p9435 = pneg %p9434
      $region130: #{clip_vision_forward.3} parent=5 // pred_check_branch
        %9437 = sbr.rel (%p9435) target = $region132
      $region131: #{clip_vision_forward.3} parent=5 // pred_region
        %s9438 = ssub.s32 %s31, 2
      $region132: #{clip_vision_forward.3} parent=5 // pred_fallthru
        _
    $region6: #{clip_vision_forward.3} parent=1 // loop_footer
      %s35 = sadd.s32 1, %s31
    $region7: #{clip_vision_forward.3} parent=1 // loop_footer_branch
      %30 = sbr.rel target = $region3
    $region8: #{clip_vision_forward.3} parent=1 // loop_exit
      _
    %9439 = vsyncpa [#allocation5], 1
    %s9440 = scalar_lea.sflag [#allocation5], 1
    %9441 = vsyncpa %s9440, 1
    %9442 = vsyncpa [#allocation7], 1

</llo_original>
